<compile_context>
chip_gen: v7x
topology: tpu7x:2x2x1
jax: 0.10.0
libtpu: 0.0.40
codegen_flags: <defaults>
</compile_context>

<pallas_src>
import numpy as np
import jax
import jax.numpy as jnp
from jax import lax
from jax.experimental import pallas as pl
from jax.experimental.pallas import tpu as pltpu


def make_resblock(channels: int, num_groups: int, H: int, W: int):
    C = channels
    G = num_groups
    assert C % G == 0
    Cg = C // G
    HW = H * W
    Cp = max(128, ((C + 127) // 128) * 128)   # lane-dense padded channel count
    eps = 1e-5
    n_elems = float(Cg * HW)                  # elements per group (real channels only)

    # ---- in-kernel helpers (traced inside the Pallas body) -------------------
    def _gnorm(v, gamma, beta, A, AT):
        # v: (HW, Cp) f32. Centered two-pass variance (no E[x^2]-mean^2 cancel).
        s = jnp.sum(v, axis=0, keepdims=True)                          # (1, Cp)
        mean_g = jnp.dot(s, A, preferred_element_type=jnp.float32) / n_elems
        mean_c = jnp.dot(mean_g, AT, preferred_element_type=jnp.float32)  # (1, Cp)
        d = v - mean_c
        ssd = jnp.sum(d * d, axis=0, keepdims=True)                    # (1, Cp)
        var_g = jnp.dot(ssd, A, preferred_element_type=jnp.float32) / n_elems
        var_c = jnp.dot(var_g, AT, preferred_element_type=jnp.float32)
        return d * lax.rsqrt(var_c + eps) * gamma + beta

    def _conv3x3(pad_ref, w, bias):
        # pad_ref: (H+2, W+2, Cp) bf16 VMEM scratch with zero halo border.
        # Single im2col matmul: (HW, 9*Cp) @ (9*Cp, Cp), f32 accumulation.
        patches = []
        for dy in range(3):
            for dx in range(3):
                patches.append(pad_ref[dy:dy + H, dx:dx + W, :].reshape(HW, Cp))
        col = jnp.concatenate(patches, axis=-1)                        # (HW, 9*Cp) bf16
        return jnp.dot(col, w, preferred_element_type=jnp.float32) + bias

    # ---- the Pallas kernel ----------------------------------------------------
    def kernel(x_ref, emb_ref, A_ref, AT_ref,
               g1_ref, b1_ref, w1_ref, cb1_ref,
               g2_ref, b2_ref, w2_ref, cb2_ref,
               out_ref, pad_ref):
        A = A_ref[...]
        AT = AT_ref[...]

        # Zero only the halo border of the persistent padded scratch each step
        # (interior is fully overwritten before every use).  Re-zeroing per step
        # keeps it correct under megacore grid sharding.
        zrow = jnp.zeros((1, W + 2, Cp), jnp.bfloat16)
        pad_ref[0:1, :, :] = zrow
        pad_ref[H + 1:H + 2, :, :] = zrow
        zcol = jnp.zeros((H, 1, Cp), jnp.bfloat16)
        pad_ref[1:H + 1, 0:1, :] = zcol
        pad_ref[1:H + 1, W + 1:W + 2, :] = zcol

        xe = (x_ref[0] + emb_ref[0]).reshape(HW, Cp)      # x + embeddings[:, :C]

        h = _gnorm(xe, g1_ref[...], b1_ref[...], A, AT)   # gnorm1
        h = jnp.maximum(h, 0.0)                           # relu
        pad_ref[1:H + 1, 1:W + 1, :] = h.astype(jnp.bfloat16).reshape(H, W, Cp)
        h = _conv3x3(pad_ref, w1_ref[...], cb1_ref[...])  # conv1 (one MXU dot)
        # TODO(synk): nn.Dropout implemented as eval-mode identity (no RNG mask).
        h = _gnorm(h, g2_ref[...], b2_ref[...], A, AT)    # gnorm2
        h = jnp.maximum(h, 0.0)                           # relu
        pad_ref[1:H + 1, 1:W + 1, :] = h.astype(jnp.bfloat16).reshape(H, W, Cp)
        h = _conv3x3(pad_ref, w2_ref[...], cb2_ref[...])  # conv2 (one MXU dot)

        # residual: recompute x+emb from the still-resident input blocks
        out_ref[0] = h.reshape(H, W, Cp) + x_ref[0] + emb_ref[0]

    # ---- wrapper (layout conversion, lane-dense channel padding) --------------
    def forward(x_nchw, emb_nchw, params):
        N = x_nchw.shape[0]
        pad_c = Cp - C

        x_nhwc = jnp.transpose(x_nchw, (0, 2, 3, 1)).astype(jnp.float32)
        emb_nhwc = jnp.transpose(emb_nchw[:, :C], (0, 2, 3, 1)).astype(jnp.float32)
        x_nhwc = jnp.pad(x_nhwc, ((0, 0), (0, 0), (0, 0), (0, pad_c)))
        emb_nhwc = jnp.pad(emb_nhwc, ((0, 0), (0, 0), (0, 0), (0, pad_c)))

        # group assignment over the padded channel axis (padded rows are zero)
        ch = jnp.arange(Cp)
        A = ((ch[:, None] // Cg == jnp.arange(G)[None, :]) &
             (ch[:, None] < C)).astype(jnp.float32)                   # (Cp, G)
        AT = jnp.transpose(A)                                         # (G, Cp)

        def pad_vec(v):
            return jnp.pad(v.astype(jnp.float32), (0, pad_c)).reshape(1, Cp)

        def pad_w(w):
            # PyTorch (Co, Ci, kh, kw) -> (kh, kw, Ci, Co) -> zero-pad -> (9*Cp, Cp) bf16
            w = jnp.transpose(w.astype(jnp.float32), (2, 3, 1, 0))
            w = jnp.pad(w, ((0, 0), (0, 0), (0, pad_c), (0, pad_c)))
            return w.reshape(9 * Cp, Cp).astype(jnp.bfloat16)

        g1, b1 = pad_vec(params["gamma1"]), pad_vec(params["beta1"])
        g2, b2 = pad_vec(params["gamma2"]), pad_vec(params["beta2"])
        cb1, cb2 = pad_vec(params["b1"]), pad_vec(params["b2"])
        w1, w2 = pad_w(params["w1"]), pad_w(params["w2"])

        img_spec = pl.BlockSpec((1, H, W, Cp), lambda n: (n, 0, 0, 0))
        vec_spec = pl.BlockSpec((1, Cp), lambda n: (0, 0))
        w_spec = pl.BlockSpec((9 * Cp, Cp), lambda n: (0, 0))

        out_nhwc = pl.pallas_call(
            kernel,
            out_shape=jax.ShapeDtypeStruct((N, H, W, Cp), jnp.float32),
            grid_spec=pltpu.PrefetchScalarGridSpec(
                num_scalar_prefetch=0,
                grid=(N,),
                in_specs=[
                    img_spec, img_spec,
                    pl.BlockSpec((Cp, G), lambda n: (0, 0)),
                    pl.BlockSpec((G, Cp), lambda n: (0, 0)),
                    vec_spec, vec_spec, w_spec, vec_spec,
                    vec_spec, vec_spec, w_spec, vec_spec,
                ],
                out_specs=img_spec,
                scratch_shapes=[pltpu.VMEM((H + 2, W + 2, Cp), jnp.bfloat16)],
            ),
            compiler_params=pltpu.CompilerParams(
                dimension_semantics=("parallel",),
                vmem_limit_bytes=64 * 1024 * 1024),
        )(x_nhwc, emb_nhwc, A, AT, g1, b1, w1, cb1, g2, b2, w2, cb2)

        out = out_nhwc[..., :C]                       # drop channel padding
        return jnp.transpose(out, (0, 3, 1, 2))       # back to NCHW

    return forward


# ---- pure-JAX reference (for correctness check) -------------------------------
def ref_forward(x, emb, params, num_groups):
    C = x.shape[1]
    x = x + emb[:, :C]

    def gn(v, gamma, beta):
        N, Cc, Hh, Ww = v.shape
        vg = v.reshape(N, num_groups, Cc // num_groups, Hh, Ww)
        mean = vg.mean(axis=(2, 3, 4), keepdims=True)
        var = ((vg - mean) ** 2).mean(axis=(2, 3, 4), keepdims=True)
        vn = ((vg - mean) / jnp.sqrt(var + 1e-5)).reshape(N, Cc, Hh, Ww)
        return vn * gamma[None, :, None, None] + beta[None, :, None, None]

    def cv(v, w, b):
        o = lax.conv_general_dilated(v, w, (1, 1), "SAME",
                                     dimension_numbers=("NCHW", "OIHW", "NCHW"))
        return o + b[None, :, None, None]

    r = cv(jax.nn.relu(gn(x, params["gamma1"], params["beta1"])), params["w1"], params["b1"])
    r = cv(jax.nn.relu(gn(r, params["gamma2"], params["beta2"])), params["w2"], params["b2"])
    return r + x


if __name__ == "__main__":
    N, C, H, W = 2, 4, 16, 16
    C_emb = 8           # embeddings have >= C channels; forward slices [:, :C]
    num_groups = 2
    dropout_prob = 0.1  # eval-mode dropout == identity

    key = jax.random.PRNGKey(0)
    kx, ke, kw1, kb1, kw2, kb2 = jax.random.split(key, 6)
    x = jax.random.normal(kx, (N, C, H, W), jnp.float32)
    emb = jax.random.normal(ke, (N, C_emb, H, W), jnp.float32)

    fan_in = C * 3 * 3
    bound = 1.0 / np.sqrt(fan_in)
    params = {
        "gamma1": jnp.ones((C,), jnp.float32),
        "beta1": jnp.zeros((C,), jnp.float32),
        "gamma2": jnp.ones((C,), jnp.float32),
        "beta2": jnp.zeros((C,), jnp.float32),
        "w1": jax.random.uniform(kw1, (C, C, 3, 3), jnp.float32, -bound, bound),
        "b1": jax.random.uniform(kb1, (C,), jnp.float32, -bound, bound),
        "w2": jax.random.uniform(kw2, (C, C, 3, 3), jnp.float32, -bound, bound),
        "b2": jax.random.uniform(kb2, (C,), jnp.float32, -bound, bound),
    }

    forward = make_resblock(C, num_groups, H, W)
    out = jax.block_until_ready(forward(x, emb, params))

    ref = jax.block_until_ready(ref_forward(x, emb, params, num_groups))
    assert out.shape == (N, C, H, W)
    # bf16 MXU inputs (f32 accumulation) -> bf16-level tolerance vs f32 reference
    np.testing.assert_allclose(np.asarray(out), np.asarray(ref), atol=3e-2, rtol=3e-2)
    print("KERNEL_OK")
</pallas_src>

<mosaic_0001>
module attributes {stable_mosaic.version = 11 : i64} {
  func.func @kernel(%arg0: i32, %arg1: memref<1x16x16x128xf32, #tpu.memory_space<vmem>>, %arg2: memref<1x16x16x128xf32, #tpu.memory_space<vmem>>, %arg3: memref<128x2xf32, #tpu.memory_space<vmem>>, %arg4: memref<2x128xf32, #tpu.memory_space<vmem>>, %arg5: memref<1x128xf32, #tpu.memory_space<vmem>>, %arg6: memref<1x128xf32, #tpu.memory_space<vmem>>, %arg7: memref<1152x128xbf16, #tpu.memory_space<vmem>>, %arg8: memref<1x128xf32, #tpu.memory_space<vmem>>, %arg9: memref<1x128xf32, #tpu.memory_space<vmem>>, %arg10: memref<1x128xf32, #tpu.memory_space<vmem>>, %arg11: memref<1152x128xbf16, #tpu.memory_space<vmem>>, %arg12: memref<1x128xf32, #tpu.memory_space<vmem>>, %arg13: memref<1x16x16x128xf32, #tpu.memory_space<vmem>>, %arg14: memref<18x18x128xbf16, #tpu.memory_space<vmem>>) attributes {dimension_semantics = [#tpu.dimension_semantics<parallel>], iteration_bounds = array<i64: 2>, scalar_prefetch = 0 : i64, scratch_operands = 1 : i64, tpu.core_type = #tpu.core_type<tc>, window_params = [{transform_indices = @transform_0, window_bounds = array<i64: 1, 16, 16, 128>}, {transform_indices = @transform_1, window_bounds = array<i64: 1, 16, 16, 128>}, {pipeline_mode = #tpu.pipeline_mode<synchronous>, transform_indices = @transform_2, window_bounds = array<i64: 128, 2>}, {pipeline_mode = #tpu.pipeline_mode<synchronous>, transform_indices = @transform_3, window_bounds = array<i64: 2, 128>}, {pipeline_mode = #tpu.pipeline_mode<synchronous>, transform_indices = @transform_4, window_bounds = array<i64: 1, 128>}, {pipeline_mode = #tpu.pipeline_mode<synchronous>, transform_indices = @transform_5, window_bounds = array<i64: 1, 128>}, {pipeline_mode = #tpu.pipeline_mode<synchronous>, transform_indices = @transform_6, window_bounds = array<i64: 1152, 128>}, {pipeline_mode = #tpu.pipeline_mode<synchronous>, transform_indices = @transform_7, window_bounds = array<i64: 1, 128>}, {pipeline_mode = #tpu.pipeline_mode<synchronous>, transform_indices = @transform_8, window_bounds = array<i64: 1, 128>}, {pipeline_mode = #tpu.pipeline_mode<synchronous>, transform_indices = @transform_9, window_bounds = array<i64: 1, 128>}, {pipeline_mode = #tpu.pipeline_mode<synchronous>, transform_indices = @transform_10, window_bounds = array<i64: 1152, 128>}, {pipeline_mode = #tpu.pipeline_mode<synchronous>, transform_indices = @transform_11, window_bounds = array<i64: 1, 128>}, {transform_indices = @transform_12, window_bounds = array<i64: 1, 16, 16, 128>}]} {
    %c0 = arith.constant 0 : index
    %c0_0 = arith.constant 0 : index
    %0 = vector.load %arg3[%c0, %c0_0] : memref<128x2xf32, #tpu.memory_space<vmem>>, vector<128x2xf32>
    %c0_1 = arith.constant 0 : index
    %c0_2 = arith.constant 0 : index
    %1 = vector.load %arg4[%c0_1, %c0_2] : memref<2x128xf32, #tpu.memory_space<vmem>>, vector<2x128xf32>
    %cst = arith.constant 0.000000e+00 : bf16
    %2 = vector.broadcast %cst : bf16 to vector<1x18x128xbf16>
    %c0_3 = arith.constant 0 : index
    %c0_4 = arith.constant 0 : index
    %c0_5 = arith.constant 0 : index
    %3 = vector.load %arg14[%c0_3, %c0_4, %c0_5] : memref<18x18x128xbf16, #tpu.memory_space<vmem>>, vector<1x18x128xbf16>
    tpu.vector_store %arg14[%c0_3, %c0_4, %c0_5], %2 {strides = array<i32>} : memref<18x18x128xbf16, #tpu.memory_space<vmem>>, vector<1x18x128xbf16>,
    %c17 = arith.constant 17 : index
    %c0_6 = arith.constant 0 : index
    %c0_7 = arith.constant 0 : index
    %4 = vector.load %arg14[%c17, %c0_6, %c0_7] : memref<18x18x128xbf16, #tpu.memory_space<vmem>>, vector<1x18x128xbf16>
    tpu.vector_store %arg14[%c17, %c0_6, %c0_7], %2 {strides = array<i32>} : memref<18x18x128xbf16, #tpu.memory_space<vmem>>, vector<1x18x128xbf16>,
    %cst_8 = arith.constant 0.000000e+00 : bf16
    %5 = vector.broadcast %cst_8 : bf16 to vector<16x1x128xbf16>
    %c1 = arith.constant 1 : index
    %c0_9 = arith.constant 0 : index
    %c0_10 = arith.constant 0 : index
    %6 = vector.load %arg14[%c1, %c0_9, %c0_10] : memref<18x18x128xbf16, #tpu.memory_space<vmem>>, vector<16x1x128xbf16>
    tpu.vector_store %arg14[%c1, %c0_9, %c0_10], %5 {strides = array<i32>} : memref<18x18x128xbf16, #tpu.memory_space<vmem>>, vector<16x1x128xbf16>,
    %c1_11 = arith.constant 1 : index
    %c17_12 = arith.constant 17 : index
    %c0_13 = arith.constant 0 : index
    %7 = vector.load %arg14[%c1_11, %c17_12, %c0_13] : memref<18x18x128xbf16, #tpu.memory_space<vmem>>, vector<16x1x128xbf16>
    tpu.vector_store %arg14[%c1_11, %c17_12, %c0_13], %5 {strides = array<i32>} : memref<18x18x128xbf16, #tpu.memory_space<vmem>>, vector<16x1x128xbf16>,
    %c0_14 = arith.constant 0 : index
    %c0_15 = arith.constant 0 : index
    %c0_16 = arith.constant 0 : index
    %c0_17 = arith.constant 0 : index
    %8 = vector.load %arg1[%c0_14, %c0_15, %c0_16, %c0_17] : memref<1x16x16x128xf32, #tpu.memory_space<vmem>>, vector<1x16x16x128xf32>
    %9 = vector.shape_cast %8 : vector<1x16x16x128xf32> to vector<16x16x128xf32>
    %c0_18 = arith.constant 0 : index
    %c0_19 = arith.constant 0 : index
    %c0_20 = arith.constant 0 : index
    %c0_21 = arith.constant 0 : index
    %10 = vector.load %arg2[%c0_18, %c0_19, %c0_20, %c0_21] : memref<1x16x16x128xf32, #tpu.memory_space<vmem>>, vector<1x16x16x128xf32>
    %11 = vector.shape_cast %10 : vector<1x16x16x128xf32> to vector<16x16x128xf32>
    %12 = arith.addf %9, %11 : vector<16x16x128xf32>
    %13 = vector.shape_cast %12 : vector<16x16x128xf32> to vector<256x128xf32>
    %c0_22 = arith.constant 0 : index
    %c0_23 = arith.constant 0 : index
    %14 = vector.load %arg5[%c0_22, %c0_23] : memref<1x128xf32, #tpu.memory_space<vmem>>, vector<1x128xf32>
    %c0_24 = arith.constant 0 : index
    %c0_25 = arith.constant 0 : index
    %15 = vector.load %arg6[%c0_24, %c0_25] : memref<1x128xf32, #tpu.memory_space<vmem>>, vector<1x128xf32>
    %cst_26 = arith.constant dense<0.000000e+00> : vector<128xf32>
    %16 = vector.multi_reduction <add>, %13, %cst_26 [0] : vector<256x128xf32> to vector<128xf32>
    %17 = vector.shape_cast %16 : vector<128xf32> to vector<1x128xf32>
    %cst_27 = arith.constant dense<0.000000e+00> : vector<1x2xf32>
    %18 = tpu.matmul %17, %0, %cst_27 {dimension_numbers = #tpu.dot_dimension_numbers<[1], [0], [0], [1], [0, 0, 1, 1], [], []>} : vector<1x128xf32>, vector<128x2xf32>, vector<1x2xf32> -> vector<1x2xf32>
    %cst_28 = arith.constant 5.120000e+02 : f32
    %19 = vector.broadcast %cst_28 : f32 to vector<1x2xf32>
    %20 = arith.divf %18, %19 : vector<1x2xf32>
    %cst_29 = arith.constant dense<0.000000e+00> : vector<1x128xf32>
    %21 = tpu.matmul %20, %1, %cst_29 {dimension_numbers = #tpu.dot_dimension_numbers<[1], [0], [0], [1], [0, 0, 1, 1], [], []>} : vector<1x2xf32>, vector<2x128xf32>, vector<1x128xf32> -> vector<1x128xf32>
    %22 = vector.broadcast %21 : vector<1x128xf32> to vector<256x128xf32>
    %23 = arith.subf %13, %22 : vector<256x128xf32>
    %24 = arith.mulf %23, %23 : vector<256x128xf32>
    %cst_30 = arith.constant dense<0.000000e+00> : vector<128xf32>
    %25 = vector.multi_reduction <add>, %24, %cst_30 [0] : vector<256x128xf32> to vector<128xf32>
    %26 = vector.shape_cast %25 : vector<128xf32> to vector<1x128xf32>
    %cst_31 = arith.constant dense<0.000000e+00> : vector<1x2xf32>
    %27 = tpu.matmul %26, %0, %cst_31 {dimension_numbers = #tpu.dot_dimension_numbers<[1], [0], [0], [1], [0, 0, 1, 1], [], []>} : vector<1x128xf32>, vector<128x2xf32>, vector<1x2xf32> -> vector<1x2xf32>
    %cst_32 = arith.constant 5.120000e+02 : f32
    %28 = vector.broadcast %cst_32 : f32 to vector<1x2xf32>
    %29 = arith.divf %27, %28 : vector<1x2xf32>
    %cst_33 = arith.constant dense<0.000000e+00> : vector<1x128xf32>
    %30 = tpu.matmul %29, %1, %cst_33 {dimension_numbers = #tpu.dot_dimension_numbers<[1], [0], [0], [1], [0, 0, 1, 1], [], []>} : vector<1x2xf32>, vector<2x128xf32>, vector<1x128xf32> -> vector<1x128xf32>
    %cst_34 = arith.constant 9.99999974E-6 : f32
    %31 = vector.broadcast %cst_34 : f32 to vector<1x128xf32>
    %32 = arith.addf %30, %31 : vector<1x128xf32>
    %33 = math.rsqrt %32 : vector<1x128xf32>
    %34 = vector.broadcast %33 : vector<1x128xf32> to vector<256x128xf32>
    %35 = arith.mulf %23, %34 : vector<256x128xf32>
    %36 = vector.broadcast %14 : vector<1x128xf32> to vector<256x128xf32>
    %37 = arith.mulf %35, %36 : vector<256x128xf32>
    %38 = vector.broadcast %15 : vector<1x128xf32> to vector<256x128xf32>
    %39 = arith.addf %37, %38 : vector<256x128xf32>
    %cst_35 = arith.constant 0.000000e+00 : f32
    %40 = vector.broadcast %cst_35 : f32 to vector<256x128xf32>
    %41 = arith.maximumf %39, %40 : vector<256x128xf32>
    %42 = arith.truncf %41 : vector<256x128xf32> to vector<256x128xbf16>
    %43 = vector.shape_cast %42 : vector<256x128xbf16> to vector<16x16x128xbf16>
    %c1_36 = arith.constant 1 : index
    %c1_37 = arith.constant 1 : index
    %c0_38 = arith.constant 0 : index
    %44 = vector.load %arg14[%c1_36, %c1_37, %c0_38] : memref<18x18x128xbf16, #tpu.memory_space<vmem>>, vector<16x16x128xbf16>
    tpu.vector_store %arg14[%c1_36, %c1_37, %c0_38], %43 {strides = array<i32>} : memref<18x18x128xbf16, #tpu.memory_space<vmem>>, vector<16x16x128xbf16>,
    %c0_39 = arith.constant 0 : index
    %c0_40 = arith.constant 0 : index
    %45 = vector.load %arg7[%c0_39, %c0_40] : memref<1152x128xbf16, #tpu.memory_space<vmem>>, vector<1152x128xbf16>
    %c0_41 = arith.constant 0 : index
    %c0_42 = arith.constant 0 : index
    %46 = vector.load %arg8[%c0_41, %c0_42] : memref<1x128xf32, #tpu.memory_space<vmem>>, vector<1x128xf32>
    %c0_43 = arith.constant 0 : index
    %c0_44 = arith.constant 0 : index
    %c0_45 = arith.constant 0 : index
    %47 = vector.load %arg14[%c0_43, %c0_44, %c0_45] : memref<18x18x128xbf16, #tpu.memory_space<vmem>>, vector<16x16x128xbf16>
    %48 = vector.shape_cast %47 : vector<16x16x128xbf16> to vector<256x128xbf16>
    %c0_46 = arith.constant 0 : index
    %c1_47 = arith.constant 1 : index
    %c0_48 = arith.constant 0 : index
    %49 = vector.load %arg14[%c0_46, %c1_47, %c0_48] : memref<18x18x128xbf16, #tpu.memory_space<vmem>>, vector<16x16x128xbf16>
    %50 = vector.shape_cast %49 : vector<16x16x128xbf16> to vector<256x128xbf16>
    %c0_49 = arith.constant 0 : index
    %c2 = arith.constant 2 : index
    %c0_50 = arith.constant 0 : index
    %51 = vector.load %arg14[%c0_49, %c2, %c0_50] : memref<18x18x128xbf16, #tpu.memory_space<vmem>>, vector<16x16x128xbf16>
    %52 = vector.shape_cast %51 : vector<16x16x128xbf16> to vector<256x128xbf16>
    %c1_51 = arith.constant 1 : index
    %c0_52 = arith.constant 0 : index
    %c0_53 = arith.constant 0 : index
    %53 = vector.load %arg14[%c1_51, %c0_52, %c0_53] : memref<18x18x128xbf16, #tpu.memory_space<vmem>>, vector<16x16x128xbf16>
    %54 = vector.shape_cast %53 : vector<16x16x128xbf16> to vector<256x128xbf16>
    %c1_54 = arith.constant 1 : index
    %c1_55 = arith.constant 1 : index
    %c0_56 = arith.constant 0 : index
    %55 = vector.load %arg14[%c1_54, %c1_55, %c0_56] : memref<18x18x128xbf16, #tpu.memory_space<vmem>>, vector<16x16x128xbf16>
    %56 = vector.shape_cast %55 : vector<16x16x128xbf16> to vector<256x128xbf16>
    %c1_57 = arith.constant 1 : index
    %c2_58 = arith.constant 2 : index
    %c0_59 = arith.constant 0 : index
    %57 = vector.load %arg14[%c1_57, %c2_58, %c0_59] : memref<18x18x128xbf16, #tpu.memory_space<vmem>>, vector<16x16x128xbf16>
    %58 = vector.shape_cast %57 : vector<16x16x128xbf16> to vector<256x128xbf16>
    %c2_60 = arith.constant 2 : index
    %c0_61 = arith.constant 0 : index
    %c0_62 = arith.constant 0 : index
    %59 = vector.load %arg14[%c2_60, %c0_61, %c0_62] : memref<18x18x128xbf16, #tpu.memory_space<vmem>>, vector<16x16x128xbf16>
    %60 = vector.shape_cast %59 : vector<16x16x128xbf16> to vector<256x128xbf16>
    %c2_63 = arith.constant 2 : index
    %c1_64 = arith.constant 1 : index
    %c0_65 = arith.constant 0 : index
    %61 = vector.load %arg14[%c2_63, %c1_64, %c0_65] : memref<18x18x128xbf16, #tpu.memory_space<vmem>>, vector<16x16x128xbf16>
    %62 = vector.shape_cast %61 : vector<16x16x128xbf16> to vector<256x128xbf16>
    %c2_66 = arith.constant 2 : index
    %c2_67 = arith.constant 2 : index
    %c0_68 = arith.constant 0 : index
    %63 = vector.load %arg14[%c2_66, %c2_67, %c0_68] : memref<18x18x128xbf16, #tpu.memory_space<vmem>>, vector<16x16x128xbf16>
    %64 = vector.shape_cast %63 : vector<16x16x128xbf16> to vector<256x128xbf16>
    %65 = tpu.concatenate %48, %50, %52, %54, %56, %58, %60, %62, %64 in 1 : vector<256x128xbf16>, vector<256x128xbf16>, vector<256x128xbf16>, vector<256x128xbf16>, vector<256x128xbf16>, vector<256x128xbf16>, vector<256x128xbf16>, vector<256x128xbf16>, vector<256x128xbf16> -> vector<256x1152xbf16>
    %cst_69 = arith.constant dense<0.000000e+00> : vector<256x128xf32>
    %66 = tpu.matmul %65, %45, %cst_69 {dimension_numbers = #tpu.dot_dimension_numbers<[1], [0], [0], [1], [0, 0, 1, 1], [], []>} : vector<256x1152xbf16>, vector<1152x128xbf16>, vector<256x128xf32> -> vector<256x128xf32>
    %67 = vector.broadcast %46 : vector<1x128xf32> to vector<256x128xf32>
    %68 = arith.addf %66, %67 : vector<256x128xf32>
    %c0_70 = arith.constant 0 : index
    %c0_71 = arith.constant 0 : index
    %69 = vector.load %arg9[%c0_70, %c0_71] : memref<1x128xf32, #tpu.memory_space<vmem>>, vector<1x128xf32>
    %c0_72 = arith.constant 0 : index
    %c0_73 = arith.constant 0 : index
    %70 = vector.load %arg10[%c0_72, %c0_73] : memref<1x128xf32, #tpu.memory_space<vmem>>, vector<1x128xf32>
    %cst_74 = arith.constant dense<0.000000e+00> : vector<128xf32>
    %71 = vector.multi_reduction <add>, %68, %cst_74 [0] : vector<256x128xf32> to vector<128xf32>
    %72 = vector.shape_cast %71 : vector<128xf32> to vector<1x128xf32>
    %cst_75 = arith.constant dense<0.000000e+00> : vector<1x2xf32>
    %73 = tpu.matmul %72, %0, %cst_75 {dimension_numbers = #tpu.dot_dimension_numbers<[1], [0], [0], [1], [0, 0, 1, 1], [], []>} : vector<1x128xf32>, vector<128x2xf32>, vector<1x2xf32> -> vector<1x2xf32>
    %cst_76 = arith.constant 5.120000e+02 : f32
    %74 = vector.broadcast %cst_76 : f32 to vector<1x2xf32>
    %75 = arith.divf %73, %74 : vector<1x2xf32>
    %cst_77 = arith.constant dense<0.000000e+00> : vector<1x128xf32>
    %76 = tpu.matmul %75, %1, %cst_77 {dimension_numbers = #tpu.dot_dimension_numbers<[1], [0], [0], [1], [0, 0, 1, 1], [], []>} : vector<1x2xf32>, vector<2x128xf32>, vector<1x128xf32> -> vector<1x128xf32>
    %77 = vector.broadcast %76 : vector<1x128xf32> to vector<256x128xf32>
    %78 = arith.subf %68, %77 : vector<256x128xf32>
    %79 = arith.mulf %78, %78 : vector<256x128xf32>
    %cst_78 = arith.constant dense<0.000000e+00> : vector<128xf32>
    %80 = vector.multi_reduction <add>, %79, %cst_78 [0] : vector<256x128xf32> to vector<128xf32>
    %81 = vector.shape_cast %80 : vector<128xf32> to vector<1x128xf32>
    %cst_79 = arith.constant dense<0.000000e+00> : vector<1x2xf32>
    %82 = tpu.matmul %81, %0, %cst_79 {dimension_numbers = #tpu.dot_dimension_numbers<[1], [0], [0], [1], [0, 0, 1, 1], [], []>} : vector<1x128xf32>, vector<128x2xf32>, vector<1x2xf32> -> vector<1x2xf32>
    %cst_80 = arith.constant 5.120000e+02 : f32
    %83 = vector.broadcast %cst_80 : f32 to vector<1x2xf32>
    %84 = arith.divf %82, %83 : vector<1x2xf32>
    %cst_81 = arith.constant dense<0.000000e+00> : vector<1x128xf32>
    %85 = tpu.matmul %84, %1, %cst_81 {dimension_numbers = #tpu.dot_dimension_numbers<[1], [0], [0], [1], [0, 0, 1, 1], [], []>} : vector<1x2xf32>, vector<2x128xf32>, vector<1x128xf32> -> vector<1x128xf32>
    %cst_82 = arith.constant 9.99999974E-6 : f32
    %86 = vector.broadcast %cst_82 : f32 to vector<1x128xf32>
    %87 = arith.addf %85, %86 : vector<1x128xf32>
    %88 = math.rsqrt %87 : vector<1x128xf32>
    %89 = vector.broadcast %88 : vector<1x128xf32> to vector<256x128xf32>
    %90 = arith.mulf %78, %89 : vector<256x128xf32>
    %91 = vector.broadcast %69 : vector<1x128xf32> to vector<256x128xf32>
    %92 = arith.mulf %90, %91 : vector<256x128xf32>
    %93 = vector.broadcast %70 : vector<1x128xf32> to vector<256x128xf32>
    %94 = arith.addf %92, %93 : vector<256x128xf32>
    %cst_83 = arith.constant 0.000000e+00 : f32
    %95 = vector.broadcast %cst_83 : f32 to vector<256x128xf32>
    %96 = arith.maximumf %94, %95 : vector<256x128xf32>
    %97 = arith.truncf %96 : vector<256x128xf32> to vector<256x128xbf16>
    %98 = vector.shape_cast %97 : vector<256x128xbf16> to vector<16x16x128xbf16>
    %c1_84 = arith.constant 1 : index
    %c1_85 = arith.constant 1 : index
    %c0_86 = arith.constant 0 : index
    %99 = vector.load %arg14[%c1_84, %c1_85, %c0_86] : memref<18x18x128xbf16, #tpu.memory_space<vmem>>, vector<16x16x128xbf16>
    tpu.vector_store %arg14[%c1_84, %c1_85, %c0_86], %98 {strides = array<i32>} : memref<18x18x128xbf16, #tpu.memory_space<vmem>>, vector<16x16x128xbf16>,
    %c0_87 = arith.constant 0 : index
    %c0_88 = arith.constant 0 : index
    %100 = vector.load %arg11[%c0_87, %c0_88] : memref<1152x128xbf16, #tpu.memory_space<vmem>>, vector<1152x128xbf16>
    %c0_89 = arith.constant 0 : index
    %c0_90 = arith.constant 0 : index
    %101 = vector.load %arg12[%c0_89, %c0_90] : memref<1x128xf32, #tpu.memory_space<vmem>>, vector<1x128xf32>
    %c0_91 = arith.constant 0 : index
    %c0_92 = arith.constant 0 : index
    %c0_93 = arith.constant 0 : index
    %102 = vector.load %arg14[%c0_91, %c0_92, %c0_93] : memref<18x18x128xbf16, #tpu.memory_space<vmem>>, vector<16x16x128xbf16>
    %103 = vector.shape_cast %102 : vector<16x16x128xbf16> to vector<256x128xbf16>
    %c0_94 = arith.constant 0 : index
    %c1_95 = arith.constant 1 : index
    %c0_96 = arith.constant 0 : index
    %104 = vector.load %arg14[%c0_94, %c1_95, %c0_96] : memref<18x18x128xbf16, #tpu.memory_space<vmem>>, vector<16x16x128xbf16>
    %105 = vector.shape_cast %104 : vector<16x16x128xbf16> to vector<256x128xbf16>
    %c0_97 = arith.constant 0 : index
    %c2_98 = arith.constant 2 : index
    %c0_99 = arith.constant 0 : index
    %106 = vector.load %arg14[%c0_97, %c2_98, %c0_99] : memref<18x18x128xbf16, #tpu.memory_space<vmem>>, vector<16x16x128xbf16>
    %107 = vector.shape_cast %106 : vector<16x16x128xbf16> to vector<256x128xbf16>
    %c1_100 = arith.constant 1 : index
    %c0_101 = arith.constant 0 : index
    %c0_102 = arith.constant 0 : index
    %108 = vector.load %arg14[%c1_100, %c0_101, %c0_102] : memref<18x18x128xbf16, #tpu.memory_space<vmem>>, vector<16x16x128xbf16>
    %109 = vector.shape_cast %108 : vector<16x16x128xbf16> to vector<256x128xbf16>
    %c1_103 = arith.constant 1 : index
    %c1_104 = arith.constant 1 : index
    %c0_105 = arith.constant 0 : index
    %110 = vector.load %arg14[%c1_103, %c1_104, %c0_105] : memref<18x18x128xbf16, #tpu.memory_space<vmem>>, vector<16x16x128xbf16>
    %111 = vector.shape_cast %110 : vector<16x16x128xbf16> to vector<256x128xbf16>
    %c1_106 = arith.constant 1 : index
    %c2_107 = arith.constant 2 : index
    %c0_108 = arith.constant 0 : index
    %112 = vector.load %arg14[%c1_106, %c2_107, %c0_108] : memref<18x18x128xbf16, #tpu.memory_space<vmem>>, vector<16x16x128xbf16>
    %113 = vector.shape_cast %112 : vector<16x16x128xbf16> to vector<256x128xbf16>
    %c2_109 = arith.constant 2 : index
    %c0_110 = arith.constant 0 : index
    %c0_111 = arith.constant 0 : index
    %114 = vector.load %arg14[%c2_109, %c0_110, %c0_111] : memref<18x18x128xbf16, #tpu.memory_space<vmem>>, vector<16x16x128xbf16>
    %115 = vector.shape_cast %114 : vector<16x16x128xbf16> to vector<256x128xbf16>
    %c2_112 = arith.constant 2 : index
    %c1_113 = arith.constant 1 : index
    %c0_114 = arith.constant 0 : index
    %116 = vector.load %arg14[%c2_112, %c1_113, %c0_114] : memref<18x18x128xbf16, #tpu.memory_space<vmem>>, vector<16x16x128xbf16>
    %117 = vector.shape_cast %116 : vector<16x16x128xbf16> to vector<256x128xbf16>
    %c2_115 = arith.constant 2 : index
    %c2_116 = arith.constant 2 : index
    %c0_117 = arith.constant 0 : index
    %118 = vector.load %arg14[%c2_115, %c2_116, %c0_117] : memref<18x18x128xbf16, #tpu.memory_space<vmem>>, vector<16x16x128xbf16>
    %119 = vector.shape_cast %118 : vector<16x16x128xbf16> to vector<256x128xbf16>
    %120 = tpu.concatenate %103, %105, %107, %109, %111, %113, %115, %117, %119 in 1 : vector<256x128xbf16>, vector<256x128xbf16>, vector<256x128xbf16>, vector<256x128xbf16>, vector<256x128xbf16>, vector<256x128xbf16>, vector<256x128xbf16>, vector<256x128xbf16>, vector<256x128xbf16> -> vector<256x1152xbf16>
    %cst_118 = arith.constant dense<0.000000e+00> : vector<256x128xf32>
    %121 = tpu.matmul %120, %100, %cst_118 {dimension_numbers = #tpu.dot_dimension_numbers<[1], [0], [0], [1], [0, 0, 1, 1], [], []>} : vector<256x1152xbf16>, vector<1152x128xbf16>, vector<256x128xf32> -> vector<256x128xf32>
    %122 = vector.broadcast %101 : vector<1x128xf32> to vector<256x128xf32>
    %123 = arith.addf %121, %122 : vector<256x128xf32>
    %124 = vector.shape_cast %123 : vector<256x128xf32> to vector<16x16x128xf32>
    %c0_119 = arith.constant 0 : index
    %c0_120 = arith.constant 0 : index
    %c0_121 = arith.constant 0 : index
    %c0_122 = arith.constant 0 : index
    %125 = vector.load %arg1[%c0_119, %c0_120, %c0_121, %c0_122] : memref<1x16x16x128xf32, #tpu.memory_space<vmem>>, vector<1x16x16x128xf32>
    %126 = vector.shape_cast %125 : vector<1x16x16x128xf32> to vector<16x16x128xf32>
    %127 = arith.addf %124, %126 : vector<16x16x128xf32>
    %c0_123 = arith.constant 0 : index
    %c0_124 = arith.constant 0 : index
    %c0_125 = arith.constant 0 : index
    %c0_126 = arith.constant 0 : index
    %128 = vector.load %arg2[%c0_123, %c0_124, %c0_125, %c0_126] : memref<1x16x16x128xf32, #tpu.memory_space<vmem>>, vector<1x16x16x128xf32>
    %129 = vector.shape_cast %128 : vector<1x16x16x128xf32> to vector<16x16x128xf32>
    %130 = arith.addf %127, %129 : vector<16x16x128xf32>
    %c0_127 = arith.constant 0 : index
    %c0_128 = arith.constant 0 : index
    %c0_129 = arith.constant 0 : index
    %c0_130 = arith.constant 0 : index
    %131 = vector.load %arg13[%c0_127, %c0_128, %c0_129, %c0_130] : memref<1x16x16x128xf32, #tpu.memory_space<vmem>>, vector<1x16x16x128xf32>
    %132 = vector.shape_cast %131 : vector<1x16x16x128xf32> to vector<16x16x128xf32>
    %133 = vector.shape_cast %130 : vector<16x16x128xf32> to vector<1x16x16x128xf32>
    tpu.vector_store %arg13[%c0_127, %c0_128, %c0_129, %c0_130], %133 {strides = array<i32>} : memref<1x16x16x128xf32, #tpu.memory_space<vmem>>, vector<1x16x16x128xf32>,
    return
  }
  func.func @transform_0(%arg0: i32) -> (i32, i32, i32, i32) {
    %c0_i32 = arith.constant 0 : i32
    %c0_i32_0 = arith.constant 0 : i32
    %c0_i32_1 = arith.constant 0 : i32
    %c0_i32_2 = arith.constant 0 : i32
    return %arg0, %c0_i32, %c0_i32_0, %c0_i32_1 : i32, i32, i32, i32
  }
  func.func @transform_1(%arg0: i32) -> (i32, i32, i32, i32) {
    %c0_i32 = arith.constant 0 : i32
    %c0_i32_0 = arith.constant 0 : i32
    %c0_i32_1 = arith.constant 0 : i32
    %c0_i32_2 = arith.constant 0 : i32
    return %arg0, %c0_i32, %c0_i32_0, %c0_i32_1 : i32, i32, i32, i32
  }
  func.func @transform_2(%arg0: i32) -> (i32, i32) {
    %c0_i32 = arith.constant 0 : i32
    %c0_i32_0 = arith.constant 0 : i32
    %c0_i32_1 = arith.constant 0 : i32
    return %c0_i32, %c0_i32_0 : i32, i32
  }
  func.func @transform_3(%arg0: i32) -> (i32, i32) {
    %c0_i32 = arith.constant 0 : i32
    %c0_i32_0 = arith.constant 0 : i32
    %c0_i32_1 = arith.constant 0 : i32
    return %c0_i32, %c0_i32_0 : i32, i32
  }
  func.func @transform_4(%arg0: i32) -> (i32, i32) {
    %c0_i32 = arith.constant 0 : i32
    %c0_i32_0 = arith.constant 0 : i32
    %c0_i32_1 = arith.constant 0 : i32
    return %c0_i32, %c0_i32_0 : i32, i32
  }
  func.func @transform_5(%arg0: i32) -> (i32, i32) {
    %c0_i32 = arith.constant 0 : i32
    %c0_i32_0 = arith.constant 0 : i32
    %c0_i32_1 = arith.constant 0 : i32
    return %c0_i32, %c0_i32_0 : i32, i32
  }
  func.func @transform_6(%arg0: i32) -> (i32, i32) {
    %c0_i32 = arith.constant 0 : i32
    %c0_i32_0 = arith.constant 0 : i32
    %c0_i32_1 = arith.constant 0 : i32
    return %c0_i32, %c0_i32_0 : i32, i32
  }
  func.func @transform_7(%arg0: i32) -> (i32, i32) {
    %c0_i32 = arith.constant 0 : i32
    %c0_i32_0 = arith.constant 0 : i32
    %c0_i32_1 = arith.constant 0 : i32
    return %c0_i32, %c0_i32_0 : i32, i32
  }
  func.func @transform_8(%arg0: i32) -> (i32, i32) {
    %c0_i32 = arith.constant 0 : i32
    %c0_i32_0 = arith.constant 0 : i32
    %c0_i32_1 = arith.constant 0 : i32
    return %c0_i32, %c0_i32_0 : i32, i32
  }
  func.func @transform_9(%arg0: i32) -> (i32, i32) {
    %c0_i32 = arith.constant 0 : i32
    %c0_i32_0 = arith.constant 0 : i32
    %c0_i32_1 = arith.constant 0 : i32
    return %c0_i32, %c0_i32_0 : i32, i32
  }
  func.func @transform_10(%arg0: i32) -> (i32, i32) {
    %c0_i32 = arith.constant 0 : i32
    %c0_i32_0 = arith.constant 0 : i32
    %c0_i32_1 = arith.constant 0 : i32
    return %c0_i32, %c0_i32_0 : i32, i32
  }
  func.func @transform_11(%arg0: i32) -> (i32, i32) {
    %c0_i32 = arith.constant 0 : i32
    %c0_i32_0 = arith.constant 0 : i32
    %c0_i32_1 = arith.constant 0 : i32
    return %c0_i32, %c0_i32_0 : i32, i32
  }
  func.func @transform_12(%arg0: i32) -> (i32, i32, i32, i32) {
    %c0_i32 = arith.constant 0 : i32
    %c0_i32_0 = arith.constant 0 : i32
    %c0_i32_1 = arith.constant 0 : i32
    %c0_i32_2 = arith.constant 0 : i32
    return %arg0, %c0_i32, %c0_i32_0, %c0_i32_1 : i32, i32, i32, i32
  }
}

</mosaic_0001>

<llo_original>
// kernel: tpu_custom_call.1
$region0: #{tpu_custom_call.1}
  #allocation0 [shape = 'u32[]', space=smem, size = 0x4, offset = 0x4, fixed_abs, tag = 'smem constant byte address 0x4 - core index']
  #allocation1 [shape = 'u32[144,128]{1,0:T(1,128)}', space=vmem, size = 0x12000, scoped, tag = 'internal scratch']
  #allocation2 [shape = 'bf16[18,18,128]{2,1,0:T(8,128)(2,1)}', space=vmem, size = 0x1b000, scoped, tag = 'scratch operand']
  %s0 = inlined_call_operand.hbm [shape: f32[2,16,16,128], index: 0, kind: input, shape index: {}]
  %s1 = inlined_call_operand.hbm [shape: f32[2,16,16,128], index: 1, kind: input, shape index: {}]
  %s2 = inlined_call_operand.hbm [shape: f32[128,2], index: 2, kind: input, shape index: {}]
  %s3 = inlined_call_operand.hbm [shape: f32[2,128], index: 3, kind: input, shape index: {}]
  %s4 = inlined_call_operand.hbm [shape: f32[1,128], index: 4, kind: input, shape index: {}]
  %s5 = inlined_call_operand.hbm [shape: f32[1,128], index: 5, kind: input, shape index: {}]
  %s6 = inlined_call_operand.hbm [shape: bf16[1152,128], index: 6, kind: input, shape index: {}]
  %s7 = inlined_call_operand.hbm [shape: f32[1,128], index: 7, kind: input, shape index: {}]
  %s8 = inlined_call_operand.hbm [shape: f32[1,128], index: 8, kind: input, shape index: {}]
  %s9 = inlined_call_operand.hbm [shape: f32[1,128], index: 9, kind: input, shape index: {}]
  %s10 = inlined_call_operand.hbm [shape: bf16[1152,128], index: 10, kind: input, shape index: {}]
  %s11 = inlined_call_operand.hbm [shape: f32[1,128], index: 11, kind: input, shape index: {}]
  %s12 = inlined_call_operand.hbm [shape: f32[2,16,16,128], index: 12, kind: output, shape index: {}]
  %s13 = sld [smem:[#allocation0]]
  $region129: #{tpu_custom_call.1} parent=0
    _
  %s15 = ssub.s32 1, %s13
  %s16 = scalar_select 0, %s15, %s13
  $region1: #{tpu_custom_call.1} parent=0
    #allocation3 [shape = 'u8[262144]{0}', space=vmem, size = 0x40000, scoped, tag = 'input window, operand 0']
    #allocation4 [shape = 's32[2]{0}', space=sflag, size = 0x8, scoped, tag = 'scoped memory for tpu_custom_call.1']
    #allocation5 [shape = 's32[2]{0}', space=sflag, size = 0x8, scoped, tag = 'scoped memory for tpu_custom_call.1']
    #allocation6 [shape = 'u8[262144]{0}', space=vmem, size = 0x40000, scoped, tag = 'input window, operand 1']
    #allocation7 [shape = 's32[2]{0}', space=sflag, size = 0x8, scoped, tag = 'scoped memory for tpu_custom_call.1']
    #allocation8 [shape = 'u8[65536]{0}', space=vmem, size = 0x10000, scoped, tag = 'input window, operand 2, single buffered']
    #allocation9 [shape = 'u8[1024]{0}', space=vmem, size = 0x400, scoped, tag = 'input window, operand 3, single buffered']
    #allocation10 [shape = 's32[1]{0}', space=sflag, size = 0x4, scoped, tag = 'scoped memory for tpu_custom_call.1']
    #allocation11 [shape = 'u8[512]{0}', space=vmem, size = 0x400, scoped, tag = 'input window, operand 4, single buffered']
    #allocation12 [shape = 'u8[512]{0}', space=vmem, size = 0x400, scoped, tag = 'input window, operand 5, single buffered']
    #allocation13 [shape = 's32[1]{0}', space=sflag, size = 0x4, scoped, tag = 'scoped memory for tpu_custom_call.1']
    #allocation14 [shape = 'u8[294912]{0}', space=vmem, size = 0x48000, scoped, tag = 'input window, operand 6, single buffered']
    #allocation15 [shape = 'u8[512]{0}', space=vmem, size = 0x400, scoped, tag = 'input window, operand 7, single buffered']
    #allocation16 [shape = 's32[1]{0}', space=sflag, size = 0x4, scoped, tag = 'scoped memory for tpu_custom_call.1']
    #allocation17 [shape = 'u8[512]{0}', space=vmem, size = 0x400, scoped, tag = 'input window, operand 8, single buffered']
    #allocation18 [shape = 'u8[512]{0}', space=vmem, size = 0x400, scoped, tag = 'input window, operand 9, single buffered']
    #allocation19 [shape = 's32[1]{0}', space=sflag, size = 0x4, scoped, tag = 'scoped memory for tpu_custom_call.1']
    #allocation20 [shape = 'u8[294912]{0}', space=vmem, size = 0x48000, scoped, tag = 'input window, operand 10, single buffered']
    #allocation21 [shape = 'u8[512]{0}', space=vmem, size = 0x400, scoped, tag = 'input window, operand 11, single buffered']
    #allocation22 [shape = 's32[1]{0}', space=sflag, size = 0x4, scoped, tag = 'scoped memory for tpu_custom_call.1']
    #allocation23 [shape = 'u8[262144]{0}', space=vmem, size = 0x40000, scoped, tag = 'output window, operand 0']
    %17 = vsyncpa [#allocation4], 0
    %s18 = scalar_lea.sflag [#allocation4], 1
    %19 = vsyncpa %s18, 0
    %20 = vsyncpa [#allocation7], 0
    %s21 = scalar_lea.sflag [#allocation7], 1
    %22 = vsyncpa %s21, 0
    %23 = vsyncpa [#allocation10], 0
    %24 = vsyncpa [#allocation13], 0
    %25 = vsyncpa [#allocation16], 0
    %26 = vsyncpa [#allocation19], 0
    %27 = vsyncpa [#allocation22], 0
    %28 = vsyncpa [#allocation5], 0
    %s29 = scalar_lea.sflag [#allocation5], 1
    %30 = vsyncpa %s29, 0
    loop: start=0, step=1, limit=4
    $region2: #{tpu_custom_call.1} parent=1 // loop_pre_header
      _
    $region3: #{tpu_custom_call.1} parent=1 // loop_header
      %s32 = sphi 0, %s36
      %p33 = scmp.ge.s32.totalorder %s32, 4
      %s42 = sphi 0, %s44
      %s45 = sphi 0, %s42
      %s46 = sphi 0, %s45
      %s62 = sphi 0, %s46
      %s68 = sphi 0, %s70
      %s71 = sphi 0, %s68
      %s72 = sphi 0, %s71
      %s88 = sphi 0, %s72
      %s92 = sphi 0, %s92
      %s94 = sphi 0, %s92
      %s95 = sphi 0, %s94
      %s109 = sphi 0, %s95
      %s113 = sphi 0, %s113
      %s115 = sphi 0, %s113
      %s116 = sphi 0, %s115
      %s130 = sphi 0, %s116
      %s134 = sphi 0, %s134
      %s136 = sphi 0, %s134
      %s137 = sphi 0, %s136
      %s151 = sphi 0, %s137
      %s155 = sphi 0, %s155
      %s157 = sphi 0, %s155
      %s158 = sphi 0, %s157
      %s172 = sphi 0, %s158
      %s176 = sphi 0, %s176
      %s178 = sphi 0, %s176
      %s179 = sphi 0, %s178
      %s193 = sphi 0, %s179
      %s197 = sphi 0, %s197
      %s199 = sphi 0, %s197
      %s200 = sphi 0, %s199
      %s214 = sphi 0, %s200
      %s218 = sphi 0, %s218
      %s220 = sphi 0, %s218
      %s221 = sphi 0, %s220
      %s235 = sphi 0, %s221
      %s239 = sphi 0, %s239
      %s241 = sphi 0, %s239
      %s242 = sphi 0, %s241
      %s256 = sphi 0, %s242
      %s260 = sphi 0, %s260
      %s262 = sphi 0, %s260
      %s263 = sphi 0, %s262
      %s277 = sphi 0, %s263
      %s281 = sphi 0, %s281
      %s283 = sphi 0, %s281
      %s284 = sphi 0, %s283
      %s298 = sphi 0, %s284
      %s304 = sphi 0, %s306
      %s307 = sphi 0, %s304
      %s308 = sphi 0, %s307
      %s324 = sphi 0, %s308
    $region4: #{tpu_custom_call.1} parent=1 // loop_header_branch
      %35 = sbr.rel (%p33) target = $region8
    $region5: #{tpu_custom_call.1} parent=1 // loop_body
      %s37 = ssub.s32 %s32, 1
      %s38 = ssub.s32 %s32, 2
      %s39 = sadd.s32 %s32, 1
      %s40 = ssub.s32 %s32, %s39
      %p41 = scmp.eq.s32.totalorder %s40, 0
      %s43 = sadd.s32 %s42, 1
      %s44 = scalar_select %p41, %s42, %s43
      %p47 = pneg %p41
      %p48 = scmp.eq.s32.totalorder %s32, 1
      %p49 = por %p47, %p48
      %p50 = scmp.ne.s32.totalorder %s42, %s45
      %p51 = scmp.eq.s32.totalorder %s32, 0
      %p52 = por %p50, %p51
      %p53 = scmp.ne.s32.totalorder %s42, %s45
      %p54 = scmp.eq.s32.totalorder %s37, 1
      %p55 = por %p53, %p54
      %p56 = scmp.ne.s32.totalorder %s45, %s46
      %p57 = scmp.eq.s32.totalorder %s37, 0
      %p58 = por %p56, %p57
      %p59 = scmp.ne.s32.totalorder %s45, %s46
      %p60 = scmp.eq.s32.totalorder %s38, 1
      %p61 = por %p59, %p60
      %p63 = scmp.ne.s32.totalorder %s46, %s62
      %p64 = scmp.eq.s32.totalorder %s38, 0
      %p65 = por %p63, %p64
      %s66 = ssub.s32 %s32, %s39
      %p67 = scmp.eq.s32.totalorder %s66, 0
      %s69 = sadd.s32 %s68, 1
      %s70 = scalar_select %p67, %s68, %s69
      %p73 = pneg %p67
      %p74 = scmp.eq.s32.totalorder %s32, 1
      %p75 = por %p73, %p74
      %p76 = scmp.ne.s32.totalorder %s68, %s71
      %p77 = scmp.eq.s32.totalorder %s32, 0
      %p78 = por %p76, %p77
      %p79 = scmp.ne.s32.totalorder %s68, %s71
      %p80 = scmp.eq.s32.totalorder %s37, 1
      %p81 = por %p79, %p80
      %p82 = scmp.ne.s32.totalorder %s71, %s72
      %p83 = scmp.eq.s32.totalorder %s37, 0
      %p84 = por %p82, %p83
      %p85 = scmp.ne.s32.totalorder %s71, %s72
      %p86 = scmp.eq.s32.totalorder %s38, 1
      %p87 = por %p85, %p86
      %p89 = scmp.ne.s32.totalorder %s72, %s88
      %p90 = scmp.eq.s32.totalorder %s38, 0
      %p91 = por %p89, %p90
      %s93 = sadd.s32 %s92, 1
      %p96 = scmp.eq.s32.totalorder %s32, 1
      %p97 = scmp.ne.s32.totalorder %s92, %s94
      %p98 = scmp.eq.s32.totalorder %s32, 0
      %p99 = por %p97, %p98
      %p100 = scmp.ne.s32.totalorder %s92, %s94
      %p101 = scmp.eq.s32.totalorder %s37, 1
      %p102 = por %p100, %p101
      %p103 = scmp.ne.s32.totalorder %s94, %s95
      %p104 = scmp.eq.s32.totalorder %s37, 0
      %p105 = por %p103, %p104
      %p106 = scmp.ne.s32.totalorder %s94, %s95
      %p107 = scmp.eq.s32.totalorder %s38, 1
      %p108 = por %p106, %p107
      %p110 = scmp.ne.s32.totalorder %s95, %s109
      %p111 = scmp.eq.s32.totalorder %s38, 0
      %p112 = por %p110, %p111
      %s114 = sadd.s32 %s113, 1
      %p117 = scmp.eq.s32.totalorder %s32, 1
      %p118 = scmp.ne.s32.totalorder %s113, %s115
      %p119 = scmp.eq.s32.totalorder %s32, 0
      %p120 = por %p118, %p119
      %p121 = scmp.ne.s32.totalorder %s113, %s115
      %p122 = scmp.eq.s32.totalorder %s37, 1
      %p123 = por %p121, %p122
      %p124 = scmp.ne.s32.totalorder %s115, %s116
      %p125 = scmp.eq.s32.totalorder %s37, 0
      %p126 = por %p124, %p125
      %p127 = scmp.ne.s32.totalorder %s115, %s116
      %p128 = scmp.eq.s32.totalorder %s38, 1
      %p129 = por %p127, %p128
      %p131 = scmp.ne.s32.totalorder %s116, %s130
      %p132 = scmp.eq.s32.totalorder %s38, 0
      %p133 = por %p131, %p132
      %s135 = sadd.s32 %s134, 1
      %p138 = scmp.eq.s32.totalorder %s32, 1
      %p139 = scmp.ne.s32.totalorder %s134, %s136
      %p140 = scmp.eq.s32.totalorder %s32, 0
      %p141 = por %p139, %p140
      %p142 = scmp.ne.s32.totalorder %s134, %s136
      %p143 = scmp.eq.s32.totalorder %s37, 1
      %p144 = por %p142, %p143
      %p145 = scmp.ne.s32.totalorder %s136, %s137
      %p146 = scmp.eq.s32.totalorder %s37, 0
      %p147 = por %p145, %p146
      %p148 = scmp.ne.s32.totalorder %s136, %s137
      %p149 = scmp.eq.s32.totalorder %s38, 1
      %p150 = por %p148, %p149
      %p152 = scmp.ne.s32.totalorder %s137, %s151
      %p153 = scmp.eq.s32.totalorder %s38, 0
      %p154 = por %p152, %p153
      %s156 = sadd.s32 %s155, 1
      %p159 = scmp.eq.s32.totalorder %s32, 1
      %p160 = scmp.ne.s32.totalorder %s155, %s157
      %p161 = scmp.eq.s32.totalorder %s32, 0
      %p162 = por %p160, %p161
      %p163 = scmp.ne.s32.totalorder %s155, %s157
      %p164 = scmp.eq.s32.totalorder %s37, 1
      %p165 = por %p163, %p164
      %p166 = scmp.ne.s32.totalorder %s157, %s158
      %p167 = scmp.eq.s32.totalorder %s37, 0
      %p168 = por %p166, %p167
      %p169 = scmp.ne.s32.totalorder %s157, %s158
      %p170 = scmp.eq.s32.totalorder %s38, 1
      %p171 = por %p169, %p170
      %p173 = scmp.ne.s32.totalorder %s158, %s172
      %p174 = scmp.eq.s32.totalorder %s38, 0
      %p175 = por %p173, %p174
      %s177 = sadd.s32 %s176, 1
      %p180 = scmp.eq.s32.totalorder %s32, 1
      %p181 = scmp.ne.s32.totalorder %s176, %s178
      %p182 = scmp.eq.s32.totalorder %s32, 0
      %p183 = por %p181, %p182
      %p184 = scmp.ne.s32.totalorder %s176, %s178
      %p185 = scmp.eq.s32.totalorder %s37, 1
      %p186 = por %p184, %p185
      %p187 = scmp.ne.s32.totalorder %s178, %s179
      %p188 = scmp.eq.s32.totalorder %s37, 0
      %p189 = por %p187, %p188
      %p190 = scmp.ne.s32.totalorder %s178, %s179
      %p191 = scmp.eq.s32.totalorder %s38, 1
      %p192 = por %p190, %p191
      %p194 = scmp.ne.s32.totalorder %s179, %s193
      %p195 = scmp.eq.s32.totalorder %s38, 0
      %p196 = por %p194, %p195
      %s198 = sadd.s32 %s197, 1
      %p201 = scmp.eq.s32.totalorder %s32, 1
      %p202 = scmp.ne.s32.totalorder %s197, %s199
      %p203 = scmp.eq.s32.totalorder %s32, 0
      %p204 = por %p202, %p203
      %p205 = scmp.ne.s32.totalorder %s197, %s199
      %p206 = scmp.eq.s32.totalorder %s37, 1
      %p207 = por %p205, %p206
      %p208 = scmp.ne.s32.totalorder %s199, %s200
      %p209 = scmp.eq.s32.totalorder %s37, 0
      %p210 = por %p208, %p209
      %p211 = scmp.ne.s32.totalorder %s199, %s200
      %p212 = scmp.eq.s32.totalorder %s38, 1
      %p213 = por %p211, %p212
      %p215 = scmp.ne.s32.totalorder %s200, %s214
      %p216 = scmp.eq.s32.totalorder %s38, 0
      %p217 = por %p215, %p216
      %s219 = sadd.s32 %s218, 1
      %p222 = scmp.eq.s32.totalorder %s32, 1
      %p223 = scmp.ne.s32.totalorder %s218, %s220
      %p224 = scmp.eq.s32.totalorder %s32, 0
      %p225 = por %p223, %p224
      %p226 = scmp.ne.s32.totalorder %s218, %s220
      %p227 = scmp.eq.s32.totalorder %s37, 1
      %p228 = por %p226, %p227
      %p229 = scmp.ne.s32.totalorder %s220, %s221
      %p230 = scmp.eq.s32.totalorder %s37, 0
      %p231 = por %p229, %p230
      %p232 = scmp.ne.s32.totalorder %s220, %s221
      %p233 = scmp.eq.s32.totalorder %s38, 1
      %p234 = por %p232, %p233
      %p236 = scmp.ne.s32.totalorder %s221, %s235
      %p237 = scmp.eq.s32.totalorder %s38, 0
      %p238 = por %p236, %p237
      %s240 = sadd.s32 %s239, 1
      %p243 = scmp.eq.s32.totalorder %s32, 1
      %p244 = scmp.ne.s32.totalorder %s239, %s241
      %p245 = scmp.eq.s32.totalorder %s32, 0
      %p246 = por %p244, %p245
      %p247 = scmp.ne.s32.totalorder %s239, %s241
      %p248 = scmp.eq.s32.totalorder %s37, 1
      %p249 = por %p247, %p248
      %p250 = scmp.ne.s32.totalorder %s241, %s242
      %p251 = scmp.eq.s32.totalorder %s37, 0
      %p252 = por %p250, %p251
      %p253 = scmp.ne.s32.totalorder %s241, %s242
      %p254 = scmp.eq.s32.totalorder %s38, 1
      %p255 = por %p253, %p254
      %p257 = scmp.ne.s32.totalorder %s242, %s256
      %p258 = scmp.eq.s32.totalorder %s38, 0
      %p259 = por %p257, %p258
      %s261 = sadd.s32 %s260, 1
      %p264 = scmp.eq.s32.totalorder %s32, 1
      %p265 = scmp.ne.s32.totalorder %s260, %s262
      %p266 = scmp.eq.s32.totalorder %s32, 0
      %p267 = por %p265, %p266
      %p268 = scmp.ne.s32.totalorder %s260, %s262
      %p269 = scmp.eq.s32.totalorder %s37, 1
      %p270 = por %p268, %p269
      %p271 = scmp.ne.s32.totalorder %s262, %s263
      %p272 = scmp.eq.s32.totalorder %s37, 0
      %p273 = por %p271, %p272
      %p274 = scmp.ne.s32.totalorder %s262, %s263
      %p275 = scmp.eq.s32.totalorder %s38, 1
      %p276 = por %p274, %p275
      %p278 = scmp.ne.s32.totalorder %s263, %s277
      %p279 = scmp.eq.s32.totalorder %s38, 0
      %p280 = por %p278, %p279
      %s282 = sadd.s32 %s281, 1
      %p285 = scmp.eq.s32.totalorder %s32, 1
      %p286 = scmp.ne.s32.totalorder %s281, %s283
      %p287 = scmp.eq.s32.totalorder %s32, 0
      %p288 = por %p286, %p287
      %p289 = scmp.ne.s32.totalorder %s281, %s283
      %p290 = scmp.eq.s32.totalorder %s37, 1
      %p291 = por %p289, %p290
      %p292 = scmp.ne.s32.totalorder %s283, %s284
      %p293 = scmp.eq.s32.totalorder %s37, 0
      %p294 = por %p292, %p293
      %p295 = scmp.ne.s32.totalorder %s283, %s284
      %p296 = scmp.eq.s32.totalorder %s38, 1
      %p297 = por %p295, %p296
      %p299 = scmp.ne.s32.totalorder %s284, %s298
      %p300 = scmp.eq.s32.totalorder %s38, 0
      %p301 = por %p299, %p300
      %s302 = ssub.s32 %s32, %s39
      %p303 = scmp.eq.s32.totalorder %s302, 0
      %s305 = sadd.s32 %s304, 1
      %s306 = scalar_select %p303, %s304, %s305
      %p309 = pneg %p303
      %p310 = scmp.eq.s32.totalorder %s32, 1
      %p311 = por %p309, %p310
      %p312 = scmp.ne.s32.totalorder %s304, %s307
      %p313 = scmp.eq.s32.totalorder %s32, 0
      %p314 = por %p312, %p313
      %p315 = scmp.ne.s32.totalorder %s304, %s307
      %p316 = scmp.eq.s32.totalorder %s37, 1
      %p317 = por %p315, %p316
      %p318 = scmp.ne.s32.totalorder %s307, %s308
      %p319 = scmp.eq.s32.totalorder %s37, 0
      %p320 = por %p318, %p319
      %p321 = scmp.ne.s32.totalorder %s307, %s308
      %p322 = scmp.eq.s32.totalorder %s38, 1
      %p323 = por %p321, %p322
      %p325 = scmp.ne.s32.totalorder %s308, %s324
      %p326 = scmp.eq.s32.totalorder %s38, 0
      %p327 = por %p325, %p326
      %p328 = scmp.le.s32.totalorder 1, %s32
      %p329 = scmp.lt.s32.totalorder %s32, 3
      %p330 = pnand %p328, %p329
      %p331 = pneg %p330
      // Predicated region
      $region9: #{tpu_custom_call.1} parent=5 // pred_check
        _
      $region10: #{tpu_custom_call.1} parent=5 // pred_check_branch
        %333 = sbr.rel (%p330) target = $region12
      $region11: #{tpu_custom_call.1} parent=5 // pred_region
        %s334 = ssub.s32 %s32, 1
        // Predicated region
        $region13: #{tpu_custom_call.1} parent=11 // pred_check
          %p335 = pneg %p105
        $region14: #{tpu_custom_call.1} parent=11 // pred_check_branch
          %337 = sbr.rel (%p335) target = $region16
        $region15: #{tpu_custom_call.1} parent=11 // pred_region
          %s339 = ssub.s32 2048, 2048
          %340 = vsyncadd [#allocation7], %s339
          %s341 = sshll.u32 [#allocation8], 4
          %s342 = int_to_ptr.vmem [resolvable:$true] %s341
          %347 = dma.hbm_to_vmem [thread:$0]  %s2, 2048, %s342, [#allocation7], 128, 128, 8
        $region16: #{tpu_custom_call.1} parent=11 // pred_fallthru
          _
        // Predicated region
        $region17: #{tpu_custom_call.1} parent=11 // pred_check
          %p348 = pneg %p126
        $region18: #{tpu_custom_call.1} parent=11 // pred_check_branch
          %350 = sbr.rel (%p348) target = $region20
        $region19: #{tpu_custom_call.1} parent=11 // pred_region
          %s352 = ssub.s32 32, 32
          %353 = vsyncadd [#allocation10], %s352
          %s355 = sshll.u32 [#allocation9], 4
          %s356 = int_to_ptr.vmem [resolvable:$true] %s355
          %358 = dma.hbm_to_vmem [thread:$0]  %s3, 32, %s356, [#allocation10]
        $region20: #{tpu_custom_call.1} parent=11 // pred_fallthru
          _
        // Predicated region
        $region21: #{tpu_custom_call.1} parent=11 // pred_check
          %p359 = pneg %p147
        $region22: #{tpu_custom_call.1} parent=11 // pred_check_branch
          %361 = sbr.rel (%p359) target = $region24
        $region23: #{tpu_custom_call.1} parent=11 // pred_region
          %s363 = ssub.s32 16, 16
          %364 = vsyncadd [#allocation10], %s363
          %s366 = sshll.u32 [#allocation11], 4
          %s367 = int_to_ptr.vmem [resolvable:$true] %s366
          %369 = dma.hbm_to_vmem [thread:$0]  %s4, 16, %s367, [#allocation10]
        $region24: #{tpu_custom_call.1} parent=11 // pred_fallthru
          _
        // Predicated region
        $region25: #{tpu_custom_call.1} parent=11 // pred_check
          %p370 = pneg %p168
        $region26: #{tpu_custom_call.1} parent=11 // pred_check_branch
          %372 = sbr.rel (%p370) target = $region28
        $region27: #{tpu_custom_call.1} parent=11 // pred_region
          %s374 = ssub.s32 16, 16
          %375 = vsyncadd [#allocation13], %s374
          %s377 = sshll.u32 [#allocation12], 4
          %s378 = int_to_ptr.vmem [resolvable:$true] %s377
          %380 = dma.hbm_to_vmem [thread:$0]  %s5, 16, %s378, [#allocation13]
        $region28: #{tpu_custom_call.1} parent=11 // pred_fallthru
          _
        // Predicated region
        $region29: #{tpu_custom_call.1} parent=11 // pred_check
          %p381 = pneg %p189
        $region30: #{tpu_custom_call.1} parent=11 // pred_check_branch
          %383 = sbr.rel (%p381) target = $region32
        $region31: #{tpu_custom_call.1} parent=11 // pred_region
          %s385 = ssub.s32 9216, 9216
          %386 = vsyncadd [#allocation13], %s385
          %s387 = sshll.u32 [#allocation14], 4
          %s388 = int_to_ptr.vmem [resolvable:$true] %s387
          %393 = dma.hbm_to_vmem [thread:$0]  %s6, 9216, %s388, [#allocation13], 64, 64, 4
        $region32: #{tpu_custom_call.1} parent=11 // pred_fallthru
          _
        // Predicated region
        $region33: #{tpu_custom_call.1} parent=11 // pred_check
          %p394 = pneg %p210
        $region34: #{tpu_custom_call.1} parent=11 // pred_check_branch
          %396 = sbr.rel (%p394) target = $region36
        $region35: #{tpu_custom_call.1} parent=11 // pred_region
          %s398 = ssub.s32 16, 16
          %399 = vsyncadd [#allocation16], %s398
          %s401 = sshll.u32 [#allocation15], 4
          %s402 = int_to_ptr.vmem [resolvable:$true] %s401
          %404 = dma.hbm_to_vmem [thread:$0]  %s7, 16, %s402, [#allocation16]
        $region36: #{tpu_custom_call.1} parent=11 // pred_fallthru
          _
        // Predicated region
        $region37: #{tpu_custom_call.1} parent=11 // pred_check
          %p405 = pneg %p231
        $region38: #{tpu_custom_call.1} parent=11 // pred_check_branch
          %407 = sbr.rel (%p405) target = $region40
        $region39: #{tpu_custom_call.1} parent=11 // pred_region
          %s409 = ssub.s32 16, 16
          %410 = vsyncadd [#allocation16], %s409
          %s412 = sshll.u32 [#allocation17], 4
          %s413 = int_to_ptr.vmem [resolvable:$true] %s412
          %415 = dma.hbm_to_vmem [thread:$0]  %s8, 16, %s413, [#allocation16]
        $region40: #{tpu_custom_call.1} parent=11 // pred_fallthru
          _
        // Predicated region
        $region41: #{tpu_custom_call.1} parent=11 // pred_check
          %p416 = pneg %p252
        $region42: #{tpu_custom_call.1} parent=11 // pred_check_branch
          %418 = sbr.rel (%p416) target = $region44
        $region43: #{tpu_custom_call.1} parent=11 // pred_region
          %s420 = ssub.s32 16, 16
          %421 = vsyncadd [#allocation19], %s420
          %s423 = sshll.u32 [#allocation18], 4
          %s424 = int_to_ptr.vmem [resolvable:$true] %s423
          %426 = dma.hbm_to_vmem [thread:$0]  %s9, 16, %s424, [#allocation19]
        $region44: #{tpu_custom_call.1} parent=11 // pred_fallthru
          _
        // Predicated region
        $region45: #{tpu_custom_call.1} parent=11 // pred_check
          %p427 = pneg %p273
        $region46: #{tpu_custom_call.1} parent=11 // pred_check_branch
          %429 = sbr.rel (%p427) target = $region48
        $region47: #{tpu_custom_call.1} parent=11 // pred_region
          %s431 = ssub.s32 9216, 9216
          %432 = vsyncadd [#allocation19], %s431
          %s433 = sshll.u32 [#allocation20], 4
          %s434 = int_to_ptr.vmem [resolvable:$true] %s433
          %439 = dma.hbm_to_vmem [thread:$0]  %s10, 9216, %s434, [#allocation19], 64, 64, 4
        $region48: #{tpu_custom_call.1} parent=11 // pred_fallthru
          _
        // Predicated region
        $region49: #{tpu_custom_call.1} parent=11 // pred_check
          %p440 = pneg %p294
        $region50: #{tpu_custom_call.1} parent=11 // pred_check_branch
          %442 = sbr.rel (%p440) target = $region52
        $region51: #{tpu_custom_call.1} parent=11 // pred_region
          %s444 = ssub.s32 16, 16
          %445 = vsyncadd [#allocation22], %s444
          %s447 = sshll.u32 [#allocation21], 4
          %s448 = int_to_ptr.vmem [resolvable:$true] %s447
          %450 = dma.hbm_to_vmem [thread:$0]  %s11, 16, %s448, [#allocation22]
        $region52: #{tpu_custom_call.1} parent=11 // pred_fallthru
          _
      $region12: #{tpu_custom_call.1} parent=5 // pred_fallthru
        _
      %p451 = scmp.lt.s32.totalorder %s32, 2
      // Predicated region
      $region53: #{tpu_custom_call.1} parent=5 // pred_check
        %p452 = pneg %p451
      $region54: #{tpu_custom_call.1} parent=5 // pred_check_branch
        %454 = sbr.rel (%p452) target = $region56
      $region55: #{tpu_custom_call.1} parent=5 // pred_region
        // Predicated region
        $region57: #{tpu_custom_call.1} parent=55 // pred_check
          %p455 = pneg %p52
        $region58: #{tpu_custom_call.1} parent=55 // pred_check_branch
          %457 = sbr.rel (%p455) target = $region60
        $region59: #{tpu_custom_call.1} parent=55 // pred_region
          %s458 = sand.u32 %s42, 1
          %s459 = scalar_lea.sflag [#allocation4], %s458
          %s460 = sand.u32 %s42, 1
          %s461 = smul.addr %s460, 256
          %s462 = scalar_lea.vmem [#allocation3], %s461
          %s464 = ssub.s32 4096, 4096
          %465 = vsyncadd %s459, %s464
          %s466 = smul.addr %s32, 32
          %s467 = smul.addr %s466, 128
          %s468 = scalar_lea.hbm %s0, %s467
          %s469 = sshll.u32 %s462, 4
          %s470 = int_to_ptr.vmem [resolvable:$true] %s469
          %475 = dma.hbm_to_vmem [thread:$0]  %s468, 4096, %s470, %s459, 128, 128, 8
        $region60: #{tpu_custom_call.1} parent=55 // pred_fallthru
          _
        // Predicated region
        $region61: #{tpu_custom_call.1} parent=55 // pred_check
          %p476 = pneg %p78
        $region62: #{tpu_custom_call.1} parent=55 // pred_check_branch
          %478 = sbr.rel (%p476) target = $region64
        $region63: #{tpu_custom_call.1} parent=55 // pred_region
          %s479 = sand.u32 %s32, 1
          %s480 = scalar_lea.sflag [#allocation7], %s479
          %s481 = sand.u32 %s68, 1
          %s482 = smul.addr %s481, 256
          %s483 = scalar_lea.vmem [#allocation6], %s482
          %s485 = ssub.s32 4096, 4096
          %486 = vsyncadd %s480, %s485
          %s487 = smul.addr %s32, 32
          %s488 = smul.addr %s487, 128
          %s489 = scalar_lea.hbm %s1, %s488
          %s490 = sshll.u32 %s483, 4
          %s491 = int_to_ptr.vmem [resolvable:$true] %s490
          %496 = dma.hbm_to_vmem [thread:$0]  %s489, 4096, %s491, %s480, 128, 128, 8
        $region64: #{tpu_custom_call.1} parent=55 // pred_fallthru
          _
      $region56: #{tpu_custom_call.1} parent=5 // pred_fallthru
        _
      %p497 = scmp.le.s32.totalorder 1, %s32
      %p498 = scmp.lt.s32.totalorder %s32, 3
      %p499 = pnand %p497, %p498
      %p500 = pneg %p499
      // Predicated region
      $region65: #{tpu_custom_call.1} parent=5 // pred_check
        _
      $region66: #{tpu_custom_call.1} parent=5 // pred_check_branch
        %502 = sbr.rel (%p499) target = $region68
      $region67: #{tpu_custom_call.1} parent=5 // pred_region
        %s503 = ssub.s32 %s32, 1
        %s504 = sand.u32 %s45, 1
        %s505 = scalar_lea.sflag [#allocation4], %s504
        %s506 = sand.u32 %s45, 1
        %s507 = smul.addr %s506, 256
        %s508 = scalar_lea.vmem [#allocation3], %s507
        // Predicated region
        $region69: #{tpu_custom_call.1} parent=67 // pred_check
          %p509 = pneg %p58
        $region70: #{tpu_custom_call.1} parent=67 // pred_check_branch
          %511 = sbr.rel (%p509) target = $region72
        $region71: #{tpu_custom_call.1} parent=67 // pred_region
          %512 = dma.done %s505, 4096
        $region72: #{tpu_custom_call.1} parent=67 // pred_fallthru
          _
        %s513 = sand.u32 %s37, 1
        %s514 = scalar_lea.sflag [#allocation7], %s513
        %s515 = sand.u32 %s71, 1
        %s516 = smul.addr %s515, 256
        %s517 = scalar_lea.vmem [#allocation6], %s516
        // Predicated region
        $region73: #{tpu_custom_call.1} parent=67 // pred_check
          %p518 = pneg %p84
        $region74: #{tpu_custom_call.1} parent=67 // pred_check_branch
          %520 = sbr.rel (%p518) target = $region76
        $region75: #{tpu_custom_call.1} parent=67 // pred_region
          %521 = dma.done %s514, 4096
        $region76: #{tpu_custom_call.1} parent=67 // pred_fallthru
          _
        // Predicated region
        $region77: #{tpu_custom_call.1} parent=67 // pred_check
          %p522 = pneg %p105
        $region78: #{tpu_custom_call.1} parent=67 // pred_check_branch
          %524 = sbr.rel (%p522) target = $region80
        $region79: #{tpu_custom_call.1} parent=67 // pred_region
          %525 = dma.done [#allocation7], 2048
        $region80: #{tpu_custom_call.1} parent=67 // pred_fallthru
          _
        // Predicated region
        $region81: #{tpu_custom_call.1} parent=67 // pred_check
          %p526 = pneg %p126
        $region82: #{tpu_custom_call.1} parent=67 // pred_check_branch
          %528 = sbr.rel (%p526) target = $region84
        $region83: #{tpu_custom_call.1} parent=67 // pred_region
          %529 = dma.done [#allocation10], 32
        $region84: #{tpu_custom_call.1} parent=67 // pred_fallthru
          _
        // Predicated region
        $region85: #{tpu_custom_call.1} parent=67 // pred_check
          %p530 = pneg %p147
        $region86: #{tpu_custom_call.1} parent=67 // pred_check_branch
          %532 = sbr.rel (%p530) target = $region88
        $region87: #{tpu_custom_call.1} parent=67 // pred_region
          %533 = dma.done [#allocation10], 16
        $region88: #{tpu_custom_call.1} parent=67 // pred_fallthru
          _
        // Predicated region
        $region89: #{tpu_custom_call.1} parent=67 // pred_check
          %p534 = pneg %p168
        $region90: #{tpu_custom_call.1} parent=67 // pred_check_branch
          %536 = sbr.rel (%p534) target = $region92
        $region91: #{tpu_custom_call.1} parent=67 // pred_region
          %537 = dma.done [#allocation13], 16
        $region92: #{tpu_custom_call.1} parent=67 // pred_fallthru
          _
        // Predicated region
        $region93: #{tpu_custom_call.1} parent=67 // pred_check
          %p538 = pneg %p189
        $region94: #{tpu_custom_call.1} parent=67 // pred_check_branch
          %540 = sbr.rel (%p538) target = $region96
        $region95: #{tpu_custom_call.1} parent=67 // pred_region
          %541 = dma.done [#allocation13], 9216
        $region96: #{tpu_custom_call.1} parent=67 // pred_fallthru
          _
        // Predicated region
        $region97: #{tpu_custom_call.1} parent=67 // pred_check
          %p542 = pneg %p210
        $region98: #{tpu_custom_call.1} parent=67 // pred_check_branch
          %544 = sbr.rel (%p542) target = $region100
        $region99: #{tpu_custom_call.1} parent=67 // pred_region
          %545 = dma.done [#allocation16], 16
        $region100: #{tpu_custom_call.1} parent=67 // pred_fallthru
          _
        // Predicated region
        $region101: #{tpu_custom_call.1} parent=67 // pred_check
          %p546 = pneg %p231
        $region102: #{tpu_custom_call.1} parent=67 // pred_check_branch
          %548 = sbr.rel (%p546) target = $region104
        $region103: #{tpu_custom_call.1} parent=67 // pred_region
          %549 = dma.done [#allocation16], 16
        $region104: #{tpu_custom_call.1} parent=67 // pred_fallthru
          _
        // Predicated region
        $region105: #{tpu_custom_call.1} parent=67 // pred_check
          %p550 = pneg %p252
        $region106: #{tpu_custom_call.1} parent=67 // pred_check_branch
          %552 = sbr.rel (%p550) target = $region108
        $region107: #{tpu_custom_call.1} parent=67 // pred_region
          %553 = dma.done [#allocation19], 16
        $region108: #{tpu_custom_call.1} parent=67 // pred_fallthru
          _
        // Predicated region
        $region109: #{tpu_custom_call.1} parent=67 // pred_check
          %p554 = pneg %p273
        $region110: #{tpu_custom_call.1} parent=67 // pred_check_branch
          %556 = sbr.rel (%p554) target = $region112
        $region111: #{tpu_custom_call.1} parent=67 // pred_region
          %557 = dma.done [#allocation19], 9216
        $region112: #{tpu_custom_call.1} parent=67 // pred_fallthru
          _
        // Predicated region
        $region113: #{tpu_custom_call.1} parent=67 // pred_check
          %p558 = pneg %p294
        $region114: #{tpu_custom_call.1} parent=67 // pred_check_branch
          %560 = sbr.rel (%p558) target = $region116
        $region115: #{tpu_custom_call.1} parent=67 // pred_region
          %561 = dma.done [#allocation22], 16
        $region116: #{tpu_custom_call.1} parent=67 // pred_fallthru
          _
        %s562 = sand.u32 %s45, 1
        %s563 = scalar_lea.sflag [#allocation4], %s562
        %s564 = sand.u32 %s45, 1
        %s565 = smul.addr %s564, 256
        %s566 = scalar_lea.vmem [#allocation3], %s565
        %p567 = pneg %p58
        %p568 = pneg %p55
        %s569 = sand.u32 %s37, 1
        %s570 = scalar_lea.sflag [#allocation7], %s569
        %s571 = sand.u32 %s71, 1
        %s572 = smul.addr %s571, 256
        %s573 = scalar_lea.vmem [#allocation6], %s572
        %p574 = pneg %p84
        %p575 = pneg %p81
        %p576 = pneg %p105
        %p577 = pneg %p102
        %p578 = pneg %p126
        %p579 = pneg %p123
        %p580 = pneg %p147
        %p581 = pneg %p144
        %p582 = pneg %p168
        %p583 = pneg %p165
        %p584 = pneg %p189
        %p585 = pneg %p186
        %p586 = pneg %p210
        %p587 = pneg %p207
        %p588 = pneg %p231
        %p589 = pneg %p228
        %p590 = pneg %p252
        %p591 = pneg %p249
        %p592 = pneg %p273
        %p593 = pneg %p270
        %p594 = pneg %p294
        %p595 = pneg %p291
        %p596 = pneg %p320
        %p597 = pneg %p317
        %s598 = sand.u32 %s307, 1
        %s599 = scalar_lea.sflag [#allocation5], %s598
        %s600 = sand.u32 %s307, 1
        %s601 = smul.addr %s600, 256
        %s602 = scalar_lea.vmem [#allocation23], %s601
        %v604 = vld [vmem:[#allocation8] sm:$0xff]
        %v605 = vld [vmem:[#allocation8 + $0x8] sm:$0xff]
        %v606 = vld [vmem:[#allocation8 + $0x10] sm:$0xff]
        %v607 = vld [vmem:[#allocation8 + $0x18] sm:$0xff]
        %v608 = vld [vmem:[#allocation8 + $0x20] sm:$0xff]
        %v609 = vld [vmem:[#allocation8 + $0x28] sm:$0xff]
        %v610 = vld [vmem:[#allocation8 + $0x30] sm:$0xff]
        %v611 = vld [vmem:[#allocation8 + $0x38] sm:$0xff]
        %v612 = vld [vmem:[#allocation8 + $0x40] sm:$0xff]
        %v613 = vld [vmem:[#allocation8 + $0x48] sm:$0xff]
        %v614 = vld [vmem:[#allocation8 + $0x50] sm:$0xff]
        %v615 = vld [vmem:[#allocation8 + $0x58] sm:$0xff]
        %v616 = vld [vmem:[#allocation8 + $0x60] sm:$0xff]
        %v617 = vld [vmem:[#allocation8 + $0x68] sm:$0xff]
        %v618 = vld [vmem:[#allocation8 + $0x70] sm:$0xff]
        %v619 = vld [vmem:[#allocation8 + $0x78] sm:$0xff]
        %v620 = vld [vmem:[#allocation9] sm:$0x3]
        %621 = vst [vmem:[#allocation2] sm:$0xf] 0
        %622 = vst [vmem:[#allocation2 + $0x4] sm:$0xf] 0
        %623 = vst [vmem:[#allocation2 + $0x8] sm:$0x1] 0
        %s624 = scalar_lea.vmem [#allocation2], 204
        %625 = vst [vmem:[%s624] sm:$0xf] 0
        %626 = vst [vmem:[%s624 + $0x4] sm:$0xf] 0
        %627 = vst [vmem:[%s624 + $0x8] sm:$0x1] 0
        %s628 = scalar_lea.vmem [#allocation2], 12
        %vm629 = vcmask 1040384
        %vm630 = vsmask.f32 256
        %vm631 = vmand %vm629, %vm630
        %v632 = vld [vmem:[%s628] sm:$0x1]
        %v633 = vsel %vm631, 0, %v632
        %634 = vst [vmem:[%s628] sm:$0x1] %v633
        %v635 = vld [vmem:[%s628 + $0xc] sm:$0x1]
        %v636 = vsel %vm631, 0, %v635
        %637 = vst [vmem:[%s628 + $0xc] sm:$0x1] %v636
        %v638 = vld [vmem:[%s628 + $0x18] sm:$0x1]
        %v639 = vsel %vm631, 0, %v638
        %640 = vst [vmem:[%s628 + $0x18] sm:$0x1] %v639
        %v641 = vld [vmem:[%s628 + $0x24] sm:$0x1]
        %v642 = vsel %vm631, 0, %v641
        %643 = vst [vmem:[%s628 + $0x24] sm:$0x1] %v642
        %v644 = vld [vmem:[%s628 + $0x30] sm:$0x1]
        %v645 = vsel %vm631, 0, %v644
        %646 = vst [vmem:[%s628 + $0x30] sm:$0x1] %v645
        %v647 = vld [vmem:[%s628 + $0x3c] sm:$0x1]
        %v648 = vsel %vm631, 0, %v647
        %649 = vst [vmem:[%s628 + $0x3c] sm:$0x1] %v648
        %v650 = vld [vmem:[%s628 + $0x48] sm:$0x1]
        %v651 = vsel %vm631, 0, %v650
        %652 = vst [vmem:[%s628 + $0x48] sm:$0x1] %v651
        %v653 = vld [vmem:[%s628 + $0x54] sm:$0x1]
        %v654 = vsel %vm631, 0, %v653
        %655 = vst [vmem:[%s628 + $0x54] sm:$0x1] %v654
        %v656 = vld [vmem:[%s628 + $0x60] sm:$0x1]
        %v657 = vsel %vm631, 0, %v656
        %658 = vst [vmem:[%s628 + $0x60] sm:$0x1] %v657
        %v659 = vld [vmem:[%s628 + $0x6c] sm:$0x1]
        %v660 = vsel %vm631, 0, %v659
        %661 = vst [vmem:[%s628 + $0x6c] sm:$0x1] %v660
        %v662 = vld [vmem:[%s628 + $0x78] sm:$0x1]
        %v663 = vsel %vm631, 0, %v662
        %664 = vst [vmem:[%s628 + $0x78] sm:$0x1] %v663
        %v665 = vld [vmem:[%s628 + $0x84] sm:$0x1]
        %v666 = vsel %vm631, 0, %v665
        %667 = vst [vmem:[%s628 + $0x84] sm:$0x1] %v666
        %v668 = vld [vmem:[%s628 + $0x90] sm:$0x1]
        %v669 = vsel %vm631, 0, %v668
        %670 = vst [vmem:[%s628 + $0x90] sm:$0x1] %v669
        %v671 = vld [vmem:[%s628 + $0x9c] sm:$0x1]
        %v672 = vsel %vm631, 0, %v671
        %673 = vst [vmem:[%s628 + $0x9c] sm:$0x1] %v672
        %v674 = vld [vmem:[%s628 + $0xa8] sm:$0x1]
        %v675 = vsel %vm631, 0, %v674
        %676 = vst [vmem:[%s628 + $0xa8] sm:$0x1] %v675
        %v677 = vld [vmem:[%s628 + $0xb4] sm:$0x1]
        %v678 = vsel %vm631, 0, %v677
        %679 = vst [vmem:[%s628 + $0xb4] sm:$0x1] %v678
        %vm680 = vsmask.f32 7938
        %vm681 = vmand %vm629, %vm680
        %v682 = vld [vmem:[%s628 + $0x8] sm:$0x1]
        %v683 = vsel %vm681, 0, %v682
        %684 = vst [vmem:[%s628 + $0x8] sm:$0x1] %v683
        %v685 = vld [vmem:[%s628 + $0x14] sm:$0x1]
        %v686 = vsel %vm681, 0, %v685
        %687 = vst [vmem:[%s628 + $0x14] sm:$0x1] %v686
        %v688 = vld [vmem:[%s628 + $0x20] sm:$0x1]
        %v689 = vsel %vm681, 0, %v688
        %690 = vst [vmem:[%s628 + $0x20] sm:$0x1] %v689
        %v691 = vld [vmem:[%s628 + $0x2c] sm:$0x1]
        %v692 = vsel %vm681, 0, %v691
        %693 = vst [vmem:[%s628 + $0x2c] sm:$0x1] %v692
        %v694 = vld [vmem:[%s628 + $0x38] sm:$0x1]
        %v695 = vsel %vm681, 0, %v694
        %696 = vst [vmem:[%s628 + $0x38] sm:$0x1] %v695
        %v697 = vld [vmem:[%s628 + $0x44] sm:$0x1]
        %v698 = vsel %vm681, 0, %v697
        %699 = vst [vmem:[%s628 + $0x44] sm:$0x1] %v698
        %v700 = vld [vmem:[%s628 + $0x50] sm:$0x1]
        %v701 = vsel %vm681, 0, %v700
        %702 = vst [vmem:[%s628 + $0x50] sm:$0x1] %v701
        %v703 = vld [vmem:[%s628 + $0x5c] sm:$0x1]
        %v704 = vsel %vm681, 0, %v703
        %705 = vst [vmem:[%s628 + $0x5c] sm:$0x1] %v704
        %v706 = vld [vmem:[%s628 + $0x68] sm:$0x1]
        %v707 = vsel %vm681, 0, %v706
        %708 = vst [vmem:[%s628 + $0x68] sm:$0x1] %v707
        %v709 = vld [vmem:[%s628 + $0x74] sm:$0x1]
        %v710 = vsel %vm681, 0, %v709
        %711 = vst [vmem:[%s628 + $0x74] sm:$0x1] %v710
        %v712 = vld [vmem:[%s628 + $0x80] sm:$0x1]
        %v713 = vsel %vm681, 0, %v712
        %714 = vst [vmem:[%s628 + $0x80] sm:$0x1] %v713
        %v715 = vld [vmem:[%s628 + $0x8c] sm:$0x1]
        %v716 = vsel %vm681, 0, %v715
        %717 = vst [vmem:[%s628 + $0x8c] sm:$0x1] %v716
        %v718 = vld [vmem:[%s628 + $0x98] sm:$0x1]
        %v719 = vsel %vm681, 0, %v718
        %720 = vst [vmem:[%s628 + $0x98] sm:$0x1] %v719
        %v721 = vld [vmem:[%s628 + $0xa4] sm:$0x1]
        %v722 = vsel %vm681, 0, %v721
        %723 = vst [vmem:[%s628 + $0xa4] sm:$0x1] %v722
        %v724 = vld [vmem:[%s628 + $0xb0] sm:$0x1]
        %v725 = vsel %vm681, 0, %v724
        %726 = vst [vmem:[%s628 + $0xb0] sm:$0x1] %v725
        %v727 = vld [vmem:[%s628 + $0xbc] sm:$0x1]
        %v728 = vsel %vm681, 0, %v727
        %729 = vst [vmem:[%s628 + $0xbc] sm:$0x1] %v728
        %v730 = vld [vmem:[%s508] sm:$0xff]
        %v731 = vld [vmem:[%s508 + $0x8] sm:$0xff]
        %v732 = vld [vmem:[%s508 + $0x10] sm:$0xff]
        %v733 = vld [vmem:[%s508 + $0x18] sm:$0xff]
        %v734 = vld [vmem:[%s508 + $0x20] sm:$0xff]
        %v735 = vld [vmem:[%s508 + $0x28] sm:$0xff]
        %v736 = vld [vmem:[%s508 + $0x30] sm:$0xff]
        %v737 = vld [vmem:[%s508 + $0x38] sm:$0xff]
        %v738 = vld [vmem:[%s508 + $0x40] sm:$0xff]
        %v739 = vld [vmem:[%s508 + $0x48] sm:$0xff]
        %v740 = vld [vmem:[%s508 + $0x50] sm:$0xff]
        %v741 = vld [vmem:[%s508 + $0x58] sm:$0xff]
        %v742 = vld [vmem:[%s508 + $0x60] sm:$0xff]
        %v743 = vld [vmem:[%s508 + $0x68] sm:$0xff]
        %v744 = vld [vmem:[%s508 + $0x70] sm:$0xff]
        %v745 = vld [vmem:[%s508 + $0x78] sm:$0xff]
        %v746 = vld [vmem:[%s508 + $0x80] sm:$0xff]
        %v747 = vld [vmem:[%s508 + $0x88] sm:$0xff]
        %v748 = vld [vmem:[%s508 + $0x90] sm:$0xff]
        %v749 = vld [vmem:[%s508 + $0x98] sm:$0xff]
        %v750 = vld [vmem:[%s508 + $0xa0] sm:$0xff]
        %v751 = vld [vmem:[%s508 + $0xa8] sm:$0xff]
        %v752 = vld [vmem:[%s508 + $0xb0] sm:$0xff]
        %v753 = vld [vmem:[%s508 + $0xb8] sm:$0xff]
        %v754 = vld [vmem:[%s508 + $0xc0] sm:$0xff]
        %v755 = vld [vmem:[%s508 + $0xc8] sm:$0xff]
        %v756 = vld [vmem:[%s508 + $0xd0] sm:$0xff]
        %v757 = vld [vmem:[%s508 + $0xd8] sm:$0xff]
        %v758 = vld [vmem:[%s508 + $0xe0] sm:$0xff]
        %v759 = vld [vmem:[%s508 + $0xe8] sm:$0xff]
        %v760 = vld [vmem:[%s508 + $0xf0] sm:$0xff]
        %v761 = vld [vmem:[%s508 + $0xf8] sm:$0xff]
        %v762 = vld [vmem:[%s517] sm:$0xff]
        %v763 = vld [vmem:[%s517 + $0x8] sm:$0xff]
        %v764 = vld [vmem:[%s517 + $0x10] sm:$0xff]
        %v765 = vld [vmem:[%s517 + $0x18] sm:$0xff]
        %v766 = vld [vmem:[%s517 + $0x20] sm:$0xff]
        %v767 = vld [vmem:[%s517 + $0x28] sm:$0xff]
        %v768 = vld [vmem:[%s517 + $0x30] sm:$0xff]
        %v769 = vld [vmem:[%s517 + $0x38] sm:$0xff]
        %v770 = vld [vmem:[%s517 + $0x40] sm:$0xff]
        %v771 = vld [vmem:[%s517 + $0x48] sm:$0xff]
        %v772 = vld [vmem:[%s517 + $0x50] sm:$0xff]
        %v773 = vld [vmem:[%s517 + $0x58] sm:$0xff]
        %v774 = vld [vmem:[%s517 + $0x60] sm:$0xff]
        %v775 = vld [vmem:[%s517 + $0x68] sm:$0xff]
        %v776 = vld [vmem:[%s517 + $0x70] sm:$0xff]
        %v777 = vld [vmem:[%s517 + $0x78] sm:$0xff]
        %v778 = vld [vmem:[%s517 + $0x80] sm:$0xff]
        %v779 = vld [vmem:[%s517 + $0x88] sm:$0xff]
        %v780 = vld [vmem:[%s517 + $0x90] sm:$0xff]
        %v781 = vld [vmem:[%s517 + $0x98] sm:$0xff]
        %v782 = vld [vmem:[%s517 + $0xa0] sm:$0xff]
        %v783 = vld [vmem:[%s517 + $0xa8] sm:$0xff]
        %v784 = vld [vmem:[%s517 + $0xb0] sm:$0xff]
        %v785 = vld [vmem:[%s517 + $0xb8] sm:$0xff]
        %v786 = vld [vmem:[%s517 + $0xc0] sm:$0xff]
        %v787 = vld [vmem:[%s517 + $0xc8] sm:$0xff]
        %v788 = vld [vmem:[%s517 + $0xd0] sm:$0xff]
        %v789 = vld [vmem:[%s517 + $0xd8] sm:$0xff]
        %v790 = vld [vmem:[%s517 + $0xe0] sm:$0xff]
        %v791 = vld [vmem:[%s517 + $0xe8] sm:$0xff]
        %v792 = vld [vmem:[%s517 + $0xf0] sm:$0xff]
        %v793 = vld [vmem:[%s517 + $0xf8] sm:$0xff]
        %v794 = vadd.f32 %v730, %v762
        %v795 = vadd.f32 %v731, %v763
        %v796 = vadd.f32 %v732, %v764
        %v797 = vadd.f32 %v733, %v765
        %v798 = vadd.f32 %v734, %v766
        %v799 = vadd.f32 %v735, %v767
        %v800 = vadd.f32 %v736, %v768
        %v801 = vadd.f32 %v737, %v769
        %v802 = vadd.f32 %v738, %v770
        %v803 = vadd.f32 %v739, %v771
        %v804 = vadd.f32 %v740, %v772
        %v805 = vadd.f32 %v741, %v773
        %v806 = vadd.f32 %v742, %v774
        %v807 = vadd.f32 %v743, %v775
        %v808 = vadd.f32 %v744, %v776
        %v809 = vadd.f32 %v745, %v777
        %v810 = vadd.f32 %v746, %v778
        %v811 = vadd.f32 %v747, %v779
        %v812 = vadd.f32 %v748, %v780
        %v813 = vadd.f32 %v749, %v781
        %v814 = vadd.f32 %v750, %v782
        %v815 = vadd.f32 %v751, %v783
        %v816 = vadd.f32 %v752, %v784
        %v817 = vadd.f32 %v753, %v785
        %v818 = vadd.f32 %v754, %v786
        %v819 = vadd.f32 %v755, %v787
        %v820 = vadd.f32 %v756, %v788
        %v821 = vadd.f32 %v757, %v789
        %v822 = vadd.f32 %v758, %v790
        %v823 = vadd.f32 %v759, %v791
        %v824 = vadd.f32 %v760, %v792
        %v825 = vadd.f32 %v761, %v793
        %v826 = vld [vmem:[#allocation11] sm:$0x1]
        %v827 = vld [vmem:[#allocation12] sm:$0x1]
        %v828 = vadd.f32 %v794, %v795
        %v829 = vadd.f32 %v828, %v796
        %v830 = vadd.f32 %v829, %v797
        %v831 = vadd.f32 %v830, %v798
        %v832 = vadd.f32 %v831, %v799
        %v833 = vadd.f32 %v832, %v800
        %v834 = vadd.f32 %v833, %v801
        %v835 = vadd.f32 %v834, %v802
        %v836 = vadd.f32 %v835, %v803
        %v837 = vadd.f32 %v836, %v804
        %v838 = vadd.f32 %v837, %v805
        %v839 = vadd.f32 %v838, %v806
        %v840 = vadd.f32 %v839, %v807
        %v841 = vadd.f32 %v840, %v808
        %v842 = vadd.f32 %v841, %v809
        %v843 = vadd.f32 %v842, %v810
        %v844 = vadd.f32 %v843, %v811
        %v845 = vadd.f32 %v844, %v812
        %v846 = vadd.f32 %v845, %v813
        %v847 = vadd.f32 %v846, %v814
        %v848 = vadd.f32 %v847, %v815
        %v849 = vadd.f32 %v848, %v816
        %v850 = vadd.f32 %v849, %v817
        %v851 = vadd.f32 %v850, %v818
        %v852 = vadd.f32 %v851, %v819
        %v853 = vadd.f32 %v852, %v820
        %v854 = vadd.f32 %v853, %v821
        %v855 = vadd.f32 %v854, %v822
        %v856 = vadd.f32 %v855, %v823
        %v857 = vadd.f32 %v856, %v824
        %v858 = vadd.f32 %v857, %v825
        %v859 = vrot.slane %v858, 4
        %v860 = vadd.f32 %v858, %v859
        %v861 = vrot.slane %v860, 2
        %v862 = vadd.f32 %v860, %v861
        %v863 = vrot.slane %v862, 1
        %v864 = vadd.f32 %v862, %v863
        %865 = vmatprep.subr.mxu0 0.0
        %866 = vmatpush1.msra.mxu0 %v604
        %867 = vmatprep.subr.mxu0 0.0
        %868 = vmatpush1.msra.mxu0 %v605
        %869 = vmatprep.subr.mxu0 0.0
        %870 = vmatpush1.msra.mxu0 %v606
        %871 = vmatprep.subr.mxu0 0.0
        %872 = vmatpush1.msra.mxu0 %v607
        %873 = vmatprep.subr.mxu0 0.0
        %874 = vmatpush1.msra.mxu0 %v608
        %875 = vmatprep.subr.mxu0 0.0
        %876 = vmatpush1.msra.mxu0 %v609
        %877 = vmatprep.subr.mxu0 0.0
        %878 = vmatpush1.msra.mxu0 %v610
        %879 = vmatprep.subr.mxu0 0.0
        %880 = vmatpush1.msra.mxu0 %v611
        %881 = vmatprep.subr.mxu0 0.0
        %882 = vmatpush1.msra.mxu0 %v612
        %883 = vmatprep.subr.mxu0 0.0
        %884 = vmatpush1.msra.mxu0 %v613
        %885 = vmatprep.subr.mxu0 0.0
        %886 = vmatpush1.msra.mxu0 %v614
        %887 = vmatprep.subr.mxu0 0.0
        %888 = vmatpush1.msra.mxu0 %v615
        %889 = vmatprep.subr.mxu0 0.0
        %890 = vmatpush1.msra.mxu0 %v616
        %891 = vmatprep.subr.mxu0 0.0
        %892 = vmatpush1.msra.mxu0 %v617
        %893 = vmatprep.subr.mxu0 0.0
        %894 = vmatpush1.msra.mxu0 %v618
        %895 = vmatprep.subr.mxu0 0.0
        %896 = vmatpush1.msra.mxu0 %v619
        %897 = vmatprep.subr.mxu0 0.0
        %898 = vmatpush1.msra.mxu0 0.0
        %899 = vmatprep.subr.mxu0 0.0
        %900 = vmatpush1.msra.mxu0 0.0
        %901 = vmatprep.subr.mxu0 0.0
        %902 = vmatpush1.msra.mxu0 0.0
        %903 = vmatprep.subr.mxu0 0.0
        %904 = vmatpush1.msra.mxu0 0.0
        %905 = vmatprep.subr.mxu0 0.0
        %906 = vmatpush1.msra.mxu0 0.0
        %907 = vmatprep.subr.mxu0 0.0
        %908 = vmatpush1.msra.mxu0 0.0
        %909 = vmatprep.subr.mxu0 0.0
        %910 = vmatpush1.msra.mxu0 0.0
        %911 = vmatprep.subr.mxu0 0.0
        %912 = vmatpush1.msra.mxu0 0.0
        %913 = vmatprep.subr.mxu0 0.0
        %914 = vmatpush1.msra.mxu0 0.0
        %915 = vmatprep.subr.mxu0 0.0
        %916 = vmatpush1.msra.mxu0 0.0
        %917 = vmatprep.subr.mxu0 0.0
        %918 = vmatpush1.msra.mxu0 0.0
        %919 = vmatprep.subr.mxu0 0.0
        %920 = vmatpush1.msra.mxu0 0.0
        %921 = vmatprep.subr.mxu0 0.0
        %922 = vmatpush1.msra.mxu0 0.0
        %923 = vmatprep.subr.mxu0 0.0
        %924 = vmatpush1.msra.mxu0 0.0
        %925 = vmatprep.subr.mxu0 0.0
        %926 = vmatpush1.msra.mxu0 0.0
        %927 = vmatprep.subr.mxu0 0.0
        %928 = vmatpush1.msra.mxu0 0.0
        %929 = vmatprep.mubr.f32.mxu0 0.0
        %930 = vmatmul.mubr.f32.gmra.mrb[0].mxu0 %v864
        %v931 = vpop.f32.mrb[0].mxu0
        %v932 = vadd.f32 0.0, %v931
        %v933 = vpop.f32.mrb[0].mxu0
        %934 = vdwg.mxu0
        %v935 = vrcp.pop 512.0
        %v936 = vmul.f32 %v932, %v935
        %vm937 = vcmask 15360
        %v939 = vsel %vm937, %v936, 0
        %vm941 = vcmask 1041408
        %v943 = vsel %vm941, %v620, 0
        %945 = vmatprep.subr.mxu0 0.0
        %946 = vmatpush1.msra.mxu0 %v943
        %947 = vmatprep.subr.mxu0 0.0
        %948 = vmatpush1.msra.mxu0 0.0
        %949 = vmatprep.subr.mxu0 0.0
        %950 = vmatpush1.msra.mxu0 0.0
        %951 = vmatprep.subr.mxu0 0.0
        %952 = vmatpush1.msra.mxu0 0.0
        %953 = vmatprep.subr.mxu0 0.0
        %954 = vmatpush1.msra.mxu0 0.0
        %955 = vmatprep.subr.mxu0 0.0
        %956 = vmatpush1.msra.mxu0 0.0
        %957 = vmatprep.subr.mxu0 0.0
        %958 = vmatpush1.msra.mxu0 0.0
        %959 = vmatprep.subr.mxu0 0.0
        %960 = vmatpush1.msra.mxu0 0.0
        %961 = vmatprep.subr.mxu0 0.0
        %962 = vmatpush1.msra.mxu0 0.0
        %963 = vmatprep.subr.mxu0 0.0
        %964 = vmatpush1.msra.mxu0 0.0
        %965 = vmatprep.subr.mxu0 0.0
        %966 = vmatpush1.msra.mxu0 0.0
        %967 = vmatprep.subr.mxu0 0.0
        %968 = vmatpush1.msra.mxu0 0.0
        %969 = vmatprep.subr.mxu0 0.0
        %970 = vmatpush1.msra.mxu0 0.0
        %971 = vmatprep.subr.mxu0 0.0
        %972 = vmatpush1.msra.mxu0 0.0
        %973 = vmatprep.subr.mxu0 0.0
        %974 = vmatpush1.msra.mxu0 0.0
        %975 = vmatprep.subr.mxu0 0.0
        %976 = vmatpush1.msra.mxu0 0.0
        %977 = vmatprep.subr.mxu0 0.0
        %978 = vmatpush1.msra.mxu0 0.0
        %979 = vmatprep.subr.mxu0 0.0
        %980 = vmatpush1.msra.mxu0 0.0
        %981 = vmatprep.subr.mxu0 0.0
        %982 = vmatpush1.msra.mxu0 0.0
        %983 = vmatprep.subr.mxu0 0.0
        %984 = vmatpush1.msra.mxu0 0.0
        %985 = vmatprep.subr.mxu0 0.0
        %986 = vmatpush1.msra.mxu0 0.0
        %987 = vmatprep.subr.mxu0 0.0
        %988 = vmatpush1.msra.mxu0 0.0
        %989 = vmatprep.subr.mxu0 0.0
        %990 = vmatpush1.msra.mxu0 0.0
        %991 = vmatprep.subr.mxu0 0.0
        %992 = vmatpush1.msra.mxu0 0.0
        %993 = vmatprep.subr.mxu0 0.0
        %994 = vmatpush1.msra.mxu0 0.0
        %995 = vmatprep.subr.mxu0 0.0
        %996 = vmatpush1.msra.mxu0 0.0
        %997 = vmatprep.subr.mxu0 0.0
        %998 = vmatpush1.msra.mxu0 0.0
        %999 = vmatprep.subr.mxu0 0.0
        %1000 = vmatpush1.msra.mxu0 0.0
        %1001 = vmatprep.subr.mxu0 0.0
        %1002 = vmatpush1.msra.mxu0 0.0
        %1003 = vmatprep.subr.mxu0 0.0
        %1004 = vmatpush1.msra.mxu0 0.0
        %1005 = vmatprep.subr.mxu0 0.0
        %1006 = vmatpush1.msra.mxu0 0.0
        %1007 = vmatprep.subr.mxu0 0.0
        %1008 = vmatpush1.msra.mxu0 0.0
        %1009 = vmatprep.mubr.f32.mxu0 0.0
        %1010 = vmatmul.mubr.f32.gmra.mrb[0].mxu0 %v939
        %v1011 = vpop.f32.mrb[0].mxu0
        %v1012 = vadd.f32 0.0, %v1011
        %v1013 = vpop.f32.mrb[0].mxu0
        %1014 = vdwg.mxu0
        %v1015 = vlaneseq
        %v1016 = vshrl.u32 %v1015, 7
        %v1017 = vsub.s32 0, %v1016
        %v1018 = vrot.slane %v1012, %v1017
        %v1019 = vsub.f32 %v794, %v1018
        %v1020 = vsub.f32 %v795, %v1018
        %v1021 = vsub.f32 %v796, %v1018
        %v1022 = vsub.f32 %v797, %v1018
        %v1023 = vsub.f32 %v798, %v1018
        %v1024 = vsub.f32 %v799, %v1018
        %v1025 = vsub.f32 %v800, %v1018
        %v1026 = vsub.f32 %v801, %v1018
        %v1027 = vsub.f32 %v802, %v1018
        %v1028 = vsub.f32 %v803, %v1018
        %v1029 = vsub.f32 %v804, %v1018
        %v1030 = vsub.f32 %v805, %v1018
        %v1031 = vsub.f32 %v806, %v1018
        %v1032 = vsub.f32 %v807, %v1018
        %v1033 = vsub.f32 %v808, %v1018
        %v1034 = vsub.f32 %v809, %v1018
        %v1035 = vsub.f32 %v810, %v1018
        %v1036 = vsub.f32 %v811, %v1018
        %v1037 = vsub.f32 %v812, %v1018
        %v1038 = vsub.f32 %v813, %v1018
        %v1039 = vsub.f32 %v814, %v1018
        %v1040 = vsub.f32 %v815, %v1018
        %v1041 = vsub.f32 %v816, %v1018
        %v1042 = vsub.f32 %v817, %v1018
        %v1043 = vsub.f32 %v818, %v1018
        %v1044 = vsub.f32 %v819, %v1018
        %v1045 = vsub.f32 %v820, %v1018
        %v1046 = vsub.f32 %v821, %v1018
        %v1047 = vsub.f32 %v822, %v1018
        %v1048 = vsub.f32 %v823, %v1018
        %v1049 = vsub.f32 %v824, %v1018
        %v1050 = vsub.f32 %v825, %v1018
        %v1051 = vmul.f32 %v1019, %v1019
        %v1052 = vmul.f32 %v1020, %v1020
        %v1053 = vmul.f32 %v1021, %v1021
        %v1054 = vmul.f32 %v1022, %v1022
        %v1055 = vmul.f32 %v1023, %v1023
        %v1056 = vmul.f32 %v1024, %v1024
        %v1057 = vmul.f32 %v1025, %v1025
        %v1058 = vmul.f32 %v1026, %v1026
        %v1059 = vmul.f32 %v1027, %v1027
        %v1060 = vmul.f32 %v1028, %v1028
        %v1061 = vmul.f32 %v1029, %v1029
        %v1062 = vmul.f32 %v1030, %v1030
        %v1063 = vmul.f32 %v1031, %v1031
        %v1064 = vmul.f32 %v1032, %v1032
        %v1065 = vmul.f32 %v1033, %v1033
        %v1066 = vmul.f32 %v1034, %v1034
        %v1067 = vmul.f32 %v1035, %v1035
        %v1068 = vmul.f32 %v1036, %v1036
        %v1069 = vmul.f32 %v1037, %v1037
        %v1070 = vmul.f32 %v1038, %v1038
        %v1071 = vmul.f32 %v1039, %v1039
        %v1072 = vmul.f32 %v1040, %v1040
        %v1073 = vmul.f32 %v1041, %v1041
        %v1074 = vmul.f32 %v1042, %v1042
        %v1075 = vmul.f32 %v1043, %v1043
        %v1076 = vmul.f32 %v1044, %v1044
        %v1077 = vmul.f32 %v1045, %v1045
        %v1078 = vmul.f32 %v1046, %v1046
        %v1079 = vmul.f32 %v1047, %v1047
        %v1080 = vmul.f32 %v1048, %v1048
        %v1081 = vmul.f32 %v1049, %v1049
        %v1082 = vmul.f32 %v1050, %v1050
        %v1083 = vadd.f32 %v1051, %v1052
        %v1084 = vadd.f32 %v1083, %v1053
        %v1085 = vadd.f32 %v1084, %v1054
        %v1086 = vadd.f32 %v1085, %v1055
        %v1087 = vadd.f32 %v1086, %v1056
        %v1088 = vadd.f32 %v1087, %v1057
        %v1089 = vadd.f32 %v1088, %v1058
        %v1090 = vadd.f32 %v1089, %v1059
        %v1091 = vadd.f32 %v1090, %v1060
        %v1092 = vadd.f32 %v1091, %v1061
        %v1093 = vadd.f32 %v1092, %v1062
        %v1094 = vadd.f32 %v1093, %v1063
        %v1095 = vadd.f32 %v1094, %v1064
        %v1096 = vadd.f32 %v1095, %v1065
        %v1097 = vadd.f32 %v1096, %v1066
        %v1098 = vadd.f32 %v1097, %v1067
        %v1099 = vadd.f32 %v1098, %v1068
        %v1100 = vadd.f32 %v1099, %v1069
        %v1101 = vadd.f32 %v1100, %v1070
        %v1102 = vadd.f32 %v1101, %v1071
        %v1103 = vadd.f32 %v1102, %v1072
        %v1104 = vadd.f32 %v1103, %v1073
        %v1105 = vadd.f32 %v1104, %v1074
        %v1106 = vadd.f32 %v1105, %v1075
        %v1107 = vadd.f32 %v1106, %v1076
        %v1108 = vadd.f32 %v1107, %v1077
        %v1109 = vadd.f32 %v1108, %v1078
        %v1110 = vadd.f32 %v1109, %v1079
        %v1111 = vadd.f32 %v1110, %v1080
        %v1112 = vadd.f32 %v1111, %v1081
        %v1113 = vadd.f32 %v1112, %v1082
        %v1114 = vrot.slane %v1113, 4
        %v1115 = vadd.f32 %v1113, %v1114
        %v1116 = vrot.slane %v1115, 2
        %v1117 = vadd.f32 %v1115, %v1116
        %v1118 = vrot.slane %v1117, 1
        %v1119 = vadd.f32 %v1117, %v1118
        %1120 = vmatprep.subr.mxu0 0.0
        %1121 = vmatpush1.msra.mxu0 %v604
        %1122 = vmatprep.subr.mxu0 0.0
        %1123 = vmatpush1.msra.mxu0 %v605
        %1124 = vmatprep.subr.mxu0 0.0
        %1125 = vmatpush1.msra.mxu0 %v606
        %1126 = vmatprep.subr.mxu0 0.0
        %1127 = vmatpush1.msra.mxu0 %v607
        %1128 = vmatprep.subr.mxu0 0.0
        %1129 = vmatpush1.msra.mxu0 %v608
        %1130 = vmatprep.subr.mxu0 0.0
        %1131 = vmatpush1.msra.mxu0 %v609
        %1132 = vmatprep.subr.mxu0 0.0
        %1133 = vmatpush1.msra.mxu0 %v610
        %1134 = vmatprep.subr.mxu0 0.0
        %1135 = vmatpush1.msra.mxu0 %v611
        %1136 = vmatprep.subr.mxu0 0.0
        %1137 = vmatpush1.msra.mxu0 %v612
        %1138 = vmatprep.subr.mxu0 0.0
        %1139 = vmatpush1.msra.mxu0 %v613
        %1140 = vmatprep.subr.mxu0 0.0
        %1141 = vmatpush1.msra.mxu0 %v614
        %1142 = vmatprep.subr.mxu0 0.0
        %1143 = vmatpush1.msra.mxu0 %v615
        %1144 = vmatprep.subr.mxu0 0.0
        %1145 = vmatpush1.msra.mxu0 %v616
        %1146 = vmatprep.subr.mxu0 0.0
        %1147 = vmatpush1.msra.mxu0 %v617
        %1148 = vmatprep.subr.mxu0 0.0
        %1149 = vmatpush1.msra.mxu0 %v618
        %1150 = vmatprep.subr.mxu0 0.0
        %1151 = vmatpush1.msra.mxu0 %v619
        %1152 = vmatprep.subr.mxu0 0.0
        %1153 = vmatpush1.msra.mxu0 0.0
        %1154 = vmatprep.subr.mxu0 0.0
        %1155 = vmatpush1.msra.mxu0 0.0
        %1156 = vmatprep.subr.mxu0 0.0
        %1157 = vmatpush1.msra.mxu0 0.0
        %1158 = vmatprep.subr.mxu0 0.0
        %1159 = vmatpush1.msra.mxu0 0.0
        %1160 = vmatprep.subr.mxu0 0.0
        %1161 = vmatpush1.msra.mxu0 0.0
        %1162 = vmatprep.subr.mxu0 0.0
        %1163 = vmatpush1.msra.mxu0 0.0
        %1164 = vmatprep.subr.mxu0 0.0
        %1165 = vmatpush1.msra.mxu0 0.0
        %1166 = vmatprep.subr.mxu0 0.0
        %1167 = vmatpush1.msra.mxu0 0.0
        %1168 = vmatprep.subr.mxu0 0.0
        %1169 = vmatpush1.msra.mxu0 0.0
        %1170 = vmatprep.subr.mxu0 0.0
        %1171 = vmatpush1.msra.mxu0 0.0
        %1172 = vmatprep.subr.mxu0 0.0
        %1173 = vmatpush1.msra.mxu0 0.0
        %1174 = vmatprep.subr.mxu0 0.0
        %1175 = vmatpush1.msra.mxu0 0.0
        %1176 = vmatprep.subr.mxu0 0.0
        %1177 = vmatpush1.msra.mxu0 0.0
        %1178 = vmatprep.subr.mxu0 0.0
        %1179 = vmatpush1.msra.mxu0 0.0
        %1180 = vmatprep.subr.mxu0 0.0
        %1181 = vmatpush1.msra.mxu0 0.0
        %1182 = vmatprep.subr.mxu0 0.0
        %1183 = vmatpush1.msra.mxu0 0.0
        %1184 = vmatprep.mubr.f32.mxu0 0.0
        %1185 = vmatmul.mubr.f32.gmra.mrb[0].mxu0 %v1119
        %v1186 = vpop.f32.mrb[0].mxu0
        %v1187 = vadd.f32 0.0, %v1186
        %v1188 = vpop.f32.mrb[0].mxu0
        %1189 = vdwg.mxu0
        %v1190 = vmul.f32 %v1187, %v935
        %v1192 = vsel %vm937, %v1190, 0
        %1194 = vmatprep.subr.mxu0 0.0
        %1195 = vmatpush1.msra.mxu0 %v943
        %1196 = vmatprep.subr.mxu0 0.0
        %1197 = vmatpush1.msra.mxu0 0.0
        %1198 = vmatprep.subr.mxu0 0.0
        %1199 = vmatpush1.msra.mxu0 0.0
        %1200 = vmatprep.subr.mxu0 0.0
        %1201 = vmatpush1.msra.mxu0 0.0
        %1202 = vmatprep.subr.mxu0 0.0
        %1203 = vmatpush1.msra.mxu0 0.0
        %1204 = vmatprep.subr.mxu0 0.0
        %1205 = vmatpush1.msra.mxu0 0.0
        %1206 = vmatprep.subr.mxu0 0.0
        %1207 = vmatpush1.msra.mxu0 0.0
        %1208 = vmatprep.subr.mxu0 0.0
        %1209 = vmatpush1.msra.mxu0 0.0
        %1210 = vmatprep.subr.mxu0 0.0
        %1211 = vmatpush1.msra.mxu0 0.0
        %1212 = vmatprep.subr.mxu0 0.0
        %1213 = vmatpush1.msra.mxu0 0.0
        %1214 = vmatprep.subr.mxu0 0.0
        %1215 = vmatpush1.msra.mxu0 0.0
        %1216 = vmatprep.subr.mxu0 0.0
        %1217 = vmatpush1.msra.mxu0 0.0
        %1218 = vmatprep.subr.mxu0 0.0
        %1219 = vmatpush1.msra.mxu0 0.0
        %1220 = vmatprep.subr.mxu0 0.0
        %1221 = vmatpush1.msra.mxu0 0.0
        %1222 = vmatprep.subr.mxu0 0.0
        %1223 = vmatpush1.msra.mxu0 0.0
        %1224 = vmatprep.subr.mxu0 0.0
        %1225 = vmatpush1.msra.mxu0 0.0
        %1226 = vmatprep.subr.mxu0 0.0
        %1227 = vmatpush1.msra.mxu0 0.0
        %1228 = vmatprep.subr.mxu0 0.0
        %1229 = vmatpush1.msra.mxu0 0.0
        %1230 = vmatprep.subr.mxu0 0.0
        %1231 = vmatpush1.msra.mxu0 0.0
        %1232 = vmatprep.subr.mxu0 0.0
        %1233 = vmatpush1.msra.mxu0 0.0
        %1234 = vmatprep.subr.mxu0 0.0
        %1235 = vmatpush1.msra.mxu0 0.0
        %1236 = vmatprep.subr.mxu0 0.0
        %1237 = vmatpush1.msra.mxu0 0.0
        %1238 = vmatprep.subr.mxu0 0.0
        %1239 = vmatpush1.msra.mxu0 0.0
        %1240 = vmatprep.subr.mxu0 0.0
        %1241 = vmatpush1.msra.mxu0 0.0
        %1242 = vmatprep.subr.mxu0 0.0
        %1243 = vmatpush1.msra.mxu0 0.0
        %1244 = vmatprep.subr.mxu0 0.0
        %1245 = vmatpush1.msra.mxu0 0.0
        %1246 = vmatprep.subr.mxu0 0.0
        %1247 = vmatpush1.msra.mxu0 0.0
        %1248 = vmatprep.subr.mxu0 0.0
        %1249 = vmatpush1.msra.mxu0 0.0
        %1250 = vmatprep.subr.mxu0 0.0
        %1251 = vmatpush1.msra.mxu0 0.0
        %1252 = vmatprep.subr.mxu0 0.0
        %1253 = vmatpush1.msra.mxu0 0.0
        %1254 = vmatprep.subr.mxu0 0.0
        %1255 = vmatpush1.msra.mxu0 0.0
        %1256 = vmatprep.subr.mxu0 0.0
        %1257 = vmatpush1.msra.mxu0 0.0
        %1258 = vmatprep.mubr.f32.mxu0 0.0
        %1259 = vmatmul.mubr.f32.gmra.mrb[0].mxu0 %v1192
        %v1260 = vpop.f32.mrb[0].mxu0
        %v1261 = vadd.f32 1e-05, %v1260
        %v1262 = vpop.f32.mrb[0].mxu0
        %1263 = vdwg.mxu0
        %v1264 = vrsqrt.pop %v1261
        %v1265 = vlaneseq
        %v1266 = vshrl.u32 %v1265, 7
        %v1267 = vsub.s32 0, %v1266
        %v1268 = vrot.slane %v1264, %v1267
        %v1269 = vmul.f32 %v1019, %v1268
        %v1270 = vmul.f32 %v1020, %v1268
        %v1271 = vmul.f32 %v1021, %v1268
        %v1272 = vmul.f32 %v1022, %v1268
        %v1273 = vmul.f32 %v1023, %v1268
        %v1274 = vmul.f32 %v1024, %v1268
        %v1275 = vmul.f32 %v1025, %v1268
        %v1276 = vmul.f32 %v1026, %v1268
        %v1277 = vmul.f32 %v1027, %v1268
        %v1278 = vmul.f32 %v1028, %v1268
        %v1279 = vmul.f32 %v1029, %v1268
        %v1280 = vmul.f32 %v1030, %v1268
        %v1281 = vmul.f32 %v1031, %v1268
        %v1282 = vmul.f32 %v1032, %v1268
        %v1283 = vmul.f32 %v1033, %v1268
        %v1284 = vmul.f32 %v1034, %v1268
        %v1285 = vmul.f32 %v1035, %v1268
        %v1286 = vmul.f32 %v1036, %v1268
        %v1287 = vmul.f32 %v1037, %v1268
        %v1288 = vmul.f32 %v1038, %v1268
        %v1289 = vmul.f32 %v1039, %v1268
        %v1290 = vmul.f32 %v1040, %v1268
        %v1291 = vmul.f32 %v1041, %v1268
        %v1292 = vmul.f32 %v1042, %v1268
        %v1293 = vmul.f32 %v1043, %v1268
        %v1294 = vmul.f32 %v1044, %v1268
        %v1295 = vmul.f32 %v1045, %v1268
        %v1296 = vmul.f32 %v1046, %v1268
        %v1297 = vmul.f32 %v1047, %v1268
        %v1298 = vmul.f32 %v1048, %v1268
        %v1299 = vmul.f32 %v1049, %v1268
        %v1300 = vmul.f32 %v1050, %v1268
        %v1302 = vlaneseq
        %v1303 = vshrl.u32 %v1302, 7
        %v1304 = vsub.s32 0, %v1303
        %v1305 = vrot.slane %v826, %v1304
        %v1307 = vmul.f32 %v1269, %v1305
        %v1308 = vmul.f32 %v1270, %v1305
        %v1309 = vmul.f32 %v1271, %v1305
        %v1310 = vmul.f32 %v1272, %v1305
        %v1311 = vmul.f32 %v1273, %v1305
        %v1312 = vmul.f32 %v1274, %v1305
        %v1313 = vmul.f32 %v1275, %v1305
        %v1314 = vmul.f32 %v1276, %v1305
        %v1315 = vmul.f32 %v1277, %v1305
        %v1316 = vmul.f32 %v1278, %v1305
        %v1317 = vmul.f32 %v1279, %v1305
        %v1318 = vmul.f32 %v1280, %v1305
        %v1319 = vmul.f32 %v1281, %v1305
        %v1320 = vmul.f32 %v1282, %v1305
        %v1321 = vmul.f32 %v1283, %v1305
        %v1322 = vmul.f32 %v1284, %v1305
        %v1323 = vmul.f32 %v1285, %v1305
        %v1324 = vmul.f32 %v1286, %v1305
        %v1325 = vmul.f32 %v1287, %v1305
        %v1326 = vmul.f32 %v1288, %v1305
        %v1327 = vmul.f32 %v1289, %v1305
        %v1328 = vmul.f32 %v1290, %v1305
        %v1329 = vmul.f32 %v1291, %v1305
        %v1330 = vmul.f32 %v1292, %v1305
        %v1331 = vmul.f32 %v1293, %v1305
        %v1332 = vmul.f32 %v1294, %v1305
        %v1333 = vmul.f32 %v1295, %v1305
        %v1334 = vmul.f32 %v1296, %v1305
        %v1335 = vmul.f32 %v1297, %v1305
        %v1336 = vmul.f32 %v1298, %v1305
        %v1337 = vmul.f32 %v1299, %v1305
        %v1338 = vmul.f32 %v1300, %v1305
        %v1340 = vlaneseq
        %v1341 = vshrl.u32 %v1340, 7
        %v1342 = vsub.s32 0, %v1341
        %v1343 = vrot.slane %v827, %v1342
        %v1345 = vadd.f32 %v1307, %v1343
        %v1346 = vadd.f32 %v1308, %v1343
        %v1347 = vadd.f32 %v1309, %v1343
        %v1348 = vadd.f32 %v1310, %v1343
        %v1349 = vadd.f32 %v1311, %v1343
        %v1350 = vadd.f32 %v1312, %v1343
        %v1351 = vadd.f32 %v1313, %v1343
        %v1352 = vadd.f32 %v1314, %v1343
        %v1353 = vadd.f32 %v1315, %v1343
        %v1354 = vadd.f32 %v1316, %v1343
        %v1355 = vadd.f32 %v1317, %v1343
        %v1356 = vadd.f32 %v1318, %v1343
        %v1357 = vadd.f32 %v1319, %v1343
        %v1358 = vadd.f32 %v1320, %v1343
        %v1359 = vadd.f32 %v1321, %v1343
        %v1360 = vadd.f32 %v1322, %v1343
        %v1361 = vadd.f32 %v1323, %v1343
        %v1362 = vadd.f32 %v1324, %v1343
        %v1363 = vadd.f32 %v1325, %v1343
        %v1364 = vadd.f32 %v1326, %v1343
        %v1365 = vadd.f32 %v1327, %v1343
        %v1366 = vadd.f32 %v1328, %v1343
        %v1367 = vadd.f32 %v1329, %v1343
        %v1368 = vadd.f32 %v1330, %v1343
        %v1369 = vadd.f32 %v1331, %v1343
        %v1370 = vadd.f32 %v1332, %v1343
        %v1371 = vadd.f32 %v1333, %v1343
        %v1372 = vadd.f32 %v1334, %v1343
        %v1373 = vadd.f32 %v1335, %v1343
        %v1374 = vadd.f32 %v1336, %v1343
        %v1375 = vadd.f32 %v1337, %v1343
        %v1376 = vadd.f32 %v1338, %v1343
        %v1377 = vmax.f32 %v1345, 0.0
        %v1378 = vmax.f32 %v1346, 0.0
        %v1379 = vmax.f32 %v1347, 0.0
        %v1380 = vmax.f32 %v1348, 0.0
        %v1381 = vmax.f32 %v1349, 0.0
        %v1382 = vmax.f32 %v1350, 0.0
        %v1383 = vmax.f32 %v1351, 0.0
        %v1384 = vmax.f32 %v1352, 0.0
        %v1385 = vmax.f32 %v1353, 0.0
        %v1386 = vmax.f32 %v1354, 0.0
        %v1387 = vmax.f32 %v1355, 0.0
        %v1388 = vmax.f32 %v1356, 0.0
        %v1389 = vmax.f32 %v1357, 0.0
        %v1390 = vmax.f32 %v1358, 0.0
        %v1391 = vmax.f32 %v1359, 0.0
        %v1392 = vmax.f32 %v1360, 0.0
        %v1393 = vmax.f32 %v1361, 0.0
        %v1394 = vmax.f32 %v1362, 0.0
        %v1395 = vmax.f32 %v1363, 0.0
        %v1396 = vmax.f32 %v1364, 0.0
        %v1397 = vmax.f32 %v1365, 0.0
        %v1398 = vmax.f32 %v1366, 0.0
        %v1399 = vmax.f32 %v1367, 0.0
        %v1400 = vmax.f32 %v1368, 0.0
        %v1401 = vmax.f32 %v1369, 0.0
        %v1402 = vmax.f32 %v1370, 0.0
        %v1403 = vmax.f32 %v1371, 0.0
        %v1404 = vmax.f32 %v1372, 0.0
        %v1405 = vmax.f32 %v1373, 0.0
        %v1406 = vmax.f32 %v1374, 0.0
        %v1407 = vmax.f32 %v1375, 0.0
        %v1408 = vmax.f32 %v1376, 0.0
        %v1409 = vpack.c.bf16 %v1378, %v1377
        %v1410 = vpack.c.bf16 %v1380, %v1379
        %v1411 = vpack.c.bf16 %v1382, %v1381
        %v1412 = vpack.c.bf16 %v1384, %v1383
        %v1413 = vpack.c.bf16 %v1386, %v1385
        %v1414 = vpack.c.bf16 %v1388, %v1387
        %v1415 = vpack.c.bf16 %v1390, %v1389
        %v1416 = vpack.c.bf16 %v1392, %v1391
        %v1417 = vpack.c.bf16 %v1394, %v1393
        %v1418 = vpack.c.bf16 %v1396, %v1395
        %v1419 = vpack.c.bf16 %v1398, %v1397
        %v1420 = vpack.c.bf16 %v1400, %v1399
        %v1421 = vpack.c.bf16 %v1402, %v1401
        %v1422 = vpack.c.bf16 %v1404, %v1403
        %v1423 = vpack.c.bf16 %v1406, %v1405
        %v1424 = vpack.c.bf16 %v1408, %v1407
        %v1441 = vunpack.c.l.b16 %v1409
        %v1442 = vunpack.c.h.b16 %v1409
        %v1443 = vunpack.c.l.b16 %v1410
        %v1444 = vunpack.c.h.b16 %v1410
        %v1445 = vunpack.c.l.b16 %v1411
        %v1446 = vunpack.c.h.b16 %v1411
        %v1447 = vunpack.c.l.b16 %v1412
        %v1448 = vunpack.c.h.b16 %v1412
        %v1449 = vunpack.c.l.b16 %v1413
        %v1450 = vunpack.c.h.b16 %v1413
        %v1451 = vunpack.c.l.b16 %v1414
        %v1452 = vunpack.c.h.b16 %v1414
        %v1453 = vunpack.c.l.b16 %v1415
        %v1454 = vunpack.c.h.b16 %v1415
        %v1455 = vunpack.c.l.b16 %v1416
        %v1456 = vunpack.c.h.b16 %v1416
        %v1457 = vunpack.c.l.b16 %v1417
        %v1458 = vunpack.c.h.b16 %v1417
        %v1459 = vunpack.c.l.b16 %v1418
        %v1460 = vunpack.c.h.b16 %v1418
        %v1461 = vunpack.c.l.b16 %v1419
        %v1462 = vunpack.c.h.b16 %v1419
        %v1463 = vunpack.c.l.b16 %v1420
        %v1464 = vunpack.c.h.b16 %v1420
        %v1465 = vunpack.c.l.b16 %v1421
        %v1466 = vunpack.c.h.b16 %v1421
        %v1467 = vunpack.c.l.b16 %v1422
        %v1468 = vunpack.c.h.b16 %v1422
        %v1469 = vunpack.c.l.b16 %v1423
        %v1470 = vunpack.c.h.b16 %v1423
        %v1471 = vunpack.c.l.b16 %v1424
        %v1472 = vunpack.c.h.b16 %v1424
        %v1473 = vpack.c.b16 %v1441, %v1441
        %v1474 = vpack.c.b16 %v1442, %v1442
        %v1475 = vpack.c.b16 %v1443, %v1443
        %v1476 = vpack.c.b16 %v1444, %v1444
        %v1477 = vpack.c.b16 %v1445, %v1445
        %v1478 = vpack.c.b16 %v1446, %v1446
        %v1479 = vpack.c.b16 %v1447, %v1447
        %v1480 = vpack.c.b16 %v1448, %v1448
        %v1481 = vpack.c.b16 %v1449, %v1449
        %v1482 = vpack.c.b16 %v1450, %v1450
        %v1483 = vpack.c.b16 %v1451, %v1451
        %v1484 = vpack.c.b16 %v1452, %v1452
        %v1485 = vpack.c.b16 %v1453, %v1453
        %v1486 = vpack.c.b16 %v1454, %v1454
        %v1487 = vpack.c.b16 %v1455, %v1455
        %v1488 = vpack.c.b16 %v1456, %v1456
        %v1489 = vpack.c.b16 %v1457, %v1457
        %v1490 = vpack.c.b16 %v1458, %v1458
        %v1491 = vpack.c.b16 %v1459, %v1459
        %v1492 = vpack.c.b16 %v1460, %v1460
        %v1493 = vpack.c.b16 %v1461, %v1461
        %v1494 = vpack.c.b16 %v1462, %v1462
        %v1495 = vpack.c.b16 %v1463, %v1463
        %v1496 = vpack.c.b16 %v1464, %v1464
        %v1497 = vpack.c.b16 %v1465, %v1465
        %v1498 = vpack.c.b16 %v1466, %v1466
        %v1499 = vpack.c.b16 %v1467, %v1467
        %v1500 = vpack.c.b16 %v1468, %v1468
        %v1501 = vpack.c.b16 %v1469, %v1469
        %v1502 = vpack.c.b16 %v1470, %v1470
        %v1503 = vpack.c.b16 %v1471, %v1471
        %v1504 = vpack.c.b16 %v1472, %v1472
        %vm1505 = vsmask.f32 4368
        %vm1506 = vmor %vm630, %vm1505
        %v1508 = vshrl.u32 %v1473, 16
        %v1510 = vrot.slane %v1508, 7
        %v1511 = vshll.u32 %v1473, 16
        %v1513 = vor.u32 %v1510, %v1511
        %v1514 = vrot.slane %v1510, 4
        %v1516 = vshrl.u32 %v1474, 16
        %v1518 = vrot.slane %v1516, 7
        %v1519 = vshll.u32 %v1474, 16
        %v1521 = vor.u32 %v1518, %v1519
        %v1522 = vsel %vm1506, %v1514, %v1521
        %v1523 = vrot.slane %v1518, 4
        %v1525 = vshrl.u32 %v1475, 16
        %v1527 = vrot.slane %v1525, 7
        %v1528 = vshll.u32 %v1475, 16
        %v1530 = vor.u32 %v1527, %v1528
        %v1531 = vrot.slane %v1527, 4
        %v1533 = vshrl.u32 %v1476, 16
        %v1535 = vrot.slane %v1533, 7
        %v1536 = vshll.u32 %v1476, 16
        %v1538 = vor.u32 %v1535, %v1536
        %v1539 = vsel %vm1506, %v1531, %v1538
        %v1540 = vrot.slane %v1535, 4
        %v1542 = vshrl.u32 %v1477, 16
        %v1544 = vrot.slane %v1542, 7
        %v1545 = vshll.u32 %v1477, 16
        %v1547 = vor.u32 %v1544, %v1545
        %v1548 = vrot.slane %v1544, 4
        %v1550 = vshrl.u32 %v1478, 16
        %v1552 = vrot.slane %v1550, 7
        %v1553 = vshll.u32 %v1478, 16
        %v1555 = vor.u32 %v1552, %v1553
        %v1556 = vsel %vm1506, %v1548, %v1555
        %v1557 = vrot.slane %v1552, 4
        %v1559 = vshrl.u32 %v1479, 16
        %v1561 = vrot.slane %v1559, 7
        %v1562 = vshll.u32 %v1479, 16
        %v1564 = vor.u32 %v1561, %v1562
        %v1565 = vrot.slane %v1561, 4
        %v1567 = vshrl.u32 %v1480, 16
        %v1569 = vrot.slane %v1567, 7
        %v1570 = vshll.u32 %v1480, 16
        %v1572 = vor.u32 %v1569, %v1570
        %v1573 = vsel %vm1506, %v1565, %v1572
        %v1574 = vrot.slane %v1569, 4
        %v1576 = vshrl.u32 %v1481, 16
        %v1578 = vrot.slane %v1576, 7
        %v1579 = vshll.u32 %v1481, 16
        %v1581 = vor.u32 %v1578, %v1579
        %v1582 = vrot.slane %v1578, 4
        %v1584 = vshrl.u32 %v1482, 16
        %v1586 = vrot.slane %v1584, 7
        %v1587 = vshll.u32 %v1482, 16
        %v1589 = vor.u32 %v1586, %v1587
        %v1590 = vsel %vm1506, %v1582, %v1589
        %v1591 = vrot.slane %v1586, 4
        %v1593 = vshrl.u32 %v1483, 16
        %v1595 = vrot.slane %v1593, 7
        %v1596 = vshll.u32 %v1483, 16
        %v1598 = vor.u32 %v1595, %v1596
        %v1599 = vrot.slane %v1595, 4
        %v1601 = vshrl.u32 %v1484, 16
        %v1603 = vrot.slane %v1601, 7
        %v1604 = vshll.u32 %v1484, 16
        %v1606 = vor.u32 %v1603, %v1604
        %v1607 = vsel %vm1506, %v1599, %v1606
        %v1608 = vrot.slane %v1603, 4
        %v1610 = vshrl.u32 %v1485, 16
        %v1612 = vrot.slane %v1610, 7
        %v1613 = vshll.u32 %v1485, 16
        %v1615 = vor.u32 %v1612, %v1613
        %v1616 = vrot.slane %v1612, 4
        %v1618 = vshrl.u32 %v1486, 16
        %v1620 = vrot.slane %v1618, 7
        %v1621 = vshll.u32 %v1486, 16
        %v1623 = vor.u32 %v1620, %v1621
        %v1624 = vsel %vm1506, %v1616, %v1623
        %v1625 = vrot.slane %v1620, 4
        %v1627 = vshrl.u32 %v1487, 16
        %v1629 = vrot.slane %v1627, 7
        %v1630 = vshll.u32 %v1487, 16
        %v1632 = vor.u32 %v1629, %v1630
        %v1633 = vrot.slane %v1629, 4
        %v1635 = vshrl.u32 %v1488, 16
        %v1637 = vrot.slane %v1635, 7
        %v1638 = vshll.u32 %v1488, 16
        %v1640 = vor.u32 %v1637, %v1638
        %v1641 = vsel %vm1506, %v1633, %v1640
        %v1642 = vrot.slane %v1637, 4
        %v1644 = vshrl.u32 %v1489, 16
        %v1646 = vrot.slane %v1644, 7
        %v1647 = vshll.u32 %v1489, 16
        %v1649 = vor.u32 %v1646, %v1647
        %v1650 = vrot.slane %v1646, 4
        %v1652 = vshrl.u32 %v1490, 16
        %v1654 = vrot.slane %v1652, 7
        %v1655 = vshll.u32 %v1490, 16
        %v1657 = vor.u32 %v1654, %v1655
        %v1658 = vsel %vm1506, %v1650, %v1657
        %v1659 = vrot.slane %v1654, 4
        %v1661 = vshrl.u32 %v1491, 16
        %v1663 = vrot.slane %v1661, 7
        %v1664 = vshll.u32 %v1491, 16
        %v1666 = vor.u32 %v1663, %v1664
        %v1667 = vrot.slane %v1663, 4
        %v1669 = vshrl.u32 %v1492, 16
        %v1671 = vrot.slane %v1669, 7
        %v1672 = vshll.u32 %v1492, 16
        %v1674 = vor.u32 %v1671, %v1672
        %v1675 = vsel %vm1506, %v1667, %v1674
        %v1676 = vrot.slane %v1671, 4
        %v1678 = vshrl.u32 %v1493, 16
        %v1680 = vrot.slane %v1678, 7
        %v1681 = vshll.u32 %v1493, 16
        %v1683 = vor.u32 %v1680, %v1681
        %v1684 = vrot.slane %v1680, 4
        %v1686 = vshrl.u32 %v1494, 16
        %v1688 = vrot.slane %v1686, 7
        %v1689 = vshll.u32 %v1494, 16
        %v1691 = vor.u32 %v1688, %v1689
        %v1692 = vsel %vm1506, %v1684, %v1691
        %v1693 = vrot.slane %v1688, 4
        %v1695 = vshrl.u32 %v1495, 16
        %v1697 = vrot.slane %v1695, 7
        %v1698 = vshll.u32 %v1495, 16
        %v1700 = vor.u32 %v1697, %v1698
        %v1701 = vrot.slane %v1697, 4
        %v1703 = vshrl.u32 %v1496, 16
        %v1705 = vrot.slane %v1703, 7
        %v1706 = vshll.u32 %v1496, 16
        %v1708 = vor.u32 %v1705, %v1706
        %v1709 = vsel %vm1506, %v1701, %v1708
        %v1710 = vrot.slane %v1705, 4
        %v1712 = vshrl.u32 %v1497, 16
        %v1714 = vrot.slane %v1712, 7
        %v1715 = vshll.u32 %v1497, 16
        %v1717 = vor.u32 %v1714, %v1715
        %v1718 = vrot.slane %v1714, 4
        %v1720 = vshrl.u32 %v1498, 16
        %v1722 = vrot.slane %v1720, 7
        %v1723 = vshll.u32 %v1498, 16
        %v1725 = vor.u32 %v1722, %v1723
        %v1726 = vsel %vm1506, %v1718, %v1725
        %v1727 = vrot.slane %v1722, 4
        %v1729 = vshrl.u32 %v1499, 16
        %v1731 = vrot.slane %v1729, 7
        %v1732 = vshll.u32 %v1499, 16
        %v1734 = vor.u32 %v1731, %v1732
        %v1735 = vrot.slane %v1731, 4
        %v1737 = vshrl.u32 %v1500, 16
        %v1739 = vrot.slane %v1737, 7
        %v1740 = vshll.u32 %v1500, 16
        %v1742 = vor.u32 %v1739, %v1740
        %v1743 = vsel %vm1506, %v1735, %v1742
        %v1744 = vrot.slane %v1739, 4
        %v1746 = vshrl.u32 %v1501, 16
        %v1748 = vrot.slane %v1746, 7
        %v1749 = vshll.u32 %v1501, 16
        %v1751 = vor.u32 %v1748, %v1749
        %v1752 = vrot.slane %v1748, 4
        %v1754 = vshrl.u32 %v1502, 16
        %v1756 = vrot.slane %v1754, 7
        %v1757 = vshll.u32 %v1502, 16
        %v1759 = vor.u32 %v1756, %v1757
        %v1760 = vsel %vm1506, %v1752, %v1759
        %v1761 = vrot.slane %v1756, 4
        %v1763 = vshrl.u32 %v1503, 16
        %v1765 = vrot.slane %v1763, 7
        %v1766 = vshll.u32 %v1503, 16
        %v1768 = vor.u32 %v1765, %v1766
        %v1769 = vrot.slane %v1765, 4
        %v1771 = vshrl.u32 %v1504, 16
        %v1773 = vrot.slane %v1771, 7
        %v1774 = vshll.u32 %v1504, 16
        %v1776 = vor.u32 %v1773, %v1774
        %v1777 = vsel %vm1506, %v1769, %v1776
        %v1778 = vrot.slane %v1773, 4
        %vm1827 = vcmask 1043456
        %vm1828 = vmand %vm1827, %vm680
        %v1829 = vld [vmem:[%s628] sm:$0xf]
        %v1830 = vsel %vm1828, %v1513, %v1829
        %1831 = vst [vmem:[%s628] sm:$0xf] %v1830
        %1832 = vst [vmem:[%s628 + $0x4] sm:$0xf] %v1522
        %v1833 = vld [vmem:[%s628 + $0x8] sm:$0x1]
        %v1834 = vsel %vm631, %v1523, %v1833
        %1835 = vst [vmem:[%s628 + $0x8] sm:$0x1] %v1834
        %v1836 = vld [vmem:[%s628 + $0xc] sm:$0xf]
        %v1837 = vsel %vm1828, %v1530, %v1836
        %1838 = vst [vmem:[%s628 + $0xc] sm:$0xf] %v1837
        %1839 = vst [vmem:[%s628 + $0x10] sm:$0xf] %v1539
        %v1840 = vld [vmem:[%s628 + $0x14] sm:$0x1]
        %v1841 = vsel %vm631, %v1540, %v1840
        %1842 = vst [vmem:[%s628 + $0x14] sm:$0x1] %v1841
        %v1843 = vld [vmem:[%s628 + $0x18] sm:$0xf]
        %v1844 = vsel %vm1828, %v1547, %v1843
        %1845 = vst [vmem:[%s628 + $0x18] sm:$0xf] %v1844
        %1846 = vst [vmem:[%s628 + $0x1c] sm:$0xf] %v1556
        %v1847 = vld [vmem:[%s628 + $0x20] sm:$0x1]
        %v1848 = vsel %vm631, %v1557, %v1847
        %1849 = vst [vmem:[%s628 + $0x20] sm:$0x1] %v1848
        %v1850 = vld [vmem:[%s628 + $0x24] sm:$0xf]
        %v1851 = vsel %vm1828, %v1564, %v1850
        %1852 = vst [vmem:[%s628 + $0x24] sm:$0xf] %v1851
        %1853 = vst [vmem:[%s628 + $0x28] sm:$0xf] %v1573
        %v1854 = vld [vmem:[%s628 + $0x2c] sm:$0x1]
        %v1855 = vsel %vm631, %v1574, %v1854
        %1856 = vst [vmem:[%s628 + $0x2c] sm:$0x1] %v1855
        %v1857 = vld [vmem:[%s628 + $0x30] sm:$0xf]
        %v1858 = vsel %vm1828, %v1581, %v1857
        %1859 = vst [vmem:[%s628 + $0x30] sm:$0xf] %v1858
        %1860 = vst [vmem:[%s628 + $0x34] sm:$0xf] %v1590
        %v1861 = vld [vmem:[%s628 + $0x38] sm:$0x1]
        %v1862 = vsel %vm631, %v1591, %v1861
        %1863 = vst [vmem:[%s628 + $0x38] sm:$0x1] %v1862
        %v1864 = vld [vmem:[%s628 + $0x3c] sm:$0xf]
        %v1865 = vsel %vm1828, %v1598, %v1864
        %1866 = vst [vmem:[%s628 + $0x3c] sm:$0xf] %v1865
        %1867 = vst [vmem:[%s628 + $0x40] sm:$0xf] %v1607
        %v1868 = vld [vmem:[%s628 + $0x44] sm:$0x1]
        %v1869 = vsel %vm631, %v1608, %v1868
        %1870 = vst [vmem:[%s628 + $0x44] sm:$0x1] %v1869
        %v1871 = vld [vmem:[%s628 + $0x48] sm:$0xf]
        %v1872 = vsel %vm1828, %v1615, %v1871
        %1873 = vst [vmem:[%s628 + $0x48] sm:$0xf] %v1872
        %1874 = vst [vmem:[%s628 + $0x4c] sm:$0xf] %v1624
        %v1875 = vld [vmem:[%s628 + $0x50] sm:$0x1]
        %v1876 = vsel %vm631, %v1625, %v1875
        %1877 = vst [vmem:[%s628 + $0x50] sm:$0x1] %v1876
        %v1878 = vld [vmem:[%s628 + $0x54] sm:$0xf]
        %v1879 = vsel %vm1828, %v1632, %v1878
        %1880 = vst [vmem:[%s628 + $0x54] sm:$0xf] %v1879
        %1881 = vst [vmem:[%s628 + $0x58] sm:$0xf] %v1641
        %v1882 = vld [vmem:[%s628 + $0x5c] sm:$0x1]
        %v1883 = vsel %vm631, %v1642, %v1882
        %1884 = vst [vmem:[%s628 + $0x5c] sm:$0x1] %v1883
        %v1885 = vld [vmem:[%s628 + $0x60] sm:$0xf]
        %v1886 = vsel %vm1828, %v1649, %v1885
        %1887 = vst [vmem:[%s628 + $0x60] sm:$0xf] %v1886
        %1888 = vst [vmem:[%s628 + $0x64] sm:$0xf] %v1658
        %v1889 = vld [vmem:[%s628 + $0x68] sm:$0x1]
        %v1890 = vsel %vm631, %v1659, %v1889
        %1891 = vst [vmem:[%s628 + $0x68] sm:$0x1] %v1890
        %v1892 = vld [vmem:[%s628 + $0x6c] sm:$0xf]
        %v1893 = vsel %vm1828, %v1666, %v1892
        %1894 = vst [vmem:[%s628 + $0x6c] sm:$0xf] %v1893
        %1895 = vst [vmem:[%s628 + $0x70] sm:$0xf] %v1675
        %v1896 = vld [vmem:[%s628 + $0x74] sm:$0x1]
        %v1897 = vsel %vm631, %v1676, %v1896
        %1898 = vst [vmem:[%s628 + $0x74] sm:$0x1] %v1897
        %v1899 = vld [vmem:[%s628 + $0x78] sm:$0xf]
        %v1900 = vsel %vm1828, %v1683, %v1899
        %1901 = vst [vmem:[%s628 + $0x78] sm:$0xf] %v1900
        %1902 = vst [vmem:[%s628 + $0x7c] sm:$0xf] %v1692
        %v1903 = vld [vmem:[%s628 + $0x80] sm:$0x1]
        %v1904 = vsel %vm631, %v1693, %v1903
        %1905 = vst [vmem:[%s628 + $0x80] sm:$0x1] %v1904
        %v1906 = vld [vmem:[%s628 + $0x84] sm:$0xf]
        %v1907 = vsel %vm1828, %v1700, %v1906
        %1908 = vst [vmem:[%s628 + $0x84] sm:$0xf] %v1907
        %1909 = vst [vmem:[%s628 + $0x88] sm:$0xf] %v1709
        %v1910 = vld [vmem:[%s628 + $0x8c] sm:$0x1]
        %v1911 = vsel %vm631, %v1710, %v1910
        %1912 = vst [vmem:[%s628 + $0x8c] sm:$0x1] %v1911
        %v1913 = vld [vmem:[%s628 + $0x90] sm:$0xf]
        %v1914 = vsel %vm1828, %v1717, %v1913
        %1915 = vst [vmem:[%s628 + $0x90] sm:$0xf] %v1914
        %1916 = vst [vmem:[%s628 + $0x94] sm:$0xf] %v1726
        %v1917 = vld [vmem:[%s628 + $0x98] sm:$0x1]
        %v1918 = vsel %vm631, %v1727, %v1917
        %1919 = vst [vmem:[%s628 + $0x98] sm:$0x1] %v1918
        %v1920 = vld [vmem:[%s628 + $0x9c] sm:$0xf]
        %v1921 = vsel %vm1828, %v1734, %v1920
        %1922 = vst [vmem:[%s628 + $0x9c] sm:$0xf] %v1921
        %1923 = vst [vmem:[%s628 + $0xa0] sm:$0xf] %v1743
        %v1924 = vld [vmem:[%s628 + $0xa4] sm:$0x1]
        %v1925 = vsel %vm631, %v1744, %v1924
        %1926 = vst [vmem:[%s628 + $0xa4] sm:$0x1] %v1925
        %v1927 = vld [vmem:[%s628 + $0xa8] sm:$0xf]
        %v1928 = vsel %vm1828, %v1751, %v1927
        %1929 = vst [vmem:[%s628 + $0xa8] sm:$0xf] %v1928
        %1930 = vst [vmem:[%s628 + $0xac] sm:$0xf] %v1760
        %v1931 = vld [vmem:[%s628 + $0xb0] sm:$0x1]
        %v1932 = vsel %vm631, %v1761, %v1931
        %1933 = vst [vmem:[%s628 + $0xb0] sm:$0x1] %v1932
        %v1934 = vld [vmem:[%s628 + $0xb4] sm:$0xf]
        %v1935 = vsel %vm1828, %v1768, %v1934
        %1936 = vst [vmem:[%s628 + $0xb4] sm:$0xf] %v1935
        %1937 = vst [vmem:[%s628 + $0xb8] sm:$0xf] %v1777
        %v1938 = vld [vmem:[%s628 + $0xbc] sm:$0x1]
        %v1939 = vsel %vm631, %v1778, %v1938
        %1940 = vst [vmem:[%s628 + $0xbc] sm:$0x1] %v1939
        %v1941 = vld [vmem:[#allocation14] sm:$0xf]
        %v1942 = vld [vmem:[#allocation14 + $0x4] sm:$0xf]
        %v1943 = vld [vmem:[#allocation14 + $0x8] sm:$0xf]
        %v1944 = vld [vmem:[#allocation14 + $0xc] sm:$0xf]
        %v1945 = vld [vmem:[#allocation14 + $0x10] sm:$0xf]
        %v1946 = vld [vmem:[#allocation14 + $0x14] sm:$0xf]
        %v1947 = vld [vmem:[#allocation14 + $0x18] sm:$0xf]
        %v1948 = vld [vmem:[#allocation14 + $0x1c] sm:$0xf]
        %v1949 = vld [vmem:[#allocation14 + $0x20] sm:$0xf]
        %v1950 = vld [vmem:[#allocation14 + $0x24] sm:$0xf]
        %v1951 = vld [vmem:[#allocation14 + $0x28] sm:$0xf]
        %v1952 = vld [vmem:[#allocation14 + $0x2c] sm:$0xf]
        %v1953 = vld [vmem:[#allocation14 + $0x30] sm:$0xf]
        %v1954 = vld [vmem:[#allocation14 + $0x34] sm:$0xf]
        %v1955 = vld [vmem:[#allocation14 + $0x38] sm:$0xf]
        %v1956 = vld [vmem:[#allocation14 + $0x3c] sm:$0xf]
        %v1957 = vld [vmem:[#allocation14 + $0x40] sm:$0xf]
        %v1958 = vld [vmem:[#allocation14 + $0x44] sm:$0xf]
        %v1959 = vld [vmem:[#allocation14 + $0x48] sm:$0xf]
        %v1960 = vld [vmem:[#allocation14 + $0x4c] sm:$0xf]
        %v1961 = vld [vmem:[#allocation14 + $0x50] sm:$0xf]
        %v1962 = vld [vmem:[#allocation14 + $0x54] sm:$0xf]
        %v1963 = vld [vmem:[#allocation14 + $0x58] sm:$0xf]
        %v1964 = vld [vmem:[#allocation14 + $0x5c] sm:$0xf]
        %v1965 = vld [vmem:[#allocation14 + $0x60] sm:$0xf]
        %v1966 = vld [vmem:[#allocation14 + $0x64] sm:$0xf]
        %v1967 = vld [vmem:[#allocation14 + $0x68] sm:$0xf]
        %v1968 = vld [vmem:[#allocation14 + $0x6c] sm:$0xf]
        %v1969 = vld [vmem:[#allocation14 + $0x70] sm:$0xf]
        %v1970 = vld [vmem:[#allocation14 + $0x74] sm:$0xf]
        %v1971 = vld [vmem:[#allocation14 + $0x78] sm:$0xf]
        %v1972 = vld [vmem:[#allocation14 + $0x7c] sm:$0xf]
        %v1973 = vld [vmem:[#allocation14 + $0x80] sm:$0xf]
        %v1974 = vld [vmem:[#allocation14 + $0x84] sm:$0xf]
        %v1975 = vld [vmem:[#allocation14 + $0x88] sm:$0xf]
        %v1976 = vld [vmem:[#allocation14 + $0x8c] sm:$0xf]
        %v1977 = vld [vmem:[#allocation14 + $0x90] sm:$0xf]
        %v1978 = vld [vmem:[#allocation14 + $0x94] sm:$0xf]
        %v1979 = vld [vmem:[#allocation14 + $0x98] sm:$0xf]
        %v1980 = vld [vmem:[#allocation14 + $0x9c] sm:$0xf]
        %v1981 = vld [vmem:[#allocation14 + $0xa0] sm:$0xf]
        %v1982 = vld [vmem:[#allocation14 + $0xa4] sm:$0xf]
        %v1983 = vld [vmem:[#allocation14 + $0xa8] sm:$0xf]
        %v1984 = vld [vmem:[#allocation14 + $0xac] sm:$0xf]
        %v1985 = vld [vmem:[#allocation14 + $0xb0] sm:$0xf]
        %v1986 = vld [vmem:[#allocation14 + $0xb4] sm:$0xf]
        %v1987 = vld [vmem:[#allocation14 + $0xb8] sm:$0xf]
        %v1988 = vld [vmem:[#allocation14 + $0xbc] sm:$0xf]
        %v1989 = vld [vmem:[#allocation14 + $0xc0] sm:$0xf]
        %v1990 = vld [vmem:[#allocation14 + $0xc4] sm:$0xf]
        %v1991 = vld [vmem:[#allocation14 + $0xc8] sm:$0xf]
        %v1992 = vld [vmem:[#allocation14 + $0xcc] sm:$0xf]
        %v1993 = vld [vmem:[#allocation14 + $0xd0] sm:$0xf]
        %v1994 = vld [vmem:[#allocation14 + $0xd4] sm:$0xf]
        %v1995 = vld [vmem:[#allocation14 + $0xd8] sm:$0xf]
        %v1996 = vld [vmem:[#allocation14 + $0xdc] sm:$0xf]
        %v1997 = vld [vmem:[#allocation14 + $0xe0] sm:$0xf]
        %v1998 = vld [vmem:[#allocation14 + $0xe4] sm:$0xf]
        %v1999 = vld [vmem:[#allocation14 + $0xe8] sm:$0xf]
        %v2000 = vld [vmem:[#allocation14 + $0xec] sm:$0xf]
        %v2001 = vld [vmem:[#allocation14 + $0xf0] sm:$0xf]
        %v2002 = vld [vmem:[#allocation14 + $0xf4] sm:$0xf]
        %v2003 = vld [vmem:[#allocation14 + $0xf8] sm:$0xf]
        %v2004 = vld [vmem:[#allocation14 + $0xfc] sm:$0xf]
        %v2005 = vld [vmem:[#allocation14 + $0x100] sm:$0xf]
        %v2006 = vld [vmem:[#allocation14 + $0x104] sm:$0xf]
        %v2007 = vld [vmem:[#allocation14 + $0x108] sm:$0xf]
        %v2008 = vld [vmem:[#allocation14 + $0x10c] sm:$0xf]
        %v2009 = vld [vmem:[#allocation14 + $0x110] sm:$0xf]
        %v2010 = vld [vmem:[#allocation14 + $0x114] sm:$0xf]
        %v2011 = vld [vmem:[#allocation14 + $0x118] sm:$0xf]
        %v2012 = vld [vmem:[#allocation14 + $0x11c] sm:$0xf]
        %v2013 = vld [vmem:[#allocation14 + $0x120] sm:$0xf]
        %v2014 = vld [vmem:[#allocation14 + $0x124] sm:$0xf]
        %v2015 = vld [vmem:[#allocation14 + $0x128] sm:$0xf]
        %v2016 = vld [vmem:[#allocation14 + $0x12c] sm:$0xf]
        %v2017 = vld [vmem:[#allocation14 + $0x130] sm:$0xf]
        %v2018 = vld [vmem:[#allocation14 + $0x134] sm:$0xf]
        %v2019 = vld [vmem:[#allocation14 + $0x138] sm:$0xf]
        %v2020 = vld [vmem:[#allocation14 + $0x13c] sm:$0xf]
        %v2021 = vld [vmem:[#allocation14 + $0x140] sm:$0xf]
        %v2022 = vld [vmem:[#allocation14 + $0x144] sm:$0xf]
        %v2023 = vld [vmem:[#allocation14 + $0x148] sm:$0xf]
        %v2024 = vld [vmem:[#allocation14 + $0x14c] sm:$0xf]
        %v2025 = vld [vmem:[#allocation14 + $0x150] sm:$0xf]
        %v2026 = vld [vmem:[#allocation14 + $0x154] sm:$0xf]
        %v2027 = vld [vmem:[#allocation14 + $0x158] sm:$0xf]
        %v2028 = vld [vmem:[#allocation14 + $0x15c] sm:$0xf]
        %v2029 = vld [vmem:[#allocation14 + $0x160] sm:$0xf]
        %v2030 = vld [vmem:[#allocation14 + $0x164] sm:$0xf]
        %v2031 = vld [vmem:[#allocation14 + $0x168] sm:$0xf]
        %v2032 = vld [vmem:[#allocation14 + $0x16c] sm:$0xf]
        %v2033 = vld [vmem:[#allocation14 + $0x170] sm:$0xf]
        %v2034 = vld [vmem:[#allocation14 + $0x174] sm:$0xf]
        %v2035 = vld [vmem:[#allocation14 + $0x178] sm:$0xf]
        %v2036 = vld [vmem:[#allocation14 + $0x17c] sm:$0xf]
        %v2037 = vld [vmem:[#allocation14 + $0x180] sm:$0xf]
        %v2038 = vld [vmem:[#allocation14 + $0x184] sm:$0xf]
        %v2039 = vld [vmem:[#allocation14 + $0x188] sm:$0xf]
        %v2040 = vld [vmem:[#allocation14 + $0x18c] sm:$0xf]
        %v2041 = vld [vmem:[#allocation14 + $0x190] sm:$0xf]
        %v2042 = vld [vmem:[#allocation14 + $0x194] sm:$0xf]
        %v2043 = vld [vmem:[#allocation14 + $0x198] sm:$0xf]
        %v2044 = vld [vmem:[#allocation14 + $0x19c] sm:$0xf]
        %v2045 = vld [vmem:[#allocation14 + $0x1a0] sm:$0xf]
        %v2046 = vld [vmem:[#allocation14 + $0x1a4] sm:$0xf]
        %v2047 = vld [vmem:[#allocation14 + $0x1a8] sm:$0xf]
        %v2048 = vld [vmem:[#allocation14 + $0x1ac] sm:$0xf]
        %v2049 = vld [vmem:[#allocation14 + $0x1b0] sm:$0xf]
        %v2050 = vld [vmem:[#allocation14 + $0x1b4] sm:$0xf]
        %v2051 = vld [vmem:[#allocation14 + $0x1b8] sm:$0xf]
        %v2052 = vld [vmem:[#allocation14 + $0x1bc] sm:$0xf]
        %v2053 = vld [vmem:[#allocation14 + $0x1c0] sm:$0xf]
        %v2054 = vld [vmem:[#allocation14 + $0x1c4] sm:$0xf]
        %v2055 = vld [vmem:[#allocation14 + $0x1c8] sm:$0xf]
        %v2056 = vld [vmem:[#allocation14 + $0x1cc] sm:$0xf]
        %v2057 = vld [vmem:[#allocation14 + $0x1d0] sm:$0xf]
        %v2058 = vld [vmem:[#allocation14 + $0x1d4] sm:$0xf]
        %v2059 = vld [vmem:[#allocation14 + $0x1d8] sm:$0xf]
        %v2060 = vld [vmem:[#allocation14 + $0x1dc] sm:$0xf]
        %v2061 = vld [vmem:[#allocation14 + $0x1e0] sm:$0xf]
        %v2062 = vld [vmem:[#allocation14 + $0x1e4] sm:$0xf]
        %v2063 = vld [vmem:[#allocation14 + $0x1e8] sm:$0xf]
        %v2064 = vld [vmem:[#allocation14 + $0x1ec] sm:$0xf]
        %v2065 = vld [vmem:[#allocation14 + $0x1f0] sm:$0xf]
        %v2066 = vld [vmem:[#allocation14 + $0x1f4] sm:$0xf]
        %v2067 = vld [vmem:[#allocation14 + $0x1f8] sm:$0xf]
        %v2068 = vld [vmem:[#allocation14 + $0x1fc] sm:$0xf]
        %v2069 = vld [vmem:[#allocation14 + $0x200] sm:$0xf]
        %v2070 = vld [vmem:[#allocation14 + $0x204] sm:$0xf]
        %v2071 = vld [vmem:[#allocation14 + $0x208] sm:$0xf]
        %v2072 = vld [vmem:[#allocation14 + $0x20c] sm:$0xf]
        %v2073 = vld [vmem:[#allocation14 + $0x210] sm:$0xf]
        %v2074 = vld [vmem:[#allocation14 + $0x214] sm:$0xf]
        %v2075 = vld [vmem:[#allocation14 + $0x218] sm:$0xf]
        %v2076 = vld [vmem:[#allocation14 + $0x21c] sm:$0xf]
        %v2077 = vld [vmem:[#allocation14 + $0x220] sm:$0xf]
        %v2078 = vld [vmem:[#allocation14 + $0x224] sm:$0xf]
        %v2079 = vld [vmem:[#allocation14 + $0x228] sm:$0xf]
        %v2080 = vld [vmem:[#allocation14 + $0x22c] sm:$0xf]
        %v2081 = vld [vmem:[#allocation14 + $0x230] sm:$0xf]
        %v2082 = vld [vmem:[#allocation14 + $0x234] sm:$0xf]
        %v2083 = vld [vmem:[#allocation14 + $0x238] sm:$0xf]
        %v2084 = vld [vmem:[#allocation14 + $0x23c] sm:$0xf]
        %v2085 = vld [vmem:[#allocation15] sm:$0x1]
        %v2086 = vld [vmem:[#allocation2] sm:$0xf]
        %v2087 = vld [vmem:[#allocation2 + $0x4] sm:$0xf]
        %v2088 = vld [vmem:[#allocation2 + $0xc] sm:$0xf]
        %v2089 = vld [vmem:[#allocation2 + $0x10] sm:$0xf]
        %v2090 = vld [vmem:[#allocation2 + $0x18] sm:$0xf]
        %v2091 = vld [vmem:[#allocation2 + $0x1c] sm:$0xf]
        %v2092 = vld [vmem:[#allocation2 + $0x24] sm:$0xf]
        %v2093 = vld [vmem:[#allocation2 + $0x28] sm:$0xf]
        %v2094 = vld [vmem:[#allocation2 + $0x30] sm:$0xf]
        %v2095 = vld [vmem:[#allocation2 + $0x34] sm:$0xf]
        %v2096 = vld [vmem:[#allocation2 + $0x3c] sm:$0xf]
        %v2097 = vld [vmem:[#allocation2 + $0x40] sm:$0xf]
        %v2098 = vld [vmem:[#allocation2 + $0x48] sm:$0xf]
        %v2099 = vld [vmem:[#allocation2 + $0x4c] sm:$0xf]
        %v2100 = vld [vmem:[#allocation2 + $0x54] sm:$0xf]
        %v2101 = vld [vmem:[#allocation2 + $0x58] sm:$0xf]
        %v2102 = vld [vmem:[#allocation2 + $0x60] sm:$0xf]
        %v2103 = vld [vmem:[#allocation2 + $0x64] sm:$0xf]
        %v2104 = vld [vmem:[#allocation2 + $0x6c] sm:$0xf]
        %v2105 = vld [vmem:[#allocation2 + $0x70] sm:$0xf]
        %v2106 = vld [vmem:[#allocation2 + $0x78] sm:$0xf]
        %v2107 = vld [vmem:[#allocation2 + $0x7c] sm:$0xf]
        %v2108 = vld [vmem:[#allocation2 + $0x84] sm:$0xf]
        %v2109 = vld [vmem:[#allocation2 + $0x88] sm:$0xf]
        %v2110 = vld [vmem:[#allocation2 + $0x90] sm:$0xf]
        %v2111 = vld [vmem:[#allocation2 + $0x94] sm:$0xf]
        %v2112 = vld [vmem:[#allocation2 + $0x9c] sm:$0xf]
        %v2113 = vld [vmem:[#allocation2 + $0xa0] sm:$0xf]
        %v2114 = vld [vmem:[#allocation2 + $0xa8] sm:$0xf]
        %v2115 = vld [vmem:[#allocation2 + $0xac] sm:$0xf]
        %v2116 = vld [vmem:[#allocation2 + $0xb4] sm:$0xf]
        %v2117 = vld [vmem:[#allocation2 + $0xb8] sm:$0xf]
        %v2118 = vld [vmem:[#allocation2 + $0x8] sm:$0x1]
        %v2119 = vld [vmem:[#allocation2 + $0x14] sm:$0x1]
        %v2120 = vld [vmem:[#allocation2 + $0x20] sm:$0x1]
        %v2121 = vld [vmem:[#allocation2 + $0x2c] sm:$0x1]
        %v2122 = vld [vmem:[#allocation2 + $0x38] sm:$0x1]
        %v2123 = vld [vmem:[#allocation2 + $0x44] sm:$0x1]
        %v2124 = vld [vmem:[#allocation2 + $0x50] sm:$0x1]
        %v2125 = vld [vmem:[#allocation2 + $0x5c] sm:$0x1]
        %v2126 = vld [vmem:[#allocation2 + $0x68] sm:$0x1]
        %v2127 = vld [vmem:[#allocation2 + $0x74] sm:$0x1]
        %v2128 = vld [vmem:[#allocation2 + $0x80] sm:$0x1]
        %v2129 = vld [vmem:[#allocation2 + $0x8c] sm:$0x1]
        %v2130 = vld [vmem:[#allocation2 + $0x98] sm:$0x1]
        %v2131 = vld [vmem:[#allocation2 + $0xa4] sm:$0x1]
        %v2132 = vld [vmem:[#allocation2 + $0xb0] sm:$0x1]
        %v2133 = vld [vmem:[#allocation2 + $0xbc] sm:$0x1]
        %vm2134 = vsmask.f32 3328
        %vm2135 = vsmask.f32 7440
        %vm2136 = vmor %vm2134, %vm2135
        %v2138 = vshrl.u32 %v2086, 16
        %v2140 = vrot.slane %v2138, 4
        %v2141 = vshll.u32 %v2086, 16
        %v2143 = vrot.slane %v2141, 5
        %v2144 = vor.u32 %v2140, %v2143
        %v2145 = vrot.slane %v2144, 4
        %v2147 = vshll.u32 %v2087, 16
        %v2149 = vrot.slane %v2147, 5
        %v2150 = vsel %vm2136, %v2145, %v2149
        %v2151 = vshrl.u32 %v2087, 16
        %v2153 = vrot.slane %v2151, 4
        %v2154 = vor.u32 %v2153, %v2149
        %v2155 = vrot.slane %v2154, 4
        %v2157 = vshll.u32 %v2118, 16
        %v2159 = vrot.slane %v2157, 5
        %v2160 = vsel %vm2136, %v2155, %v2159
        %v2162 = vshrl.u32 %v2088, 16
        %v2164 = vrot.slane %v2162, 4
        %v2165 = vshll.u32 %v2088, 16
        %v2167 = vrot.slane %v2165, 5
        %v2168 = vor.u32 %v2164, %v2167
        %v2169 = vrot.slane %v2168, 4
        %v2171 = vshll.u32 %v2089, 16
        %v2173 = vrot.slane %v2171, 5
        %v2174 = vsel %vm2136, %v2169, %v2173
        %v2175 = vshrl.u32 %v2089, 16
        %v2177 = vrot.slane %v2175, 4
        %v2178 = vor.u32 %v2177, %v2173
        %v2179 = vrot.slane %v2178, 4
        %v2181 = vshll.u32 %v2119, 16
        %v2183 = vrot.slane %v2181, 5
        %v2184 = vsel %vm2136, %v2179, %v2183
        %v2186 = vshrl.u32 %v2090, 16
        %v2188 = vrot.slane %v2186, 4
        %v2189 = vshll.u32 %v2090, 16
        %v2191 = vrot.slane %v2189, 5
        %v2192 = vor.u32 %v2188, %v2191
        %v2193 = vrot.slane %v2192, 4
        %v2195 = vshll.u32 %v2091, 16
        %v2197 = vrot.slane %v2195, 5
        %v2198 = vsel %vm2136, %v2193, %v2197
        %v2199 = vshrl.u32 %v2091, 16
        %v2201 = vrot.slane %v2199, 4
        %v2202 = vor.u32 %v2201, %v2197
        %v2203 = vrot.slane %v2202, 4
        %v2205 = vshll.u32 %v2120, 16
        %v2207 = vrot.slane %v2205, 5
        %v2208 = vsel %vm2136, %v2203, %v2207
        %v2210 = vshrl.u32 %v2092, 16
        %v2212 = vrot.slane %v2210, 4
        %v2213 = vshll.u32 %v2092, 16
        %v2215 = vrot.slane %v2213, 5
        %v2216 = vor.u32 %v2212, %v2215
        %v2217 = vrot.slane %v2216, 4
        %v2219 = vshll.u32 %v2093, 16
        %v2221 = vrot.slane %v2219, 5
        %v2222 = vsel %vm2136, %v2217, %v2221
        %v2223 = vshrl.u32 %v2093, 16
        %v2225 = vrot.slane %v2223, 4
        %v2226 = vor.u32 %v2225, %v2221
        %v2227 = vrot.slane %v2226, 4
        %v2229 = vshll.u32 %v2121, 16
        %v2231 = vrot.slane %v2229, 5
        %v2232 = vsel %vm2136, %v2227, %v2231
        %v2234 = vshrl.u32 %v2094, 16
        %v2236 = vrot.slane %v2234, 4
        %v2237 = vshll.u32 %v2094, 16
        %v2239 = vrot.slane %v2237, 5
        %v2240 = vor.u32 %v2236, %v2239
        %v2241 = vrot.slane %v2240, 4
        %v2243 = vshll.u32 %v2095, 16
        %v2245 = vrot.slane %v2243, 5
        %v2246 = vsel %vm2136, %v2241, %v2245
        %v2247 = vshrl.u32 %v2095, 16
        %v2249 = vrot.slane %v2247, 4
        %v2250 = vor.u32 %v2249, %v2245
        %v2251 = vrot.slane %v2250, 4
        %v2253 = vshll.u32 %v2122, 16
        %v2255 = vrot.slane %v2253, 5
        %v2256 = vsel %vm2136, %v2251, %v2255
        %v2258 = vshrl.u32 %v2096, 16
        %v2260 = vrot.slane %v2258, 4
        %v2261 = vshll.u32 %v2096, 16
        %v2263 = vrot.slane %v2261, 5
        %v2264 = vor.u32 %v2260, %v2263
        %v2265 = vrot.slane %v2264, 4
        %v2267 = vshll.u32 %v2097, 16
        %v2269 = vrot.slane %v2267, 5
        %v2270 = vsel %vm2136, %v2265, %v2269
        %v2271 = vshrl.u32 %v2097, 16
        %v2273 = vrot.slane %v2271, 4
        %v2274 = vor.u32 %v2273, %v2269
        %v2275 = vrot.slane %v2274, 4
        %v2277 = vshll.u32 %v2123, 16
        %v2279 = vrot.slane %v2277, 5
        %v2280 = vsel %vm2136, %v2275, %v2279
        %v2282 = vshrl.u32 %v2098, 16
        %v2284 = vrot.slane %v2282, 4
        %v2285 = vshll.u32 %v2098, 16
        %v2287 = vrot.slane %v2285, 5
        %v2288 = vor.u32 %v2284, %v2287
        %v2289 = vrot.slane %v2288, 4
        %v2291 = vshll.u32 %v2099, 16
        %v2293 = vrot.slane %v2291, 5
        %v2294 = vsel %vm2136, %v2289, %v2293
        %v2295 = vshrl.u32 %v2099, 16
        %v2297 = vrot.slane %v2295, 4
        %v2298 = vor.u32 %v2297, %v2293
        %v2299 = vrot.slane %v2298, 4
        %v2301 = vshll.u32 %v2124, 16
        %v2303 = vrot.slane %v2301, 5
        %v2304 = vsel %vm2136, %v2299, %v2303
        %v2306 = vshrl.u32 %v2100, 16
        %v2308 = vrot.slane %v2306, 4
        %v2309 = vshll.u32 %v2100, 16
        %v2311 = vrot.slane %v2309, 5
        %v2312 = vor.u32 %v2308, %v2311
        %v2313 = vrot.slane %v2312, 4
        %v2315 = vshll.u32 %v2101, 16
        %v2317 = vrot.slane %v2315, 5
        %v2318 = vsel %vm2136, %v2313, %v2317
        %v2319 = vshrl.u32 %v2101, 16
        %v2321 = vrot.slane %v2319, 4
        %v2322 = vor.u32 %v2321, %v2317
        %v2323 = vrot.slane %v2322, 4
        %v2325 = vshll.u32 %v2125, 16
        %v2327 = vrot.slane %v2325, 5
        %v2328 = vsel %vm2136, %v2323, %v2327
        %v2330 = vshrl.u32 %v2102, 16
        %v2332 = vrot.slane %v2330, 4
        %v2333 = vshll.u32 %v2102, 16
        %v2335 = vrot.slane %v2333, 5
        %v2336 = vor.u32 %v2332, %v2335
        %v2337 = vrot.slane %v2336, 4
        %v2339 = vshll.u32 %v2103, 16
        %v2341 = vrot.slane %v2339, 5
        %v2342 = vsel %vm2136, %v2337, %v2341
        %v2343 = vshrl.u32 %v2103, 16
        %v2345 = vrot.slane %v2343, 4
        %v2346 = vor.u32 %v2345, %v2341
        %v2347 = vrot.slane %v2346, 4
        %v2349 = vshll.u32 %v2126, 16
        %v2351 = vrot.slane %v2349, 5
        %v2352 = vsel %vm2136, %v2347, %v2351
        %v2354 = vshrl.u32 %v2104, 16
        %v2356 = vrot.slane %v2354, 4
        %v2357 = vshll.u32 %v2104, 16
        %v2359 = vrot.slane %v2357, 5
        %v2360 = vor.u32 %v2356, %v2359
        %v2361 = vrot.slane %v2360, 4
        %v2363 = vshll.u32 %v2105, 16
        %v2365 = vrot.slane %v2363, 5
        %v2366 = vsel %vm2136, %v2361, %v2365
        %v2367 = vshrl.u32 %v2105, 16
        %v2369 = vrot.slane %v2367, 4
        %v2370 = vor.u32 %v2369, %v2365
        %v2371 = vrot.slane %v2370, 4
        %v2373 = vshll.u32 %v2127, 16
        %v2375 = vrot.slane %v2373, 5
        %v2376 = vsel %vm2136, %v2371, %v2375
        %v2378 = vshrl.u32 %v2106, 16
        %v2380 = vrot.slane %v2378, 4
        %v2381 = vshll.u32 %v2106, 16
        %v2383 = vrot.slane %v2381, 5
        %v2384 = vor.u32 %v2380, %v2383
        %v2385 = vrot.slane %v2384, 4
        %v2387 = vshll.u32 %v2107, 16
        %v2389 = vrot.slane %v2387, 5
        %v2390 = vsel %vm2136, %v2385, %v2389
        %v2391 = vshrl.u32 %v2107, 16
        %v2393 = vrot.slane %v2391, 4
        %v2394 = vor.u32 %v2393, %v2389
        %v2395 = vrot.slane %v2394, 4
        %v2397 = vshll.u32 %v2128, 16
        %v2399 = vrot.slane %v2397, 5
        %v2400 = vsel %vm2136, %v2395, %v2399
        %v2402 = vshrl.u32 %v2108, 16
        %v2404 = vrot.slane %v2402, 4
        %v2405 = vshll.u32 %v2108, 16
        %v2407 = vrot.slane %v2405, 5
        %v2408 = vor.u32 %v2404, %v2407
        %v2409 = vrot.slane %v2408, 4
        %v2411 = vshll.u32 %v2109, 16
        %v2413 = vrot.slane %v2411, 5
        %v2414 = vsel %vm2136, %v2409, %v2413
        %v2415 = vshrl.u32 %v2109, 16
        %v2417 = vrot.slane %v2415, 4
        %v2418 = vor.u32 %v2417, %v2413
        %v2419 = vrot.slane %v2418, 4
        %v2421 = vshll.u32 %v2129, 16
        %v2423 = vrot.slane %v2421, 5
        %v2424 = vsel %vm2136, %v2419, %v2423
        %v2426 = vshrl.u32 %v2110, 16
        %v2428 = vrot.slane %v2426, 4
        %v2429 = vshll.u32 %v2110, 16
        %v2431 = vrot.slane %v2429, 5
        %v2432 = vor.u32 %v2428, %v2431
        %v2433 = vrot.slane %v2432, 4
        %v2435 = vshll.u32 %v2111, 16
        %v2437 = vrot.slane %v2435, 5
        %v2438 = vsel %vm2136, %v2433, %v2437
        %v2439 = vshrl.u32 %v2111, 16
        %v2441 = vrot.slane %v2439, 4
        %v2442 = vor.u32 %v2441, %v2437
        %v2443 = vrot.slane %v2442, 4
        %v2445 = vshll.u32 %v2130, 16
        %v2447 = vrot.slane %v2445, 5
        %v2448 = vsel %vm2136, %v2443, %v2447
        %v2450 = vshrl.u32 %v2112, 16
        %v2452 = vrot.slane %v2450, 4
        %v2453 = vshll.u32 %v2112, 16
        %v2455 = vrot.slane %v2453, 5
        %v2456 = vor.u32 %v2452, %v2455
        %v2457 = vrot.slane %v2456, 4
        %v2459 = vshll.u32 %v2113, 16
        %v2461 = vrot.slane %v2459, 5
        %v2462 = vsel %vm2136, %v2457, %v2461
        %v2463 = vshrl.u32 %v2113, 16
        %v2465 = vrot.slane %v2463, 4
        %v2466 = vor.u32 %v2465, %v2461
        %v2467 = vrot.slane %v2466, 4
        %v2469 = vshll.u32 %v2131, 16
        %v2471 = vrot.slane %v2469, 5
        %v2472 = vsel %vm2136, %v2467, %v2471
        %v2474 = vshrl.u32 %v2114, 16
        %v2476 = vrot.slane %v2474, 4
        %v2477 = vshll.u32 %v2114, 16
        %v2479 = vrot.slane %v2477, 5
        %v2480 = vor.u32 %v2476, %v2479
        %v2481 = vrot.slane %v2480, 4
        %v2483 = vshll.u32 %v2115, 16
        %v2485 = vrot.slane %v2483, 5
        %v2486 = vsel %vm2136, %v2481, %v2485
        %v2487 = vshrl.u32 %v2115, 16
        %v2489 = vrot.slane %v2487, 4
        %v2490 = vor.u32 %v2489, %v2485
        %v2491 = vrot.slane %v2490, 4
        %v2493 = vshll.u32 %v2132, 16
        %v2495 = vrot.slane %v2493, 5
        %v2496 = vsel %vm2136, %v2491, %v2495
        %v2498 = vshrl.u32 %v2116, 16
        %v2500 = vrot.slane %v2498, 4
        %v2501 = vshll.u32 %v2116, 16
        %v2503 = vrot.slane %v2501, 5
        %v2504 = vor.u32 %v2500, %v2503
        %v2505 = vrot.slane %v2504, 4
        %v2507 = vshll.u32 %v2117, 16
        %v2509 = vrot.slane %v2507, 5
        %v2510 = vsel %vm2136, %v2505, %v2509
        %v2511 = vshrl.u32 %v2117, 16
        %v2513 = vrot.slane %v2511, 4
        %v2514 = vor.u32 %v2513, %v2509
        %v2515 = vrot.slane %v2514, 4
        %v2517 = vshll.u32 %v2133, 16
        %v2519 = vrot.slane %v2517, 5
        %v2520 = vsel %vm2136, %v2515, %v2519
        %v2521 = vld [vmem:[#allocation2] sm:$0xe]
        %v2522 = vld [vmem:[#allocation2 + $0xc] sm:$0xe]
        %v2523 = vld [vmem:[#allocation2 + $0x18] sm:$0xe]
        %v2524 = vld [vmem:[#allocation2 + $0x24] sm:$0xe]
        %v2525 = vld [vmem:[#allocation2 + $0x30] sm:$0xe]
        %v2526 = vld [vmem:[#allocation2 + $0x3c] sm:$0xe]
        %v2527 = vld [vmem:[#allocation2 + $0x48] sm:$0xe]
        %v2528 = vld [vmem:[#allocation2 + $0x54] sm:$0xe]
        %v2529 = vld [vmem:[#allocation2 + $0x60] sm:$0xe]
        %v2530 = vld [vmem:[#allocation2 + $0x6c] sm:$0xe]
        %v2531 = vld [vmem:[#allocation2 + $0x78] sm:$0xe]
        %v2532 = vld [vmem:[#allocation2 + $0x84] sm:$0xe]
        %v2533 = vld [vmem:[#allocation2 + $0x90] sm:$0xe]
        %v2534 = vld [vmem:[#allocation2 + $0x9c] sm:$0xe]
        %v2535 = vld [vmem:[#allocation2 + $0xa8] sm:$0xe]
        %v2536 = vld [vmem:[#allocation2 + $0xb4] sm:$0xe]
        %vm2585 = vcmask 1042432
        %vm2586 = vcmask 1046532
        %vm2587 = vmor %vm2585, %vm2586
        %v2588 = vrot.slane %v2521, 5
        %v2589 = vrot.slane %v2588, 4
        %v2590 = vrot.slane %v2087, 5
        %v2591 = vsel %vm2587, %v2589, %v2590
        %v2592 = vrot.slane %v2590, 4
        %v2593 = vrot.slane %v2118, 5
        %v2594 = vsel %vm2587, %v2592, %v2593
        %v2595 = vrot.slane %v2522, 5
        %v2596 = vrot.slane %v2595, 4
        %v2597 = vrot.slane %v2089, 5
        %v2598 = vsel %vm2587, %v2596, %v2597
        %v2599 = vrot.slane %v2597, 4
        %v2600 = vrot.slane %v2119, 5
        %v2601 = vsel %vm2587, %v2599, %v2600
        %v2602 = vrot.slane %v2523, 5
        %v2603 = vrot.slane %v2602, 4
        %v2604 = vrot.slane %v2091, 5
        %v2605 = vsel %vm2587, %v2603, %v2604
        %v2606 = vrot.slane %v2604, 4
        %v2607 = vrot.slane %v2120, 5
        %v2608 = vsel %vm2587, %v2606, %v2607
        %v2609 = vrot.slane %v2524, 5
        %v2610 = vrot.slane %v2609, 4
        %v2611 = vrot.slane %v2093, 5
        %v2612 = vsel %vm2587, %v2610, %v2611
        %v2613 = vrot.slane %v2611, 4
        %v2614 = vrot.slane %v2121, 5
        %v2615 = vsel %vm2587, %v2613, %v2614
        %v2616 = vrot.slane %v2525, 5
        %v2617 = vrot.slane %v2616, 4
        %v2618 = vrot.slane %v2095, 5
        %v2619 = vsel %vm2587, %v2617, %v2618
        %v2620 = vrot.slane %v2618, 4
        %v2621 = vrot.slane %v2122, 5
        %v2622 = vsel %vm2587, %v2620, %v2621
        %v2623 = vrot.slane %v2526, 5
        %v2624 = vrot.slane %v2623, 4
        %v2625 = vrot.slane %v2097, 5
        %v2626 = vsel %vm2587, %v2624, %v2625
        %v2627 = vrot.slane %v2625, 4
        %v2628 = vrot.slane %v2123, 5
        %v2629 = vsel %vm2587, %v2627, %v2628
        %v2630 = vrot.slane %v2527, 5
        %v2631 = vrot.slane %v2630, 4
        %v2632 = vrot.slane %v2099, 5
        %v2633 = vsel %vm2587, %v2631, %v2632
        %v2634 = vrot.slane %v2632, 4
        %v2635 = vrot.slane %v2124, 5
        %v2636 = vsel %vm2587, %v2634, %v2635
        %v2637 = vrot.slane %v2528, 5
        %v2638 = vrot.slane %v2637, 4
        %v2639 = vrot.slane %v2101, 5
        %v2640 = vsel %vm2587, %v2638, %v2639
        %v2641 = vrot.slane %v2639, 4
        %v2642 = vrot.slane %v2125, 5
        %v2643 = vsel %vm2587, %v2641, %v2642
        %v2644 = vrot.slane %v2529, 5
        %v2645 = vrot.slane %v2644, 4
        %v2646 = vrot.slane %v2103, 5
        %v2647 = vsel %vm2587, %v2645, %v2646
        %v2648 = vrot.slane %v2646, 4
        %v2649 = vrot.slane %v2126, 5
        %v2650 = vsel %vm2587, %v2648, %v2649
        %v2651 = vrot.slane %v2530, 5
        %v2652 = vrot.slane %v2651, 4
        %v2653 = vrot.slane %v2105, 5
        %v2654 = vsel %vm2587, %v2652, %v2653
        %v2655 = vrot.slane %v2653, 4
        %v2656 = vrot.slane %v2127, 5
        %v2657 = vsel %vm2587, %v2655, %v2656
        %v2658 = vrot.slane %v2531, 5
        %v2659 = vrot.slane %v2658, 4
        %v2660 = vrot.slane %v2107, 5
        %v2661 = vsel %vm2587, %v2659, %v2660
        %v2662 = vrot.slane %v2660, 4
        %v2663 = vrot.slane %v2128, 5
        %v2664 = vsel %vm2587, %v2662, %v2663
        %v2665 = vrot.slane %v2532, 5
        %v2666 = vrot.slane %v2665, 4
        %v2667 = vrot.slane %v2109, 5
        %v2668 = vsel %vm2587, %v2666, %v2667
        %v2669 = vrot.slane %v2667, 4
        %v2670 = vrot.slane %v2129, 5
        %v2671 = vsel %vm2587, %v2669, %v2670
        %v2672 = vrot.slane %v2533, 5
        %v2673 = vrot.slane %v2672, 4
        %v2674 = vrot.slane %v2111, 5
        %v2675 = vsel %vm2587, %v2673, %v2674
        %v2676 = vrot.slane %v2674, 4
        %v2677 = vrot.slane %v2130, 5
        %v2678 = vsel %vm2587, %v2676, %v2677
        %v2679 = vrot.slane %v2534, 5
        %v2680 = vrot.slane %v2679, 4
        %v2681 = vrot.slane %v2113, 5
        %v2682 = vsel %vm2587, %v2680, %v2681
        %v2683 = vrot.slane %v2681, 4
        %v2684 = vrot.slane %v2131, 5
        %v2685 = vsel %vm2587, %v2683, %v2684
        %v2686 = vrot.slane %v2535, 5
        %v2687 = vrot.slane %v2686, 4
        %v2688 = vrot.slane %v2115, 5
        %v2689 = vsel %vm2587, %v2687, %v2688
        %v2690 = vrot.slane %v2688, 4
        %v2691 = vrot.slane %v2132, 5
        %v2692 = vsel %vm2587, %v2690, %v2691
        %v2693 = vrot.slane %v2536, 5
        %v2694 = vrot.slane %v2693, 4
        %v2695 = vrot.slane %v2117, 5
        %v2696 = vsel %vm2587, %v2694, %v2695
        %v2697 = vrot.slane %v2695, 4
        %v2698 = vrot.slane %v2133, 5
        %v2699 = vsel %vm2587, %v2697, %v2698
        %v2700 = vld [vmem:[%s628] sm:$0xf]
        %v2701 = vld [vmem:[%s628 + $0x4] sm:$0xf]
        %v2702 = vld [vmem:[%s628 + $0xc] sm:$0xf]
        %v2703 = vld [vmem:[%s628 + $0x10] sm:$0xf]
        %v2704 = vld [vmem:[%s628 + $0x18] sm:$0xf]
        %v2705 = vld [vmem:[%s628 + $0x1c] sm:$0xf]
        %v2706 = vld [vmem:[%s628 + $0x24] sm:$0xf]
        %v2707 = vld [vmem:[%s628 + $0x28] sm:$0xf]
        %v2708 = vld [vmem:[%s628 + $0x30] sm:$0xf]
        %v2709 = vld [vmem:[%s628 + $0x34] sm:$0xf]
        %v2710 = vld [vmem:[%s628 + $0x3c] sm:$0xf]
        %v2711 = vld [vmem:[%s628 + $0x40] sm:$0xf]
        %v2712 = vld [vmem:[%s628 + $0x48] sm:$0xf]
        %v2713 = vld [vmem:[%s628 + $0x4c] sm:$0xf]
        %v2714 = vld [vmem:[%s628 + $0x54] sm:$0xf]
        %v2715 = vld [vmem:[%s628 + $0x58] sm:$0xf]
        %v2716 = vld [vmem:[%s628 + $0x60] sm:$0xf]
        %v2717 = vld [vmem:[%s628 + $0x64] sm:$0xf]
        %v2718 = vld [vmem:[%s628 + $0x6c] sm:$0xf]
        %v2719 = vld [vmem:[%s628 + $0x70] sm:$0xf]
        %v2720 = vld [vmem:[%s628 + $0x78] sm:$0xf]
        %v2721 = vld [vmem:[%s628 + $0x7c] sm:$0xf]
        %v2722 = vld [vmem:[%s628 + $0x84] sm:$0xf]
        %v2723 = vld [vmem:[%s628 + $0x88] sm:$0xf]
        %v2724 = vld [vmem:[%s628 + $0x90] sm:$0xf]
        %v2725 = vld [vmem:[%s628 + $0x94] sm:$0xf]
        %v2726 = vld [vmem:[%s628 + $0x9c] sm:$0xf]
        %v2727 = vld [vmem:[%s628 + $0xa0] sm:$0xf]
        %v2728 = vld [vmem:[%s628 + $0xa8] sm:$0xf]
        %v2729 = vld [vmem:[%s628 + $0xac] sm:$0xf]
        %v2730 = vld [vmem:[%s628 + $0xb4] sm:$0xf]
        %v2731 = vld [vmem:[%s628 + $0xb8] sm:$0xf]
        %v2732 = vld [vmem:[%s628 + $0x8] sm:$0x1]
        %v2733 = vld [vmem:[%s628 + $0x14] sm:$0x1]
        %v2734 = vld [vmem:[%s628 + $0x20] sm:$0x1]
        %v2735 = vld [vmem:[%s628 + $0x2c] sm:$0x1]
        %v2736 = vld [vmem:[%s628 + $0x38] sm:$0x1]
        %v2737 = vld [vmem:[%s628 + $0x44] sm:$0x1]
        %v2738 = vld [vmem:[%s628 + $0x50] sm:$0x1]
        %v2739 = vld [vmem:[%s628 + $0x5c] sm:$0x1]
        %v2740 = vld [vmem:[%s628 + $0x68] sm:$0x1]
        %v2741 = vld [vmem:[%s628 + $0x74] sm:$0x1]
        %v2742 = vld [vmem:[%s628 + $0x80] sm:$0x1]
        %v2743 = vld [vmem:[%s628 + $0x8c] sm:$0x1]
        %v2744 = vld [vmem:[%s628 + $0x98] sm:$0x1]
        %v2745 = vld [vmem:[%s628 + $0xa4] sm:$0x1]
        %v2746 = vld [vmem:[%s628 + $0xb0] sm:$0x1]
        %v2747 = vld [vmem:[%s628 + $0xbc] sm:$0x1]
        %v2749 = vshrl.u32 %v2700, 16
        %v2751 = vrot.slane %v2749, 4
        %v2752 = vshll.u32 %v2700, 16
        %v2754 = vrot.slane %v2752, 5
        %v2755 = vor.u32 %v2751, %v2754
        %v2756 = vrot.slane %v2755, 4
        %v2758 = vshll.u32 %v2701, 16
        %v2760 = vrot.slane %v2758, 5
        %v2761 = vsel %vm2136, %v2756, %v2760
        %v2762 = vshrl.u32 %v2701, 16
        %v2764 = vrot.slane %v2762, 4
        %v2765 = vor.u32 %v2764, %v2760
        %v2766 = vrot.slane %v2765, 4
        %v2768 = vshll.u32 %v2732, 16
        %v2770 = vrot.slane %v2768, 5
        %v2771 = vsel %vm2136, %v2766, %v2770
        %v2773 = vshrl.u32 %v2702, 16
        %v2775 = vrot.slane %v2773, 4
        %v2776 = vshll.u32 %v2702, 16
        %v2778 = vrot.slane %v2776, 5
        %v2779 = vor.u32 %v2775, %v2778
        %v2780 = vrot.slane %v2779, 4
        %v2782 = vshll.u32 %v2703, 16
        %v2784 = vrot.slane %v2782, 5
        %v2785 = vsel %vm2136, %v2780, %v2784
        %v2786 = vshrl.u32 %v2703, 16
        %v2788 = vrot.slane %v2786, 4
        %v2789 = vor.u32 %v2788, %v2784
        %v2790 = vrot.slane %v2789, 4
        %v2792 = vshll.u32 %v2733, 16
        %v2794 = vrot.slane %v2792, 5
        %v2795 = vsel %vm2136, %v2790, %v2794
        %v2797 = vshrl.u32 %v2704, 16
        %v2799 = vrot.slane %v2797, 4
        %v2800 = vshll.u32 %v2704, 16
        %v2802 = vrot.slane %v2800, 5
        %v2803 = vor.u32 %v2799, %v2802
        %v2804 = vrot.slane %v2803, 4
        %v2806 = vshll.u32 %v2705, 16
        %v2808 = vrot.slane %v2806, 5
        %v2809 = vsel %vm2136, %v2804, %v2808
        %v2810 = vshrl.u32 %v2705, 16
        %v2812 = vrot.slane %v2810, 4
        %v2813 = vor.u32 %v2812, %v2808
        %v2814 = vrot.slane %v2813, 4
        %v2816 = vshll.u32 %v2734, 16
        %v2818 = vrot.slane %v2816, 5
        %v2819 = vsel %vm2136, %v2814, %v2818
        %v2821 = vshrl.u32 %v2706, 16
        %v2823 = vrot.slane %v2821, 4
        %v2824 = vshll.u32 %v2706, 16
        %v2826 = vrot.slane %v2824, 5
        %v2827 = vor.u32 %v2823, %v2826
        %v2828 = vrot.slane %v2827, 4
        %v2830 = vshll.u32 %v2707, 16
        %v2832 = vrot.slane %v2830, 5
        %v2833 = vsel %vm2136, %v2828, %v2832
        %v2834 = vshrl.u32 %v2707, 16
        %v2836 = vrot.slane %v2834, 4
        %v2837 = vor.u32 %v2836, %v2832
        %v2838 = vrot.slane %v2837, 4
        %v2840 = vshll.u32 %v2735, 16
        %v2842 = vrot.slane %v2840, 5
        %v2843 = vsel %vm2136, %v2838, %v2842
        %v2845 = vshrl.u32 %v2708, 16
        %v2847 = vrot.slane %v2845, 4
        %v2848 = vshll.u32 %v2708, 16
        %v2850 = vrot.slane %v2848, 5
        %v2851 = vor.u32 %v2847, %v2850
        %v2852 = vrot.slane %v2851, 4
        %v2854 = vshll.u32 %v2709, 16
        %v2856 = vrot.slane %v2854, 5
        %v2857 = vsel %vm2136, %v2852, %v2856
        %v2858 = vshrl.u32 %v2709, 16
        %v2860 = vrot.slane %v2858, 4
        %v2861 = vor.u32 %v2860, %v2856
        %v2862 = vrot.slane %v2861, 4
        %v2864 = vshll.u32 %v2736, 16
        %v2866 = vrot.slane %v2864, 5
        %v2867 = vsel %vm2136, %v2862, %v2866
        %v2869 = vshrl.u32 %v2710, 16
        %v2871 = vrot.slane %v2869, 4
        %v2872 = vshll.u32 %v2710, 16
        %v2874 = vrot.slane %v2872, 5
        %v2875 = vor.u32 %v2871, %v2874
        %v2876 = vrot.slane %v2875, 4
        %v2878 = vshll.u32 %v2711, 16
        %v2880 = vrot.slane %v2878, 5
        %v2881 = vsel %vm2136, %v2876, %v2880
        %v2882 = vshrl.u32 %v2711, 16
        %v2884 = vrot.slane %v2882, 4
        %v2885 = vor.u32 %v2884, %v2880
        %v2886 = vrot.slane %v2885, 4
        %v2888 = vshll.u32 %v2737, 16
        %v2890 = vrot.slane %v2888, 5
        %v2891 = vsel %vm2136, %v2886, %v2890
        %v2893 = vshrl.u32 %v2712, 16
        %v2895 = vrot.slane %v2893, 4
        %v2896 = vshll.u32 %v2712, 16
        %v2898 = vrot.slane %v2896, 5
        %v2899 = vor.u32 %v2895, %v2898
        %v2900 = vrot.slane %v2899, 4
        %v2902 = vshll.u32 %v2713, 16
        %v2904 = vrot.slane %v2902, 5
        %v2905 = vsel %vm2136, %v2900, %v2904
        %v2906 = vshrl.u32 %v2713, 16
        %v2908 = vrot.slane %v2906, 4
        %v2909 = vor.u32 %v2908, %v2904
        %v2910 = vrot.slane %v2909, 4
        %v2912 = vshll.u32 %v2738, 16
        %v2914 = vrot.slane %v2912, 5
        %v2915 = vsel %vm2136, %v2910, %v2914
        %v2917 = vshrl.u32 %v2714, 16
        %v2919 = vrot.slane %v2917, 4
        %v2920 = vshll.u32 %v2714, 16
        %v2922 = vrot.slane %v2920, 5
        %v2923 = vor.u32 %v2919, %v2922
        %v2924 = vrot.slane %v2923, 4
        %v2926 = vshll.u32 %v2715, 16
        %v2928 = vrot.slane %v2926, 5
        %v2929 = vsel %vm2136, %v2924, %v2928
        %v2930 = vshrl.u32 %v2715, 16
        %v2932 = vrot.slane %v2930, 4
        %v2933 = vor.u32 %v2932, %v2928
        %v2934 = vrot.slane %v2933, 4
        %v2936 = vshll.u32 %v2739, 16
        %v2938 = vrot.slane %v2936, 5
        %v2939 = vsel %vm2136, %v2934, %v2938
        %v2941 = vshrl.u32 %v2716, 16
        %v2943 = vrot.slane %v2941, 4
        %v2944 = vshll.u32 %v2716, 16
        %v2946 = vrot.slane %v2944, 5
        %v2947 = vor.u32 %v2943, %v2946
        %v2948 = vrot.slane %v2947, 4
        %v2950 = vshll.u32 %v2717, 16
        %v2952 = vrot.slane %v2950, 5
        %v2953 = vsel %vm2136, %v2948, %v2952
        %v2954 = vshrl.u32 %v2717, 16
        %v2956 = vrot.slane %v2954, 4
        %v2957 = vor.u32 %v2956, %v2952
        %v2958 = vrot.slane %v2957, 4
        %v2960 = vshll.u32 %v2740, 16
        %v2962 = vrot.slane %v2960, 5
        %v2963 = vsel %vm2136, %v2958, %v2962
        %v2965 = vshrl.u32 %v2718, 16
        %v2967 = vrot.slane %v2965, 4
        %v2968 = vshll.u32 %v2718, 16
        %v2970 = vrot.slane %v2968, 5
        %v2971 = vor.u32 %v2967, %v2970
        %v2972 = vrot.slane %v2971, 4
        %v2974 = vshll.u32 %v2719, 16
        %v2976 = vrot.slane %v2974, 5
        %v2977 = vsel %vm2136, %v2972, %v2976
        %v2978 = vshrl.u32 %v2719, 16
        %v2980 = vrot.slane %v2978, 4
        %v2981 = vor.u32 %v2980, %v2976
        %v2982 = vrot.slane %v2981, 4
        %v2984 = vshll.u32 %v2741, 16
        %v2986 = vrot.slane %v2984, 5
        %v2987 = vsel %vm2136, %v2982, %v2986
        %v2989 = vshrl.u32 %v2720, 16
        %v2991 = vrot.slane %v2989, 4
        %v2992 = vshll.u32 %v2720, 16
        %v2994 = vrot.slane %v2992, 5
        %v2995 = vor.u32 %v2991, %v2994
        %v2996 = vrot.slane %v2995, 4
        %v2998 = vshll.u32 %v2721, 16
        %v3000 = vrot.slane %v2998, 5
        %v3001 = vsel %vm2136, %v2996, %v3000
        %v3002 = vshrl.u32 %v2721, 16
        %v3004 = vrot.slane %v3002, 4
        %v3005 = vor.u32 %v3004, %v3000
        %v3006 = vrot.slane %v3005, 4
        %v3008 = vshll.u32 %v2742, 16
        %v3010 = vrot.slane %v3008, 5
        %v3011 = vsel %vm2136, %v3006, %v3010
        %v3013 = vshrl.u32 %v2722, 16
        %v3015 = vrot.slane %v3013, 4
        %v3016 = vshll.u32 %v2722, 16
        %v3018 = vrot.slane %v3016, 5
        %v3019 = vor.u32 %v3015, %v3018
        %v3020 = vrot.slane %v3019, 4
        %v3022 = vshll.u32 %v2723, 16
        %v3024 = vrot.slane %v3022, 5
        %v3025 = vsel %vm2136, %v3020, %v3024
        %v3026 = vshrl.u32 %v2723, 16
        %v3028 = vrot.slane %v3026, 4
        %v3029 = vor.u32 %v3028, %v3024
        %v3030 = vrot.slane %v3029, 4
        %v3032 = vshll.u32 %v2743, 16
        %v3034 = vrot.slane %v3032, 5
        %v3035 = vsel %vm2136, %v3030, %v3034
        %v3037 = vshrl.u32 %v2724, 16
        %v3039 = vrot.slane %v3037, 4
        %v3040 = vshll.u32 %v2724, 16
        %v3042 = vrot.slane %v3040, 5
        %v3043 = vor.u32 %v3039, %v3042
        %v3044 = vrot.slane %v3043, 4
        %v3046 = vshll.u32 %v2725, 16
        %v3048 = vrot.slane %v3046, 5
        %v3049 = vsel %vm2136, %v3044, %v3048
        %v3050 = vshrl.u32 %v2725, 16
        %v3052 = vrot.slane %v3050, 4
        %v3053 = vor.u32 %v3052, %v3048
        %v3054 = vrot.slane %v3053, 4
        %v3056 = vshll.u32 %v2744, 16
        %v3058 = vrot.slane %v3056, 5
        %v3059 = vsel %vm2136, %v3054, %v3058
        %v3061 = vshrl.u32 %v2726, 16
        %v3063 = vrot.slane %v3061, 4
        %v3064 = vshll.u32 %v2726, 16
        %v3066 = vrot.slane %v3064, 5
        %v3067 = vor.u32 %v3063, %v3066
        %v3068 = vrot.slane %v3067, 4
        %v3070 = vshll.u32 %v2727, 16
        %v3072 = vrot.slane %v3070, 5
        %v3073 = vsel %vm2136, %v3068, %v3072
        %v3074 = vshrl.u32 %v2727, 16
        %v3076 = vrot.slane %v3074, 4
        %v3077 = vor.u32 %v3076, %v3072
        %v3078 = vrot.slane %v3077, 4
        %v3080 = vshll.u32 %v2745, 16
        %v3082 = vrot.slane %v3080, 5
        %v3083 = vsel %vm2136, %v3078, %v3082
        %v3085 = vshrl.u32 %v2728, 16
        %v3087 = vrot.slane %v3085, 4
        %v3088 = vshll.u32 %v2728, 16
        %v3090 = vrot.slane %v3088, 5
        %v3091 = vor.u32 %v3087, %v3090
        %v3092 = vrot.slane %v3091, 4
        %v3094 = vshll.u32 %v2729, 16
        %v3096 = vrot.slane %v3094, 5
        %v3097 = vsel %vm2136, %v3092, %v3096
        %v3098 = vshrl.u32 %v2729, 16
        %v3100 = vrot.slane %v3098, 4
        %v3101 = vor.u32 %v3100, %v3096
        %v3102 = vrot.slane %v3101, 4
        %v3104 = vshll.u32 %v2746, 16
        %v3106 = vrot.slane %v3104, 5
        %v3107 = vsel %vm2136, %v3102, %v3106
        %v3109 = vshrl.u32 %v2730, 16
        %v3111 = vrot.slane %v3109, 4
        %v3112 = vshll.u32 %v2730, 16
        %v3114 = vrot.slane %v3112, 5
        %v3115 = vor.u32 %v3111, %v3114
        %v3116 = vrot.slane %v3115, 4
        %v3118 = vshll.u32 %v2731, 16
        %v3120 = vrot.slane %v3118, 5
        %v3121 = vsel %vm2136, %v3116, %v3120
        %v3122 = vshrl.u32 %v2731, 16
        %v3124 = vrot.slane %v3122, 4
        %v3125 = vor.u32 %v3124, %v3120
        %v3126 = vrot.slane %v3125, 4
        %v3128 = vshll.u32 %v2747, 16
        %v3130 = vrot.slane %v3128, 5
        %v3131 = vsel %vm2136, %v3126, %v3130
        %v3132 = vld [vmem:[%s628] sm:$0xe]
        %v3133 = vld [vmem:[%s628 + $0xc] sm:$0xe]
        %v3134 = vld [vmem:[%s628 + $0x18] sm:$0xe]
        %v3135 = vld [vmem:[%s628 + $0x24] sm:$0xe]
        %v3136 = vld [vmem:[%s628 + $0x30] sm:$0xe]
        %v3137 = vld [vmem:[%s628 + $0x3c] sm:$0xe]
        %v3138 = vld [vmem:[%s628 + $0x48] sm:$0xe]
        %v3139 = vld [vmem:[%s628 + $0x54] sm:$0xe]
        %v3140 = vld [vmem:[%s628 + $0x60] sm:$0xe]
        %v3141 = vld [vmem:[%s628 + $0x6c] sm:$0xe]
        %v3142 = vld [vmem:[%s628 + $0x78] sm:$0xe]
        %v3143 = vld [vmem:[%s628 + $0x84] sm:$0xe]
        %v3144 = vld [vmem:[%s628 + $0x90] sm:$0xe]
        %v3145 = vld [vmem:[%s628 + $0x9c] sm:$0xe]
        %v3146 = vld [vmem:[%s628 + $0xa8] sm:$0xe]
        %v3147 = vld [vmem:[%s628 + $0xb4] sm:$0xe]
        %v3196 = vrot.slane %v3132, 5
        %v3197 = vrot.slane %v3196, 4
        %v3198 = vrot.slane %v2701, 5
        %v3199 = vsel %vm2587, %v3197, %v3198
        %v3200 = vrot.slane %v3198, 4
        %v3201 = vrot.slane %v2732, 5
        %v3202 = vsel %vm2587, %v3200, %v3201
        %v3203 = vrot.slane %v3133, 5
        %v3204 = vrot.slane %v3203, 4
        %v3205 = vrot.slane %v2703, 5
        %v3206 = vsel %vm2587, %v3204, %v3205
        %v3207 = vrot.slane %v3205, 4
        %v3208 = vrot.slane %v2733, 5
        %v3209 = vsel %vm2587, %v3207, %v3208
        %v3210 = vrot.slane %v3134, 5
        %v3211 = vrot.slane %v3210, 4
        %v3212 = vrot.slane %v2705, 5
        %v3213 = vsel %vm2587, %v3211, %v3212
        %v3214 = vrot.slane %v3212, 4
        %v3215 = vrot.slane %v2734, 5
        %v3216 = vsel %vm2587, %v3214, %v3215
        %v3217 = vrot.slane %v3135, 5
        %v3218 = vrot.slane %v3217, 4
        %v3219 = vrot.slane %v2707, 5
        %v3220 = vsel %vm2587, %v3218, %v3219
        %v3221 = vrot.slane %v3219, 4
        %v3222 = vrot.slane %v2735, 5
        %v3223 = vsel %vm2587, %v3221, %v3222
        %v3224 = vrot.slane %v3136, 5
        %v3225 = vrot.slane %v3224, 4
        %v3226 = vrot.slane %v2709, 5
        %v3227 = vsel %vm2587, %v3225, %v3226
        %v3228 = vrot.slane %v3226, 4
        %v3229 = vrot.slane %v2736, 5
        %v3230 = vsel %vm2587, %v3228, %v3229
        %v3231 = vrot.slane %v3137, 5
        %v3232 = vrot.slane %v3231, 4
        %v3233 = vrot.slane %v2711, 5
        %v3234 = vsel %vm2587, %v3232, %v3233
        %v3235 = vrot.slane %v3233, 4
        %v3236 = vrot.slane %v2737, 5
        %v3237 = vsel %vm2587, %v3235, %v3236
        %v3238 = vrot.slane %v3138, 5
        %v3239 = vrot.slane %v3238, 4
        %v3240 = vrot.slane %v2713, 5
        %v3241 = vsel %vm2587, %v3239, %v3240
        %v3242 = vrot.slane %v3240, 4
        %v3243 = vrot.slane %v2738, 5
        %v3244 = vsel %vm2587, %v3242, %v3243
        %v3245 = vrot.slane %v3139, 5
        %v3246 = vrot.slane %v3245, 4
        %v3247 = vrot.slane %v2715, 5
        %v3248 = vsel %vm2587, %v3246, %v3247
        %v3249 = vrot.slane %v3247, 4
        %v3250 = vrot.slane %v2739, 5
        %v3251 = vsel %vm2587, %v3249, %v3250
        %v3252 = vrot.slane %v3140, 5
        %v3253 = vrot.slane %v3252, 4
        %v3254 = vrot.slane %v2717, 5
        %v3255 = vsel %vm2587, %v3253, %v3254
        %v3256 = vrot.slane %v3254, 4
        %v3257 = vrot.slane %v2740, 5
        %v3258 = vsel %vm2587, %v3256, %v3257
        %v3259 = vrot.slane %v3141, 5
        %v3260 = vrot.slane %v3259, 4
        %v3261 = vrot.slane %v2719, 5
        %v3262 = vsel %vm2587, %v3260, %v3261
        %v3263 = vrot.slane %v3261, 4
        %v3264 = vrot.slane %v2741, 5
        %v3265 = vsel %vm2587, %v3263, %v3264
        %v3266 = vrot.slane %v3142, 5
        %v3267 = vrot.slane %v3266, 4
        %v3268 = vrot.slane %v2721, 5
        %v3269 = vsel %vm2587, %v3267, %v3268
        %v3270 = vrot.slane %v3268, 4
        %v3271 = vrot.slane %v2742, 5
        %v3272 = vsel %vm2587, %v3270, %v3271
        %v3273 = vrot.slane %v3143, 5
        %v3274 = vrot.slane %v3273, 4
        %v3275 = vrot.slane %v2723, 5
        %v3276 = vsel %vm2587, %v3274, %v3275
        %v3277 = vrot.slane %v3275, 4
        %v3278 = vrot.slane %v2743, 5
        %v3279 = vsel %vm2587, %v3277, %v3278
        %v3280 = vrot.slane %v3144, 5
        %v3281 = vrot.slane %v3280, 4
        %v3282 = vrot.slane %v2725, 5
        %v3283 = vsel %vm2587, %v3281, %v3282
        %v3284 = vrot.slane %v3282, 4
        %v3285 = vrot.slane %v2744, 5
        %v3286 = vsel %vm2587, %v3284, %v3285
        %v3287 = vrot.slane %v3145, 5
        %v3288 = vrot.slane %v3287, 4
        %v3289 = vrot.slane %v2727, 5
        %v3290 = vsel %vm2587, %v3288, %v3289
        %v3291 = vrot.slane %v3289, 4
        %v3292 = vrot.slane %v2745, 5
        %v3293 = vsel %vm2587, %v3291, %v3292
        %v3294 = vrot.slane %v3146, 5
        %v3295 = vrot.slane %v3294, 4
        %v3296 = vrot.slane %v2729, 5
        %v3297 = vsel %vm2587, %v3295, %v3296
        %v3298 = vrot.slane %v3296, 4
        %v3299 = vrot.slane %v2746, 5
        %v3300 = vsel %vm2587, %v3298, %v3299
        %v3301 = vrot.slane %v3147, 5
        %v3302 = vrot.slane %v3301, 4
        %v3303 = vrot.slane %v2731, 5
        %v3304 = vsel %vm2587, %v3302, %v3303
        %v3305 = vrot.slane %v3303, 4
        %v3306 = vrot.slane %v2747, 5
        %v3307 = vsel %vm2587, %v3305, %v3306
        %s3308 = scalar_lea.vmem [#allocation2], 24
        %v3309 = vld [vmem:[%s3308] sm:$0xf]
        %v3310 = vld [vmem:[%s3308 + $0x4] sm:$0xf]
        %v3311 = vld [vmem:[%s3308 + $0xc] sm:$0xf]
        %v3312 = vld [vmem:[%s3308 + $0x10] sm:$0xf]
        %v3313 = vld [vmem:[%s3308 + $0x18] sm:$0xf]
        %v3314 = vld [vmem:[%s3308 + $0x1c] sm:$0xf]
        %v3315 = vld [vmem:[%s3308 + $0x24] sm:$0xf]
        %v3316 = vld [vmem:[%s3308 + $0x28] sm:$0xf]
        %v3317 = vld [vmem:[%s3308 + $0x30] sm:$0xf]
        %v3318 = vld [vmem:[%s3308 + $0x34] sm:$0xf]
        %v3319 = vld [vmem:[%s3308 + $0x3c] sm:$0xf]
        %v3320 = vld [vmem:[%s3308 + $0x40] sm:$0xf]
        %v3321 = vld [vmem:[%s3308 + $0x48] sm:$0xf]
        %v3322 = vld [vmem:[%s3308 + $0x4c] sm:$0xf]
        %v3323 = vld [vmem:[%s3308 + $0x54] sm:$0xf]
        %v3324 = vld [vmem:[%s3308 + $0x58] sm:$0xf]
        %v3325 = vld [vmem:[%s3308 + $0x60] sm:$0xf]
        %v3326 = vld [vmem:[%s3308 + $0x64] sm:$0xf]
        %v3327 = vld [vmem:[%s3308 + $0x6c] sm:$0xf]
        %v3328 = vld [vmem:[%s3308 + $0x70] sm:$0xf]
        %v3329 = vld [vmem:[%s3308 + $0x78] sm:$0xf]
        %v3330 = vld [vmem:[%s3308 + $0x7c] sm:$0xf]
        %v3331 = vld [vmem:[%s3308 + $0x84] sm:$0xf]
        %v3332 = vld [vmem:[%s3308 + $0x88] sm:$0xf]
        %v3333 = vld [vmem:[%s3308 + $0x90] sm:$0xf]
        %v3334 = vld [vmem:[%s3308 + $0x94] sm:$0xf]
        %v3335 = vld [vmem:[%s3308 + $0x9c] sm:$0xf]
        %v3336 = vld [vmem:[%s3308 + $0xa0] sm:$0xf]
        %v3337 = vld [vmem:[%s3308 + $0xa8] sm:$0xf]
        %v3338 = vld [vmem:[%s3308 + $0xac] sm:$0xf]
        %v3339 = vld [vmem:[%s3308 + $0xb4] sm:$0xf]
        %v3340 = vld [vmem:[%s3308 + $0xb8] sm:$0xf]
        %v3341 = vld [vmem:[%s3308 + $0x8] sm:$0x1]
        %v3342 = vld [vmem:[%s3308 + $0x14] sm:$0x1]
        %v3343 = vld [vmem:[%s3308 + $0x20] sm:$0x1]
        %v3344 = vld [vmem:[%s3308 + $0x2c] sm:$0x1]
        %v3345 = vld [vmem:[%s3308 + $0x38] sm:$0x1]
        %v3346 = vld [vmem:[%s3308 + $0x44] sm:$0x1]
        %v3347 = vld [vmem:[%s3308 + $0x50] sm:$0x1]
        %v3348 = vld [vmem:[%s3308 + $0x5c] sm:$0x1]
        %v3349 = vld [vmem:[%s3308 + $0x68] sm:$0x1]
        %v3350 = vld [vmem:[%s3308 + $0x74] sm:$0x1]
        %v3351 = vld [vmem:[%s3308 + $0x80] sm:$0x1]
        %v3352 = vld [vmem:[%s3308 + $0x8c] sm:$0x1]
        %v3353 = vld [vmem:[%s3308 + $0x98] sm:$0x1]
        %v3354 = vld [vmem:[%s3308 + $0xa4] sm:$0x1]
        %v3355 = vld [vmem:[%s3308 + $0xb0] sm:$0x1]
        %v3356 = vld [vmem:[%s3308 + $0xbc] sm:$0x1]
        %v3358 = vshrl.u32 %v3309, 16
        %v3360 = vrot.slane %v3358, 4
        %v3361 = vshll.u32 %v3309, 16
        %v3363 = vrot.slane %v3361, 5
        %v3364 = vor.u32 %v3360, %v3363
        %v3365 = vrot.slane %v3364, 4
        %v3367 = vshll.u32 %v3310, 16
        %v3369 = vrot.slane %v3367, 5
        %v3370 = vsel %vm2136, %v3365, %v3369
        %v3371 = vshrl.u32 %v3310, 16
        %v3373 = vrot.slane %v3371, 4
        %v3374 = vor.u32 %v3373, %v3369
        %v3375 = vrot.slane %v3374, 4
        %v3377 = vshll.u32 %v3341, 16
        %v3379 = vrot.slane %v3377, 5
        %v3380 = vsel %vm2136, %v3375, %v3379
        %v3382 = vshrl.u32 %v3311, 16
        %v3384 = vrot.slane %v3382, 4
        %v3385 = vshll.u32 %v3311, 16
        %v3387 = vrot.slane %v3385, 5
        %v3388 = vor.u32 %v3384, %v3387
        %v3389 = vrot.slane %v3388, 4
        %v3391 = vshll.u32 %v3312, 16
        %v3393 = vrot.slane %v3391, 5
        %v3394 = vsel %vm2136, %v3389, %v3393
        %v3395 = vshrl.u32 %v3312, 16
        %v3397 = vrot.slane %v3395, 4
        %v3398 = vor.u32 %v3397, %v3393
        %v3399 = vrot.slane %v3398, 4
        %v3401 = vshll.u32 %v3342, 16
        %v3403 = vrot.slane %v3401, 5
        %v3404 = vsel %vm2136, %v3399, %v3403
        %v3406 = vshrl.u32 %v3313, 16
        %v3408 = vrot.slane %v3406, 4
        %v3409 = vshll.u32 %v3313, 16
        %v3411 = vrot.slane %v3409, 5
        %v3412 = vor.u32 %v3408, %v3411
        %v3413 = vrot.slane %v3412, 4
        %v3415 = vshll.u32 %v3314, 16
        %v3417 = vrot.slane %v3415, 5
        %v3418 = vsel %vm2136, %v3413, %v3417
        %v3419 = vshrl.u32 %v3314, 16
        %v3421 = vrot.slane %v3419, 4
        %v3422 = vor.u32 %v3421, %v3417
        %v3423 = vrot.slane %v3422, 4
        %v3425 = vshll.u32 %v3343, 16
        %v3427 = vrot.slane %v3425, 5
        %v3428 = vsel %vm2136, %v3423, %v3427
        %v3430 = vshrl.u32 %v3315, 16
        %v3432 = vrot.slane %v3430, 4
        %v3433 = vshll.u32 %v3315, 16
        %v3435 = vrot.slane %v3433, 5
        %v3436 = vor.u32 %v3432, %v3435
        %v3437 = vrot.slane %v3436, 4
        %v3439 = vshll.u32 %v3316, 16
        %v3441 = vrot.slane %v3439, 5
        %v3442 = vsel %vm2136, %v3437, %v3441
        %v3443 = vshrl.u32 %v3316, 16
        %v3445 = vrot.slane %v3443, 4
        %v3446 = vor.u32 %v3445, %v3441
        %v3447 = vrot.slane %v3446, 4
        %v3449 = vshll.u32 %v3344, 16
        %v3451 = vrot.slane %v3449, 5
        %v3452 = vsel %vm2136, %v3447, %v3451
        %v3454 = vshrl.u32 %v3317, 16
        %v3456 = vrot.slane %v3454, 4
        %v3457 = vshll.u32 %v3317, 16
        %v3459 = vrot.slane %v3457, 5
        %v3460 = vor.u32 %v3456, %v3459
        %v3461 = vrot.slane %v3460, 4
        %v3463 = vshll.u32 %v3318, 16
        %v3465 = vrot.slane %v3463, 5
        %v3466 = vsel %vm2136, %v3461, %v3465
        %v3467 = vshrl.u32 %v3318, 16
        %v3469 = vrot.slane %v3467, 4
        %v3470 = vor.u32 %v3469, %v3465
        %v3471 = vrot.slane %v3470, 4
        %v3473 = vshll.u32 %v3345, 16
        %v3475 = vrot.slane %v3473, 5
        %v3476 = vsel %vm2136, %v3471, %v3475
        %v3478 = vshrl.u32 %v3319, 16
        %v3480 = vrot.slane %v3478, 4
        %v3481 = vshll.u32 %v3319, 16
        %v3483 = vrot.slane %v3481, 5
        %v3484 = vor.u32 %v3480, %v3483
        %v3485 = vrot.slane %v3484, 4
        %v3487 = vshll.u32 %v3320, 16
        %v3489 = vrot.slane %v3487, 5
        %v3490 = vsel %vm2136, %v3485, %v3489
        %v3491 = vshrl.u32 %v3320, 16
        %v3493 = vrot.slane %v3491, 4
        %v3494 = vor.u32 %v3493, %v3489
        %v3495 = vrot.slane %v3494, 4
        %v3497 = vshll.u32 %v3346, 16
        %v3499 = vrot.slane %v3497, 5
        %v3500 = vsel %vm2136, %v3495, %v3499
        %v3502 = vshrl.u32 %v3321, 16
        %v3504 = vrot.slane %v3502, 4
        %v3505 = vshll.u32 %v3321, 16
        %v3507 = vrot.slane %v3505, 5
        %v3508 = vor.u32 %v3504, %v3507
        %v3509 = vrot.slane %v3508, 4
        %v3511 = vshll.u32 %v3322, 16
        %v3513 = vrot.slane %v3511, 5
        %v3514 = vsel %vm2136, %v3509, %v3513
        %v3515 = vshrl.u32 %v3322, 16
        %v3517 = vrot.slane %v3515, 4
        %v3518 = vor.u32 %v3517, %v3513
        %v3519 = vrot.slane %v3518, 4
        %v3521 = vshll.u32 %v3347, 16
        %v3523 = vrot.slane %v3521, 5
        %v3524 = vsel %vm2136, %v3519, %v3523
        %v3526 = vshrl.u32 %v3323, 16
        %v3528 = vrot.slane %v3526, 4
        %v3529 = vshll.u32 %v3323, 16
        %v3531 = vrot.slane %v3529, 5
        %v3532 = vor.u32 %v3528, %v3531
        %v3533 = vrot.slane %v3532, 4
        %v3535 = vshll.u32 %v3324, 16
        %v3537 = vrot.slane %v3535, 5
        %v3538 = vsel %vm2136, %v3533, %v3537
        %v3539 = vshrl.u32 %v3324, 16
        %v3541 = vrot.slane %v3539, 4
        %v3542 = vor.u32 %v3541, %v3537
        %v3543 = vrot.slane %v3542, 4
        %v3545 = vshll.u32 %v3348, 16
        %v3547 = vrot.slane %v3545, 5
        %v3548 = vsel %vm2136, %v3543, %v3547
        %v3550 = vshrl.u32 %v3325, 16
        %v3552 = vrot.slane %v3550, 4
        %v3553 = vshll.u32 %v3325, 16
        %v3555 = vrot.slane %v3553, 5
        %v3556 = vor.u32 %v3552, %v3555
        %v3557 = vrot.slane %v3556, 4
        %v3559 = vshll.u32 %v3326, 16
        %v3561 = vrot.slane %v3559, 5
        %v3562 = vsel %vm2136, %v3557, %v3561
        %v3563 = vshrl.u32 %v3326, 16
        %v3565 = vrot.slane %v3563, 4
        %v3566 = vor.u32 %v3565, %v3561
        %v3567 = vrot.slane %v3566, 4
        %v3569 = vshll.u32 %v3349, 16
        %v3571 = vrot.slane %v3569, 5
        %v3572 = vsel %vm2136, %v3567, %v3571
        %v3574 = vshrl.u32 %v3327, 16
        %v3576 = vrot.slane %v3574, 4
        %v3577 = vshll.u32 %v3327, 16
        %v3579 = vrot.slane %v3577, 5
        %v3580 = vor.u32 %v3576, %v3579
        %v3581 = vrot.slane %v3580, 4
        %v3583 = vshll.u32 %v3328, 16
        %v3585 = vrot.slane %v3583, 5
        %v3586 = vsel %vm2136, %v3581, %v3585
        %v3587 = vshrl.u32 %v3328, 16
        %v3589 = vrot.slane %v3587, 4
        %v3590 = vor.u32 %v3589, %v3585
        %v3591 = vrot.slane %v3590, 4
        %v3593 = vshll.u32 %v3350, 16
        %v3595 = vrot.slane %v3593, 5
        %v3596 = vsel %vm2136, %v3591, %v3595
        %v3598 = vshrl.u32 %v3329, 16
        %v3600 = vrot.slane %v3598, 4
        %v3601 = vshll.u32 %v3329, 16
        %v3603 = vrot.slane %v3601, 5
        %v3604 = vor.u32 %v3600, %v3603
        %v3605 = vrot.slane %v3604, 4
        %v3607 = vshll.u32 %v3330, 16
        %v3609 = vrot.slane %v3607, 5
        %v3610 = vsel %vm2136, %v3605, %v3609
        %v3611 = vshrl.u32 %v3330, 16
        %v3613 = vrot.slane %v3611, 4
        %v3614 = vor.u32 %v3613, %v3609
        %v3615 = vrot.slane %v3614, 4
        %v3617 = vshll.u32 %v3351, 16
        %v3619 = vrot.slane %v3617, 5
        %v3620 = vsel %vm2136, %v3615, %v3619
        %v3622 = vshrl.u32 %v3331, 16
        %v3624 = vrot.slane %v3622, 4
        %v3625 = vshll.u32 %v3331, 16
        %v3627 = vrot.slane %v3625, 5
        %v3628 = vor.u32 %v3624, %v3627
        %v3629 = vrot.slane %v3628, 4
        %v3631 = vshll.u32 %v3332, 16
        %v3633 = vrot.slane %v3631, 5
        %v3634 = vsel %vm2136, %v3629, %v3633
        %v3635 = vshrl.u32 %v3332, 16
        %v3637 = vrot.slane %v3635, 4
        %v3638 = vor.u32 %v3637, %v3633
        %v3639 = vrot.slane %v3638, 4
        %v3641 = vshll.u32 %v3352, 16
        %v3643 = vrot.slane %v3641, 5
        %v3644 = vsel %vm2136, %v3639, %v3643
        %v3646 = vshrl.u32 %v3333, 16
        %v3648 = vrot.slane %v3646, 4
        %v3649 = vshll.u32 %v3333, 16
        %v3651 = vrot.slane %v3649, 5
        %v3652 = vor.u32 %v3648, %v3651
        %v3653 = vrot.slane %v3652, 4
        %v3655 = vshll.u32 %v3334, 16
        %v3657 = vrot.slane %v3655, 5
        %v3658 = vsel %vm2136, %v3653, %v3657
        %v3659 = vshrl.u32 %v3334, 16
        %v3661 = vrot.slane %v3659, 4
        %v3662 = vor.u32 %v3661, %v3657
        %v3663 = vrot.slane %v3662, 4
        %v3665 = vshll.u32 %v3353, 16
        %v3667 = vrot.slane %v3665, 5
        %v3668 = vsel %vm2136, %v3663, %v3667
        %v3670 = vshrl.u32 %v3335, 16
        %v3672 = vrot.slane %v3670, 4
        %v3673 = vshll.u32 %v3335, 16
        %v3675 = vrot.slane %v3673, 5
        %v3676 = vor.u32 %v3672, %v3675
        %v3677 = vrot.slane %v3676, 4
        %v3679 = vshll.u32 %v3336, 16
        %v3681 = vrot.slane %v3679, 5
        %v3682 = vsel %vm2136, %v3677, %v3681
        %v3683 = vshrl.u32 %v3336, 16
        %v3685 = vrot.slane %v3683, 4
        %v3686 = vor.u32 %v3685, %v3681
        %v3687 = vrot.slane %v3686, 4
        %v3689 = vshll.u32 %v3354, 16
        %v3691 = vrot.slane %v3689, 5
        %v3692 = vsel %vm2136, %v3687, %v3691
        %v3694 = vshrl.u32 %v3337, 16
        %v3696 = vrot.slane %v3694, 4
        %v3697 = vshll.u32 %v3337, 16
        %v3699 = vrot.slane %v3697, 5
        %v3700 = vor.u32 %v3696, %v3699
        %v3701 = vrot.slane %v3700, 4
        %v3703 = vshll.u32 %v3338, 16
        %v3705 = vrot.slane %v3703, 5
        %v3706 = vsel %vm2136, %v3701, %v3705
        %v3707 = vshrl.u32 %v3338, 16
        %v3709 = vrot.slane %v3707, 4
        %v3710 = vor.u32 %v3709, %v3705
        %v3711 = vrot.slane %v3710, 4
        %v3713 = vshll.u32 %v3355, 16
        %v3715 = vrot.slane %v3713, 5
        %v3716 = vsel %vm2136, %v3711, %v3715
        %v3718 = vshrl.u32 %v3339, 16
        %v3720 = vrot.slane %v3718, 4
        %v3721 = vshll.u32 %v3339, 16
        %v3723 = vrot.slane %v3721, 5
        %v3724 = vor.u32 %v3720, %v3723
        %v3725 = vrot.slane %v3724, 4
        %v3727 = vshll.u32 %v3340, 16
        %v3729 = vrot.slane %v3727, 5
        %v3730 = vsel %vm2136, %v3725, %v3729
        %v3731 = vshrl.u32 %v3340, 16
        %v3733 = vrot.slane %v3731, 4
        %v3734 = vor.u32 %v3733, %v3729
        %v3735 = vrot.slane %v3734, 4
        %v3737 = vshll.u32 %v3356, 16
        %v3739 = vrot.slane %v3737, 5
        %v3740 = vsel %vm2136, %v3735, %v3739
        %v3741 = vld [vmem:[%s3308] sm:$0xe]
        %v3742 = vld [vmem:[%s3308 + $0xc] sm:$0xe]
        %v3743 = vld [vmem:[%s3308 + $0x18] sm:$0xe]
        %v3744 = vld [vmem:[%s3308 + $0x24] sm:$0xe]
        %v3745 = vld [vmem:[%s3308 + $0x30] sm:$0xe]
        %v3746 = vld [vmem:[%s3308 + $0x3c] sm:$0xe]
        %v3747 = vld [vmem:[%s3308 + $0x48] sm:$0xe]
        %v3748 = vld [vmem:[%s3308 + $0x54] sm:$0xe]
        %v3749 = vld [vmem:[%s3308 + $0x60] sm:$0xe]
        %v3750 = vld [vmem:[%s3308 + $0x6c] sm:$0xe]
        %v3751 = vld [vmem:[%s3308 + $0x78] sm:$0xe]
        %v3752 = vld [vmem:[%s3308 + $0x84] sm:$0xe]
        %v3753 = vld [vmem:[%s3308 + $0x90] sm:$0xe]
        %v3754 = vld [vmem:[%s3308 + $0x9c] sm:$0xe]
        %v3755 = vld [vmem:[%s3308 + $0xa8] sm:$0xe]
        %v3756 = vld [vmem:[%s3308 + $0xb4] sm:$0xe]
        %v3805 = vrot.slane %v3741, 5
        %v3806 = vrot.slane %v3805, 4
        %v3807 = vrot.slane %v3310, 5
        %v3808 = vsel %vm2587, %v3806, %v3807
        %v3809 = vrot.slane %v3807, 4
        %v3810 = vrot.slane %v3341, 5
        %v3811 = vsel %vm2587, %v3809, %v3810
        %v3812 = vrot.slane %v3742, 5
        %v3813 = vrot.slane %v3812, 4
        %v3814 = vrot.slane %v3312, 5
        %v3815 = vsel %vm2587, %v3813, %v3814
        %v3816 = vrot.slane %v3814, 4
        %v3817 = vrot.slane %v3342, 5
        %v3818 = vsel %vm2587, %v3816, %v3817
        %v3819 = vrot.slane %v3743, 5
        %v3820 = vrot.slane %v3819, 4
        %v3821 = vrot.slane %v3314, 5
        %v3822 = vsel %vm2587, %v3820, %v3821
        %v3823 = vrot.slane %v3821, 4
        %v3824 = vrot.slane %v3343, 5
        %v3825 = vsel %vm2587, %v3823, %v3824
        %v3826 = vrot.slane %v3744, 5
        %v3827 = vrot.slane %v3826, 4
        %v3828 = vrot.slane %v3316, 5
        %v3829 = vsel %vm2587, %v3827, %v3828
        %v3830 = vrot.slane %v3828, 4
        %v3831 = vrot.slane %v3344, 5
        %v3832 = vsel %vm2587, %v3830, %v3831
        %v3833 = vrot.slane %v3745, 5
        %v3834 = vrot.slane %v3833, 4
        %v3835 = vrot.slane %v3318, 5
        %v3836 = vsel %vm2587, %v3834, %v3835
        %v3837 = vrot.slane %v3835, 4
        %v3838 = vrot.slane %v3345, 5
        %v3839 = vsel %vm2587, %v3837, %v3838
        %v3840 = vrot.slane %v3746, 5
        %v3841 = vrot.slane %v3840, 4
        %v3842 = vrot.slane %v3320, 5
        %v3843 = vsel %vm2587, %v3841, %v3842
        %v3844 = vrot.slane %v3842, 4
        %v3845 = vrot.slane %v3346, 5
        %v3846 = vsel %vm2587, %v3844, %v3845
        %v3847 = vrot.slane %v3747, 5
        %v3848 = vrot.slane %v3847, 4
        %v3849 = vrot.slane %v3322, 5
        %v3850 = vsel %vm2587, %v3848, %v3849
        %v3851 = vrot.slane %v3849, 4
        %v3852 = vrot.slane %v3347, 5
        %v3853 = vsel %vm2587, %v3851, %v3852
        %v3854 = vrot.slane %v3748, 5
        %v3855 = vrot.slane %v3854, 4
        %v3856 = vrot.slane %v3324, 5
        %v3857 = vsel %vm2587, %v3855, %v3856
        %v3858 = vrot.slane %v3856, 4
        %v3859 = vrot.slane %v3348, 5
        %v3860 = vsel %vm2587, %v3858, %v3859
        %v3861 = vrot.slane %v3749, 5
        %v3862 = vrot.slane %v3861, 4
        %v3863 = vrot.slane %v3326, 5
        %v3864 = vsel %vm2587, %v3862, %v3863
        %v3865 = vrot.slane %v3863, 4
        %v3866 = vrot.slane %v3349, 5
        %v3867 = vsel %vm2587, %v3865, %v3866
        %v3868 = vrot.slane %v3750, 5
        %v3869 = vrot.slane %v3868, 4
        %v3870 = vrot.slane %v3328, 5
        %v3871 = vsel %vm2587, %v3869, %v3870
        %v3872 = vrot.slane %v3870, 4
        %v3873 = vrot.slane %v3350, 5
        %v3874 = vsel %vm2587, %v3872, %v3873
        %v3875 = vrot.slane %v3751, 5
        %v3876 = vrot.slane %v3875, 4
        %v3877 = vrot.slane %v3330, 5
        %v3878 = vsel %vm2587, %v3876, %v3877
        %v3879 = vrot.slane %v3877, 4
        %v3880 = vrot.slane %v3351, 5
        %v3881 = vsel %vm2587, %v3879, %v3880
        %v3882 = vrot.slane %v3752, 5
        %v3883 = vrot.slane %v3882, 4
        %v3884 = vrot.slane %v3332, 5
        %v3885 = vsel %vm2587, %v3883, %v3884
        %v3886 = vrot.slane %v3884, 4
        %v3887 = vrot.slane %v3352, 5
        %v3888 = vsel %vm2587, %v3886, %v3887
        %v3889 = vrot.slane %v3753, 5
        %v3890 = vrot.slane %v3889, 4
        %v3891 = vrot.slane %v3334, 5
        %v3892 = vsel %vm2587, %v3890, %v3891
        %v3893 = vrot.slane %v3891, 4
        %v3894 = vrot.slane %v3353, 5
        %v3895 = vsel %vm2587, %v3893, %v3894
        %v3896 = vrot.slane %v3754, 5
        %v3897 = vrot.slane %v3896, 4
        %v3898 = vrot.slane %v3336, 5
        %v3899 = vsel %vm2587, %v3897, %v3898
        %v3900 = vrot.slane %v3898, 4
        %v3901 = vrot.slane %v3354, 5
        %v3902 = vsel %vm2587, %v3900, %v3901
        %v3903 = vrot.slane %v3755, 5
        %v3904 = vrot.slane %v3903, 4
        %v3905 = vrot.slane %v3338, 5
        %v3906 = vsel %vm2587, %v3904, %v3905
        %v3907 = vrot.slane %v3905, 4
        %v3908 = vrot.slane %v3355, 5
        %v3909 = vsel %vm2587, %v3907, %v3908
        %v3910 = vrot.slane %v3756, 5
        %v3911 = vrot.slane %v3910, 4
        %v3912 = vrot.slane %v3340, 5
        %v3913 = vsel %vm2587, %v3911, %v3912
        %v3914 = vrot.slane %v3912, 4
        %v3915 = vrot.slane %v3356, 5
        %v3916 = vsel %vm2587, %v3914, %v3915
        %v3933 = vunpack.c.l.b16 %v2086
        %v3934 = vunpack.c.l.b16 %v2087
        %v3935 = vunpack.c.l.b16 %v2088
        %v3936 = vunpack.c.l.b16 %v2089
        %v3937 = vunpack.c.l.b16 %v2090
        %v3938 = vunpack.c.l.b16 %v2091
        %v3939 = vunpack.c.l.b16 %v2092
        %v3940 = vunpack.c.l.b16 %v2093
        %v3941 = vunpack.c.l.b16 %v2094
        %v3942 = vunpack.c.l.b16 %v2095
        %v3943 = vunpack.c.l.b16 %v2096
        %v3944 = vunpack.c.l.b16 %v2097
        %v3945 = vunpack.c.l.b16 %v2098
        %v3946 = vunpack.c.l.b16 %v2099
        %v3947 = vunpack.c.l.b16 %v2100
        %v3948 = vunpack.c.l.b16 %v2101
        %v3949 = vunpack.c.l.b16 %v2102
        %v3950 = vunpack.c.l.b16 %v2103
        %v3951 = vunpack.c.l.b16 %v2104
        %v3952 = vunpack.c.l.b16 %v2105
        %v3953 = vunpack.c.l.b16 %v2106
        %v3954 = vunpack.c.l.b16 %v2107
        %v3955 = vunpack.c.l.b16 %v2108
        %v3956 = vunpack.c.l.b16 %v2109
        %v3957 = vunpack.c.l.b16 %v2110
        %v3958 = vunpack.c.l.b16 %v2111
        %v3959 = vunpack.c.l.b16 %v2112
        %v3960 = vunpack.c.l.b16 %v2113
        %v3961 = vunpack.c.l.b16 %v2114
        %v3962 = vunpack.c.l.b16 %v2115
        %v3963 = vunpack.c.l.b16 %v2116
        %v3964 = vunpack.c.l.b16 %v2117
        %v3965 = vpack.c.b16 %v3934, %v3933
        %v3966 = vpack.c.b16 %v3936, %v3935
        %v3967 = vpack.c.b16 %v3938, %v3937
        %v3968 = vpack.c.b16 %v3940, %v3939
        %v3969 = vpack.c.b16 %v3942, %v3941
        %v3970 = vpack.c.b16 %v3944, %v3943
        %v3971 = vpack.c.b16 %v3946, %v3945
        %v3972 = vpack.c.b16 %v3948, %v3947
        %v3973 = vpack.c.b16 %v3950, %v3949
        %v3974 = vpack.c.b16 %v3952, %v3951
        %v3975 = vpack.c.b16 %v3954, %v3953
        %v3976 = vpack.c.b16 %v3956, %v3955
        %v3977 = vpack.c.b16 %v3958, %v3957
        %v3978 = vpack.c.b16 %v3960, %v3959
        %v3979 = vpack.c.b16 %v3962, %v3961
        %v3980 = vpack.c.b16 %v3964, %v3963
        %v3997 = vunpack.c.l.b16 %v2150
        %v3998 = vunpack.c.l.b16 %v2160
        %v3999 = vunpack.c.l.b16 %v2174
        %v4000 = vunpack.c.l.b16 %v2184
        %v4001 = vunpack.c.l.b16 %v2198
        %v4002 = vunpack.c.l.b16 %v2208
        %v4003 = vunpack.c.l.b16 %v2222
        %v4004 = vunpack.c.l.b16 %v2232
        %v4005 = vunpack.c.l.b16 %v2246
        %v4006 = vunpack.c.l.b16 %v2256
        %v4007 = vunpack.c.l.b16 %v2270
        %v4008 = vunpack.c.l.b16 %v2280
        %v4009 = vunpack.c.l.b16 %v2294
        %v4010 = vunpack.c.l.b16 %v2304
        %v4011 = vunpack.c.l.b16 %v2318
        %v4012 = vunpack.c.l.b16 %v2328
        %v4013 = vunpack.c.l.b16 %v2342
        %v4014 = vunpack.c.l.b16 %v2352
        %v4015 = vunpack.c.l.b16 %v2366
        %v4016 = vunpack.c.l.b16 %v2376
        %v4017 = vunpack.c.l.b16 %v2390
        %v4018 = vunpack.c.l.b16 %v2400
        %v4019 = vunpack.c.l.b16 %v2414
        %v4020 = vunpack.c.l.b16 %v2424
        %v4021 = vunpack.c.l.b16 %v2438
        %v4022 = vunpack.c.l.b16 %v2448
        %v4023 = vunpack.c.l.b16 %v2462
        %v4024 = vunpack.c.l.b16 %v2472
        %v4025 = vunpack.c.l.b16 %v2486
        %v4026 = vunpack.c.l.b16 %v2496
        %v4027 = vunpack.c.l.b16 %v2510
        %v4028 = vunpack.c.l.b16 %v2520
        %v4029 = vpack.c.b16 %v3998, %v3997
        %v4030 = vpack.c.b16 %v4000, %v3999
        %v4031 = vpack.c.b16 %v4002, %v4001
        %v4032 = vpack.c.b16 %v4004, %v4003
        %v4033 = vpack.c.b16 %v4006, %v4005
        %v4034 = vpack.c.b16 %v4008, %v4007
        %v4035 = vpack.c.b16 %v4010, %v4009
        %v4036 = vpack.c.b16 %v4012, %v4011
        %v4037 = vpack.c.b16 %v4014, %v4013
        %v4038 = vpack.c.b16 %v4016, %v4015
        %v4039 = vpack.c.b16 %v4018, %v4017
        %v4040 = vpack.c.b16 %v4020, %v4019
        %v4041 = vpack.c.b16 %v4022, %v4021
        %v4042 = vpack.c.b16 %v4024, %v4023
        %v4043 = vpack.c.b16 %v4026, %v4025
        %v4044 = vpack.c.b16 %v4028, %v4027
        %v4061 = vunpack.c.l.b16 %v2591
        %v4062 = vunpack.c.l.b16 %v2594
        %v4063 = vunpack.c.l.b16 %v2598
        %v4064 = vunpack.c.l.b16 %v2601
        %v4065 = vunpack.c.l.b16 %v2605
        %v4066 = vunpack.c.l.b16 %v2608
        %v4067 = vunpack.c.l.b16 %v2612
        %v4068 = vunpack.c.l.b16 %v2615
        %v4069 = vunpack.c.l.b16 %v2619
        %v4070 = vunpack.c.l.b16 %v2622
        %v4071 = vunpack.c.l.b16 %v2626
        %v4072 = vunpack.c.l.b16 %v2629
        %v4073 = vunpack.c.l.b16 %v2633
        %v4074 = vunpack.c.l.b16 %v2636
        %v4075 = vunpack.c.l.b16 %v2640
        %v4076 = vunpack.c.l.b16 %v2643
        %v4077 = vunpack.c.l.b16 %v2647
        %v4078 = vunpack.c.l.b16 %v2650
        %v4079 = vunpack.c.l.b16 %v2654
        %v4080 = vunpack.c.l.b16 %v2657
        %v4081 = vunpack.c.l.b16 %v2661
        %v4082 = vunpack.c.l.b16 %v2664
        %v4083 = vunpack.c.l.b16 %v2668
        %v4084 = vunpack.c.l.b16 %v2671
        %v4085 = vunpack.c.l.b16 %v2675
        %v4086 = vunpack.c.l.b16 %v2678
        %v4087 = vunpack.c.l.b16 %v2682
        %v4088 = vunpack.c.l.b16 %v2685
        %v4089 = vunpack.c.l.b16 %v2689
        %v4090 = vunpack.c.l.b16 %v2692
        %v4091 = vunpack.c.l.b16 %v2696
        %v4092 = vunpack.c.l.b16 %v2699
        %v4093 = vpack.c.b16 %v4062, %v4061
        %v4094 = vpack.c.b16 %v4064, %v4063
        %v4095 = vpack.c.b16 %v4066, %v4065
        %v4096 = vpack.c.b16 %v4068, %v4067
        %v4097 = vpack.c.b16 %v4070, %v4069
        %v4098 = vpack.c.b16 %v4072, %v4071
        %v4099 = vpack.c.b16 %v4074, %v4073
        %v4100 = vpack.c.b16 %v4076, %v4075
        %v4101 = vpack.c.b16 %v4078, %v4077
        %v4102 = vpack.c.b16 %v4080, %v4079
        %v4103 = vpack.c.b16 %v4082, %v4081
        %v4104 = vpack.c.b16 %v4084, %v4083
        %v4105 = vpack.c.b16 %v4086, %v4085
        %v4106 = vpack.c.b16 %v4088, %v4087
        %v4107 = vpack.c.b16 %v4090, %v4089
        %v4108 = vpack.c.b16 %v4092, %v4091
        %v4141 = vunpack.c.l.b16 %v2700
        %v4142 = vunpack.c.l.b16 %v2701
        %v4143 = vunpack.c.l.b16 %v2702
        %v4144 = vunpack.c.l.b16 %v2703
        %v4145 = vunpack.c.l.b16 %v2704
        %v4146 = vunpack.c.l.b16 %v2705
        %v4147 = vunpack.c.l.b16 %v2706
        %v4148 = vunpack.c.l.b16 %v2707
        %v4149 = vunpack.c.l.b16 %v2708
        %v4150 = vunpack.c.l.b16 %v2709
        %v4151 = vunpack.c.l.b16 %v2710
        %v4152 = vunpack.c.l.b16 %v2711
        %v4153 = vunpack.c.l.b16 %v2712
        %v4154 = vunpack.c.l.b16 %v2713
        %v4155 = vunpack.c.l.b16 %v2714
        %v4156 = vunpack.c.l.b16 %v2715
        %v4157 = vunpack.c.l.b16 %v2716
        %v4158 = vunpack.c.l.b16 %v2717
        %v4159 = vunpack.c.l.b16 %v2718
        %v4160 = vunpack.c.l.b16 %v2719
        %v4161 = vunpack.c.l.b16 %v2720
        %v4162 = vunpack.c.l.b16 %v2721
        %v4163 = vunpack.c.l.b16 %v2722
        %v4164 = vunpack.c.l.b16 %v2723
        %v4165 = vunpack.c.l.b16 %v2724
        %v4166 = vunpack.c.l.b16 %v2725
        %v4167 = vunpack.c.l.b16 %v2726
        %v4168 = vunpack.c.l.b16 %v2727
        %v4169 = vunpack.c.l.b16 %v2728
        %v4170 = vunpack.c.l.b16 %v2729
        %v4171 = vunpack.c.l.b16 %v2730
        %v4172 = vunpack.c.l.b16 %v2731
        %v4173 = vpack.c.b16 %v4142, %v4141
        %v4174 = vpack.c.b16 %v4144, %v4143
        %v4175 = vpack.c.b16 %v4146, %v4145
        %v4176 = vpack.c.b16 %v4148, %v4147
        %v4177 = vpack.c.b16 %v4150, %v4149
        %v4178 = vpack.c.b16 %v4152, %v4151
        %v4179 = vpack.c.b16 %v4154, %v4153
        %v4180 = vpack.c.b16 %v4156, %v4155
        %v4181 = vpack.c.b16 %v4158, %v4157
        %v4182 = vpack.c.b16 %v4160, %v4159
        %v4183 = vpack.c.b16 %v4162, %v4161
        %v4184 = vpack.c.b16 %v4164, %v4163
        %v4185 = vpack.c.b16 %v4166, %v4165
        %v4186 = vpack.c.b16 %v4168, %v4167
        %v4187 = vpack.c.b16 %v4170, %v4169
        %v4188 = vpack.c.b16 %v4172, %v4171
        %v4205 = vunpack.c.l.b16 %v2761
        %v4206 = vunpack.c.l.b16 %v2771
        %v4207 = vunpack.c.l.b16 %v2785
        %v4208 = vunpack.c.l.b16 %v2795
        %v4209 = vunpack.c.l.b16 %v2809
        %v4210 = vunpack.c.l.b16 %v2819
        %v4211 = vunpack.c.l.b16 %v2833
        %v4212 = vunpack.c.l.b16 %v2843
        %v4213 = vunpack.c.l.b16 %v2857
        %v4214 = vunpack.c.l.b16 %v2867
        %v4215 = vunpack.c.l.b16 %v2881
        %v4216 = vunpack.c.l.b16 %v2891
        %v4217 = vunpack.c.l.b16 %v2905
        %v4218 = vunpack.c.l.b16 %v2915
        %v4219 = vunpack.c.l.b16 %v2929
        %v4220 = vunpack.c.l.b16 %v2939
        %v4221 = vunpack.c.l.b16 %v2953
        %v4222 = vunpack.c.l.b16 %v2963
        %v4223 = vunpack.c.l.b16 %v2977
        %v4224 = vunpack.c.l.b16 %v2987
        %v4225 = vunpack.c.l.b16 %v3001
        %v4226 = vunpack.c.l.b16 %v3011
        %v4227 = vunpack.c.l.b16 %v3025
        %v4228 = vunpack.c.l.b16 %v3035
        %v4229 = vunpack.c.l.b16 %v3049
        %v4230 = vunpack.c.l.b16 %v3059
        %v4231 = vunpack.c.l.b16 %v3073
        %v4232 = vunpack.c.l.b16 %v3083
        %v4233 = vunpack.c.l.b16 %v3097
        %v4234 = vunpack.c.l.b16 %v3107
        %v4235 = vunpack.c.l.b16 %v3121
        %v4236 = vunpack.c.l.b16 %v3131
        %v4237 = vpack.c.b16 %v4206, %v4205
        %v4238 = vpack.c.b16 %v4208, %v4207
        %v4239 = vpack.c.b16 %v4210, %v4209
        %v4240 = vpack.c.b16 %v4212, %v4211
        %v4241 = vpack.c.b16 %v4214, %v4213
        %v4242 = vpack.c.b16 %v4216, %v4215
        %v4243 = vpack.c.b16 %v4218, %v4217
        %v4244 = vpack.c.b16 %v4220, %v4219
        %v4245 = vpack.c.b16 %v4222, %v4221
        %v4246 = vpack.c.b16 %v4224, %v4223
        %v4247 = vpack.c.b16 %v4226, %v4225
        %v4248 = vpack.c.b16 %v4228, %v4227
        %v4249 = vpack.c.b16 %v4230, %v4229
        %v4250 = vpack.c.b16 %v4232, %v4231
        %v4251 = vpack.c.b16 %v4234, %v4233
        %v4252 = vpack.c.b16 %v4236, %v4235
        %v4269 = vunpack.c.l.b16 %v3199
        %v4270 = vunpack.c.l.b16 %v3202
        %v4271 = vunpack.c.l.b16 %v3206
        %v4272 = vunpack.c.l.b16 %v3209
        %v4273 = vunpack.c.l.b16 %v3213
        %v4274 = vunpack.c.l.b16 %v3216
        %v4275 = vunpack.c.l.b16 %v3220
        %v4276 = vunpack.c.l.b16 %v3223
        %v4277 = vunpack.c.l.b16 %v3227
        %v4278 = vunpack.c.l.b16 %v3230
        %v4279 = vunpack.c.l.b16 %v3234
        %v4280 = vunpack.c.l.b16 %v3237
        %v4281 = vunpack.c.l.b16 %v3241
        %v4282 = vunpack.c.l.b16 %v3244
        %v4283 = vunpack.c.l.b16 %v3248
        %v4284 = vunpack.c.l.b16 %v3251
        %v4285 = vunpack.c.l.b16 %v3255
        %v4286 = vunpack.c.l.b16 %v3258
        %v4287 = vunpack.c.l.b16 %v3262
        %v4288 = vunpack.c.l.b16 %v3265
        %v4289 = vunpack.c.l.b16 %v3269
        %v4290 = vunpack.c.l.b16 %v3272
        %v4291 = vunpack.c.l.b16 %v3276
        %v4292 = vunpack.c.l.b16 %v3279
        %v4293 = vunpack.c.l.b16 %v3283
        %v4294 = vunpack.c.l.b16 %v3286
        %v4295 = vunpack.c.l.b16 %v3290
        %v4296 = vunpack.c.l.b16 %v3293
        %v4297 = vunpack.c.l.b16 %v3297
        %v4298 = vunpack.c.l.b16 %v3300
        %v4299 = vunpack.c.l.b16 %v3304
        %v4300 = vunpack.c.l.b16 %v3307
        %v4301 = vpack.c.b16 %v4270, %v4269
        %v4302 = vpack.c.b16 %v4272, %v4271
        %v4303 = vpack.c.b16 %v4274, %v4273
        %v4304 = vpack.c.b16 %v4276, %v4275
        %v4305 = vpack.c.b16 %v4278, %v4277
        %v4306 = vpack.c.b16 %v4280, %v4279
        %v4307 = vpack.c.b16 %v4282, %v4281
        %v4308 = vpack.c.b16 %v4284, %v4283
        %v4309 = vpack.c.b16 %v4286, %v4285
        %v4310 = vpack.c.b16 %v4288, %v4287
        %v4311 = vpack.c.b16 %v4290, %v4289
        %v4312 = vpack.c.b16 %v4292, %v4291
        %v4313 = vpack.c.b16 %v4294, %v4293
        %v4314 = vpack.c.b16 %v4296, %v4295
        %v4315 = vpack.c.b16 %v4298, %v4297
        %v4316 = vpack.c.b16 %v4300, %v4299
        %v4349 = vunpack.c.l.b16 %v3309
        %v4350 = vunpack.c.l.b16 %v3310
        %v4351 = vunpack.c.l.b16 %v3311
        %v4352 = vunpack.c.l.b16 %v3312
        %v4353 = vunpack.c.l.b16 %v3313
        %v4354 = vunpack.c.l.b16 %v3314
        %v4355 = vunpack.c.l.b16 %v3315
        %v4356 = vunpack.c.l.b16 %v3316
        %v4357 = vunpack.c.l.b16 %v3317
        %v4358 = vunpack.c.l.b16 %v3318
        %v4359 = vunpack.c.l.b16 %v3319
        %v4360 = vunpack.c.l.b16 %v3320
        %v4361 = vunpack.c.l.b16 %v3321
        %v4362 = vunpack.c.l.b16 %v3322
        %v4363 = vunpack.c.l.b16 %v3323
        %v4364 = vunpack.c.l.b16 %v3324
        %v4365 = vunpack.c.l.b16 %v3325
        %v4366 = vunpack.c.l.b16 %v3326
        %v4367 = vunpack.c.l.b16 %v3327
        %v4368 = vunpack.c.l.b16 %v3328
        %v4369 = vunpack.c.l.b16 %v3329
        %v4370 = vunpack.c.l.b16 %v3330
        %v4371 = vunpack.c.l.b16 %v3331
        %v4372 = vunpack.c.l.b16 %v3332
        %v4373 = vunpack.c.l.b16 %v3333
        %v4374 = vunpack.c.l.b16 %v3334
        %v4375 = vunpack.c.l.b16 %v3335
        %v4376 = vunpack.c.l.b16 %v3336
        %v4377 = vunpack.c.l.b16 %v3337
        %v4378 = vunpack.c.l.b16 %v3338
        %v4379 = vunpack.c.l.b16 %v3339
        %v4380 = vunpack.c.l.b16 %v3340
        %v4381 = vpack.c.b16 %v4350, %v4349
        %v4382 = vpack.c.b16 %v4352, %v4351
        %v4383 = vpack.c.b16 %v4354, %v4353
        %v4384 = vpack.c.b16 %v4356, %v4355
        %v4385 = vpack.c.b16 %v4358, %v4357
        %v4386 = vpack.c.b16 %v4360, %v4359
        %v4387 = vpack.c.b16 %v4362, %v4361
        %v4388 = vpack.c.b16 %v4364, %v4363
        %v4389 = vpack.c.b16 %v4366, %v4365
        %v4390 = vpack.c.b16 %v4368, %v4367
        %v4391 = vpack.c.b16 %v4370, %v4369
        %v4392 = vpack.c.b16 %v4372, %v4371
        %v4393 = vpack.c.b16 %v4374, %v4373
        %v4394 = vpack.c.b16 %v4376, %v4375
        %v4395 = vpack.c.b16 %v4378, %v4377
        %v4396 = vpack.c.b16 %v4380, %v4379
        %v4413 = vunpack.c.l.b16 %v3370
        %v4414 = vunpack.c.l.b16 %v3380
        %v4415 = vunpack.c.l.b16 %v3394
        %v4416 = vunpack.c.l.b16 %v3404
        %v4417 = vunpack.c.l.b16 %v3418
        %v4418 = vunpack.c.l.b16 %v3428
        %v4419 = vunpack.c.l.b16 %v3442
        %v4420 = vunpack.c.l.b16 %v3452
        %v4421 = vunpack.c.l.b16 %v3466
        %v4422 = vunpack.c.l.b16 %v3476
        %v4423 = vunpack.c.l.b16 %v3490
        %v4424 = vunpack.c.l.b16 %v3500
        %v4425 = vunpack.c.l.b16 %v3514
        %v4426 = vunpack.c.l.b16 %v3524
        %v4427 = vunpack.c.l.b16 %v3538
        %v4428 = vunpack.c.l.b16 %v3548
        %v4429 = vunpack.c.l.b16 %v3562
        %v4430 = vunpack.c.l.b16 %v3572
        %v4431 = vunpack.c.l.b16 %v3586
        %v4432 = vunpack.c.l.b16 %v3596
        %v4433 = vunpack.c.l.b16 %v3610
        %v4434 = vunpack.c.l.b16 %v3620
        %v4435 = vunpack.c.l.b16 %v3634
        %v4436 = vunpack.c.l.b16 %v3644
        %v4437 = vunpack.c.l.b16 %v3658
        %v4438 = vunpack.c.l.b16 %v3668
        %v4439 = vunpack.c.l.b16 %v3682
        %v4440 = vunpack.c.l.b16 %v3692
        %v4441 = vunpack.c.l.b16 %v3706
        %v4442 = vunpack.c.l.b16 %v3716
        %v4443 = vunpack.c.l.b16 %v3730
        %v4444 = vunpack.c.l.b16 %v3740
        %v4445 = vpack.c.b16 %v4414, %v4413
        %v4446 = vpack.c.b16 %v4416, %v4415
        %v4447 = vpack.c.b16 %v4418, %v4417
        %v4448 = vpack.c.b16 %v4420, %v4419
        %v4449 = vpack.c.b16 %v4422, %v4421
        %v4450 = vpack.c.b16 %v4424, %v4423
        %v4451 = vpack.c.b16 %v4426, %v4425
        %v4452 = vpack.c.b16 %v4428, %v4427
        %v4453 = vpack.c.b16 %v4430, %v4429
        %v4454 = vpack.c.b16 %v4432, %v4431
        %v4455 = vpack.c.b16 %v4434, %v4433
        %v4456 = vpack.c.b16 %v4436, %v4435
        %v4457 = vpack.c.b16 %v4438, %v4437
        %v4458 = vpack.c.b16 %v4440, %v4439
        %v4459 = vpack.c.b16 %v4442, %v4441
        %v4460 = vpack.c.b16 %v4444, %v4443
        %v4477 = vunpack.c.l.b16 %v3808
        %v4478 = vunpack.c.l.b16 %v3811
        %v4479 = vunpack.c.l.b16 %v3815
        %v4480 = vunpack.c.l.b16 %v3818
        %v4481 = vunpack.c.l.b16 %v3822
        %v4482 = vunpack.c.l.b16 %v3825
        %v4483 = vunpack.c.l.b16 %v3829
        %v4484 = vunpack.c.l.b16 %v3832
        %v4485 = vunpack.c.l.b16 %v3836
        %v4486 = vunpack.c.l.b16 %v3839
        %v4487 = vunpack.c.l.b16 %v3843
        %v4488 = vunpack.c.l.b16 %v3846
        %v4489 = vunpack.c.l.b16 %v3850
        %v4490 = vunpack.c.l.b16 %v3853
        %v4491 = vunpack.c.l.b16 %v3857
        %v4492 = vunpack.c.l.b16 %v3860
        %v4493 = vunpack.c.l.b16 %v3864
        %v4494 = vunpack.c.l.b16 %v3867
        %v4495 = vunpack.c.l.b16 %v3871
        %v4496 = vunpack.c.l.b16 %v3874
        %v4497 = vunpack.c.l.b16 %v3878
        %v4498 = vunpack.c.l.b16 %v3881
        %v4499 = vunpack.c.l.b16 %v3885
        %v4500 = vunpack.c.l.b16 %v3888
        %v4501 = vunpack.c.l.b16 %v3892
        %v4502 = vunpack.c.l.b16 %v3895
        %v4503 = vunpack.c.l.b16 %v3899
        %v4504 = vunpack.c.l.b16 %v3902
        %v4505 = vunpack.c.l.b16 %v3906
        %v4506 = vunpack.c.l.b16 %v3909
        %v4507 = vunpack.c.l.b16 %v3913
        %v4508 = vunpack.c.l.b16 %v3916
        %v4509 = vpack.c.b16 %v4478, %v4477
        %v4510 = vpack.c.b16 %v4480, %v4479
        %v4511 = vpack.c.b16 %v4482, %v4481
        %v4512 = vpack.c.b16 %v4484, %v4483
        %v4513 = vpack.c.b16 %v4486, %v4485
        %v4514 = vpack.c.b16 %v4488, %v4487
        %v4515 = vpack.c.b16 %v4490, %v4489
        %v4516 = vpack.c.b16 %v4492, %v4491
        %v4517 = vpack.c.b16 %v4494, %v4493
        %v4518 = vpack.c.b16 %v4496, %v4495
        %v4519 = vpack.c.b16 %v4498, %v4497
        %v4520 = vpack.c.b16 %v4500, %v4499
        %v4521 = vpack.c.b16 %v4502, %v4501
        %v4522 = vpack.c.b16 %v4504, %v4503
        %v4523 = vpack.c.b16 %v4506, %v4505
        %v4524 = vpack.c.b16 %v4508, %v4507
        %v4542 = vlaneseq
        %v4543 = vshrl.u32 %v4542, 7
        %v4544 = vsub.s32 0, %v4543
        %v4545 = vrot.slane %v2085, %v4544
        %v4691 = vunpack.c.l.b16 %v1941
        %v4692 = vunpack.c.l.b16 %v1942
        %v4693 = vunpack.c.l.b16 %v1943
        %v4694 = vunpack.c.l.b16 %v1944
        %v4695 = vunpack.c.l.b16 %v1945
        %v4696 = vunpack.c.l.b16 %v1946
        %v4697 = vunpack.c.l.b16 %v1947
        %v4698 = vunpack.c.l.b16 %v1948
        %v4699 = vunpack.c.l.b16 %v1949
        %v4700 = vunpack.c.l.b16 %v1950
        %v4701 = vunpack.c.l.b16 %v1951
        %v4702 = vunpack.c.l.b16 %v1952
        %v4703 = vunpack.c.l.b16 %v1953
        %v4704 = vunpack.c.l.b16 %v1954
        %v4705 = vunpack.c.l.b16 %v1955
        %v4706 = vunpack.c.l.b16 %v1956
        %v4707 = vunpack.c.l.b16 %v1957
        %v4708 = vunpack.c.l.b16 %v1958
        %v4709 = vunpack.c.l.b16 %v1959
        %v4710 = vunpack.c.l.b16 %v1960
        %v4711 = vunpack.c.l.b16 %v1961
        %v4712 = vunpack.c.l.b16 %v1962
        %v4713 = vunpack.c.l.b16 %v1963
        %v4714 = vunpack.c.l.b16 %v1964
        %v4715 = vunpack.c.l.b16 %v1965
        %v4716 = vunpack.c.l.b16 %v1966
        %v4717 = vunpack.c.l.b16 %v1967
        %v4718 = vunpack.c.l.b16 %v1968
        %v4719 = vunpack.c.l.b16 %v1969
        %v4720 = vunpack.c.l.b16 %v1970
        %v4721 = vunpack.c.l.b16 %v1971
        %v4722 = vunpack.c.l.b16 %v1972
        %v4723 = vunpack.c.l.b16 %v1973
        %v4724 = vunpack.c.l.b16 %v1974
        %v4725 = vunpack.c.l.b16 %v1975
        %v4726 = vunpack.c.l.b16 %v1976
        %v4727 = vunpack.c.l.b16 %v1977
        %v4728 = vunpack.c.l.b16 %v1978
        %v4729 = vunpack.c.l.b16 %v1979
        %v4730 = vunpack.c.l.b16 %v1980
        %v4731 = vunpack.c.l.b16 %v1981
        %v4732 = vunpack.c.l.b16 %v1982
        %v4733 = vunpack.c.l.b16 %v1983
        %v4734 = vunpack.c.l.b16 %v1984
        %v4735 = vunpack.c.l.b16 %v1985
        %v4736 = vunpack.c.l.b16 %v1986
        %v4737 = vunpack.c.l.b16 %v1987
        %v4738 = vunpack.c.l.b16 %v1988
        %v4739 = vunpack.c.l.b16 %v1989
        %v4740 = vunpack.c.l.b16 %v1990
        %v4741 = vunpack.c.l.b16 %v1991
        %v4742 = vunpack.c.l.b16 %v1992
        %v4743 = vunpack.c.l.b16 %v1993
        %v4744 = vunpack.c.l.b16 %v1994
        %v4745 = vunpack.c.l.b16 %v1995
        %v4746 = vunpack.c.l.b16 %v1996
        %v4747 = vunpack.c.l.b16 %v1997
        %v4748 = vunpack.c.l.b16 %v1998
        %v4749 = vunpack.c.l.b16 %v1999
        %v4750 = vunpack.c.l.b16 %v2000
        %v4751 = vunpack.c.l.b16 %v2001
        %v4752 = vunpack.c.l.b16 %v2002
        %v4753 = vunpack.c.l.b16 %v2003
        %v4754 = vunpack.c.l.b16 %v2004
        %v4755 = vunpack.c.l.b16 %v2005
        %v4756 = vunpack.c.l.b16 %v2006
        %v4757 = vunpack.c.l.b16 %v2007
        %v4758 = vunpack.c.l.b16 %v2008
        %v4759 = vunpack.c.l.b16 %v2009
        %v4760 = vunpack.c.l.b16 %v2010
        %v4761 = vunpack.c.l.b16 %v2011
        %v4762 = vunpack.c.l.b16 %v2012
        %v4763 = vunpack.c.l.b16 %v2013
        %v4764 = vunpack.c.l.b16 %v2014
        %v4765 = vunpack.c.l.b16 %v2015
        %v4766 = vunpack.c.l.b16 %v2016
        %v4767 = vunpack.c.l.b16 %v2017
        %v4768 = vunpack.c.l.b16 %v2018
        %v4769 = vunpack.c.l.b16 %v2019
        %v4770 = vunpack.c.l.b16 %v2020
        %v4771 = vunpack.c.l.b16 %v2021
        %v4772 = vunpack.c.l.b16 %v2022
        %v4773 = vunpack.c.l.b16 %v2023
        %v4774 = vunpack.c.l.b16 %v2024
        %v4775 = vunpack.c.l.b16 %v2025
        %v4776 = vunpack.c.l.b16 %v2026
        %v4777 = vunpack.c.l.b16 %v2027
        %v4778 = vunpack.c.l.b16 %v2028
        %v4779 = vunpack.c.l.b16 %v2029
        %v4780 = vunpack.c.l.b16 %v2030
        %v4781 = vunpack.c.l.b16 %v2031
        %v4782 = vunpack.c.l.b16 %v2032
        %v4783 = vunpack.c.l.b16 %v2033
        %v4784 = vunpack.c.l.b16 %v2034
        %v4785 = vunpack.c.l.b16 %v2035
        %v4786 = vunpack.c.l.b16 %v2036
        %v4787 = vunpack.c.l.b16 %v2037
        %v4788 = vunpack.c.l.b16 %v2038
        %v4789 = vunpack.c.l.b16 %v2039
        %v4790 = vunpack.c.l.b16 %v2040
        %v4791 = vunpack.c.l.b16 %v2041
        %v4792 = vunpack.c.l.b16 %v2042
        %v4793 = vunpack.c.l.b16 %v2043
        %v4794 = vunpack.c.l.b16 %v2044
        %v4795 = vunpack.c.l.b16 %v2045
        %v4796 = vunpack.c.l.b16 %v2046
        %v4797 = vunpack.c.l.b16 %v2047
        %v4798 = vunpack.c.l.b16 %v2048
        %v4799 = vunpack.c.l.b16 %v2049
        %v4800 = vunpack.c.l.b16 %v2050
        %v4801 = vunpack.c.l.b16 %v2051
        %v4802 = vunpack.c.l.b16 %v2052
        %v4803 = vunpack.c.l.b16 %v2053
        %v4804 = vunpack.c.l.b16 %v2054
        %v4805 = vunpack.c.l.b16 %v2055
        %v4806 = vunpack.c.l.b16 %v2056
        %v4807 = vunpack.c.l.b16 %v2057
        %v4808 = vunpack.c.l.b16 %v2058
        %v4809 = vunpack.c.l.b16 %v2059
        %v4810 = vunpack.c.l.b16 %v2060
        %v4811 = vunpack.c.l.b16 %v2061
        %v4812 = vunpack.c.l.b16 %v2062
        %v4813 = vunpack.c.l.b16 %v2063
        %v4814 = vunpack.c.l.b16 %v2064
        %v4815 = vunpack.c.l.b16 %v2065
        %v4816 = vunpack.c.l.b16 %v2066
        %v4817 = vunpack.c.l.b16 %v2067
        %v4818 = vunpack.c.l.b16 %v2068
        %v4819 = vunpack.c.l.b16 %v2069
        %v4820 = vunpack.c.l.b16 %v2070
        %v4821 = vunpack.c.l.b16 %v2071
        %v4822 = vunpack.c.l.b16 %v2072
        %v4823 = vunpack.c.l.b16 %v2073
        %v4824 = vunpack.c.l.b16 %v2074
        %v4825 = vunpack.c.l.b16 %v2075
        %v4826 = vunpack.c.l.b16 %v2076
        %v4827 = vunpack.c.l.b16 %v2077
        %v4828 = vunpack.c.l.b16 %v2078
        %v4829 = vunpack.c.l.b16 %v2079
        %v4830 = vunpack.c.l.b16 %v2080
        %v4831 = vunpack.c.l.b16 %v2081
        %v4832 = vunpack.c.l.b16 %v2082
        %v4833 = vunpack.c.l.b16 %v2083
        %v4834 = vunpack.c.l.b16 %v2084
        %v4835 = vpack.c.b16 %v4692, %v4691
        %v4836 = vpack.c.b16 %v4694, %v4693
        %v4837 = vpack.c.b16 %v4696, %v4695
        %v4838 = vpack.c.b16 %v4698, %v4697
        %v4839 = vpack.c.b16 %v4700, %v4699
        %v4840 = vpack.c.b16 %v4702, %v4701
        %v4841 = vpack.c.b16 %v4704, %v4703
        %v4842 = vpack.c.b16 %v4706, %v4705
        %v4843 = vpack.c.b16 %v4708, %v4707
        %v4844 = vpack.c.b16 %v4710, %v4709
        %v4845 = vpack.c.b16 %v4712, %v4711
        %v4846 = vpack.c.b16 %v4714, %v4713
        %v4847 = vpack.c.b16 %v4716, %v4715
        %v4848 = vpack.c.b16 %v4718, %v4717
        %v4849 = vpack.c.b16 %v4720, %v4719
        %v4850 = vpack.c.b16 %v4722, %v4721
        %v4851 = vpack.c.b16 %v4724, %v4723
        %v4852 = vpack.c.b16 %v4726, %v4725
        %v4853 = vpack.c.b16 %v4728, %v4727
        %v4854 = vpack.c.b16 %v4730, %v4729
        %v4855 = vpack.c.b16 %v4732, %v4731
        %v4856 = vpack.c.b16 %v4734, %v4733
        %v4857 = vpack.c.b16 %v4736, %v4735
        %v4858 = vpack.c.b16 %v4738, %v4737
        %v4859 = vpack.c.b16 %v4740, %v4739
        %v4860 = vpack.c.b16 %v4742, %v4741
        %v4861 = vpack.c.b16 %v4744, %v4743
        %v4862 = vpack.c.b16 %v4746, %v4745
        %v4863 = vpack.c.b16 %v4748, %v4747
        %v4864 = vpack.c.b16 %v4750, %v4749
        %v4865 = vpack.c.b16 %v4752, %v4751
        %v4866 = vpack.c.b16 %v4754, %v4753
        %v4867 = vpack.c.b16 %v4756, %v4755
        %v4868 = vpack.c.b16 %v4758, %v4757
        %v4869 = vpack.c.b16 %v4760, %v4759
        %v4870 = vpack.c.b16 %v4762, %v4761
        %v4871 = vpack.c.b16 %v4764, %v4763
        %v4872 = vpack.c.b16 %v4766, %v4765
        %v4873 = vpack.c.b16 %v4768, %v4767
        %v4874 = vpack.c.b16 %v4770, %v4769
        %v4875 = vpack.c.b16 %v4772, %v4771
        %v4876 = vpack.c.b16 %v4774, %v4773
        %v4877 = vpack.c.b16 %v4776, %v4775
        %v4878 = vpack.c.b16 %v4778, %v4777
        %v4879 = vpack.c.b16 %v4780, %v4779
        %v4880 = vpack.c.b16 %v4782, %v4781
        %v4881 = vpack.c.b16 %v4784, %v4783
        %v4882 = vpack.c.b16 %v4786, %v4785
        %v4883 = vpack.c.b16 %v4788, %v4787
        %v4884 = vpack.c.b16 %v4790, %v4789
        %v4885 = vpack.c.b16 %v4792, %v4791
        %v4886 = vpack.c.b16 %v4794, %v4793
        %v4887 = vpack.c.b16 %v4796, %v4795
        %v4888 = vpack.c.b16 %v4798, %v4797
        %v4889 = vpack.c.b16 %v4800, %v4799
        %v4890 = vpack.c.b16 %v4802, %v4801
        %v4891 = vpack.c.b16 %v4804, %v4803
        %v4892 = vpack.c.b16 %v4806, %v4805
        %v4893 = vpack.c.b16 %v4808, %v4807
        %v4894 = vpack.c.b16 %v4810, %v4809
        %v4895 = vpack.c.b16 %v4812, %v4811
        %v4896 = vpack.c.b16 %v4814, %v4813
        %v4897 = vpack.c.b16 %v4816, %v4815
        %v4898 = vpack.c.b16 %v4818, %v4817
        %v4899 = vpack.c.b16 %v4820, %v4819
        %v4900 = vpack.c.b16 %v4822, %v4821
        %v4901 = vpack.c.b16 %v4824, %v4823
        %v4902 = vpack.c.b16 %v4826, %v4825
        %v4903 = vpack.c.b16 %v4828, %v4827
        %v4904 = vpack.c.b16 %v4830, %v4829
        %v4905 = vpack.c.b16 %v4832, %v4831
        %v4906 = vpack.c.b16 %v4834, %v4833
        %4979 = vmatprep.subr.bf16.mxu0 0
        %4980 = vmatpush1.bf16.msra.mxu0 %v4835
        %4981 = vmatprep.subr.bf16.mxu0 0
        %4982 = vmatpush1.bf16.msra.mxu0 %v4836
        %4983 = vmatprep.subr.bf16.mxu0 0
        %4984 = vmatpush1.bf16.msra.mxu0 %v4837
        %4985 = vmatprep.subr.bf16.mxu0 0
        %4986 = vmatpush1.bf16.msra.mxu0 %v4838
        %4987 = vmatprep.subr.bf16.mxu0 0
        %4988 = vmatpush1.bf16.msra.mxu0 %v4839
        %4989 = vmatprep.subr.bf16.mxu0 0
        %4990 = vmatpush1.bf16.msra.mxu0 %v4840
        %4991 = vmatprep.subr.bf16.mxu0 0
        %4992 = vmatpush1.bf16.msra.mxu0 %v4841
        %4993 = vmatprep.subr.bf16.mxu0 0
        %4994 = vmatpush1.bf16.msra.mxu0 %v4842
        %4995 = vmatprep.subr.bf16.mxu0 0
        %4996 = vmatpush1.bf16.msra.mxu0 %v4843
        %4997 = vmatprep.subr.bf16.mxu0 0
        %4998 = vmatpush1.bf16.msra.mxu0 %v4844
        %4999 = vmatprep.subr.bf16.mxu0 0
        %5000 = vmatpush1.bf16.msra.mxu0 %v4845
        %5001 = vmatprep.subr.bf16.mxu0 0
        %5002 = vmatpush1.bf16.msra.mxu0 %v4846
        %5003 = vmatprep.subr.bf16.mxu0 0
        %5004 = vmatpush1.bf16.msra.mxu0 %v4847
        %5005 = vmatprep.subr.bf16.mxu0 0
        %5006 = vmatpush1.bf16.msra.mxu0 %v4848
        %5007 = vmatprep.subr.bf16.mxu0 0
        %5008 = vmatpush1.bf16.msra.mxu0 %v4849
        %5009 = vmatprep.subr.bf16.mxu0 0
        %5010 = vmatpush1.bf16.msra.mxu0 %v4850
        %5011 = vmatprep.mubr.bf16.mxu0 %v4029
        %5012 = vmatmul.mubr.bf16.gmra.mrb[0].mxu0 %v3965
        %v5013 = vpop.f32.mrb[0].mxu0
        %v5014 = vadd.f32 %v4545, %v5013
        %v5015 = vpop.f32.mrb[0].mxu0
        %v5016 = vpop.f32.mrb[0].mxu0
        %v5017 = vadd.f32 %v4545, %v5016
        %v5018 = vpop.f32.mrb[0].mxu0
        %5019 = vmatprep.mubr.bf16.mxu0 %v4030
        %5020 = vmatmul.mubr.bf16.gmra.mrb[0].mxu0 %v3966
        %v5021 = vpop.f32.mrb[0].mxu0
        %v5022 = vadd.f32 %v4545, %v5021
        %v5023 = vpop.f32.mrb[0].mxu0
        %v5024 = vpop.f32.mrb[0].mxu0
        %v5025 = vadd.f32 %v4545, %v5024
        %v5026 = vpop.f32.mrb[0].mxu0
        %5027 = vmatprep.mubr.bf16.mxu0 %v4031
        %5028 = vmatmul.mubr.bf16.gmra.mrb[0].mxu0 %v3967
        %v5029 = vpop.f32.mrb[0].mxu0
        %v5030 = vadd.f32 %v4545, %v5029
        %v5031 = vpop.f32.mrb[0].mxu0
        %v5032 = vpop.f32.mrb[0].mxu0
        %v5033 = vadd.f32 %v4545, %v5032
        %v5034 = vpop.f32.mrb[0].mxu0
        %5035 = vmatprep.mubr.bf16.mxu0 %v4032
        %5036 = vmatmul.mubr.bf16.gmra.mrb[0].mxu0 %v3968
        %v5037 = vpop.f32.mrb[0].mxu0
        %v5038 = vadd.f32 %v4545, %v5037
        %v5039 = vpop.f32.mrb[0].mxu0
        %v5040 = vpop.f32.mrb[0].mxu0
        %v5041 = vadd.f32 %v4545, %v5040
        %v5042 = vpop.f32.mrb[0].mxu0
        %5043 = vmatprep.mubr.bf16.mxu0 %v4033
        %5044 = vmatmul.mubr.bf16.gmra.mrb[0].mxu0 %v3969
        %v5045 = vpop.f32.mrb[0].mxu0
        %v5046 = vadd.f32 %v4545, %v5045
        %v5047 = vpop.f32.mrb[0].mxu0
        %v5048 = vpop.f32.mrb[0].mxu0
        %v5049 = vadd.f32 %v4545, %v5048
        %v5050 = vpop.f32.mrb[0].mxu0
        %5051 = vmatprep.mubr.bf16.mxu0 %v4034
        %5052 = vmatmul.mubr.bf16.gmra.mrb[0].mxu0 %v3970
        %v5053 = vpop.f32.mrb[0].mxu0
        %v5054 = vadd.f32 %v4545, %v5053
        %v5055 = vpop.f32.mrb[0].mxu0
        %v5056 = vpop.f32.mrb[0].mxu0
        %v5057 = vadd.f32 %v4545, %v5056
        %v5058 = vpop.f32.mrb[0].mxu0
        %5059 = vmatprep.mubr.bf16.mxu0 %v4035
        %5060 = vmatmul.mubr.bf16.gmra.mrb[0].mxu0 %v3971
        %v5061 = vpop.f32.mrb[0].mxu0
        %v5062 = vadd.f32 %v4545, %v5061
        %v5063 = vpop.f32.mrb[0].mxu0
        %v5064 = vpop.f32.mrb[0].mxu0
        %v5065 = vadd.f32 %v4545, %v5064
        %v5066 = vpop.f32.mrb[0].mxu0
        %5067 = vmatprep.mubr.bf16.mxu0 %v4036
        %5068 = vmatmul.mubr.bf16.gmra.mrb[0].mxu0 %v3972
        %v5069 = vpop.f32.mrb[0].mxu0
        %v5070 = vadd.f32 %v4545, %v5069
        %v5071 = vpop.f32.mrb[0].mxu0
        %v5072 = vpop.f32.mrb[0].mxu0
        %v5073 = vadd.f32 %v4545, %v5072
        %v5074 = vpop.f32.mrb[0].mxu0
        %5075 = vmatprep.mubr.bf16.mxu0 %v4037
        %5076 = vmatmul.mubr.bf16.gmra.mrb[0].mxu0 %v3973
        %v5077 = vpop.f32.mrb[0].mxu0
        %v5078 = vadd.f32 %v4545, %v5077
        %v5079 = vpop.f32.mrb[0].mxu0
        %v5080 = vpop.f32.mrb[0].mxu0
        %v5081 = vadd.f32 %v4545, %v5080
        %v5082 = vpop.f32.mrb[0].mxu0
        %5083 = vmatprep.mubr.bf16.mxu0 %v4038
        %5084 = vmatmul.mubr.bf16.gmra.mrb[0].mxu0 %v3974
        %v5085 = vpop.f32.mrb[0].mxu0
        %v5086 = vadd.f32 %v4545, %v5085
        %v5087 = vpop.f32.mrb[0].mxu0
        %v5088 = vpop.f32.mrb[0].mxu0
        %v5089 = vadd.f32 %v4545, %v5088
        %v5090 = vpop.f32.mrb[0].mxu0
        %5091 = vmatprep.mubr.bf16.mxu0 %v4039
        %5092 = vmatmul.mubr.bf16.gmra.mrb[0].mxu0 %v3975
        %v5093 = vpop.f32.mrb[0].mxu0
        %v5094 = vadd.f32 %v4545, %v5093
        %v5095 = vpop.f32.mrb[0].mxu0
        %v5096 = vpop.f32.mrb[0].mxu0
        %v5097 = vadd.f32 %v4545, %v5096
        %v5098 = vpop.f32.mrb[0].mxu0
        %5099 = vmatprep.mubr.bf16.mxu0 %v4040
        %5100 = vmatmul.mubr.bf16.gmra.mrb[0].mxu0 %v3976
        %v5101 = vpop.f32.mrb[0].mxu0
        %v5102 = vadd.f32 %v4545, %v5101
        %v5103 = vpop.f32.mrb[0].mxu0
        %v5104 = vpop.f32.mrb[0].mxu0
        %v5105 = vadd.f32 %v4545, %v5104
        %v5106 = vpop.f32.mrb[0].mxu0
        %5107 = vmatprep.mubr.bf16.mxu0 %v4041
        %5108 = vmatmul.mubr.bf16.gmra.mrb[0].mxu0 %v3977
        %v5109 = vpop.f32.mrb[0].mxu0
        %v5110 = vadd.f32 %v4545, %v5109
        %v5111 = vpop.f32.mrb[0].mxu0
        %v5112 = vpop.f32.mrb[0].mxu0
        %v5113 = vadd.f32 %v4545, %v5112
        %v5114 = vpop.f32.mrb[0].mxu0
        %5115 = vmatprep.mubr.bf16.mxu0 %v4042
        %5116 = vmatmul.mubr.bf16.gmra.mrb[0].mxu0 %v3978
        %v5117 = vpop.f32.mrb[0].mxu0
        %v5118 = vadd.f32 %v4545, %v5117
        %v5119 = vpop.f32.mrb[0].mxu0
        %v5120 = vpop.f32.mrb[0].mxu0
        %v5121 = vadd.f32 %v4545, %v5120
        %v5122 = vpop.f32.mrb[0].mxu0
        %5123 = vmatprep.mubr.bf16.mxu0 %v4043
        %5124 = vmatmul.mubr.bf16.gmra.mrb[0].mxu0 %v3979
        %v5125 = vpop.f32.mrb[0].mxu0
        %v5126 = vadd.f32 %v4545, %v5125
        %v5127 = vpop.f32.mrb[0].mxu0
        %v5128 = vpop.f32.mrb[0].mxu0
        %v5129 = vadd.f32 %v4545, %v5128
        %v5130 = vpop.f32.mrb[0].mxu0
        %5131 = vmatprep.mubr.bf16.mxu0 %v4044
        %5132 = vmatmul.mubr.bf16.gmra.mrb[0].mxu0 %v3980
        %v5133 = vpop.f32.mrb[0].mxu0
        %v5134 = vadd.f32 %v4545, %v5133
        %v5135 = vpop.f32.mrb[0].mxu0
        %v5136 = vpop.f32.mrb[0].mxu0
        %v5137 = vadd.f32 %v4545, %v5136
        %v5138 = vpop.f32.mrb[0].mxu0
        %5139 = vdwg.mxu0
        %5140 = vmatprep.subr.bf16.mxu0 0
        %5141 = vmatpush1.bf16.msra.mxu0 %v4851
        %5142 = vmatprep.subr.bf16.mxu0 0
        %5143 = vmatpush1.bf16.msra.mxu0 %v4852
        %5144 = vmatprep.subr.bf16.mxu0 0
        %5145 = vmatpush1.bf16.msra.mxu0 %v4853
        %5146 = vmatprep.subr.bf16.mxu0 0
        %5147 = vmatpush1.bf16.msra.mxu0 %v4854
        %5148 = vmatprep.subr.bf16.mxu0 0
        %5149 = vmatpush1.bf16.msra.mxu0 %v4855
        %5150 = vmatprep.subr.bf16.mxu0 0
        %5151 = vmatpush1.bf16.msra.mxu0 %v4856
        %5152 = vmatprep.subr.bf16.mxu0 0
        %5153 = vmatpush1.bf16.msra.mxu0 %v4857
        %5154 = vmatprep.subr.bf16.mxu0 0
        %5155 = vmatpush1.bf16.msra.mxu0 %v4858
        %5156 = vmatprep.subr.bf16.mxu0 0
        %5157 = vmatpush1.bf16.msra.mxu0 %v4859
        %5158 = vmatprep.subr.bf16.mxu0 0
        %5159 = vmatpush1.bf16.msra.mxu0 %v4860
        %5160 = vmatprep.subr.bf16.mxu0 0
        %5161 = vmatpush1.bf16.msra.mxu0 %v4861
        %5162 = vmatprep.subr.bf16.mxu0 0
        %5163 = vmatpush1.bf16.msra.mxu0 %v4862
        %5164 = vmatprep.subr.bf16.mxu0 0
        %5165 = vmatpush1.bf16.msra.mxu0 %v4863
        %5166 = vmatprep.subr.bf16.mxu0 0
        %5167 = vmatpush1.bf16.msra.mxu0 %v4864
        %5168 = vmatprep.subr.bf16.mxu0 0
        %5169 = vmatpush1.bf16.msra.mxu0 %v4865
        %5170 = vmatprep.subr.bf16.mxu0 0
        %5171 = vmatpush1.bf16.msra.mxu0 %v4866
        %5172 = vmatprep.mubr.bf16.mxu0 %v4173
        %5173 = vmatmul.mubr.bf16.gmra.mrb[0].mxu0 %v4093
        %v5174 = vpop.f32.mrb[0].mxu0
        %v5175 = vadd.f32 %v5014, %v5174
        %v5176 = vpop.f32.mrb[0].mxu0
        %v5177 = vpop.f32.mrb[0].mxu0
        %v5178 = vadd.f32 %v5017, %v5177
        %v5179 = vpop.f32.mrb[0].mxu0
        %5180 = vmatprep.mubr.bf16.mxu0 %v4174
        %5181 = vmatmul.mubr.bf16.gmra.mrb[0].mxu0 %v4094
        %v5182 = vpop.f32.mrb[0].mxu0
        %v5183 = vadd.f32 %v5022, %v5182
        %v5184 = vpop.f32.mrb[0].mxu0
        %v5185 = vpop.f32.mrb[0].mxu0
        %v5186 = vadd.f32 %v5025, %v5185
        %v5187 = vpop.f32.mrb[0].mxu0
        %5188 = vmatprep.mubr.bf16.mxu0 %v4175
        %5189 = vmatmul.mubr.bf16.gmra.mrb[0].mxu0 %v4095
        %v5190 = vpop.f32.mrb[0].mxu0
        %v5191 = vadd.f32 %v5030, %v5190
        %v5192 = vpop.f32.mrb[0].mxu0
        %v5193 = vpop.f32.mrb[0].mxu0
        %v5194 = vadd.f32 %v5033, %v5193
        %v5195 = vpop.f32.mrb[0].mxu0
        %5196 = vmatprep.mubr.bf16.mxu0 %v4176
        %5197 = vmatmul.mubr.bf16.gmra.mrb[0].mxu0 %v4096
        %v5198 = vpop.f32.mrb[0].mxu0
        %v5199 = vadd.f32 %v5038, %v5198
        %v5200 = vpop.f32.mrb[0].mxu0
        %v5201 = vpop.f32.mrb[0].mxu0
        %v5202 = vadd.f32 %v5041, %v5201
        %v5203 = vpop.f32.mrb[0].mxu0
        %5204 = vmatprep.mubr.bf16.mxu0 %v4177
        %5205 = vmatmul.mubr.bf16.gmra.mrb[0].mxu0 %v4097
        %v5206 = vpop.f32.mrb[0].mxu0
        %v5207 = vadd.f32 %v5046, %v5206
        %v5208 = vpop.f32.mrb[0].mxu0
        %v5209 = vpop.f32.mrb[0].mxu0
        %v5210 = vadd.f32 %v5049, %v5209
        %v5211 = vpop.f32.mrb[0].mxu0
        %5212 = vmatprep.mubr.bf16.mxu0 %v4178
        %5213 = vmatmul.mubr.bf16.gmra.mrb[0].mxu0 %v4098
        %v5214 = vpop.f32.mrb[0].mxu0
        %v5215 = vadd.f32 %v5054, %v5214
        %v5216 = vpop.f32.mrb[0].mxu0
        %v5217 = vpop.f32.mrb[0].mxu0
        %v5218 = vadd.f32 %v5057, %v5217
        %v5219 = vpop.f32.mrb[0].mxu0
        %5220 = vmatprep.mubr.bf16.mxu0 %v4179
        %5221 = vmatmul.mubr.bf16.gmra.mrb[0].mxu0 %v4099
        %v5222 = vpop.f32.mrb[0].mxu0
        %v5223 = vadd.f32 %v5062, %v5222
        %v5224 = vpop.f32.mrb[0].mxu0
        %v5225 = vpop.f32.mrb[0].mxu0
        %v5226 = vadd.f32 %v5065, %v5225
        %v5227 = vpop.f32.mrb[0].mxu0
        %5228 = vmatprep.mubr.bf16.mxu0 %v4180
        %5229 = vmatmul.mubr.bf16.gmra.mrb[0].mxu0 %v4100
        %v5230 = vpop.f32.mrb[0].mxu0
        %v5231 = vadd.f32 %v5070, %v5230
        %v5232 = vpop.f32.mrb[0].mxu0
        %v5233 = vpop.f32.mrb[0].mxu0
        %v5234 = vadd.f32 %v5073, %v5233
        %v5235 = vpop.f32.mrb[0].mxu0
        %5236 = vmatprep.mubr.bf16.mxu0 %v4181
        %5237 = vmatmul.mubr.bf16.gmra.mrb[0].mxu0 %v4101
        %v5238 = vpop.f32.mrb[0].mxu0
        %v5239 = vadd.f32 %v5078, %v5238
        %v5240 = vpop.f32.mrb[0].mxu0
        %v5241 = vpop.f32.mrb[0].mxu0
        %v5242 = vadd.f32 %v5081, %v5241
        %v5243 = vpop.f32.mrb[0].mxu0
        %5244 = vmatprep.mubr.bf16.mxu0 %v4182
        %5245 = vmatmul.mubr.bf16.gmra.mrb[0].mxu0 %v4102
        %v5246 = vpop.f32.mrb[0].mxu0
        %v5247 = vadd.f32 %v5086, %v5246
        %v5248 = vpop.f32.mrb[0].mxu0
        %v5249 = vpop.f32.mrb[0].mxu0
        %v5250 = vadd.f32 %v5089, %v5249
        %v5251 = vpop.f32.mrb[0].mxu0
        %5252 = vmatprep.mubr.bf16.mxu0 %v4183
        %5253 = vmatmul.mubr.bf16.gmra.mrb[0].mxu0 %v4103
        %v5254 = vpop.f32.mrb[0].mxu0
        %v5255 = vadd.f32 %v5094, %v5254
        %v5256 = vpop.f32.mrb[0].mxu0
        %v5257 = vpop.f32.mrb[0].mxu0
        %v5258 = vadd.f32 %v5097, %v5257
        %v5259 = vpop.f32.mrb[0].mxu0
        %5260 = vmatprep.mubr.bf16.mxu0 %v4184
        %5261 = vmatmul.mubr.bf16.gmra.mrb[0].mxu0 %v4104
        %v5262 = vpop.f32.mrb[0].mxu0
        %v5263 = vadd.f32 %v5102, %v5262
        %v5264 = vpop.f32.mrb[0].mxu0
        %v5265 = vpop.f32.mrb[0].mxu0
        %v5266 = vadd.f32 %v5105, %v5265
        %v5267 = vpop.f32.mrb[0].mxu0
        %5268 = vmatprep.mubr.bf16.mxu0 %v4185
        %5269 = vmatmul.mubr.bf16.gmra.mrb[0].mxu0 %v4105
        %v5270 = vpop.f32.mrb[0].mxu0
        %v5271 = vadd.f32 %v5110, %v5270
        %v5272 = vpop.f32.mrb[0].mxu0
        %v5273 = vpop.f32.mrb[0].mxu0
        %v5274 = vadd.f32 %v5113, %v5273
        %v5275 = vpop.f32.mrb[0].mxu0
        %5276 = vmatprep.mubr.bf16.mxu0 %v4186
        %5277 = vmatmul.mubr.bf16.gmra.mrb[0].mxu0 %v4106
        %v5278 = vpop.f32.mrb[0].mxu0
        %v5279 = vadd.f32 %v5118, %v5278
        %v5280 = vpop.f32.mrb[0].mxu0
        %v5281 = vpop.f32.mrb[0].mxu0
        %v5282 = vadd.f32 %v5121, %v5281
        %v5283 = vpop.f32.mrb[0].mxu0
        %5284 = vmatprep.mubr.bf16.mxu0 %v4187
        %5285 = vmatmul.mubr.bf16.gmra.mrb[0].mxu0 %v4107
        %v5286 = vpop.f32.mrb[0].mxu0
        %v5287 = vadd.f32 %v5126, %v5286
        %v5288 = vpop.f32.mrb[0].mxu0
        %v5289 = vpop.f32.mrb[0].mxu0
        %v5290 = vadd.f32 %v5129, %v5289
        %v5291 = vpop.f32.mrb[0].mxu0
        %5292 = vmatprep.mubr.bf16.mxu0 %v4188
        %5293 = vmatmul.mubr.bf16.gmra.mrb[0].mxu0 %v4108
        %v5294 = vpop.f32.mrb[0].mxu0
        %v5295 = vadd.f32 %v5134, %v5294
        %v5296 = vpop.f32.mrb[0].mxu0
        %v5297 = vpop.f32.mrb[0].mxu0
        %v5298 = vadd.f32 %v5137, %v5297
        %v5299 = vpop.f32.mrb[0].mxu0
        %5300 = vdwg.mxu0
        %5301 = vmatprep.subr.bf16.mxu0 0
        %5302 = vmatpush1.bf16.msra.mxu0 %v4867
        %5303 = vmatprep.subr.bf16.mxu0 0
        %5304 = vmatpush1.bf16.msra.mxu0 %v4868
        %5305 = vmatprep.subr.bf16.mxu0 0
        %5306 = vmatpush1.bf16.msra.mxu0 %v4869
        %5307 = vmatprep.subr.bf16.mxu0 0
        %5308 = vmatpush1.bf16.msra.mxu0 %v4870
        %5309 = vmatprep.subr.bf16.mxu0 0
        %5310 = vmatpush1.bf16.msra.mxu0 %v4871
        %5311 = vmatprep.subr.bf16.mxu0 0
        %5312 = vmatpush1.bf16.msra.mxu0 %v4872
        %5313 = vmatprep.subr.bf16.mxu0 0
        %5314 = vmatpush1.bf16.msra.mxu0 %v4873
        %5315 = vmatprep.subr.bf16.mxu0 0
        %5316 = vmatpush1.bf16.msra.mxu0 %v4874
        %5317 = vmatprep.subr.bf16.mxu0 0
        %5318 = vmatpush1.bf16.msra.mxu0 %v4875
        %5319 = vmatprep.subr.bf16.mxu0 0
        %5320 = vmatpush1.bf16.msra.mxu0 %v4876
        %5321 = vmatprep.subr.bf16.mxu0 0
        %5322 = vmatpush1.bf16.msra.mxu0 %v4877
        %5323 = vmatprep.subr.bf16.mxu0 0
        %5324 = vmatpush1.bf16.msra.mxu0 %v4878
        %5325 = vmatprep.subr.bf16.mxu0 0
        %5326 = vmatpush1.bf16.msra.mxu0 %v4879
        %5327 = vmatprep.subr.bf16.mxu0 0
        %5328 = vmatpush1.bf16.msra.mxu0 %v4880
        %5329 = vmatprep.subr.bf16.mxu0 0
        %5330 = vmatpush1.bf16.msra.mxu0 %v4881
        %5331 = vmatprep.subr.bf16.mxu0 0
        %5332 = vmatpush1.bf16.msra.mxu0 %v4882
        %5333 = vmatprep.mubr.bf16.mxu0 %v4301
        %5334 = vmatmul.mubr.bf16.gmra.mrb[0].mxu0 %v4237
        %v5335 = vpop.f32.mrb[0].mxu0
        %v5336 = vadd.f32 %v5175, %v5335
        %v5337 = vpop.f32.mrb[0].mxu0
        %v5338 = vpop.f32.mrb[0].mxu0
        %v5339 = vadd.f32 %v5178, %v5338
        %v5340 = vpop.f32.mrb[0].mxu0
        %5341 = vmatprep.mubr.bf16.mxu0 %v4302
        %5342 = vmatmul.mubr.bf16.gmra.mrb[0].mxu0 %v4238
        %v5343 = vpop.f32.mrb[0].mxu0
        %v5344 = vadd.f32 %v5183, %v5343
        %v5345 = vpop.f32.mrb[0].mxu0
        %v5346 = vpop.f32.mrb[0].mxu0
        %v5347 = vadd.f32 %v5186, %v5346
        %v5348 = vpop.f32.mrb[0].mxu0
        %5349 = vmatprep.mubr.bf16.mxu0 %v4303
        %5350 = vmatmul.mubr.bf16.gmra.mrb[0].mxu0 %v4239
        %v5351 = vpop.f32.mrb[0].mxu0
        %v5352 = vadd.f32 %v5191, %v5351
        %v5353 = vpop.f32.mrb[0].mxu0
        %v5354 = vpop.f32.mrb[0].mxu0
        %v5355 = vadd.f32 %v5194, %v5354
        %v5356 = vpop.f32.mrb[0].mxu0
        %5357 = vmatprep.mubr.bf16.mxu0 %v4304
        %5358 = vmatmul.mubr.bf16.gmra.mrb[0].mxu0 %v4240
        %v5359 = vpop.f32.mrb[0].mxu0
        %v5360 = vadd.f32 %v5199, %v5359
        %v5361 = vpop.f32.mrb[0].mxu0
        %v5362 = vpop.f32.mrb[0].mxu0
        %v5363 = vadd.f32 %v5202, %v5362
        %v5364 = vpop.f32.mrb[0].mxu0
        %5365 = vmatprep.mubr.bf16.mxu0 %v4305
        %5366 = vmatmul.mubr.bf16.gmra.mrb[0].mxu0 %v4241
        %v5367 = vpop.f32.mrb[0].mxu0
        %v5368 = vadd.f32 %v5207, %v5367
        %v5369 = vpop.f32.mrb[0].mxu0
        %v5370 = vpop.f32.mrb[0].mxu0
        %v5371 = vadd.f32 %v5210, %v5370
        %v5372 = vpop.f32.mrb[0].mxu0
        %5373 = vmatprep.mubr.bf16.mxu0 %v4306
        %5374 = vmatmul.mubr.bf16.gmra.mrb[0].mxu0 %v4242
        %v5375 = vpop.f32.mrb[0].mxu0
        %v5376 = vadd.f32 %v5215, %v5375
        %v5377 = vpop.f32.mrb[0].mxu0
        %v5378 = vpop.f32.mrb[0].mxu0
        %v5379 = vadd.f32 %v5218, %v5378
        %v5380 = vpop.f32.mrb[0].mxu0
        %5381 = vmatprep.mubr.bf16.mxu0 %v4307
        %5382 = vmatmul.mubr.bf16.gmra.mrb[0].mxu0 %v4243
        %v5383 = vpop.f32.mrb[0].mxu0
        %v5384 = vadd.f32 %v5223, %v5383
        %v5385 = vpop.f32.mrb[0].mxu0
        %v5386 = vpop.f32.mrb[0].mxu0
        %v5387 = vadd.f32 %v5226, %v5386
        %v5388 = vpop.f32.mrb[0].mxu0
        %5389 = vmatprep.mubr.bf16.mxu0 %v4308
        %5390 = vmatmul.mubr.bf16.gmra.mrb[0].mxu0 %v4244
        %v5391 = vpop.f32.mrb[0].mxu0
        %v5392 = vadd.f32 %v5231, %v5391
        %v5393 = vpop.f32.mrb[0].mxu0
        %v5394 = vpop.f32.mrb[0].mxu0
        %v5395 = vadd.f32 %v5234, %v5394
        %v5396 = vpop.f32.mrb[0].mxu0
        %5397 = vmatprep.mubr.bf16.mxu0 %v4309
        %5398 = vmatmul.mubr.bf16.gmra.mrb[0].mxu0 %v4245
        %v5399 = vpop.f32.mrb[0].mxu0
        %v5400 = vadd.f32 %v5239, %v5399
        %v5401 = vpop.f32.mrb[0].mxu0
        %v5402 = vpop.f32.mrb[0].mxu0
        %v5403 = vadd.f32 %v5242, %v5402
        %v5404 = vpop.f32.mrb[0].mxu0
        %5405 = vmatprep.mubr.bf16.mxu0 %v4310
        %5406 = vmatmul.mubr.bf16.gmra.mrb[0].mxu0 %v4246
        %v5407 = vpop.f32.mrb[0].mxu0
        %v5408 = vadd.f32 %v5247, %v5407
        %v5409 = vpop.f32.mrb[0].mxu0
        %v5410 = vpop.f32.mrb[0].mxu0
        %v5411 = vadd.f32 %v5250, %v5410
        %v5412 = vpop.f32.mrb[0].mxu0
        %5413 = vmatprep.mubr.bf16.mxu0 %v4311
        %5414 = vmatmul.mubr.bf16.gmra.mrb[0].mxu0 %v4247
        %v5415 = vpop.f32.mrb[0].mxu0
        %v5416 = vadd.f32 %v5255, %v5415
        %v5417 = vpop.f32.mrb[0].mxu0
        %v5418 = vpop.f32.mrb[0].mxu0
        %v5419 = vadd.f32 %v5258, %v5418
        %v5420 = vpop.f32.mrb[0].mxu0
        %5421 = vmatprep.mubr.bf16.mxu0 %v4312
        %5422 = vmatmul.mubr.bf16.gmra.mrb[0].mxu0 %v4248
        %v5423 = vpop.f32.mrb[0].mxu0
        %v5424 = vadd.f32 %v5263, %v5423
        %v5425 = vpop.f32.mrb[0].mxu0
        %v5426 = vpop.f32.mrb[0].mxu0
        %v5427 = vadd.f32 %v5266, %v5426
        %v5428 = vpop.f32.mrb[0].mxu0
        %5429 = vmatprep.mubr.bf16.mxu0 %v4313
        %5430 = vmatmul.mubr.bf16.gmra.mrb[0].mxu0 %v4249
        %v5431 = vpop.f32.mrb[0].mxu0
        %v5432 = vadd.f32 %v5271, %v5431
        %v5433 = vpop.f32.mrb[0].mxu0
        %v5434 = vpop.f32.mrb[0].mxu0
        %v5435 = vadd.f32 %v5274, %v5434
        %v5436 = vpop.f32.mrb[0].mxu0
        %5437 = vmatprep.mubr.bf16.mxu0 %v4314
        %5438 = vmatmul.mubr.bf16.gmra.mrb[0].mxu0 %v4250
        %v5439 = vpop.f32.mrb[0].mxu0
        %v5440 = vadd.f32 %v5279, %v5439
        %v5441 = vpop.f32.mrb[0].mxu0
        %v5442 = vpop.f32.mrb[0].mxu0
        %v5443 = vadd.f32 %v5282, %v5442
        %v5444 = vpop.f32.mrb[0].mxu0
        %5445 = vmatprep.mubr.bf16.mxu0 %v4315
        %5446 = vmatmul.mubr.bf16.gmra.mrb[0].mxu0 %v4251
        %v5447 = vpop.f32.mrb[0].mxu0
        %v5448 = vadd.f32 %v5287, %v5447
        %v5449 = vpop.f32.mrb[0].mxu0
        %v5450 = vpop.f32.mrb[0].mxu0
        %v5451 = vadd.f32 %v5290, %v5450
        %v5452 = vpop.f32.mrb[0].mxu0
        %5453 = vmatprep.mubr.bf16.mxu0 %v4316
        %5454 = vmatmul.mubr.bf16.gmra.mrb[0].mxu0 %v4252
        %v5455 = vpop.f32.mrb[0].mxu0
        %v5456 = vadd.f32 %v5295, %v5455
        %v5457 = vpop.f32.mrb[0].mxu0
        %v5458 = vpop.f32.mrb[0].mxu0
        %v5459 = vadd.f32 %v5298, %v5458
        %v5460 = vpop.f32.mrb[0].mxu0
        %5461 = vdwg.mxu0
        %5462 = vmatprep.subr.bf16.mxu0 0
        %5463 = vmatpush1.bf16.msra.mxu0 %v4883
        %5464 = vmatprep.subr.bf16.mxu0 0
        %5465 = vmatpush1.bf16.msra.mxu0 %v4884
        %5466 = vmatprep.subr.bf16.mxu0 0
        %5467 = vmatpush1.bf16.msra.mxu0 %v4885
        %5468 = vmatprep.subr.bf16.mxu0 0
        %5469 = vmatpush1.bf16.msra.mxu0 %v4886
        %5470 = vmatprep.subr.bf16.mxu0 0
        %5471 = vmatpush1.bf16.msra.mxu0 %v4887
        %5472 = vmatprep.subr.bf16.mxu0 0
        %5473 = vmatpush1.bf16.msra.mxu0 %v4888
        %5474 = vmatprep.subr.bf16.mxu0 0
        %5475 = vmatpush1.bf16.msra.mxu0 %v4889
        %5476 = vmatprep.subr.bf16.mxu0 0
        %5477 = vmatpush1.bf16.msra.mxu0 %v4890
        %5478 = vmatprep.subr.bf16.mxu0 0
        %5479 = vmatpush1.bf16.msra.mxu0 %v4891
        %5480 = vmatprep.subr.bf16.mxu0 0
        %5481 = vmatpush1.bf16.msra.mxu0 %v4892
        %5482 = vmatprep.subr.bf16.mxu0 0
        %5483 = vmatpush1.bf16.msra.mxu0 %v4893
        %5484 = vmatprep.subr.bf16.mxu0 0
        %5485 = vmatpush1.bf16.msra.mxu0 %v4894
        %5486 = vmatprep.subr.bf16.mxu0 0
        %5487 = vmatpush1.bf16.msra.mxu0 %v4895
        %5488 = vmatprep.subr.bf16.mxu0 0
        %5489 = vmatpush1.bf16.msra.mxu0 %v4896
        %5490 = vmatprep.subr.bf16.mxu0 0
        %5491 = vmatpush1.bf16.msra.mxu0 %v4897
        %5492 = vmatprep.subr.bf16.mxu0 0
        %5493 = vmatpush1.bf16.msra.mxu0 %v4898
        %5494 = vmatprep.mubr.bf16.mxu0 %v4445
        %5495 = vmatmul.mubr.bf16.gmra.mrb[0].mxu0 %v4381
        %v5496 = vpop.f32.mrb[0].mxu0
        %v5497 = vadd.f32 %v5336, %v5496
        %v5498 = vpop.f32.mrb[0].mxu0
        %v5499 = vpop.f32.mrb[0].mxu0
        %v5500 = vadd.f32 %v5339, %v5499
        %v5501 = vpop.f32.mrb[0].mxu0
        %5502 = vmatprep.mubr.bf16.mxu0 %v4446
        %5503 = vmatmul.mubr.bf16.gmra.mrb[0].mxu0 %v4382
        %v5504 = vpop.f32.mrb[0].mxu0
        %v5505 = vadd.f32 %v5344, %v5504
        %v5506 = vpop.f32.mrb[0].mxu0
        %v5507 = vpop.f32.mrb[0].mxu0
        %v5508 = vadd.f32 %v5347, %v5507
        %v5509 = vpop.f32.mrb[0].mxu0
        %5510 = vmatprep.mubr.bf16.mxu0 %v4447
        %5511 = vmatmul.mubr.bf16.gmra.mrb[0].mxu0 %v4383
        %v5512 = vpop.f32.mrb[0].mxu0
        %v5513 = vadd.f32 %v5352, %v5512
        %v5514 = vpop.f32.mrb[0].mxu0
        %v5515 = vpop.f32.mrb[0].mxu0
        %v5516 = vadd.f32 %v5355, %v5515
        %v5517 = vpop.f32.mrb[0].mxu0
        %5518 = vmatprep.mubr.bf16.mxu0 %v4448
        %5519 = vmatmul.mubr.bf16.gmra.mrb[0].mxu0 %v4384
        %v5520 = vpop.f32.mrb[0].mxu0
        %v5521 = vadd.f32 %v5360, %v5520
        %v5522 = vpop.f32.mrb[0].mxu0
        %v5523 = vpop.f32.mrb[0].mxu0
        %v5524 = vadd.f32 %v5363, %v5523
        %v5525 = vpop.f32.mrb[0].mxu0
        %5526 = vmatprep.mubr.bf16.mxu0 %v4449
        %5527 = vmatmul.mubr.bf16.gmra.mrb[0].mxu0 %v4385
        %v5528 = vpop.f32.mrb[0].mxu0
        %v5529 = vadd.f32 %v5368, %v5528
        %v5530 = vpop.f32.mrb[0].mxu0
        %v5531 = vpop.f32.mrb[0].mxu0
        %v5532 = vadd.f32 %v5371, %v5531
        %v5533 = vpop.f32.mrb[0].mxu0
        %5534 = vmatprep.mubr.bf16.mxu0 %v4450
        %5535 = vmatmul.mubr.bf16.gmra.mrb[0].mxu0 %v4386
        %v5536 = vpop.f32.mrb[0].mxu0
        %v5537 = vadd.f32 %v5376, %v5536
        %v5538 = vpop.f32.mrb[0].mxu0
        %v5539 = vpop.f32.mrb[0].mxu0
        %v5540 = vadd.f32 %v5379, %v5539
        %v5541 = vpop.f32.mrb[0].mxu0
        %5542 = vmatprep.mubr.bf16.mxu0 %v4451
        %5543 = vmatmul.mubr.bf16.gmra.mrb[0].mxu0 %v4387
        %v5544 = vpop.f32.mrb[0].mxu0
        %v5545 = vadd.f32 %v5384, %v5544
        %v5546 = vpop.f32.mrb[0].mxu0
        %v5547 = vpop.f32.mrb[0].mxu0
        %v5548 = vadd.f32 %v5387, %v5547
        %v5549 = vpop.f32.mrb[0].mxu0
        %5550 = vmatprep.mubr.bf16.mxu0 %v4452
        %5551 = vmatmul.mubr.bf16.gmra.mrb[0].mxu0 %v4388
        %v5552 = vpop.f32.mrb[0].mxu0
        %v5553 = vadd.f32 %v5392, %v5552
        %v5554 = vpop.f32.mrb[0].mxu0
        %v5555 = vpop.f32.mrb[0].mxu0
        %v5556 = vadd.f32 %v5395, %v5555
        %v5557 = vpop.f32.mrb[0].mxu0
        %5558 = vmatprep.mubr.bf16.mxu0 %v4453
        %5559 = vmatmul.mubr.bf16.gmra.mrb[0].mxu0 %v4389
        %v5560 = vpop.f32.mrb[0].mxu0
        %v5561 = vadd.f32 %v5400, %v5560
        %v5562 = vpop.f32.mrb[0].mxu0
        %v5563 = vpop.f32.mrb[0].mxu0
        %v5564 = vadd.f32 %v5403, %v5563
        %v5565 = vpop.f32.mrb[0].mxu0
        %5566 = vmatprep.mubr.bf16.mxu0 %v4454
        %5567 = vmatmul.mubr.bf16.gmra.mrb[0].mxu0 %v4390
        %v5568 = vpop.f32.mrb[0].mxu0
        %v5569 = vadd.f32 %v5408, %v5568
        %v5570 = vpop.f32.mrb[0].mxu0
        %v5571 = vpop.f32.mrb[0].mxu0
        %v5572 = vadd.f32 %v5411, %v5571
        %v5573 = vpop.f32.mrb[0].mxu0
        %5574 = vmatprep.mubr.bf16.mxu0 %v4455
        %5575 = vmatmul.mubr.bf16.gmra.mrb[0].mxu0 %v4391
        %v5576 = vpop.f32.mrb[0].mxu0
        %v5577 = vadd.f32 %v5416, %v5576
        %v5578 = vpop.f32.mrb[0].mxu0
        %v5579 = vpop.f32.mrb[0].mxu0
        %v5580 = vadd.f32 %v5419, %v5579
        %v5581 = vpop.f32.mrb[0].mxu0
        %5582 = vmatprep.mubr.bf16.mxu0 %v4456
        %5583 = vmatmul.mubr.bf16.gmra.mrb[0].mxu0 %v4392
        %v5584 = vpop.f32.mrb[0].mxu0
        %v5585 = vadd.f32 %v5424, %v5584
        %v5586 = vpop.f32.mrb[0].mxu0
        %v5587 = vpop.f32.mrb[0].mxu0
        %v5588 = vadd.f32 %v5427, %v5587
        %v5589 = vpop.f32.mrb[0].mxu0
        %5590 = vmatprep.mubr.bf16.mxu0 %v4457
        %5591 = vmatmul.mubr.bf16.gmra.mrb[0].mxu0 %v4393
        %v5592 = vpop.f32.mrb[0].mxu0
        %v5593 = vadd.f32 %v5432, %v5592
        %v5594 = vpop.f32.mrb[0].mxu0
        %v5595 = vpop.f32.mrb[0].mxu0
        %v5596 = vadd.f32 %v5435, %v5595
        %v5597 = vpop.f32.mrb[0].mxu0
        %5598 = vmatprep.mubr.bf16.mxu0 %v4458
        %5599 = vmatmul.mubr.bf16.gmra.mrb[0].mxu0 %v4394
        %v5600 = vpop.f32.mrb[0].mxu0
        %v5601 = vadd.f32 %v5440, %v5600
        %v5602 = vpop.f32.mrb[0].mxu0
        %v5603 = vpop.f32.mrb[0].mxu0
        %v5604 = vadd.f32 %v5443, %v5603
        %v5605 = vpop.f32.mrb[0].mxu0
        %5606 = vmatprep.mubr.bf16.mxu0 %v4459
        %5607 = vmatmul.mubr.bf16.gmra.mrb[0].mxu0 %v4395
        %v5608 = vpop.f32.mrb[0].mxu0
        %v5609 = vadd.f32 %v5448, %v5608
        %v5610 = vpop.f32.mrb[0].mxu0
        %v5611 = vpop.f32.mrb[0].mxu0
        %v5612 = vadd.f32 %v5451, %v5611
        %v5613 = vpop.f32.mrb[0].mxu0
        %5614 = vmatprep.mubr.bf16.mxu0 %v4460
        %5615 = vmatmul.mubr.bf16.gmra.mrb[0].mxu0 %v4396
        %v5616 = vpop.f32.mrb[0].mxu0
        %v5617 = vadd.f32 %v5456, %v5616
        %v5618 = vpop.f32.mrb[0].mxu0
        %v5619 = vpop.f32.mrb[0].mxu0
        %v5620 = vadd.f32 %v5459, %v5619
        %v5621 = vpop.f32.mrb[0].mxu0
        %5622 = vdwg.mxu0
        %5623 = vmatprep.subr.bf16.mxu0 0
        %5624 = vmatpush1.bf16.msra.mxu0 %v4899
        %5625 = vmatprep.subr.bf16.mxu0 0
        %5626 = vmatpush1.bf16.msra.mxu0 %v4900
        %5627 = vmatprep.subr.bf16.mxu0 0
        %5628 = vmatpush1.bf16.msra.mxu0 %v4901
        %5629 = vmatprep.subr.bf16.mxu0 0
        %5630 = vmatpush1.bf16.msra.mxu0 %v4902
        %5631 = vmatprep.subr.bf16.mxu0 0
        %5632 = vmatpush1.bf16.msra.mxu0 %v4903
        %5633 = vmatprep.subr.bf16.mxu0 0
        %5634 = vmatpush1.bf16.msra.mxu0 %v4904
        %5635 = vmatprep.subr.bf16.mxu0 0
        %5636 = vmatpush1.bf16.msra.mxu0 %v4905
        %5637 = vmatprep.subr.bf16.mxu0 0
        %5638 = vmatpush1.bf16.msra.mxu0 %v4906
        %5639 = vmatprep.subr.bf16.mxu0 0
        %5640 = vmatpush1.bf16.msra.mxu0 0
        %5641 = vmatprep.subr.bf16.mxu0 0
        %5642 = vmatpush1.bf16.msra.mxu0 0
        %5643 = vmatprep.subr.bf16.mxu0 0
        %5644 = vmatpush1.bf16.msra.mxu0 0
        %5645 = vmatprep.subr.bf16.mxu0 0
        %5646 = vmatpush1.bf16.msra.mxu0 0
        %5647 = vmatprep.subr.bf16.mxu0 0
        %5648 = vmatpush1.bf16.msra.mxu0 0
        %5649 = vmatprep.subr.bf16.mxu0 0
        %5650 = vmatpush1.bf16.msra.mxu0 0
        %5651 = vmatprep.subr.bf16.mxu0 0
        %5652 = vmatpush1.bf16.msra.mxu0 0
        %5653 = vmatprep.subr.bf16.mxu0 0
        %5654 = vmatpush1.bf16.msra.mxu0 0
        %5655 = vmatprep.mubr.bf16.mxu0 0
        %5656 = vmatmul.mubr.bf16.gmra.mrb[0].mxu0 %v4509
        %v5657 = vpop.f32.mrb[0].mxu0
        %v5658 = vadd.f32 %v5497, %v5657
        %v5659 = vpop.f32.mrb[0].mxu0
        %v5660 = vpop.f32.mrb[0].mxu0
        %v5661 = vadd.f32 %v5500, %v5660
        %v5662 = vpop.f32.mrb[0].mxu0
        %5663 = vmatprep.mubr.bf16.mxu0 0
        %5664 = vmatmul.mubr.bf16.gmra.mrb[0].mxu0 %v4510
        %v5665 = vpop.f32.mrb[0].mxu0
        %v5666 = vadd.f32 %v5505, %v5665
        %v5667 = vpop.f32.mrb[0].mxu0
        %v5668 = vpop.f32.mrb[0].mxu0
        %v5669 = vadd.f32 %v5508, %v5668
        %v5670 = vpop.f32.mrb[0].mxu0
        %5671 = vmatprep.mubr.bf16.mxu0 0
        %5672 = vmatmul.mubr.bf16.gmra.mrb[0].mxu0 %v4511
        %v5673 = vpop.f32.mrb[0].mxu0
        %v5674 = vadd.f32 %v5513, %v5673
        %v5675 = vpop.f32.mrb[0].mxu0
        %v5676 = vpop.f32.mrb[0].mxu0
        %v5677 = vadd.f32 %v5516, %v5676
        %v5678 = vpop.f32.mrb[0].mxu0
        %5679 = vmatprep.mubr.bf16.mxu0 0
        %5680 = vmatmul.mubr.bf16.gmra.mrb[0].mxu0 %v4512
        %v5681 = vpop.f32.mrb[0].mxu0
        %v5682 = vadd.f32 %v5521, %v5681
        %v5683 = vpop.f32.mrb[0].mxu0
        %v5684 = vpop.f32.mrb[0].mxu0
        %v5685 = vadd.f32 %v5524, %v5684
        %v5686 = vpop.f32.mrb[0].mxu0
        %5687 = vmatprep.mubr.bf16.mxu0 0
        %5688 = vmatmul.mubr.bf16.gmra.mrb[0].mxu0 %v4513
        %v5689 = vpop.f32.mrb[0].mxu0
        %v5690 = vadd.f32 %v5529, %v5689
        %v5691 = vpop.f32.mrb[0].mxu0
        %v5692 = vpop.f32.mrb[0].mxu0
        %v5693 = vadd.f32 %v5532, %v5692
        %v5694 = vpop.f32.mrb[0].mxu0
        %5695 = vmatprep.mubr.bf16.mxu0 0
        %5696 = vmatmul.mubr.bf16.gmra.mrb[0].mxu0 %v4514
        %v5697 = vpop.f32.mrb[0].mxu0
        %v5698 = vadd.f32 %v5537, %v5697
        %v5699 = vpop.f32.mrb[0].mxu0
        %v5700 = vpop.f32.mrb[0].mxu0
        %v5701 = vadd.f32 %v5540, %v5700
        %v5702 = vpop.f32.mrb[0].mxu0
        %5703 = vmatprep.mubr.bf16.mxu0 0
        %5704 = vmatmul.mubr.bf16.gmra.mrb[0].mxu0 %v4515
        %v5705 = vpop.f32.mrb[0].mxu0
        %v5706 = vadd.f32 %v5545, %v5705
        %v5707 = vpop.f32.mrb[0].mxu0
        %v5708 = vpop.f32.mrb[0].mxu0
        %v5709 = vadd.f32 %v5548, %v5708
        %v5710 = vpop.f32.mrb[0].mxu0
        %5711 = vmatprep.mubr.bf16.mxu0 0
        %5712 = vmatmul.mubr.bf16.gmra.mrb[0].mxu0 %v4516
        %v5713 = vpop.f32.mrb[0].mxu0
        %v5714 = vadd.f32 %v5553, %v5713
        %v5715 = vpop.f32.mrb[0].mxu0
        %v5716 = vpop.f32.mrb[0].mxu0
        %v5717 = vadd.f32 %v5556, %v5716
        %v5718 = vpop.f32.mrb[0].mxu0
        %5719 = vmatprep.mubr.bf16.mxu0 0
        %5720 = vmatmul.mubr.bf16.gmra.mrb[0].mxu0 %v4517
        %v5721 = vpop.f32.mrb[0].mxu0
        %v5722 = vadd.f32 %v5561, %v5721
        %v5723 = vpop.f32.mrb[0].mxu0
        %v5724 = vpop.f32.mrb[0].mxu0
        %v5725 = vadd.f32 %v5564, %v5724
        %v5726 = vpop.f32.mrb[0].mxu0
        %5727 = vmatprep.mubr.bf16.mxu0 0
        %5728 = vmatmul.mubr.bf16.gmra.mrb[0].mxu0 %v4518
        %v5729 = vpop.f32.mrb[0].mxu0
        %v5730 = vadd.f32 %v5569, %v5729
        %v5731 = vpop.f32.mrb[0].mxu0
        %v5732 = vpop.f32.mrb[0].mxu0
        %v5733 = vadd.f32 %v5572, %v5732
        %v5734 = vpop.f32.mrb[0].mxu0
        %5735 = vmatprep.mubr.bf16.mxu0 0
        %5736 = vmatmul.mubr.bf16.gmra.mrb[0].mxu0 %v4519
        %v5737 = vpop.f32.mrb[0].mxu0
        %v5738 = vadd.f32 %v5577, %v5737
        %v5739 = vpop.f32.mrb[0].mxu0
        %v5740 = vpop.f32.mrb[0].mxu0
        %v5741 = vadd.f32 %v5580, %v5740
        %v5742 = vpop.f32.mrb[0].mxu0
        %5743 = vmatprep.mubr.bf16.mxu0 0
        %5744 = vmatmul.mubr.bf16.gmra.mrb[0].mxu0 %v4520
        %v5745 = vpop.f32.mrb[0].mxu0
        %v5746 = vadd.f32 %v5585, %v5745
        %v5747 = vpop.f32.mrb[0].mxu0
        %v5748 = vpop.f32.mrb[0].mxu0
        %v5749 = vadd.f32 %v5588, %v5748
        %v5750 = vpop.f32.mrb[0].mxu0
        %5751 = vmatprep.mubr.bf16.mxu0 0
        %5752 = vmatmul.mubr.bf16.gmra.mrb[0].mxu0 %v4521
        %v5753 = vpop.f32.mrb[0].mxu0
        %v5754 = vadd.f32 %v5593, %v5753
        %v5755 = vpop.f32.mrb[0].mxu0
        %v5756 = vpop.f32.mrb[0].mxu0
        %v5757 = vadd.f32 %v5596, %v5756
        %v5758 = vpop.f32.mrb[0].mxu0
        %5759 = vmatprep.mubr.bf16.mxu0 0
        %5760 = vmatmul.mubr.bf16.gmra.mrb[0].mxu0 %v4522
        %v5761 = vpop.f32.mrb[0].mxu0
        %v5762 = vadd.f32 %v5601, %v5761
        %v5763 = vpop.f32.mrb[0].mxu0
        %v5764 = vpop.f32.mrb[0].mxu0
        %v5765 = vadd.f32 %v5604, %v5764
        %v5766 = vpop.f32.mrb[0].mxu0
        %5767 = vmatprep.mubr.bf16.mxu0 0
        %5768 = vmatmul.mubr.bf16.gmra.mrb[0].mxu0 %v4523
        %v5769 = vpop.f32.mrb[0].mxu0
        %v5770 = vadd.f32 %v5609, %v5769
        %v5771 = vpop.f32.mrb[0].mxu0
        %v5772 = vpop.f32.mrb[0].mxu0
        %v5773 = vadd.f32 %v5612, %v5772
        %v5774 = vpop.f32.mrb[0].mxu0
        %5775 = vmatprep.mubr.bf16.mxu0 0
        %5776 = vmatmul.mubr.bf16.gmra.mrb[0].mxu0 %v4524
        %v5777 = vpop.f32.mrb[0].mxu0
        %v5778 = vadd.f32 %v5617, %v5777
        %v5779 = vpop.f32.mrb[0].mxu0
        %v5780 = vpop.f32.mrb[0].mxu0
        %v5781 = vadd.f32 %v5620, %v5780
        %v5782 = vpop.f32.mrb[0].mxu0
        %5783 = vdwg.mxu0
        %v5784 = vld [vmem:[#allocation17] sm:$0x1]
        %v5785 = vld [vmem:[#allocation18] sm:$0x1]
        %v5786 = vadd.f32 %v5658, %v5661
        %v5787 = vadd.f32 %v5786, %v5666
        %v5788 = vadd.f32 %v5787, %v5669
        %v5789 = vadd.f32 %v5788, %v5674
        %v5790 = vadd.f32 %v5789, %v5677
        %v5791 = vadd.f32 %v5790, %v5682
        %v5792 = vadd.f32 %v5791, %v5685
        %v5793 = vadd.f32 %v5792, %v5690
        %v5794 = vadd.f32 %v5793, %v5693
        %v5795 = vadd.f32 %v5794, %v5698
        %v5796 = vadd.f32 %v5795, %v5701
        %v5797 = vadd.f32 %v5796, %v5706
        %v5798 = vadd.f32 %v5797, %v5709
        %v5799 = vadd.f32 %v5798, %v5714
        %v5800 = vadd.f32 %v5799, %v5717
        %v5801 = vadd.f32 %v5800, %v5722
        %v5802 = vadd.f32 %v5801, %v5725
        %v5803 = vadd.f32 %v5802, %v5730
        %v5804 = vadd.f32 %v5803, %v5733
        %v5805 = vadd.f32 %v5804, %v5738
        %v5806 = vadd.f32 %v5805, %v5741
        %v5807 = vadd.f32 %v5806, %v5746
        %v5808 = vadd.f32 %v5807, %v5749
        %v5809 = vadd.f32 %v5808, %v5754
        %v5810 = vadd.f32 %v5809, %v5757
        %v5811 = vadd.f32 %v5810, %v5762
        %v5812 = vadd.f32 %v5811, %v5765
        %v5813 = vadd.f32 %v5812, %v5770
        %v5814 = vadd.f32 %v5813, %v5773
        %v5815 = vadd.f32 %v5814, %v5778
        %v5816 = vadd.f32 %v5815, %v5781
        %v5817 = vrot.slane %v5816, 4
        %v5818 = vadd.f32 %v5816, %v5817
        %v5819 = vrot.slane %v5818, 2
        %v5820 = vadd.f32 %v5818, %v5819
        %v5821 = vrot.slane %v5820, 1
        %v5822 = vadd.f32 %v5820, %v5821
        %5823 = vmatprep.subr.mxu0 0.0
        %5824 = vmatpush1.msra.mxu0 %v604
        %5825 = vmatprep.subr.mxu0 0.0
        %5826 = vmatpush1.msra.mxu0 %v605
        %5827 = vmatprep.subr.mxu0 0.0
        %5828 = vmatpush1.msra.mxu0 %v606
        %5829 = vmatprep.subr.mxu0 0.0
        %5830 = vmatpush1.msra.mxu0 %v607
        %5831 = vmatprep.subr.mxu0 0.0
        %5832 = vmatpush1.msra.mxu0 %v608
        %5833 = vmatprep.subr.mxu0 0.0
        %5834 = vmatpush1.msra.mxu0 %v609
        %5835 = vmatprep.subr.mxu0 0.0
        %5836 = vmatpush1.msra.mxu0 %v610
        %5837 = vmatprep.subr.mxu0 0.0
        %5838 = vmatpush1.msra.mxu0 %v611
        %5839 = vmatprep.subr.mxu0 0.0
        %5840 = vmatpush1.msra.mxu0 %v612
        %5841 = vmatprep.subr.mxu0 0.0
        %5842 = vmatpush1.msra.mxu0 %v613
        %5843 = vmatprep.subr.mxu0 0.0
        %5844 = vmatpush1.msra.mxu0 %v614
        %5845 = vmatprep.subr.mxu0 0.0
        %5846 = vmatpush1.msra.mxu0 %v615
        %5847 = vmatprep.subr.mxu0 0.0
        %5848 = vmatpush1.msra.mxu0 %v616
        %5849 = vmatprep.subr.mxu0 0.0
        %5850 = vmatpush1.msra.mxu0 %v617
        %5851 = vmatprep.subr.mxu0 0.0
        %5852 = vmatpush1.msra.mxu0 %v618
        %5853 = vmatprep.subr.mxu0 0.0
        %5854 = vmatpush1.msra.mxu0 %v619
        %5855 = vmatprep.subr.mxu0 0.0
        %5856 = vmatpush1.msra.mxu0 0.0
        %5857 = vmatprep.subr.mxu0 0.0
        %5858 = vmatpush1.msra.mxu0 0.0
        %5859 = vmatprep.subr.mxu0 0.0
        %5860 = vmatpush1.msra.mxu0 0.0
        %5861 = vmatprep.subr.mxu0 0.0
        %5862 = vmatpush1.msra.mxu0 0.0
        %5863 = vmatprep.subr.mxu0 0.0
        %5864 = vmatpush1.msra.mxu0 0.0
        %5865 = vmatprep.subr.mxu0 0.0
        %5866 = vmatpush1.msra.mxu0 0.0
        %5867 = vmatprep.subr.mxu0 0.0
        %5868 = vmatpush1.msra.mxu0 0.0
        %5869 = vmatprep.subr.mxu0 0.0
        %5870 = vmatpush1.msra.mxu0 0.0
        %5871 = vmatprep.subr.mxu0 0.0
        %5872 = vmatpush1.msra.mxu0 0.0
        %5873 = vmatprep.subr.mxu0 0.0
        %5874 = vmatpush1.msra.mxu0 0.0
        %5875 = vmatprep.subr.mxu0 0.0
        %5876 = vmatpush1.msra.mxu0 0.0
        %5877 = vmatprep.subr.mxu0 0.0
        %5878 = vmatpush1.msra.mxu0 0.0
        %5879 = vmatprep.subr.mxu0 0.0
        %5880 = vmatpush1.msra.mxu0 0.0
        %5881 = vmatprep.subr.mxu0 0.0
        %5882 = vmatpush1.msra.mxu0 0.0
        %5883 = vmatprep.subr.mxu0 0.0
        %5884 = vmatpush1.msra.mxu0 0.0
        %5885 = vmatprep.subr.mxu0 0.0
        %5886 = vmatpush1.msra.mxu0 0.0
        %5887 = vmatprep.mubr.f32.mxu0 0.0
        %5888 = vmatmul.mubr.f32.gmra.mrb[0].mxu0 %v5822
        %v5889 = vpop.f32.mrb[0].mxu0
        %v5890 = vadd.f32 0.0, %v5889
        %v5891 = vpop.f32.mrb[0].mxu0
        %5892 = vdwg.mxu0
        %v5893 = vmul.f32 %v5890, %v935
        %v5895 = vsel %vm937, %v5893, 0
        %5897 = vmatprep.subr.mxu0 0.0
        %5898 = vmatpush1.msra.mxu0 %v943
        %5899 = vmatprep.subr.mxu0 0.0
        %5900 = vmatpush1.msra.mxu0 0.0
        %5901 = vmatprep.subr.mxu0 0.0
        %5902 = vmatpush1.msra.mxu0 0.0
        %5903 = vmatprep.subr.mxu0 0.0
        %5904 = vmatpush1.msra.mxu0 0.0
        %5905 = vmatprep.subr.mxu0 0.0
        %5906 = vmatpush1.msra.mxu0 0.0
        %5907 = vmatprep.subr.mxu0 0.0
        %5908 = vmatpush1.msra.mxu0 0.0
        %5909 = vmatprep.subr.mxu0 0.0
        %5910 = vmatpush1.msra.mxu0 0.0
        %5911 = vmatprep.subr.mxu0 0.0
        %5912 = vmatpush1.msra.mxu0 0.0
        %5913 = vmatprep.subr.mxu0 0.0
        %5914 = vmatpush1.msra.mxu0 0.0
        %5915 = vmatprep.subr.mxu0 0.0
        %5916 = vmatpush1.msra.mxu0 0.0
        %5917 = vmatprep.subr.mxu0 0.0
        %5918 = vmatpush1.msra.mxu0 0.0
        %5919 = vmatprep.subr.mxu0 0.0
        %5920 = vmatpush1.msra.mxu0 0.0
        %5921 = vmatprep.subr.mxu0 0.0
        %5922 = vmatpush1.msra.mxu0 0.0
        %5923 = vmatprep.subr.mxu0 0.0
        %5924 = vmatpush1.msra.mxu0 0.0
        %5925 = vmatprep.subr.mxu0 0.0
        %5926 = vmatpush1.msra.mxu0 0.0
        %5927 = vmatprep.subr.mxu0 0.0
        %5928 = vmatpush1.msra.mxu0 0.0
        %5929 = vmatprep.subr.mxu0 0.0
        %5930 = vmatpush1.msra.mxu0 0.0
        %5931 = vmatprep.subr.mxu0 0.0
        %5932 = vmatpush1.msra.mxu0 0.0
        %5933 = vmatprep.subr.mxu0 0.0
        %5934 = vmatpush1.msra.mxu0 0.0
        %5935 = vmatprep.subr.mxu0 0.0
        %5936 = vmatpush1.msra.mxu0 0.0
        %5937 = vmatprep.subr.mxu0 0.0
        %5938 = vmatpush1.msra.mxu0 0.0
        %5939 = vmatprep.subr.mxu0 0.0
        %5940 = vmatpush1.msra.mxu0 0.0
        %5941 = vmatprep.subr.mxu0 0.0
        %5942 = vmatpush1.msra.mxu0 0.0
        %5943 = vmatprep.subr.mxu0 0.0
        %5944 = vmatpush1.msra.mxu0 0.0
        %5945 = vmatprep.subr.mxu0 0.0
        %5946 = vmatpush1.msra.mxu0 0.0
        %5947 = vmatprep.subr.mxu0 0.0
        %5948 = vmatpush1.msra.mxu0 0.0
        %5949 = vmatprep.subr.mxu0 0.0
        %5950 = vmatpush1.msra.mxu0 0.0
        %5951 = vmatprep.subr.mxu0 0.0
        %5952 = vmatpush1.msra.mxu0 0.0
        %5953 = vmatprep.subr.mxu0 0.0
        %5954 = vmatpush1.msra.mxu0 0.0
        %5955 = vmatprep.subr.mxu0 0.0
        %5956 = vmatpush1.msra.mxu0 0.0
        %5957 = vmatprep.subr.mxu0 0.0
        %5958 = vmatpush1.msra.mxu0 0.0
        %5959 = vmatprep.subr.mxu0 0.0
        %5960 = vmatpush1.msra.mxu0 0.0
        %5961 = vmatprep.mubr.f32.mxu0 0.0
        %5962 = vmatmul.mubr.f32.gmra.mrb[0].mxu0 %v5895
        %v5963 = vpop.f32.mrb[0].mxu0
        %v5964 = vadd.f32 0.0, %v5963
        %v5965 = vpop.f32.mrb[0].mxu0
        %5966 = vdwg.mxu0
        %v5967 = vlaneseq
        %v5968 = vshrl.u32 %v5967, 7
        %v5969 = vsub.s32 0, %v5968
        %v5970 = vrot.slane %v5964, %v5969
        %v5971 = vsub.f32 %v5658, %v5970
        %v5972 = vsub.f32 %v5661, %v5970
        %v5973 = vsub.f32 %v5666, %v5970
        %v5974 = vsub.f32 %v5669, %v5970
        %v5975 = vsub.f32 %v5674, %v5970
        %v5976 = vsub.f32 %v5677, %v5970
        %v5977 = vsub.f32 %v5682, %v5970
        %v5978 = vsub.f32 %v5685, %v5970
        %v5979 = vsub.f32 %v5690, %v5970
        %v5980 = vsub.f32 %v5693, %v5970
        %v5981 = vsub.f32 %v5698, %v5970
        %v5982 = vsub.f32 %v5701, %v5970
        %v5983 = vsub.f32 %v5706, %v5970
        %v5984 = vsub.f32 %v5709, %v5970
        %v5985 = vsub.f32 %v5714, %v5970
        %v5986 = vsub.f32 %v5717, %v5970
        %v5987 = vsub.f32 %v5722, %v5970
        %v5988 = vsub.f32 %v5725, %v5970
        %v5989 = vsub.f32 %v5730, %v5970
        %v5990 = vsub.f32 %v5733, %v5970
        %v5991 = vsub.f32 %v5738, %v5970
        %v5992 = vsub.f32 %v5741, %v5970
        %v5993 = vsub.f32 %v5746, %v5970
        %v5994 = vsub.f32 %v5749, %v5970
        %v5995 = vsub.f32 %v5754, %v5970
        %v5996 = vsub.f32 %v5757, %v5970
        %v5997 = vsub.f32 %v5762, %v5970
        %v5998 = vsub.f32 %v5765, %v5970
        %v5999 = vsub.f32 %v5770, %v5970
        %v6000 = vsub.f32 %v5773, %v5970
        %v6001 = vsub.f32 %v5778, %v5970
        %v6002 = vsub.f32 %v5781, %v5970
        %v6003 = vmul.f32 %v5971, %v5971
        %v6004 = vmul.f32 %v5972, %v5972
        %v6005 = vmul.f32 %v5973, %v5973
        %v6006 = vmul.f32 %v5974, %v5974
        %v6007 = vmul.f32 %v5975, %v5975
        %v6008 = vmul.f32 %v5976, %v5976
        %v6009 = vmul.f32 %v5977, %v5977
        %v6010 = vmul.f32 %v5978, %v5978
        %v6011 = vmul.f32 %v5979, %v5979
        %v6012 = vmul.f32 %v5980, %v5980
        %v6013 = vmul.f32 %v5981, %v5981
        %v6014 = vmul.f32 %v5982, %v5982
        %v6015 = vmul.f32 %v5983, %v5983
        %v6016 = vmul.f32 %v5984, %v5984
        %v6017 = vmul.f32 %v5985, %v5985
        %v6018 = vmul.f32 %v5986, %v5986
        %v6019 = vmul.f32 %v5987, %v5987
        %v6020 = vmul.f32 %v5988, %v5988
        %v6021 = vmul.f32 %v5989, %v5989
        %v6022 = vmul.f32 %v5990, %v5990
        %v6023 = vmul.f32 %v5991, %v5991
        %v6024 = vmul.f32 %v5992, %v5992
        %v6025 = vmul.f32 %v5993, %v5993
        %v6026 = vmul.f32 %v5994, %v5994
        %v6027 = vmul.f32 %v5995, %v5995
        %v6028 = vmul.f32 %v5996, %v5996
        %v6029 = vmul.f32 %v5997, %v5997
        %v6030 = vmul.f32 %v5998, %v5998
        %v6031 = vmul.f32 %v5999, %v5999
        %v6032 = vmul.f32 %v6000, %v6000
        %v6033 = vmul.f32 %v6001, %v6001
        %v6034 = vmul.f32 %v6002, %v6002
        %v6035 = vadd.f32 %v6003, %v6004
        %v6036 = vadd.f32 %v6035, %v6005
        %v6037 = vadd.f32 %v6036, %v6006
        %v6038 = vadd.f32 %v6037, %v6007
        %v6039 = vadd.f32 %v6038, %v6008
        %v6040 = vadd.f32 %v6039, %v6009
        %v6041 = vadd.f32 %v6040, %v6010
        %v6042 = vadd.f32 %v6041, %v6011
        %v6043 = vadd.f32 %v6042, %v6012
        %v6044 = vadd.f32 %v6043, %v6013
        %v6045 = vadd.f32 %v6044, %v6014
        %v6046 = vadd.f32 %v6045, %v6015
        %v6047 = vadd.f32 %v6046, %v6016
        %v6048 = vadd.f32 %v6047, %v6017
        %v6049 = vadd.f32 %v6048, %v6018
        %v6050 = vadd.f32 %v6049, %v6019
        %v6051 = vadd.f32 %v6050, %v6020
        %v6052 = vadd.f32 %v6051, %v6021
        %v6053 = vadd.f32 %v6052, %v6022
        %v6054 = vadd.f32 %v6053, %v6023
        %v6055 = vadd.f32 %v6054, %v6024
        %v6056 = vadd.f32 %v6055, %v6025
        %v6057 = vadd.f32 %v6056, %v6026
        %v6058 = vadd.f32 %v6057, %v6027
        %v6059 = vadd.f32 %v6058, %v6028
        %v6060 = vadd.f32 %v6059, %v6029
        %v6061 = vadd.f32 %v6060, %v6030
        %v6062 = vadd.f32 %v6061, %v6031
        %v6063 = vadd.f32 %v6062, %v6032
        %v6064 = vadd.f32 %v6063, %v6033
        %v6065 = vadd.f32 %v6064, %v6034
        %v6066 = vrot.slane %v6065, 4
        %v6067 = vadd.f32 %v6065, %v6066
        %v6068 = vrot.slane %v6067, 2
        %v6069 = vadd.f32 %v6067, %v6068
        %v6070 = vrot.slane %v6069, 1
        %v6071 = vadd.f32 %v6069, %v6070
        %6072 = vmatprep.subr.mxu0 0.0
        %6073 = vmatpush1.msra.mxu0 %v604
        %6074 = vmatprep.subr.mxu0 0.0
        %6075 = vmatpush1.msra.mxu0 %v605
        %6076 = vmatprep.subr.mxu0 0.0
        %6077 = vmatpush1.msra.mxu0 %v606
        %6078 = vmatprep.subr.mxu0 0.0
        %6079 = vmatpush1.msra.mxu0 %v607
        %6080 = vmatprep.subr.mxu0 0.0
        %6081 = vmatpush1.msra.mxu0 %v608
        %6082 = vmatprep.subr.mxu0 0.0
        %6083 = vmatpush1.msra.mxu0 %v609
        %6084 = vmatprep.subr.mxu0 0.0
        %6085 = vmatpush1.msra.mxu0 %v610
        %6086 = vmatprep.subr.mxu0 0.0
        %6087 = vmatpush1.msra.mxu0 %v611
        %6088 = vmatprep.subr.mxu0 0.0
        %6089 = vmatpush1.msra.mxu0 %v612
        %6090 = vmatprep.subr.mxu0 0.0
        %6091 = vmatpush1.msra.mxu0 %v613
        %6092 = vmatprep.subr.mxu0 0.0
        %6093 = vmatpush1.msra.mxu0 %v614
        %6094 = vmatprep.subr.mxu0 0.0
        %6095 = vmatpush1.msra.mxu0 %v615
        %6096 = vmatprep.subr.mxu0 0.0
        %6097 = vmatpush1.msra.mxu0 %v616
        %6098 = vmatprep.subr.mxu0 0.0
        %6099 = vmatpush1.msra.mxu0 %v617
        %6100 = vmatprep.subr.mxu0 0.0
        %6101 = vmatpush1.msra.mxu0 %v618
        %6102 = vmatprep.subr.mxu0 0.0
        %6103 = vmatpush1.msra.mxu0 %v619
        %6104 = vmatprep.subr.mxu0 0.0
        %6105 = vmatpush1.msra.mxu0 0.0
        %6106 = vmatprep.subr.mxu0 0.0
        %6107 = vmatpush1.msra.mxu0 0.0
        %6108 = vmatprep.subr.mxu0 0.0
        %6109 = vmatpush1.msra.mxu0 0.0
        %6110 = vmatprep.subr.mxu0 0.0
        %6111 = vmatpush1.msra.mxu0 0.0
        %6112 = vmatprep.subr.mxu0 0.0
        %6113 = vmatpush1.msra.mxu0 0.0
        %6114 = vmatprep.subr.mxu0 0.0
        %6115 = vmatpush1.msra.mxu0 0.0
        %6116 = vmatprep.subr.mxu0 0.0
        %6117 = vmatpush1.msra.mxu0 0.0
        %6118 = vmatprep.subr.mxu0 0.0
        %6119 = vmatpush1.msra.mxu0 0.0
        %6120 = vmatprep.subr.mxu0 0.0
        %6121 = vmatpush1.msra.mxu0 0.0
        %6122 = vmatprep.subr.mxu0 0.0
        %6123 = vmatpush1.msra.mxu0 0.0
        %6124 = vmatprep.subr.mxu0 0.0
        %6125 = vmatpush1.msra.mxu0 0.0
        %6126 = vmatprep.subr.mxu0 0.0
        %6127 = vmatpush1.msra.mxu0 0.0
        %6128 = vmatprep.subr.mxu0 0.0
        %6129 = vmatpush1.msra.mxu0 0.0
        %6130 = vmatprep.subr.mxu0 0.0
        %6131 = vmatpush1.msra.mxu0 0.0
        %6132 = vmatprep.subr.mxu0 0.0
        %6133 = vmatpush1.msra.mxu0 0.0
        %6134 = vmatprep.subr.mxu0 0.0
        %6135 = vmatpush1.msra.mxu0 0.0
        %6136 = vmatprep.mubr.f32.mxu0 0.0
        %6137 = vmatmul.mubr.f32.gmra.mrb[0].mxu0 %v6071
        %v6138 = vpop.f32.mrb[0].mxu0
        %v6139 = vadd.f32 0.0, %v6138
        %v6140 = vpop.f32.mrb[0].mxu0
        %6141 = vdwg.mxu0
        %v6142 = vmul.f32 %v6139, %v935
        %v6144 = vsel %vm937, %v6142, 0
        %6146 = vmatprep.subr.mxu0 0.0
        %6147 = vmatpush1.msra.mxu0 %v943
        %6148 = vmatprep.subr.mxu0 0.0
        %6149 = vmatpush1.msra.mxu0 0.0
        %6150 = vmatprep.subr.mxu0 0.0
        %6151 = vmatpush1.msra.mxu0 0.0
        %6152 = vmatprep.subr.mxu0 0.0
        %6153 = vmatpush1.msra.mxu0 0.0
        %6154 = vmatprep.subr.mxu0 0.0
        %6155 = vmatpush1.msra.mxu0 0.0
        %6156 = vmatprep.subr.mxu0 0.0
        %6157 = vmatpush1.msra.mxu0 0.0
        %6158 = vmatprep.subr.mxu0 0.0
        %6159 = vmatpush1.msra.mxu0 0.0
        %6160 = vmatprep.subr.mxu0 0.0
        %6161 = vmatpush1.msra.mxu0 0.0
        %6162 = vmatprep.subr.mxu0 0.0
        %6163 = vmatpush1.msra.mxu0 0.0
        %6164 = vmatprep.subr.mxu0 0.0
        %6165 = vmatpush1.msra.mxu0 0.0
        %6166 = vmatprep.subr.mxu0 0.0
        %6167 = vmatpush1.msra.mxu0 0.0
        %6168 = vmatprep.subr.mxu0 0.0
        %6169 = vmatpush1.msra.mxu0 0.0
        %6170 = vmatprep.subr.mxu0 0.0
        %6171 = vmatpush1.msra.mxu0 0.0
        %6172 = vmatprep.subr.mxu0 0.0
        %6173 = vmatpush1.msra.mxu0 0.0
        %6174 = vmatprep.subr.mxu0 0.0
        %6175 = vmatpush1.msra.mxu0 0.0
        %6176 = vmatprep.subr.mxu0 0.0
        %6177 = vmatpush1.msra.mxu0 0.0
        %6178 = vmatprep.subr.mxu0 0.0
        %6179 = vmatpush1.msra.mxu0 0.0
        %6180 = vmatprep.subr.mxu0 0.0
        %6181 = vmatpush1.msra.mxu0 0.0
        %6182 = vmatprep.subr.mxu0 0.0
        %6183 = vmatpush1.msra.mxu0 0.0
        %6184 = vmatprep.subr.mxu0 0.0
        %6185 = vmatpush1.msra.mxu0 0.0
        %6186 = vmatprep.subr.mxu0 0.0
        %6187 = vmatpush1.msra.mxu0 0.0
        %6188 = vmatprep.subr.mxu0 0.0
        %6189 = vmatpush1.msra.mxu0 0.0
        %6190 = vmatprep.subr.mxu0 0.0
        %6191 = vmatpush1.msra.mxu0 0.0
        %6192 = vmatprep.subr.mxu0 0.0
        %6193 = vmatpush1.msra.mxu0 0.0
        %6194 = vmatprep.subr.mxu0 0.0
        %6195 = vmatpush1.msra.mxu0 0.0
        %6196 = vmatprep.subr.mxu0 0.0
        %6197 = vmatpush1.msra.mxu0 0.0
        %6198 = vmatprep.subr.mxu0 0.0
        %6199 = vmatpush1.msra.mxu0 0.0
        %6200 = vmatprep.subr.mxu0 0.0
        %6201 = vmatpush1.msra.mxu0 0.0
        %6202 = vmatprep.subr.mxu0 0.0
        %6203 = vmatpush1.msra.mxu0 0.0
        %6204 = vmatprep.subr.mxu0 0.0
        %6205 = vmatpush1.msra.mxu0 0.0
        %6206 = vmatprep.subr.mxu0 0.0
        %6207 = vmatpush1.msra.mxu0 0.0
        %6208 = vmatprep.subr.mxu0 0.0
        %6209 = vmatpush1.msra.mxu0 0.0
        %6210 = vmatprep.mubr.f32.mxu0 0.0
        %6211 = vmatmul.mubr.f32.gmra.mrb[0].mxu0 %v6144
        %v6212 = vpop.f32.mrb[0].mxu0
        %v6213 = vadd.f32 1e-05, %v6212
        %v6214 = vpop.f32.mrb[0].mxu0
        %6215 = vdwg.mxu0
        %v6216 = vrsqrt.pop %v6213
        %v6217 = vlaneseq
        %v6218 = vshrl.u32 %v6217, 7
        %v6219 = vsub.s32 0, %v6218
        %v6220 = vrot.slane %v6216, %v6219
        %v6221 = vmul.f32 %v5971, %v6220
        %v6222 = vmul.f32 %v5972, %v6220
        %v6223 = vmul.f32 %v5973, %v6220
        %v6224 = vmul.f32 %v5974, %v6220
        %v6225 = vmul.f32 %v5975, %v6220
        %v6226 = vmul.f32 %v5976, %v6220
        %v6227 = vmul.f32 %v5977, %v6220
        %v6228 = vmul.f32 %v5978, %v6220
        %v6229 = vmul.f32 %v5979, %v6220
        %v6230 = vmul.f32 %v5980, %v6220
        %v6231 = vmul.f32 %v5981, %v6220
        %v6232 = vmul.f32 %v5982, %v6220
        %v6233 = vmul.f32 %v5983, %v6220
        %v6234 = vmul.f32 %v5984, %v6220
        %v6235 = vmul.f32 %v5985, %v6220
        %v6236 = vmul.f32 %v5986, %v6220
        %v6237 = vmul.f32 %v5987, %v6220
        %v6238 = vmul.f32 %v5988, %v6220
        %v6239 = vmul.f32 %v5989, %v6220
        %v6240 = vmul.f32 %v5990, %v6220
        %v6241 = vmul.f32 %v5991, %v6220
        %v6242 = vmul.f32 %v5992, %v6220
        %v6243 = vmul.f32 %v5993, %v6220
        %v6244 = vmul.f32 %v5994, %v6220
        %v6245 = vmul.f32 %v5995, %v6220
        %v6246 = vmul.f32 %v5996, %v6220
        %v6247 = vmul.f32 %v5997, %v6220
        %v6248 = vmul.f32 %v5998, %v6220
        %v6249 = vmul.f32 %v5999, %v6220
        %v6250 = vmul.f32 %v6000, %v6220
        %v6251 = vmul.f32 %v6001, %v6220
        %v6252 = vmul.f32 %v6002, %v6220
        %v6254 = vlaneseq
        %v6255 = vshrl.u32 %v6254, 7
        %v6256 = vsub.s32 0, %v6255
        %v6257 = vrot.slane %v5784, %v6256
        %v6259 = vmul.f32 %v6221, %v6257
        %v6260 = vmul.f32 %v6222, %v6257
        %v6261 = vmul.f32 %v6223, %v6257
        %v6262 = vmul.f32 %v6224, %v6257
        %v6263 = vmul.f32 %v6225, %v6257
        %v6264 = vmul.f32 %v6226, %v6257
        %v6265 = vmul.f32 %v6227, %v6257
        %v6266 = vmul.f32 %v6228, %v6257
        %v6267 = vmul.f32 %v6229, %v6257
        %v6268 = vmul.f32 %v6230, %v6257
        %v6269 = vmul.f32 %v6231, %v6257
        %v6270 = vmul.f32 %v6232, %v6257
        %v6271 = vmul.f32 %v6233, %v6257
        %v6272 = vmul.f32 %v6234, %v6257
        %v6273 = vmul.f32 %v6235, %v6257
        %v6274 = vmul.f32 %v6236, %v6257
        %v6275 = vmul.f32 %v6237, %v6257
        %v6276 = vmul.f32 %v6238, %v6257
        %v6277 = vmul.f32 %v6239, %v6257
        %v6278 = vmul.f32 %v6240, %v6257
        %v6279 = vmul.f32 %v6241, %v6257
        %v6280 = vmul.f32 %v6242, %v6257
        %v6281 = vmul.f32 %v6243, %v6257
        %v6282 = vmul.f32 %v6244, %v6257
        %v6283 = vmul.f32 %v6245, %v6257
        %v6284 = vmul.f32 %v6246, %v6257
        %v6285 = vmul.f32 %v6247, %v6257
        %v6286 = vmul.f32 %v6248, %v6257
        %v6287 = vmul.f32 %v6249, %v6257
        %v6288 = vmul.f32 %v6250, %v6257
        %v6289 = vmul.f32 %v6251, %v6257
        %v6290 = vmul.f32 %v6252, %v6257
        %v6292 = vlaneseq
        %v6293 = vshrl.u32 %v6292, 7
        %v6294 = vsub.s32 0, %v6293
        %v6295 = vrot.slane %v5785, %v6294
        %v6297 = vadd.f32 %v6259, %v6295
        %v6298 = vadd.f32 %v6260, %v6295
        %v6299 = vadd.f32 %v6261, %v6295
        %v6300 = vadd.f32 %v6262, %v6295
        %v6301 = vadd.f32 %v6263, %v6295
        %v6302 = vadd.f32 %v6264, %v6295
        %v6303 = vadd.f32 %v6265, %v6295
        %v6304 = vadd.f32 %v6266, %v6295
        %v6305 = vadd.f32 %v6267, %v6295
        %v6306 = vadd.f32 %v6268, %v6295
        %v6307 = vadd.f32 %v6269, %v6295
        %v6308 = vadd.f32 %v6270, %v6295
        %v6309 = vadd.f32 %v6271, %v6295
        %v6310 = vadd.f32 %v6272, %v6295
        %v6311 = vadd.f32 %v6273, %v6295
        %v6312 = vadd.f32 %v6274, %v6295
        %v6313 = vadd.f32 %v6275, %v6295
        %v6314 = vadd.f32 %v6276, %v6295
        %v6315 = vadd.f32 %v6277, %v6295
        %v6316 = vadd.f32 %v6278, %v6295
        %v6317 = vadd.f32 %v6279, %v6295
        %v6318 = vadd.f32 %v6280, %v6295
        %v6319 = vadd.f32 %v6281, %v6295
        %v6320 = vadd.f32 %v6282, %v6295
        %v6321 = vadd.f32 %v6283, %v6295
        %v6322 = vadd.f32 %v6284, %v6295
        %v6323 = vadd.f32 %v6285, %v6295
        %v6324 = vadd.f32 %v6286, %v6295
        %v6325 = vadd.f32 %v6287, %v6295
        %v6326 = vadd.f32 %v6288, %v6295
        %v6327 = vadd.f32 %v6289, %v6295
        %v6328 = vadd.f32 %v6290, %v6295
        %v6329 = vmax.f32 %v6297, 0.0
        %v6330 = vmax.f32 %v6298, 0.0
        %v6331 = vmax.f32 %v6299, 0.0
        %v6332 = vmax.f32 %v6300, 0.0
        %v6333 = vmax.f32 %v6301, 0.0
        %v6334 = vmax.f32 %v6302, 0.0
        %v6335 = vmax.f32 %v6303, 0.0
        %v6336 = vmax.f32 %v6304, 0.0
        %v6337 = vmax.f32 %v6305, 0.0
        %v6338 = vmax.f32 %v6306, 0.0
        %v6339 = vmax.f32 %v6307, 0.0
        %v6340 = vmax.f32 %v6308, 0.0
        %v6341 = vmax.f32 %v6309, 0.0
        %v6342 = vmax.f32 %v6310, 0.0
        %v6343 = vmax.f32 %v6311, 0.0
        %v6344 = vmax.f32 %v6312, 0.0
        %v6345 = vmax.f32 %v6313, 0.0
        %v6346 = vmax.f32 %v6314, 0.0
        %v6347 = vmax.f32 %v6315, 0.0
        %v6348 = vmax.f32 %v6316, 0.0
        %v6349 = vmax.f32 %v6317, 0.0
        %v6350 = vmax.f32 %v6318, 0.0
        %v6351 = vmax.f32 %v6319, 0.0
        %v6352 = vmax.f32 %v6320, 0.0
        %v6353 = vmax.f32 %v6321, 0.0
        %v6354 = vmax.f32 %v6322, 0.0
        %v6355 = vmax.f32 %v6323, 0.0
        %v6356 = vmax.f32 %v6324, 0.0
        %v6357 = vmax.f32 %v6325, 0.0
        %v6358 = vmax.f32 %v6326, 0.0
        %v6359 = vmax.f32 %v6327, 0.0
        %v6360 = vmax.f32 %v6328, 0.0
        %v6361 = vpack.c.bf16 %v6330, %v6329
        %v6362 = vpack.c.bf16 %v6332, %v6331
        %v6363 = vpack.c.bf16 %v6334, %v6333
        %v6364 = vpack.c.bf16 %v6336, %v6335
        %v6365 = vpack.c.bf16 %v6338, %v6337
        %v6366 = vpack.c.bf16 %v6340, %v6339
        %v6367 = vpack.c.bf16 %v6342, %v6341
        %v6368 = vpack.c.bf16 %v6344, %v6343
        %v6369 = vpack.c.bf16 %v6346, %v6345
        %v6370 = vpack.c.bf16 %v6348, %v6347
        %v6371 = vpack.c.bf16 %v6350, %v6349
        %v6372 = vpack.c.bf16 %v6352, %v6351
        %v6373 = vpack.c.bf16 %v6354, %v6353
        %v6374 = vpack.c.bf16 %v6356, %v6355
        %v6375 = vpack.c.bf16 %v6358, %v6357
        %v6376 = vpack.c.bf16 %v6360, %v6359
        %v6393 = vunpack.c.l.b16 %v6361
        %v6394 = vunpack.c.h.b16 %v6361
        %v6395 = vunpack.c.l.b16 %v6362
        %v6396 = vunpack.c.h.b16 %v6362
        %v6397 = vunpack.c.l.b16 %v6363
        %v6398 = vunpack.c.h.b16 %v6363
        %v6399 = vunpack.c.l.b16 %v6364
        %v6400 = vunpack.c.h.b16 %v6364
        %v6401 = vunpack.c.l.b16 %v6365
        %v6402 = vunpack.c.h.b16 %v6365
        %v6403 = vunpack.c.l.b16 %v6366
        %v6404 = vunpack.c.h.b16 %v6366
        %v6405 = vunpack.c.l.b16 %v6367
        %v6406 = vunpack.c.h.b16 %v6367
        %v6407 = vunpack.c.l.b16 %v6368
        %v6408 = vunpack.c.h.b16 %v6368
        %v6409 = vunpack.c.l.b16 %v6369
        %v6410 = vunpack.c.h.b16 %v6369
        %v6411 = vunpack.c.l.b16 %v6370
        %v6412 = vunpack.c.h.b16 %v6370
        %v6413 = vunpack.c.l.b16 %v6371
        %v6414 = vunpack.c.h.b16 %v6371
        %v6415 = vunpack.c.l.b16 %v6372
        %v6416 = vunpack.c.h.b16 %v6372
        %v6417 = vunpack.c.l.b16 %v6373
        %v6418 = vunpack.c.h.b16 %v6373
        %v6419 = vunpack.c.l.b16 %v6374
        %v6420 = vunpack.c.h.b16 %v6374
        %v6421 = vunpack.c.l.b16 %v6375
        %v6422 = vunpack.c.h.b16 %v6375
        %v6423 = vunpack.c.l.b16 %v6376
        %v6424 = vunpack.c.h.b16 %v6376
        %v6425 = vpack.c.b16 %v6393, %v6393
        %v6426 = vpack.c.b16 %v6394, %v6394
        %v6427 = vpack.c.b16 %v6395, %v6395
        %v6428 = vpack.c.b16 %v6396, %v6396
        %v6429 = vpack.c.b16 %v6397, %v6397
        %v6430 = vpack.c.b16 %v6398, %v6398
        %v6431 = vpack.c.b16 %v6399, %v6399
        %v6432 = vpack.c.b16 %v6400, %v6400
        %v6433 = vpack.c.b16 %v6401, %v6401
        %v6434 = vpack.c.b16 %v6402, %v6402
        %v6435 = vpack.c.b16 %v6403, %v6403
        %v6436 = vpack.c.b16 %v6404, %v6404
        %v6437 = vpack.c.b16 %v6405, %v6405
        %v6438 = vpack.c.b16 %v6406, %v6406
        %v6439 = vpack.c.b16 %v6407, %v6407
        %v6440 = vpack.c.b16 %v6408, %v6408
        %v6441 = vpack.c.b16 %v6409, %v6409
        %v6442 = vpack.c.b16 %v6410, %v6410
        %v6443 = vpack.c.b16 %v6411, %v6411
        %v6444 = vpack.c.b16 %v6412, %v6412
        %v6445 = vpack.c.b16 %v6413, %v6413
        %v6446 = vpack.c.b16 %v6414, %v6414
        %v6447 = vpack.c.b16 %v6415, %v6415
        %v6448 = vpack.c.b16 %v6416, %v6416
        %v6449 = vpack.c.b16 %v6417, %v6417
        %v6450 = vpack.c.b16 %v6418, %v6418
        %v6451 = vpack.c.b16 %v6419, %v6419
        %v6452 = vpack.c.b16 %v6420, %v6420
        %v6453 = vpack.c.b16 %v6421, %v6421
        %v6454 = vpack.c.b16 %v6422, %v6422
        %v6455 = vpack.c.b16 %v6423, %v6423
        %v6456 = vpack.c.b16 %v6424, %v6424
        %v6458 = vshrl.u32 %v6425, 16
        %v6460 = vrot.slane %v6458, 7
        %v6461 = vshll.u32 %v6425, 16
        %v6463 = vor.u32 %v6460, %v6461
        %v6464 = vrot.slane %v6460, 4
        %v6466 = vshrl.u32 %v6426, 16
        %v6468 = vrot.slane %v6466, 7
        %v6469 = vshll.u32 %v6426, 16
        %v6471 = vor.u32 %v6468, %v6469
        %v6472 = vsel %vm1506, %v6464, %v6471
        %v6473 = vrot.slane %v6468, 4
        %v6475 = vshrl.u32 %v6427, 16
        %v6477 = vrot.slane %v6475, 7
        %v6478 = vshll.u32 %v6427, 16
        %v6480 = vor.u32 %v6477, %v6478
        %v6481 = vrot.slane %v6477, 4
        %v6483 = vshrl.u32 %v6428, 16
        %v6485 = vrot.slane %v6483, 7
        %v6486 = vshll.u32 %v6428, 16
        %v6488 = vor.u32 %v6485, %v6486
        %v6489 = vsel %vm1506, %v6481, %v6488
        %v6490 = vrot.slane %v6485, 4
        %v6492 = vshrl.u32 %v6429, 16
        %v6494 = vrot.slane %v6492, 7
        %v6495 = vshll.u32 %v6429, 16
        %v6497 = vor.u32 %v6494, %v6495
        %v6498 = vrot.slane %v6494, 4
        %v6500 = vshrl.u32 %v6430, 16
        %v6502 = vrot.slane %v6500, 7
        %v6503 = vshll.u32 %v6430, 16
        %v6505 = vor.u32 %v6502, %v6503
        %v6506 = vsel %vm1506, %v6498, %v6505
        %v6507 = vrot.slane %v6502, 4
        %v6509 = vshrl.u32 %v6431, 16
        %v6511 = vrot.slane %v6509, 7
        %v6512 = vshll.u32 %v6431, 16
        %v6514 = vor.u32 %v6511, %v6512
        %v6515 = vrot.slane %v6511, 4
        %v6517 = vshrl.u32 %v6432, 16
        %v6519 = vrot.slane %v6517, 7
        %v6520 = vshll.u32 %v6432, 16
        %v6522 = vor.u32 %v6519, %v6520
        %v6523 = vsel %vm1506, %v6515, %v6522
        %v6524 = vrot.slane %v6519, 4
        %v6526 = vshrl.u32 %v6433, 16
        %v6528 = vrot.slane %v6526, 7
        %v6529 = vshll.u32 %v6433, 16
        %v6531 = vor.u32 %v6528, %v6529
        %v6532 = vrot.slane %v6528, 4
        %v6534 = vshrl.u32 %v6434, 16
        %v6536 = vrot.slane %v6534, 7
        %v6537 = vshll.u32 %v6434, 16
        %v6539 = vor.u32 %v6536, %v6537
        %v6540 = vsel %vm1506, %v6532, %v6539
        %v6541 = vrot.slane %v6536, 4
        %v6543 = vshrl.u32 %v6435, 16
        %v6545 = vrot.slane %v6543, 7
        %v6546 = vshll.u32 %v6435, 16
        %v6548 = vor.u32 %v6545, %v6546
        %v6549 = vrot.slane %v6545, 4
        %v6551 = vshrl.u32 %v6436, 16
        %v6553 = vrot.slane %v6551, 7
        %v6554 = vshll.u32 %v6436, 16
        %v6556 = vor.u32 %v6553, %v6554
        %v6557 = vsel %vm1506, %v6549, %v6556
        %v6558 = vrot.slane %v6553, 4
        %v6560 = vshrl.u32 %v6437, 16
        %v6562 = vrot.slane %v6560, 7
        %v6563 = vshll.u32 %v6437, 16
        %v6565 = vor.u32 %v6562, %v6563
        %v6566 = vrot.slane %v6562, 4
        %v6568 = vshrl.u32 %v6438, 16
        %v6570 = vrot.slane %v6568, 7
        %v6571 = vshll.u32 %v6438, 16
        %v6573 = vor.u32 %v6570, %v6571
        %v6574 = vsel %vm1506, %v6566, %v6573
        %v6575 = vrot.slane %v6570, 4
        %v6577 = vshrl.u32 %v6439, 16
        %v6579 = vrot.slane %v6577, 7
        %v6580 = vshll.u32 %v6439, 16
        %v6582 = vor.u32 %v6579, %v6580
        %v6583 = vrot.slane %v6579, 4
        %v6585 = vshrl.u32 %v6440, 16
        %v6587 = vrot.slane %v6585, 7
        %v6588 = vshll.u32 %v6440, 16
        %v6590 = vor.u32 %v6587, %v6588
        %v6591 = vsel %vm1506, %v6583, %v6590
        %v6592 = vrot.slane %v6587, 4
        %v6594 = vshrl.u32 %v6441, 16
        %v6596 = vrot.slane %v6594, 7
        %v6597 = vshll.u32 %v6441, 16
        %v6599 = vor.u32 %v6596, %v6597
        %v6600 = vrot.slane %v6596, 4
        %v6602 = vshrl.u32 %v6442, 16
        %v6604 = vrot.slane %v6602, 7
        %v6605 = vshll.u32 %v6442, 16
        %v6607 = vor.u32 %v6604, %v6605
        %v6608 = vsel %vm1506, %v6600, %v6607
        %v6609 = vrot.slane %v6604, 4
        %v6611 = vshrl.u32 %v6443, 16
        %v6613 = vrot.slane %v6611, 7
        %v6614 = vshll.u32 %v6443, 16
        %v6616 = vor.u32 %v6613, %v6614
        %v6617 = vrot.slane %v6613, 4
        %v6619 = vshrl.u32 %v6444, 16
        %v6621 = vrot.slane %v6619, 7
        %v6622 = vshll.u32 %v6444, 16
        %v6624 = vor.u32 %v6621, %v6622
        %v6625 = vsel %vm1506, %v6617, %v6624
        %v6626 = vrot.slane %v6621, 4
        %v6628 = vshrl.u32 %v6445, 16
        %v6630 = vrot.slane %v6628, 7
        %v6631 = vshll.u32 %v6445, 16
        %v6633 = vor.u32 %v6630, %v6631
        %v6634 = vrot.slane %v6630, 4
        %v6636 = vshrl.u32 %v6446, 16
        %v6638 = vrot.slane %v6636, 7
        %v6639 = vshll.u32 %v6446, 16
        %v6641 = vor.u32 %v6638, %v6639
        %v6642 = vsel %vm1506, %v6634, %v6641
        %v6643 = vrot.slane %v6638, 4
        %v6645 = vshrl.u32 %v6447, 16
        %v6647 = vrot.slane %v6645, 7
        %v6648 = vshll.u32 %v6447, 16
        %v6650 = vor.u32 %v6647, %v6648
        %v6651 = vrot.slane %v6647, 4
        %v6653 = vshrl.u32 %v6448, 16
        %v6655 = vrot.slane %v6653, 7
        %v6656 = vshll.u32 %v6448, 16
        %v6658 = vor.u32 %v6655, %v6656
        %v6659 = vsel %vm1506, %v6651, %v6658
        %v6660 = vrot.slane %v6655, 4
        %v6662 = vshrl.u32 %v6449, 16
        %v6664 = vrot.slane %v6662, 7
        %v6665 = vshll.u32 %v6449, 16
        %v6667 = vor.u32 %v6664, %v6665
        %v6668 = vrot.slane %v6664, 4
        %v6670 = vshrl.u32 %v6450, 16
        %v6672 = vrot.slane %v6670, 7
        %v6673 = vshll.u32 %v6450, 16
        %v6675 = vor.u32 %v6672, %v6673
        %v6676 = vsel %vm1506, %v6668, %v6675
        %v6677 = vrot.slane %v6672, 4
        %v6679 = vshrl.u32 %v6451, 16
        %v6681 = vrot.slane %v6679, 7
        %v6682 = vshll.u32 %v6451, 16
        %v6684 = vor.u32 %v6681, %v6682
        %v6685 = vrot.slane %v6681, 4
        %v6687 = vshrl.u32 %v6452, 16
        %v6689 = vrot.slane %v6687, 7
        %v6690 = vshll.u32 %v6452, 16
        %v6692 = vor.u32 %v6689, %v6690
        %v6693 = vsel %vm1506, %v6685, %v6692
        %v6694 = vrot.slane %v6689, 4
        %v6696 = vshrl.u32 %v6453, 16
        %v6698 = vrot.slane %v6696, 7
        %v6699 = vshll.u32 %v6453, 16
        %v6701 = vor.u32 %v6698, %v6699
        %v6702 = vrot.slane %v6698, 4
        %v6704 = vshrl.u32 %v6454, 16
        %v6706 = vrot.slane %v6704, 7
        %v6707 = vshll.u32 %v6454, 16
        %v6709 = vor.u32 %v6706, %v6707
        %v6710 = vsel %vm1506, %v6702, %v6709
        %v6711 = vrot.slane %v6706, 4
        %v6713 = vshrl.u32 %v6455, 16
        %v6715 = vrot.slane %v6713, 7
        %v6716 = vshll.u32 %v6455, 16
        %v6718 = vor.u32 %v6715, %v6716
        %v6719 = vrot.slane %v6715, 4
        %v6721 = vshrl.u32 %v6456, 16
        %v6723 = vrot.slane %v6721, 7
        %v6724 = vshll.u32 %v6456, 16
        %v6726 = vor.u32 %v6723, %v6724
        %v6727 = vsel %vm1506, %v6719, %v6726
        %v6728 = vrot.slane %v6723, 4
        %v6777 = vsel %vm1828, %v6463, %v2700
        %6778 = vst [vmem:[%s628] sm:$0xf] %v6777
        %6779 = vst [vmem:[%s628 + $0x4] sm:$0xf] %v6472
        %v6780 = vld [vmem:[%s628 + $0x8] sm:$0x1]
        %v6781 = vsel %vm631, %v6473, %v6780
        %6782 = vst [vmem:[%s628 + $0x8] sm:$0x1] %v6781
        %v6783 = vld [vmem:[%s628 + $0xc] sm:$0xf]
        %v6784 = vsel %vm1828, %v6480, %v6783
        %6785 = vst [vmem:[%s628 + $0xc] sm:$0xf] %v6784
        %6786 = vst [vmem:[%s628 + $0x10] sm:$0xf] %v6489
        %v6787 = vld [vmem:[%s628 + $0x14] sm:$0x1]
        %v6788 = vsel %vm631, %v6490, %v6787
        %6789 = vst [vmem:[%s628 + $0x14] sm:$0x1] %v6788
        %v6790 = vld [vmem:[%s628 + $0x18] sm:$0xf]
        %v6791 = vsel %vm1828, %v6497, %v6790
        %6792 = vst [vmem:[%s628 + $0x18] sm:$0xf] %v6791
        %6793 = vst [vmem:[%s628 + $0x1c] sm:$0xf] %v6506
        %v6794 = vld [vmem:[%s628 + $0x20] sm:$0x1]
        %v6795 = vsel %vm631, %v6507, %v6794
        %6796 = vst [vmem:[%s628 + $0x20] sm:$0x1] %v6795
        %v6797 = vld [vmem:[%s628 + $0x24] sm:$0xf]
        %v6798 = vsel %vm1828, %v6514, %v6797
        %6799 = vst [vmem:[%s628 + $0x24] sm:$0xf] %v6798
        %6800 = vst [vmem:[%s628 + $0x28] sm:$0xf] %v6523
        %v6801 = vld [vmem:[%s628 + $0x2c] sm:$0x1]
        %v6802 = vsel %vm631, %v6524, %v6801
        %6803 = vst [vmem:[%s628 + $0x2c] sm:$0x1] %v6802
        %v6804 = vld [vmem:[%s628 + $0x30] sm:$0xf]
        %v6805 = vsel %vm1828, %v6531, %v6804
        %6806 = vst [vmem:[%s628 + $0x30] sm:$0xf] %v6805
        %6807 = vst [vmem:[%s628 + $0x34] sm:$0xf] %v6540
        %v6808 = vld [vmem:[%s628 + $0x38] sm:$0x1]
        %v6809 = vsel %vm631, %v6541, %v6808
        %6810 = vst [vmem:[%s628 + $0x38] sm:$0x1] %v6809
        %v6811 = vld [vmem:[%s628 + $0x3c] sm:$0xf]
        %v6812 = vsel %vm1828, %v6548, %v6811
        %6813 = vst [vmem:[%s628 + $0x3c] sm:$0xf] %v6812
        %6814 = vst [vmem:[%s628 + $0x40] sm:$0xf] %v6557
        %v6815 = vld [vmem:[%s628 + $0x44] sm:$0x1]
        %v6816 = vsel %vm631, %v6558, %v6815
        %6817 = vst [vmem:[%s628 + $0x44] sm:$0x1] %v6816
        %v6818 = vld [vmem:[%s628 + $0x48] sm:$0xf]
        %v6819 = vsel %vm1828, %v6565, %v6818
        %6820 = vst [vmem:[%s628 + $0x48] sm:$0xf] %v6819
        %6821 = vst [vmem:[%s628 + $0x4c] sm:$0xf] %v6574
        %v6822 = vld [vmem:[%s628 + $0x50] sm:$0x1]
        %v6823 = vsel %vm631, %v6575, %v6822
        %6824 = vst [vmem:[%s628 + $0x50] sm:$0x1] %v6823
        %v6825 = vld [vmem:[%s628 + $0x54] sm:$0xf]
        %v6826 = vsel %vm1828, %v6582, %v6825
        %6827 = vst [vmem:[%s628 + $0x54] sm:$0xf] %v6826
        %6828 = vst [vmem:[%s628 + $0x58] sm:$0xf] %v6591
        %v6829 = vld [vmem:[%s628 + $0x5c] sm:$0x1]
        %v6830 = vsel %vm631, %v6592, %v6829
        %6831 = vst [vmem:[%s628 + $0x5c] sm:$0x1] %v6830
        %v6832 = vld [vmem:[%s628 + $0x60] sm:$0xf]
        %v6833 = vsel %vm1828, %v6599, %v6832
        %6834 = vst [vmem:[%s628 + $0x60] sm:$0xf] %v6833
        %6835 = vst [vmem:[%s628 + $0x64] sm:$0xf] %v6608
        %v6836 = vld [vmem:[%s628 + $0x68] sm:$0x1]
        %v6837 = vsel %vm631, %v6609, %v6836
        %6838 = vst [vmem:[%s628 + $0x68] sm:$0x1] %v6837
        %v6839 = vld [vmem:[%s628 + $0x6c] sm:$0xf]
        %v6840 = vsel %vm1828, %v6616, %v6839
        %6841 = vst [vmem:[%s628 + $0x6c] sm:$0xf] %v6840
        %6842 = vst [vmem:[%s628 + $0x70] sm:$0xf] %v6625
        %v6843 = vld [vmem:[%s628 + $0x74] sm:$0x1]
        %v6844 = vsel %vm631, %v6626, %v6843
        %6845 = vst [vmem:[%s628 + $0x74] sm:$0x1] %v6844
        %v6846 = vld [vmem:[%s628 + $0x78] sm:$0xf]
        %v6847 = vsel %vm1828, %v6633, %v6846
        %6848 = vst [vmem:[%s628 + $0x78] sm:$0xf] %v6847
        %6849 = vst [vmem:[%s628 + $0x7c] sm:$0xf] %v6642
        %v6850 = vld [vmem:[%s628 + $0x80] sm:$0x1]
        %v6851 = vsel %vm631, %v6643, %v6850
        %6852 = vst [vmem:[%s628 + $0x80] sm:$0x1] %v6851
        %v6853 = vld [vmem:[%s628 + $0x84] sm:$0xf]
        %v6854 = vsel %vm1828, %v6650, %v6853
        %6855 = vst [vmem:[%s628 + $0x84] sm:$0xf] %v6854
        %6856 = vst [vmem:[%s628 + $0x88] sm:$0xf] %v6659
        %v6857 = vld [vmem:[%s628 + $0x8c] sm:$0x1]
        %v6858 = vsel %vm631, %v6660, %v6857
        %6859 = vst [vmem:[%s628 + $0x8c] sm:$0x1] %v6858
        %v6860 = vld [vmem:[%s628 + $0x90] sm:$0xf]
        %v6861 = vsel %vm1828, %v6667, %v6860
        %6862 = vst [vmem:[%s628 + $0x90] sm:$0xf] %v6861
        %6863 = vst [vmem:[%s628 + $0x94] sm:$0xf] %v6676
        %v6864 = vld [vmem:[%s628 + $0x98] sm:$0x1]
        %v6865 = vsel %vm631, %v6677, %v6864
        %6866 = vst [vmem:[%s628 + $0x98] sm:$0x1] %v6865
        %v6867 = vld [vmem:[%s628 + $0x9c] sm:$0xf]
        %v6868 = vsel %vm1828, %v6684, %v6867
        %6869 = vst [vmem:[%s628 + $0x9c] sm:$0xf] %v6868
        %6870 = vst [vmem:[%s628 + $0xa0] sm:$0xf] %v6693
        %v6871 = vld [vmem:[%s628 + $0xa4] sm:$0x1]
        %v6872 = vsel %vm631, %v6694, %v6871
        %6873 = vst [vmem:[%s628 + $0xa4] sm:$0x1] %v6872
        %v6874 = vld [vmem:[%s628 + $0xa8] sm:$0xf]
        %v6875 = vsel %vm1828, %v6701, %v6874
        %6876 = vst [vmem:[%s628 + $0xa8] sm:$0xf] %v6875
        %6877 = vst [vmem:[%s628 + $0xac] sm:$0xf] %v6710
        %v6878 = vld [vmem:[%s628 + $0xb0] sm:$0x1]
        %v6879 = vsel %vm631, %v6711, %v6878
        %6880 = vst [vmem:[%s628 + $0xb0] sm:$0x1] %v6879
        %v6881 = vld [vmem:[%s628 + $0xb4] sm:$0xf]
        %v6882 = vsel %vm1828, %v6718, %v6881
        %6883 = vst [vmem:[%s628 + $0xb4] sm:$0xf] %v6882
        %6884 = vst [vmem:[%s628 + $0xb8] sm:$0xf] %v6727
        %v6885 = vld [vmem:[%s628 + $0xbc] sm:$0x1]
        %v6886 = vsel %vm631, %v6728, %v6885
        %6887 = vst [vmem:[%s628 + $0xbc] sm:$0x1] %v6886
        %v6888 = vld [vmem:[#allocation20] sm:$0xf]
        %v6889 = vld [vmem:[#allocation20 + $0x4] sm:$0xf]
        %v6890 = vld [vmem:[#allocation20 + $0x8] sm:$0xf]
        %v6891 = vld [vmem:[#allocation20 + $0xc] sm:$0xf]
        %v6892 = vld [vmem:[#allocation20 + $0x10] sm:$0xf]
        %v6893 = vld [vmem:[#allocation20 + $0x14] sm:$0xf]
        %v6894 = vld [vmem:[#allocation20 + $0x18] sm:$0xf]
        %v6895 = vld [vmem:[#allocation20 + $0x1c] sm:$0xf]
        %v6896 = vld [vmem:[#allocation20 + $0x20] sm:$0xf]
        %v6897 = vld [vmem:[#allocation20 + $0x24] sm:$0xf]
        %v6898 = vld [vmem:[#allocation20 + $0x28] sm:$0xf]
        %v6899 = vld [vmem:[#allocation20 + $0x2c] sm:$0xf]
        %v6900 = vld [vmem:[#allocation20 + $0x30] sm:$0xf]
        %v6901 = vld [vmem:[#allocation20 + $0x34] sm:$0xf]
        %v6902 = vld [vmem:[#allocation20 + $0x38] sm:$0xf]
        %v6903 = vld [vmem:[#allocation20 + $0x3c] sm:$0xf]
        %v6904 = vld [vmem:[#allocation20 + $0x40] sm:$0xf]
        %v6905 = vld [vmem:[#allocation20 + $0x44] sm:$0xf]
        %v6906 = vld [vmem:[#allocation20 + $0x48] sm:$0xf]
        %v6907 = vld [vmem:[#allocation20 + $0x4c] sm:$0xf]
        %v6908 = vld [vmem:[#allocation20 + $0x50] sm:$0xf]
        %v6909 = vld [vmem:[#allocation20 + $0x54] sm:$0xf]
        %v6910 = vld [vmem:[#allocation20 + $0x58] sm:$0xf]
        %v6911 = vld [vmem:[#allocation20 + $0x5c] sm:$0xf]
        %v6912 = vld [vmem:[#allocation20 + $0x60] sm:$0xf]
        %v6913 = vld [vmem:[#allocation20 + $0x64] sm:$0xf]
        %v6914 = vld [vmem:[#allocation20 + $0x68] sm:$0xf]
        %v6915 = vld [vmem:[#allocation20 + $0x6c] sm:$0xf]
        %v6916 = vld [vmem:[#allocation20 + $0x70] sm:$0xf]
        %v6917 = vld [vmem:[#allocation20 + $0x74] sm:$0xf]
        %v6918 = vld [vmem:[#allocation20 + $0x78] sm:$0xf]
        %v6919 = vld [vmem:[#allocation20 + $0x7c] sm:$0xf]
        %v6920 = vld [vmem:[#allocation20 + $0x80] sm:$0xf]
        %v6921 = vld [vmem:[#allocation20 + $0x84] sm:$0xf]
        %v6922 = vld [vmem:[#allocation20 + $0x88] sm:$0xf]
        %v6923 = vld [vmem:[#allocation20 + $0x8c] sm:$0xf]
        %v6924 = vld [vmem:[#allocation20 + $0x90] sm:$0xf]
        %v6925 = vld [vmem:[#allocation20 + $0x94] sm:$0xf]
        %v6926 = vld [vmem:[#allocation20 + $0x98] sm:$0xf]
        %v6927 = vld [vmem:[#allocation20 + $0x9c] sm:$0xf]
        %v6928 = vld [vmem:[#allocation20 + $0xa0] sm:$0xf]
        %v6929 = vld [vmem:[#allocation20 + $0xa4] sm:$0xf]
        %v6930 = vld [vmem:[#allocation20 + $0xa8] sm:$0xf]
        %v6931 = vld [vmem:[#allocation20 + $0xac] sm:$0xf]
        %v6932 = vld [vmem:[#allocation20 + $0xb0] sm:$0xf]
        %v6933 = vld [vmem:[#allocation20 + $0xb4] sm:$0xf]
        %v6934 = vld [vmem:[#allocation20 + $0xb8] sm:$0xf]
        %v6935 = vld [vmem:[#allocation20 + $0xbc] sm:$0xf]
        %v6936 = vld [vmem:[#allocation20 + $0xc0] sm:$0xf]
        %v6937 = vld [vmem:[#allocation20 + $0xc4] sm:$0xf]
        %v6938 = vld [vmem:[#allocation20 + $0xc8] sm:$0xf]
        %v6939 = vld [vmem:[#allocation20 + $0xcc] sm:$0xf]
        %v6940 = vld [vmem:[#allocation20 + $0xd0] sm:$0xf]
        %v6941 = vld [vmem:[#allocation20 + $0xd4] sm:$0xf]
        %v6942 = vld [vmem:[#allocation20 + $0xd8] sm:$0xf]
        %v6943 = vld [vmem:[#allocation20 + $0xdc] sm:$0xf]
        %v6944 = vld [vmem:[#allocation20 + $0xe0] sm:$0xf]
        %v6945 = vld [vmem:[#allocation20 + $0xe4] sm:$0xf]
        %v6946 = vld [vmem:[#allocation20 + $0xe8] sm:$0xf]
        %v6947 = vld [vmem:[#allocation20 + $0xec] sm:$0xf]
        %v6948 = vld [vmem:[#allocation20 + $0xf0] sm:$0xf]
        %v6949 = vld [vmem:[#allocation20 + $0xf4] sm:$0xf]
        %v6950 = vld [vmem:[#allocation20 + $0xf8] sm:$0xf]
        %v6951 = vld [vmem:[#allocation20 + $0xfc] sm:$0xf]
        %v6952 = vld [vmem:[#allocation20 + $0x100] sm:$0xf]
        %v6953 = vld [vmem:[#allocation20 + $0x104] sm:$0xf]
        %v6954 = vld [vmem:[#allocation20 + $0x108] sm:$0xf]
        %v6955 = vld [vmem:[#allocation20 + $0x10c] sm:$0xf]
        %v6956 = vld [vmem:[#allocation20 + $0x110] sm:$0xf]
        %v6957 = vld [vmem:[#allocation20 + $0x114] sm:$0xf]
        %v6958 = vld [vmem:[#allocation20 + $0x118] sm:$0xf]
        %v6959 = vld [vmem:[#allocation20 + $0x11c] sm:$0xf]
        %v6960 = vld [vmem:[#allocation20 + $0x120] sm:$0xf]
        %v6961 = vld [vmem:[#allocation20 + $0x124] sm:$0xf]
        %v6962 = vld [vmem:[#allocation20 + $0x128] sm:$0xf]
        %v6963 = vld [vmem:[#allocation20 + $0x12c] sm:$0xf]
        %v6964 = vld [vmem:[#allocation20 + $0x130] sm:$0xf]
        %v6965 = vld [vmem:[#allocation20 + $0x134] sm:$0xf]
        %v6966 = vld [vmem:[#allocation20 + $0x138] sm:$0xf]
        %v6967 = vld [vmem:[#allocation20 + $0x13c] sm:$0xf]
        %v6968 = vld [vmem:[#allocation20 + $0x140] sm:$0xf]
        %v6969 = vld [vmem:[#allocation20 + $0x144] sm:$0xf]
        %v6970 = vld [vmem:[#allocation20 + $0x148] sm:$0xf]
        %v6971 = vld [vmem:[#allocation20 + $0x14c] sm:$0xf]
        %v6972 = vld [vmem:[#allocation20 + $0x150] sm:$0xf]
        %v6973 = vld [vmem:[#allocation20 + $0x154] sm:$0xf]
        %v6974 = vld [vmem:[#allocation20 + $0x158] sm:$0xf]
        %v6975 = vld [vmem:[#allocation20 + $0x15c] sm:$0xf]
        %v6976 = vld [vmem:[#allocation20 + $0x160] sm:$0xf]
        %v6977 = vld [vmem:[#allocation20 + $0x164] sm:$0xf]
        %v6978 = vld [vmem:[#allocation20 + $0x168] sm:$0xf]
        %v6979 = vld [vmem:[#allocation20 + $0x16c] sm:$0xf]
        %v6980 = vld [vmem:[#allocation20 + $0x170] sm:$0xf]
        %v6981 = vld [vmem:[#allocation20 + $0x174] sm:$0xf]
        %v6982 = vld [vmem:[#allocation20 + $0x178] sm:$0xf]
        %v6983 = vld [vmem:[#allocation20 + $0x17c] sm:$0xf]
        %v6984 = vld [vmem:[#allocation20 + $0x180] sm:$0xf]
        %v6985 = vld [vmem:[#allocation20 + $0x184] sm:$0xf]
        %v6986 = vld [vmem:[#allocation20 + $0x188] sm:$0xf]
        %v6987 = vld [vmem:[#allocation20 + $0x18c] sm:$0xf]
        %v6988 = vld [vmem:[#allocation20 + $0x190] sm:$0xf]
        %v6989 = vld [vmem:[#allocation20 + $0x194] sm:$0xf]
        %v6990 = vld [vmem:[#allocation20 + $0x198] sm:$0xf]
        %v6991 = vld [vmem:[#allocation20 + $0x19c] sm:$0xf]
        %v6992 = vld [vmem:[#allocation20 + $0x1a0] sm:$0xf]
        %v6993 = vld [vmem:[#allocation20 + $0x1a4] sm:$0xf]
        %v6994 = vld [vmem:[#allocation20 + $0x1a8] sm:$0xf]
        %v6995 = vld [vmem:[#allocation20 + $0x1ac] sm:$0xf]
        %v6996 = vld [vmem:[#allocation20 + $0x1b0] sm:$0xf]
        %v6997 = vld [vmem:[#allocation20 + $0x1b4] sm:$0xf]
        %v6998 = vld [vmem:[#allocation20 + $0x1b8] sm:$0xf]
        %v6999 = vld [vmem:[#allocation20 + $0x1bc] sm:$0xf]
        %v7000 = vld [vmem:[#allocation20 + $0x1c0] sm:$0xf]
        %v7001 = vld [vmem:[#allocation20 + $0x1c4] sm:$0xf]
        %v7002 = vld [vmem:[#allocation20 + $0x1c8] sm:$0xf]
        %v7003 = vld [vmem:[#allocation20 + $0x1cc] sm:$0xf]
        %v7004 = vld [vmem:[#allocation20 + $0x1d0] sm:$0xf]
        %v7005 = vld [vmem:[#allocation20 + $0x1d4] sm:$0xf]
        %v7006 = vld [vmem:[#allocation20 + $0x1d8] sm:$0xf]
        %v7007 = vld [vmem:[#allocation20 + $0x1dc] sm:$0xf]
        %v7008 = vld [vmem:[#allocation20 + $0x1e0] sm:$0xf]
        %v7009 = vld [vmem:[#allocation20 + $0x1e4] sm:$0xf]
        %v7010 = vld [vmem:[#allocation20 + $0x1e8] sm:$0xf]
        %v7011 = vld [vmem:[#allocation20 + $0x1ec] sm:$0xf]
        %v7012 = vld [vmem:[#allocation20 + $0x1f0] sm:$0xf]
        %v7013 = vld [vmem:[#allocation20 + $0x1f4] sm:$0xf]
        %v7014 = vld [vmem:[#allocation20 + $0x1f8] sm:$0xf]
        %v7015 = vld [vmem:[#allocation20 + $0x1fc] sm:$0xf]
        %v7016 = vld [vmem:[#allocation20 + $0x200] sm:$0xf]
        %v7017 = vld [vmem:[#allocation20 + $0x204] sm:$0xf]
        %v7018 = vld [vmem:[#allocation20 + $0x208] sm:$0xf]
        %v7019 = vld [vmem:[#allocation20 + $0x20c] sm:$0xf]
        %v7020 = vld [vmem:[#allocation20 + $0x210] sm:$0xf]
        %v7021 = vld [vmem:[#allocation20 + $0x214] sm:$0xf]
        %v7022 = vld [vmem:[#allocation20 + $0x218] sm:$0xf]
        %v7023 = vld [vmem:[#allocation20 + $0x21c] sm:$0xf]
        %v7024 = vld [vmem:[#allocation20 + $0x220] sm:$0xf]
        %v7025 = vld [vmem:[#allocation20 + $0x224] sm:$0xf]
        %v7026 = vld [vmem:[#allocation20 + $0x228] sm:$0xf]
        %v7027 = vld [vmem:[#allocation20 + $0x22c] sm:$0xf]
        %v7028 = vld [vmem:[#allocation20 + $0x230] sm:$0xf]
        %v7029 = vld [vmem:[#allocation20 + $0x234] sm:$0xf]
        %v7030 = vld [vmem:[#allocation20 + $0x238] sm:$0xf]
        %v7031 = vld [vmem:[#allocation20 + $0x23c] sm:$0xf]
        %v7032 = vld [vmem:[#allocation21] sm:$0x1]
        %v7033 = vld [vmem:[#allocation2] sm:$0xf]
        %v7034 = vld [vmem:[#allocation2 + $0x4] sm:$0xf]
        %v7035 = vld [vmem:[#allocation2 + $0xc] sm:$0xf]
        %v7036 = vld [vmem:[#allocation2 + $0x10] sm:$0xf]
        %v7037 = vld [vmem:[#allocation2 + $0x18] sm:$0xf]
        %v7038 = vld [vmem:[#allocation2 + $0x1c] sm:$0xf]
        %v7039 = vld [vmem:[#allocation2 + $0x24] sm:$0xf]
        %v7040 = vld [vmem:[#allocation2 + $0x28] sm:$0xf]
        %v7041 = vld [vmem:[#allocation2 + $0x30] sm:$0xf]
        %v7042 = vld [vmem:[#allocation2 + $0x34] sm:$0xf]
        %v7043 = vld [vmem:[#allocation2 + $0x3c] sm:$0xf]
        %v7044 = vld [vmem:[#allocation2 + $0x40] sm:$0xf]
        %v7045 = vld [vmem:[#allocation2 + $0x48] sm:$0xf]
        %v7046 = vld [vmem:[#allocation2 + $0x4c] sm:$0xf]
        %v7047 = vld [vmem:[#allocation2 + $0x54] sm:$0xf]
        %v7048 = vld [vmem:[#allocation2 + $0x58] sm:$0xf]
        %v7049 = vld [vmem:[#allocation2 + $0x60] sm:$0xf]
        %v7050 = vld [vmem:[#allocation2 + $0x64] sm:$0xf]
        %v7051 = vld [vmem:[#allocation2 + $0x6c] sm:$0xf]
        %v7052 = vld [vmem:[#allocation2 + $0x70] sm:$0xf]
        %v7053 = vld [vmem:[#allocation2 + $0x78] sm:$0xf]
        %v7054 = vld [vmem:[#allocation2 + $0x7c] sm:$0xf]
        %v7055 = vld [vmem:[#allocation2 + $0x84] sm:$0xf]
        %v7056 = vld [vmem:[#allocation2 + $0x88] sm:$0xf]
        %v7057 = vld [vmem:[#allocation2 + $0x90] sm:$0xf]
        %v7058 = vld [vmem:[#allocation2 + $0x94] sm:$0xf]
        %v7059 = vld [vmem:[#allocation2 + $0x9c] sm:$0xf]
        %v7060 = vld [vmem:[#allocation2 + $0xa0] sm:$0xf]
        %v7061 = vld [vmem:[#allocation2 + $0xa8] sm:$0xf]
        %v7062 = vld [vmem:[#allocation2 + $0xac] sm:$0xf]
        %v7063 = vld [vmem:[#allocation2 + $0xb4] sm:$0xf]
        %v7064 = vld [vmem:[#allocation2 + $0xb8] sm:$0xf]
        %v7065 = vld [vmem:[#allocation2 + $0x8] sm:$0x1]
        %v7066 = vld [vmem:[#allocation2 + $0x14] sm:$0x1]
        %v7067 = vld [vmem:[#allocation2 + $0x20] sm:$0x1]
        %v7068 = vld [vmem:[#allocation2 + $0x2c] sm:$0x1]
        %v7069 = vld [vmem:[#allocation2 + $0x38] sm:$0x1]
        %v7070 = vld [vmem:[#allocation2 + $0x44] sm:$0x1]
        %v7071 = vld [vmem:[#allocation2 + $0x50] sm:$0x1]
        %v7072 = vld [vmem:[#allocation2 + $0x5c] sm:$0x1]
        %v7073 = vld [vmem:[#allocation2 + $0x68] sm:$0x1]
        %v7074 = vld [vmem:[#allocation2 + $0x74] sm:$0x1]
        %v7075 = vld [vmem:[#allocation2 + $0x80] sm:$0x1]
        %v7076 = vld [vmem:[#allocation2 + $0x8c] sm:$0x1]
        %v7077 = vld [vmem:[#allocation2 + $0x98] sm:$0x1]
        %v7078 = vld [vmem:[#allocation2 + $0xa4] sm:$0x1]
        %v7079 = vld [vmem:[#allocation2 + $0xb0] sm:$0x1]
        %v7080 = vld [vmem:[#allocation2 + $0xbc] sm:$0x1]
        %v7082 = vshrl.u32 %v7033, 16
        %v7084 = vrot.slane %v7082, 4
        %v7085 = vshll.u32 %v7033, 16
        %v7087 = vrot.slane %v7085, 5
        %v7088 = vor.u32 %v7084, %v7087
        %v7089 = vrot.slane %v7088, 4
        %v7091 = vshll.u32 %v7034, 16
        %v7093 = vrot.slane %v7091, 5
        %v7094 = vsel %vm2136, %v7089, %v7093
        %v7095 = vshrl.u32 %v7034, 16
        %v7097 = vrot.slane %v7095, 4
        %v7098 = vor.u32 %v7097, %v7093
        %v7099 = vrot.slane %v7098, 4
        %v7101 = vshll.u32 %v7065, 16
        %v7103 = vrot.slane %v7101, 5
        %v7104 = vsel %vm2136, %v7099, %v7103
        %v7106 = vshrl.u32 %v7035, 16
        %v7108 = vrot.slane %v7106, 4
        %v7109 = vshll.u32 %v7035, 16
        %v7111 = vrot.slane %v7109, 5
        %v7112 = vor.u32 %v7108, %v7111
        %v7113 = vrot.slane %v7112, 4
        %v7115 = vshll.u32 %v7036, 16
        %v7117 = vrot.slane %v7115, 5
        %v7118 = vsel %vm2136, %v7113, %v7117
        %v7119 = vshrl.u32 %v7036, 16
        %v7121 = vrot.slane %v7119, 4
        %v7122 = vor.u32 %v7121, %v7117
        %v7123 = vrot.slane %v7122, 4
        %v7125 = vshll.u32 %v7066, 16
        %v7127 = vrot.slane %v7125, 5
        %v7128 = vsel %vm2136, %v7123, %v7127
        %v7130 = vshrl.u32 %v7037, 16
        %v7132 = vrot.slane %v7130, 4
        %v7133 = vshll.u32 %v7037, 16
        %v7135 = vrot.slane %v7133, 5
        %v7136 = vor.u32 %v7132, %v7135
        %v7137 = vrot.slane %v7136, 4
        %v7139 = vshll.u32 %v7038, 16
        %v7141 = vrot.slane %v7139, 5
        %v7142 = vsel %vm2136, %v7137, %v7141
        %v7143 = vshrl.u32 %v7038, 16
        %v7145 = vrot.slane %v7143, 4
        %v7146 = vor.u32 %v7145, %v7141
        %v7147 = vrot.slane %v7146, 4
        %v7149 = vshll.u32 %v7067, 16
        %v7151 = vrot.slane %v7149, 5
        %v7152 = vsel %vm2136, %v7147, %v7151
        %v7154 = vshrl.u32 %v7039, 16
        %v7156 = vrot.slane %v7154, 4
        %v7157 = vshll.u32 %v7039, 16
        %v7159 = vrot.slane %v7157, 5
        %v7160 = vor.u32 %v7156, %v7159
        %v7161 = vrot.slane %v7160, 4
        %v7163 = vshll.u32 %v7040, 16
        %v7165 = vrot.slane %v7163, 5
        %v7166 = vsel %vm2136, %v7161, %v7165
        %v7167 = vshrl.u32 %v7040, 16
        %v7169 = vrot.slane %v7167, 4
        %v7170 = vor.u32 %v7169, %v7165
        %v7171 = vrot.slane %v7170, 4
        %v7173 = vshll.u32 %v7068, 16
        %v7175 = vrot.slane %v7173, 5
        %v7176 = vsel %vm2136, %v7171, %v7175
        %v7178 = vshrl.u32 %v7041, 16
        %v7180 = vrot.slane %v7178, 4
        %v7181 = vshll.u32 %v7041, 16
        %v7183 = vrot.slane %v7181, 5
        %v7184 = vor.u32 %v7180, %v7183
        %v7185 = vrot.slane %v7184, 4
        %v7187 = vshll.u32 %v7042, 16
        %v7189 = vrot.slane %v7187, 5
        %v7190 = vsel %vm2136, %v7185, %v7189
        %v7191 = vshrl.u32 %v7042, 16
        %v7193 = vrot.slane %v7191, 4
        %v7194 = vor.u32 %v7193, %v7189
        %v7195 = vrot.slane %v7194, 4
        %v7197 = vshll.u32 %v7069, 16
        %v7199 = vrot.slane %v7197, 5
        %v7200 = vsel %vm2136, %v7195, %v7199
        %v7202 = vshrl.u32 %v7043, 16
        %v7204 = vrot.slane %v7202, 4
        %v7205 = vshll.u32 %v7043, 16
        %v7207 = vrot.slane %v7205, 5
        %v7208 = vor.u32 %v7204, %v7207
        %v7209 = vrot.slane %v7208, 4
        %v7211 = vshll.u32 %v7044, 16
        %v7213 = vrot.slane %v7211, 5
        %v7214 = vsel %vm2136, %v7209, %v7213
        %v7215 = vshrl.u32 %v7044, 16
        %v7217 = vrot.slane %v7215, 4
        %v7218 = vor.u32 %v7217, %v7213
        %v7219 = vrot.slane %v7218, 4
        %v7221 = vshll.u32 %v7070, 16
        %v7223 = vrot.slane %v7221, 5
        %v7224 = vsel %vm2136, %v7219, %v7223
        %v7226 = vshrl.u32 %v7045, 16
        %v7228 = vrot.slane %v7226, 4
        %v7229 = vshll.u32 %v7045, 16
        %v7231 = vrot.slane %v7229, 5
        %v7232 = vor.u32 %v7228, %v7231
        %v7233 = vrot.slane %v7232, 4
        %v7235 = vshll.u32 %v7046, 16
        %v7237 = vrot.slane %v7235, 5
        %v7238 = vsel %vm2136, %v7233, %v7237
        %v7239 = vshrl.u32 %v7046, 16
        %v7241 = vrot.slane %v7239, 4
        %v7242 = vor.u32 %v7241, %v7237
        %v7243 = vrot.slane %v7242, 4
        %v7245 = vshll.u32 %v7071, 16
        %v7247 = vrot.slane %v7245, 5
        %v7248 = vsel %vm2136, %v7243, %v7247
        %v7250 = vshrl.u32 %v7047, 16
        %v7252 = vrot.slane %v7250, 4
        %v7253 = vshll.u32 %v7047, 16
        %v7255 = vrot.slane %v7253, 5
        %v7256 = vor.u32 %v7252, %v7255
        %v7257 = vrot.slane %v7256, 4
        %v7259 = vshll.u32 %v7048, 16
        %v7261 = vrot.slane %v7259, 5
        %v7262 = vsel %vm2136, %v7257, %v7261
        %v7263 = vshrl.u32 %v7048, 16
        %v7265 = vrot.slane %v7263, 4
        %v7266 = vor.u32 %v7265, %v7261
        %v7267 = vrot.slane %v7266, 4
        %v7269 = vshll.u32 %v7072, 16
        %v7271 = vrot.slane %v7269, 5
        %v7272 = vsel %vm2136, %v7267, %v7271
        %v7274 = vshrl.u32 %v7049, 16
        %v7276 = vrot.slane %v7274, 4
        %v7277 = vshll.u32 %v7049, 16
        %v7279 = vrot.slane %v7277, 5
        %v7280 = vor.u32 %v7276, %v7279
        %v7281 = vrot.slane %v7280, 4
        %v7283 = vshll.u32 %v7050, 16
        %v7285 = vrot.slane %v7283, 5
        %v7286 = vsel %vm2136, %v7281, %v7285
        %v7287 = vshrl.u32 %v7050, 16
        %v7289 = vrot.slane %v7287, 4
        %v7290 = vor.u32 %v7289, %v7285
        %v7291 = vrot.slane %v7290, 4
        %v7293 = vshll.u32 %v7073, 16
        %v7295 = vrot.slane %v7293, 5
        %v7296 = vsel %vm2136, %v7291, %v7295
        %v7298 = vshrl.u32 %v7051, 16
        %v7300 = vrot.slane %v7298, 4
        %v7301 = vshll.u32 %v7051, 16
        %v7303 = vrot.slane %v7301, 5
        %v7304 = vor.u32 %v7300, %v7303
        %v7305 = vrot.slane %v7304, 4
        %v7307 = vshll.u32 %v7052, 16
        %v7309 = vrot.slane %v7307, 5
        %v7310 = vsel %vm2136, %v7305, %v7309
        %v7311 = vshrl.u32 %v7052, 16
        %v7313 = vrot.slane %v7311, 4
        %v7314 = vor.u32 %v7313, %v7309
        %v7315 = vrot.slane %v7314, 4
        %v7317 = vshll.u32 %v7074, 16
        %v7319 = vrot.slane %v7317, 5
        %v7320 = vsel %vm2136, %v7315, %v7319
        %v7322 = vshrl.u32 %v7053, 16
        %v7324 = vrot.slane %v7322, 4
        %v7325 = vshll.u32 %v7053, 16
        %v7327 = vrot.slane %v7325, 5
        %v7328 = vor.u32 %v7324, %v7327
        %v7329 = vrot.slane %v7328, 4
        %v7331 = vshll.u32 %v7054, 16
        %v7333 = vrot.slane %v7331, 5
        %v7334 = vsel %vm2136, %v7329, %v7333
        %v7335 = vshrl.u32 %v7054, 16
        %v7337 = vrot.slane %v7335, 4
        %v7338 = vor.u32 %v7337, %v7333
        %v7339 = vrot.slane %v7338, 4
        %v7341 = vshll.u32 %v7075, 16
        %v7343 = vrot.slane %v7341, 5
        %v7344 = vsel %vm2136, %v7339, %v7343
        %v7346 = vshrl.u32 %v7055, 16
        %v7348 = vrot.slane %v7346, 4
        %v7349 = vshll.u32 %v7055, 16
        %v7351 = vrot.slane %v7349, 5
        %v7352 = vor.u32 %v7348, %v7351
        %v7353 = vrot.slane %v7352, 4
        %v7355 = vshll.u32 %v7056, 16
        %v7357 = vrot.slane %v7355, 5
        %v7358 = vsel %vm2136, %v7353, %v7357
        %v7359 = vshrl.u32 %v7056, 16
        %v7361 = vrot.slane %v7359, 4
        %v7362 = vor.u32 %v7361, %v7357
        %v7363 = vrot.slane %v7362, 4
        %v7365 = vshll.u32 %v7076, 16
        %v7367 = vrot.slane %v7365, 5
        %v7368 = vsel %vm2136, %v7363, %v7367
        %v7370 = vshrl.u32 %v7057, 16
        %v7372 = vrot.slane %v7370, 4
        %v7373 = vshll.u32 %v7057, 16
        %v7375 = vrot.slane %v7373, 5
        %v7376 = vor.u32 %v7372, %v7375
        %v7377 = vrot.slane %v7376, 4
        %v7379 = vshll.u32 %v7058, 16
        %v7381 = vrot.slane %v7379, 5
        %v7382 = vsel %vm2136, %v7377, %v7381
        %v7383 = vshrl.u32 %v7058, 16
        %v7385 = vrot.slane %v7383, 4
        %v7386 = vor.u32 %v7385, %v7381
        %v7387 = vrot.slane %v7386, 4
        %v7389 = vshll.u32 %v7077, 16
        %v7391 = vrot.slane %v7389, 5
        %v7392 = vsel %vm2136, %v7387, %v7391
        %v7394 = vshrl.u32 %v7059, 16
        %v7396 = vrot.slane %v7394, 4
        %v7397 = vshll.u32 %v7059, 16
        %v7399 = vrot.slane %v7397, 5
        %v7400 = vor.u32 %v7396, %v7399
        %v7401 = vrot.slane %v7400, 4
        %v7403 = vshll.u32 %v7060, 16
        %v7405 = vrot.slane %v7403, 5
        %v7406 = vsel %vm2136, %v7401, %v7405
        %v7407 = vshrl.u32 %v7060, 16
        %v7409 = vrot.slane %v7407, 4
        %v7410 = vor.u32 %v7409, %v7405
        %v7411 = vrot.slane %v7410, 4
        %v7413 = vshll.u32 %v7078, 16
        %v7415 = vrot.slane %v7413, 5
        %v7416 = vsel %vm2136, %v7411, %v7415
        %v7418 = vshrl.u32 %v7061, 16
        %v7420 = vrot.slane %v7418, 4
        %v7421 = vshll.u32 %v7061, 16
        %v7423 = vrot.slane %v7421, 5
        %v7424 = vor.u32 %v7420, %v7423
        %v7425 = vrot.slane %v7424, 4
        %v7427 = vshll.u32 %v7062, 16
        %v7429 = vrot.slane %v7427, 5
        %v7430 = vsel %vm2136, %v7425, %v7429
        %v7431 = vshrl.u32 %v7062, 16
        %v7433 = vrot.slane %v7431, 4
        %v7434 = vor.u32 %v7433, %v7429
        %v7435 = vrot.slane %v7434, 4
        %v7437 = vshll.u32 %v7079, 16
        %v7439 = vrot.slane %v7437, 5
        %v7440 = vsel %vm2136, %v7435, %v7439
        %v7442 = vshrl.u32 %v7063, 16
        %v7444 = vrot.slane %v7442, 4
        %v7445 = vshll.u32 %v7063, 16
        %v7447 = vrot.slane %v7445, 5
        %v7448 = vor.u32 %v7444, %v7447
        %v7449 = vrot.slane %v7448, 4
        %v7451 = vshll.u32 %v7064, 16
        %v7453 = vrot.slane %v7451, 5
        %v7454 = vsel %vm2136, %v7449, %v7453
        %v7455 = vshrl.u32 %v7064, 16
        %v7457 = vrot.slane %v7455, 4
        %v7458 = vor.u32 %v7457, %v7453
        %v7459 = vrot.slane %v7458, 4
        %v7461 = vshll.u32 %v7080, 16
        %v7463 = vrot.slane %v7461, 5
        %v7464 = vsel %vm2136, %v7459, %v7463
        %v7465 = vld [vmem:[#allocation2] sm:$0xe]
        %v7466 = vld [vmem:[#allocation2 + $0xc] sm:$0xe]
        %v7467 = vld [vmem:[#allocation2 + $0x18] sm:$0xe]
        %v7468 = vld [vmem:[#allocation2 + $0x24] sm:$0xe]
        %v7469 = vld [vmem:[#allocation2 + $0x30] sm:$0xe]
        %v7470 = vld [vmem:[#allocation2 + $0x3c] sm:$0xe]
        %v7471 = vld [vmem:[#allocation2 + $0x48] sm:$0xe]
        %v7472 = vld [vmem:[#allocation2 + $0x54] sm:$0xe]
        %v7473 = vld [vmem:[#allocation2 + $0x60] sm:$0xe]
        %v7474 = vld [vmem:[#allocation2 + $0x6c] sm:$0xe]
        %v7475 = vld [vmem:[#allocation2 + $0x78] sm:$0xe]
        %v7476 = vld [vmem:[#allocation2 + $0x84] sm:$0xe]
        %v7477 = vld [vmem:[#allocation2 + $0x90] sm:$0xe]
        %v7478 = vld [vmem:[#allocation2 + $0x9c] sm:$0xe]
        %v7479 = vld [vmem:[#allocation2 + $0xa8] sm:$0xe]
        %v7480 = vld [vmem:[#allocation2 + $0xb4] sm:$0xe]
        %v7529 = vrot.slane %v7465, 5
        %v7530 = vrot.slane %v7529, 4
        %v7531 = vrot.slane %v7034, 5
        %v7532 = vsel %vm2587, %v7530, %v7531
        %v7533 = vrot.slane %v7531, 4
        %v7534 = vrot.slane %v7065, 5
        %v7535 = vsel %vm2587, %v7533, %v7534
        %v7536 = vrot.slane %v7466, 5
        %v7537 = vrot.slane %v7536, 4
        %v7538 = vrot.slane %v7036, 5
        %v7539 = vsel %vm2587, %v7537, %v7538
        %v7540 = vrot.slane %v7538, 4
        %v7541 = vrot.slane %v7066, 5
        %v7542 = vsel %vm2587, %v7540, %v7541
        %v7543 = vrot.slane %v7467, 5
        %v7544 = vrot.slane %v7543, 4
        %v7545 = vrot.slane %v7038, 5
        %v7546 = vsel %vm2587, %v7544, %v7545
        %v7547 = vrot.slane %v7545, 4
        %v7548 = vrot.slane %v7067, 5
        %v7549 = vsel %vm2587, %v7547, %v7548
        %v7550 = vrot.slane %v7468, 5
        %v7551 = vrot.slane %v7550, 4
        %v7552 = vrot.slane %v7040, 5
        %v7553 = vsel %vm2587, %v7551, %v7552
        %v7554 = vrot.slane %v7552, 4
        %v7555 = vrot.slane %v7068, 5
        %v7556 = vsel %vm2587, %v7554, %v7555
        %v7557 = vrot.slane %v7469, 5
        %v7558 = vrot.slane %v7557, 4
        %v7559 = vrot.slane %v7042, 5
        %v7560 = vsel %vm2587, %v7558, %v7559
        %v7561 = vrot.slane %v7559, 4
        %v7562 = vrot.slane %v7069, 5
        %v7563 = vsel %vm2587, %v7561, %v7562
        %v7564 = vrot.slane %v7470, 5
        %v7565 = vrot.slane %v7564, 4
        %v7566 = vrot.slane %v7044, 5
        %v7567 = vsel %vm2587, %v7565, %v7566
        %v7568 = vrot.slane %v7566, 4
        %v7569 = vrot.slane %v7070, 5
        %v7570 = vsel %vm2587, %v7568, %v7569
        %v7571 = vrot.slane %v7471, 5
        %v7572 = vrot.slane %v7571, 4
        %v7573 = vrot.slane %v7046, 5
        %v7574 = vsel %vm2587, %v7572, %v7573
        %v7575 = vrot.slane %v7573, 4
        %v7576 = vrot.slane %v7071, 5
        %v7577 = vsel %vm2587, %v7575, %v7576
        %v7578 = vrot.slane %v7472, 5
        %v7579 = vrot.slane %v7578, 4
        %v7580 = vrot.slane %v7048, 5
        %v7581 = vsel %vm2587, %v7579, %v7580
        %v7582 = vrot.slane %v7580, 4
        %v7583 = vrot.slane %v7072, 5
        %v7584 = vsel %vm2587, %v7582, %v7583
        %v7585 = vrot.slane %v7473, 5
        %v7586 = vrot.slane %v7585, 4
        %v7587 = vrot.slane %v7050, 5
        %v7588 = vsel %vm2587, %v7586, %v7587
        %v7589 = vrot.slane %v7587, 4
        %v7590 = vrot.slane %v7073, 5
        %v7591 = vsel %vm2587, %v7589, %v7590
        %v7592 = vrot.slane %v7474, 5
        %v7593 = vrot.slane %v7592, 4
        %v7594 = vrot.slane %v7052, 5
        %v7595 = vsel %vm2587, %v7593, %v7594
        %v7596 = vrot.slane %v7594, 4
        %v7597 = vrot.slane %v7074, 5
        %v7598 = vsel %vm2587, %v7596, %v7597
        %v7599 = vrot.slane %v7475, 5
        %v7600 = vrot.slane %v7599, 4
        %v7601 = vrot.slane %v7054, 5
        %v7602 = vsel %vm2587, %v7600, %v7601
        %v7603 = vrot.slane %v7601, 4
        %v7604 = vrot.slane %v7075, 5
        %v7605 = vsel %vm2587, %v7603, %v7604
        %v7606 = vrot.slane %v7476, 5
        %v7607 = vrot.slane %v7606, 4
        %v7608 = vrot.slane %v7056, 5
        %v7609 = vsel %vm2587, %v7607, %v7608
        %v7610 = vrot.slane %v7608, 4
        %v7611 = vrot.slane %v7076, 5
        %v7612 = vsel %vm2587, %v7610, %v7611
        %v7613 = vrot.slane %v7477, 5
        %v7614 = vrot.slane %v7613, 4
        %v7615 = vrot.slane %v7058, 5
        %v7616 = vsel %vm2587, %v7614, %v7615
        %v7617 = vrot.slane %v7615, 4
        %v7618 = vrot.slane %v7077, 5
        %v7619 = vsel %vm2587, %v7617, %v7618
        %v7620 = vrot.slane %v7478, 5
        %v7621 = vrot.slane %v7620, 4
        %v7622 = vrot.slane %v7060, 5
        %v7623 = vsel %vm2587, %v7621, %v7622
        %v7624 = vrot.slane %v7622, 4
        %v7625 = vrot.slane %v7078, 5
        %v7626 = vsel %vm2587, %v7624, %v7625
        %v7627 = vrot.slane %v7479, 5
        %v7628 = vrot.slane %v7627, 4
        %v7629 = vrot.slane %v7062, 5
        %v7630 = vsel %vm2587, %v7628, %v7629
        %v7631 = vrot.slane %v7629, 4
        %v7632 = vrot.slane %v7079, 5
        %v7633 = vsel %vm2587, %v7631, %v7632
        %v7634 = vrot.slane %v7480, 5
        %v7635 = vrot.slane %v7634, 4
        %v7636 = vrot.slane %v7064, 5
        %v7637 = vsel %vm2587, %v7635, %v7636
        %v7638 = vrot.slane %v7636, 4
        %v7639 = vrot.slane %v7080, 5
        %v7640 = vsel %vm2587, %v7638, %v7639
        %v7641 = vld [vmem:[%s628] sm:$0xf]
        %v7642 = vld [vmem:[%s628 + $0x4] sm:$0xf]
        %v7643 = vld [vmem:[%s628 + $0xc] sm:$0xf]
        %v7644 = vld [vmem:[%s628 + $0x10] sm:$0xf]
        %v7645 = vld [vmem:[%s628 + $0x18] sm:$0xf]
        %v7646 = vld [vmem:[%s628 + $0x1c] sm:$0xf]
        %v7647 = vld [vmem:[%s628 + $0x24] sm:$0xf]
        %v7648 = vld [vmem:[%s628 + $0x28] sm:$0xf]
        %v7649 = vld [vmem:[%s628 + $0x30] sm:$0xf]
        %v7650 = vld [vmem:[%s628 + $0x34] sm:$0xf]
        %v7651 = vld [vmem:[%s628 + $0x3c] sm:$0xf]
        %v7652 = vld [vmem:[%s628 + $0x40] sm:$0xf]
        %v7653 = vld [vmem:[%s628 + $0x48] sm:$0xf]
        %v7654 = vld [vmem:[%s628 + $0x4c] sm:$0xf]
        %v7655 = vld [vmem:[%s628 + $0x54] sm:$0xf]
        %v7656 = vld [vmem:[%s628 + $0x58] sm:$0xf]
        %v7657 = vld [vmem:[%s628 + $0x60] sm:$0xf]
        %v7658 = vld [vmem:[%s628 + $0x64] sm:$0xf]
        %v7659 = vld [vmem:[%s628 + $0x6c] sm:$0xf]
        %v7660 = vld [vmem:[%s628 + $0x70] sm:$0xf]
        %v7661 = vld [vmem:[%s628 + $0x78] sm:$0xf]
        %v7662 = vld [vmem:[%s628 + $0x7c] sm:$0xf]
        %v7663 = vld [vmem:[%s628 + $0x84] sm:$0xf]
        %v7664 = vld [vmem:[%s628 + $0x88] sm:$0xf]
        %v7665 = vld [vmem:[%s628 + $0x90] sm:$0xf]
        %v7666 = vld [vmem:[%s628 + $0x94] sm:$0xf]
        %v7667 = vld [vmem:[%s628 + $0x9c] sm:$0xf]
        %v7668 = vld [vmem:[%s628 + $0xa0] sm:$0xf]
        %v7669 = vld [vmem:[%s628 + $0xa8] sm:$0xf]
        %v7670 = vld [vmem:[%s628 + $0xac] sm:$0xf]
        %v7671 = vld [vmem:[%s628 + $0xb4] sm:$0xf]
        %v7672 = vld [vmem:[%s628 + $0xb8] sm:$0xf]
        %v7673 = vld [vmem:[%s628 + $0x8] sm:$0x1]
        %v7674 = vld [vmem:[%s628 + $0x14] sm:$0x1]
        %v7675 = vld [vmem:[%s628 + $0x20] sm:$0x1]
        %v7676 = vld [vmem:[%s628 + $0x2c] sm:$0x1]
        %v7677 = vld [vmem:[%s628 + $0x38] sm:$0x1]
        %v7678 = vld [vmem:[%s628 + $0x44] sm:$0x1]
        %v7679 = vld [vmem:[%s628 + $0x50] sm:$0x1]
        %v7680 = vld [vmem:[%s628 + $0x5c] sm:$0x1]
        %v7681 = vld [vmem:[%s628 + $0x68] sm:$0x1]
        %v7682 = vld [vmem:[%s628 + $0x74] sm:$0x1]
        %v7683 = vld [vmem:[%s628 + $0x80] sm:$0x1]
        %v7684 = vld [vmem:[%s628 + $0x8c] sm:$0x1]
        %v7685 = vld [vmem:[%s628 + $0x98] sm:$0x1]
        %v7686 = vld [vmem:[%s628 + $0xa4] sm:$0x1]
        %v7687 = vld [vmem:[%s628 + $0xb0] sm:$0x1]
        %v7688 = vld [vmem:[%s628 + $0xbc] sm:$0x1]
        %v7690 = vshrl.u32 %v7641, 16
        %v7692 = vrot.slane %v7690, 4
        %v7693 = vshll.u32 %v7641, 16
        %v7695 = vrot.slane %v7693, 5
        %v7696 = vor.u32 %v7692, %v7695
        %v7697 = vrot.slane %v7696, 4
        %v7699 = vshll.u32 %v7642, 16
        %v7701 = vrot.slane %v7699, 5
        %v7702 = vsel %vm2136, %v7697, %v7701
        %v7703 = vshrl.u32 %v7642, 16
        %v7705 = vrot.slane %v7703, 4
        %v7706 = vor.u32 %v7705, %v7701
        %v7707 = vrot.slane %v7706, 4
        %v7709 = vshll.u32 %v7673, 16
        %v7711 = vrot.slane %v7709, 5
        %v7712 = vsel %vm2136, %v7707, %v7711
        %v7714 = vshrl.u32 %v7643, 16
        %v7716 = vrot.slane %v7714, 4
        %v7717 = vshll.u32 %v7643, 16
        %v7719 = vrot.slane %v7717, 5
        %v7720 = vor.u32 %v7716, %v7719
        %v7721 = vrot.slane %v7720, 4
        %v7723 = vshll.u32 %v7644, 16
        %v7725 = vrot.slane %v7723, 5
        %v7726 = vsel %vm2136, %v7721, %v7725
        %v7727 = vshrl.u32 %v7644, 16
        %v7729 = vrot.slane %v7727, 4
        %v7730 = vor.u32 %v7729, %v7725
        %v7731 = vrot.slane %v7730, 4
        %v7733 = vshll.u32 %v7674, 16
        %v7735 = vrot.slane %v7733, 5
        %v7736 = vsel %vm2136, %v7731, %v7735
        %v7738 = vshrl.u32 %v7645, 16
        %v7740 = vrot.slane %v7738, 4
        %v7741 = vshll.u32 %v7645, 16
        %v7743 = vrot.slane %v7741, 5
        %v7744 = vor.u32 %v7740, %v7743
        %v7745 = vrot.slane %v7744, 4
        %v7747 = vshll.u32 %v7646, 16
        %v7749 = vrot.slane %v7747, 5
        %v7750 = vsel %vm2136, %v7745, %v7749
        %v7751 = vshrl.u32 %v7646, 16
        %v7753 = vrot.slane %v7751, 4
        %v7754 = vor.u32 %v7753, %v7749
        %v7755 = vrot.slane %v7754, 4
        %v7757 = vshll.u32 %v7675, 16
        %v7759 = vrot.slane %v7757, 5
        %v7760 = vsel %vm2136, %v7755, %v7759
        %v7762 = vshrl.u32 %v7647, 16
        %v7764 = vrot.slane %v7762, 4
        %v7765 = vshll.u32 %v7647, 16
        %v7767 = vrot.slane %v7765, 5
        %v7768 = vor.u32 %v7764, %v7767
        %v7769 = vrot.slane %v7768, 4
        %v7771 = vshll.u32 %v7648, 16
        %v7773 = vrot.slane %v7771, 5
        %v7774 = vsel %vm2136, %v7769, %v7773
        %v7775 = vshrl.u32 %v7648, 16
        %v7777 = vrot.slane %v7775, 4
        %v7778 = vor.u32 %v7777, %v7773
        %v7779 = vrot.slane %v7778, 4
        %v7781 = vshll.u32 %v7676, 16
        %v7783 = vrot.slane %v7781, 5
        %v7784 = vsel %vm2136, %v7779, %v7783
        %v7786 = vshrl.u32 %v7649, 16
        %v7788 = vrot.slane %v7786, 4
        %v7789 = vshll.u32 %v7649, 16
        %v7791 = vrot.slane %v7789, 5
        %v7792 = vor.u32 %v7788, %v7791
        %v7793 = vrot.slane %v7792, 4
        %v7795 = vshll.u32 %v7650, 16
        %v7797 = vrot.slane %v7795, 5
        %v7798 = vsel %vm2136, %v7793, %v7797
        %v7799 = vshrl.u32 %v7650, 16
        %v7801 = vrot.slane %v7799, 4
        %v7802 = vor.u32 %v7801, %v7797
        %v7803 = vrot.slane %v7802, 4
        %v7805 = vshll.u32 %v7677, 16
        %v7807 = vrot.slane %v7805, 5
        %v7808 = vsel %vm2136, %v7803, %v7807
        %v7810 = vshrl.u32 %v7651, 16
        %v7812 = vrot.slane %v7810, 4
        %v7813 = vshll.u32 %v7651, 16
        %v7815 = vrot.slane %v7813, 5
        %v7816 = vor.u32 %v7812, %v7815
        %v7817 = vrot.slane %v7816, 4
        %v7819 = vshll.u32 %v7652, 16
        %v7821 = vrot.slane %v7819, 5
        %v7822 = vsel %vm2136, %v7817, %v7821
        %v7823 = vshrl.u32 %v7652, 16
        %v7825 = vrot.slane %v7823, 4
        %v7826 = vor.u32 %v7825, %v7821
        %v7827 = vrot.slane %v7826, 4
        %v7829 = vshll.u32 %v7678, 16
        %v7831 = vrot.slane %v7829, 5
        %v7832 = vsel %vm2136, %v7827, %v7831
        %v7834 = vshrl.u32 %v7653, 16
        %v7836 = vrot.slane %v7834, 4
        %v7837 = vshll.u32 %v7653, 16
        %v7839 = vrot.slane %v7837, 5
        %v7840 = vor.u32 %v7836, %v7839
        %v7841 = vrot.slane %v7840, 4
        %v7843 = vshll.u32 %v7654, 16
        %v7845 = vrot.slane %v7843, 5
        %v7846 = vsel %vm2136, %v7841, %v7845
        %v7847 = vshrl.u32 %v7654, 16
        %v7849 = vrot.slane %v7847, 4
        %v7850 = vor.u32 %v7849, %v7845
        %v7851 = vrot.slane %v7850, 4
        %v7853 = vshll.u32 %v7679, 16
        %v7855 = vrot.slane %v7853, 5
        %v7856 = vsel %vm2136, %v7851, %v7855
        %v7858 = vshrl.u32 %v7655, 16
        %v7860 = vrot.slane %v7858, 4
        %v7861 = vshll.u32 %v7655, 16
        %v7863 = vrot.slane %v7861, 5
        %v7864 = vor.u32 %v7860, %v7863
        %v7865 = vrot.slane %v7864, 4
        %v7867 = vshll.u32 %v7656, 16
        %v7869 = vrot.slane %v7867, 5
        %v7870 = vsel %vm2136, %v7865, %v7869
        %v7871 = vshrl.u32 %v7656, 16
        %v7873 = vrot.slane %v7871, 4
        %v7874 = vor.u32 %v7873, %v7869
        %v7875 = vrot.slane %v7874, 4
        %v7877 = vshll.u32 %v7680, 16
        %v7879 = vrot.slane %v7877, 5
        %v7880 = vsel %vm2136, %v7875, %v7879
        %v7882 = vshrl.u32 %v7657, 16
        %v7884 = vrot.slane %v7882, 4
        %v7885 = vshll.u32 %v7657, 16
        %v7887 = vrot.slane %v7885, 5
        %v7888 = vor.u32 %v7884, %v7887
        %v7889 = vrot.slane %v7888, 4
        %v7891 = vshll.u32 %v7658, 16
        %v7893 = vrot.slane %v7891, 5
        %v7894 = vsel %vm2136, %v7889, %v7893
        %v7895 = vshrl.u32 %v7658, 16
        %v7897 = vrot.slane %v7895, 4
        %v7898 = vor.u32 %v7897, %v7893
        %v7899 = vrot.slane %v7898, 4
        %v7901 = vshll.u32 %v7681, 16
        %v7903 = vrot.slane %v7901, 5
        %v7904 = vsel %vm2136, %v7899, %v7903
        %v7906 = vshrl.u32 %v7659, 16
        %v7908 = vrot.slane %v7906, 4
        %v7909 = vshll.u32 %v7659, 16
        %v7911 = vrot.slane %v7909, 5
        %v7912 = vor.u32 %v7908, %v7911
        %v7913 = vrot.slane %v7912, 4
        %v7915 = vshll.u32 %v7660, 16
        %v7917 = vrot.slane %v7915, 5
        %v7918 = vsel %vm2136, %v7913, %v7917
        %v7919 = vshrl.u32 %v7660, 16
        %v7921 = vrot.slane %v7919, 4
        %v7922 = vor.u32 %v7921, %v7917
        %v7923 = vrot.slane %v7922, 4
        %v7925 = vshll.u32 %v7682, 16
        %v7927 = vrot.slane %v7925, 5
        %v7928 = vsel %vm2136, %v7923, %v7927
        %v7930 = vshrl.u32 %v7661, 16
        %v7932 = vrot.slane %v7930, 4
        %v7933 = vshll.u32 %v7661, 16
        %v7935 = vrot.slane %v7933, 5
        %v7936 = vor.u32 %v7932, %v7935
        %v7937 = vrot.slane %v7936, 4
        %v7939 = vshll.u32 %v7662, 16
        %v7941 = vrot.slane %v7939, 5
        %v7942 = vsel %vm2136, %v7937, %v7941
        %v7943 = vshrl.u32 %v7662, 16
        %v7945 = vrot.slane %v7943, 4
        %v7946 = vor.u32 %v7945, %v7941
        %v7947 = vrot.slane %v7946, 4
        %v7949 = vshll.u32 %v7683, 16
        %v7951 = vrot.slane %v7949, 5
        %v7952 = vsel %vm2136, %v7947, %v7951
        %v7954 = vshrl.u32 %v7663, 16
        %v7956 = vrot.slane %v7954, 4
        %v7957 = vshll.u32 %v7663, 16
        %v7959 = vrot.slane %v7957, 5
        %v7960 = vor.u32 %v7956, %v7959
        %v7961 = vrot.slane %v7960, 4
        %v7963 = vshll.u32 %v7664, 16
        %v7965 = vrot.slane %v7963, 5
        %v7966 = vsel %vm2136, %v7961, %v7965
        %v7967 = vshrl.u32 %v7664, 16
        %v7969 = vrot.slane %v7967, 4
        %v7970 = vor.u32 %v7969, %v7965
        %v7971 = vrot.slane %v7970, 4
        %v7973 = vshll.u32 %v7684, 16
        %v7975 = vrot.slane %v7973, 5
        %v7976 = vsel %vm2136, %v7971, %v7975
        %v7978 = vshrl.u32 %v7665, 16
        %v7980 = vrot.slane %v7978, 4
        %v7981 = vshll.u32 %v7665, 16
        %v7983 = vrot.slane %v7981, 5
        %v7984 = vor.u32 %v7980, %v7983
        %v7985 = vrot.slane %v7984, 4
        %v7987 = vshll.u32 %v7666, 16
        %v7989 = vrot.slane %v7987, 5
        %v7990 = vsel %vm2136, %v7985, %v7989
        %v7991 = vshrl.u32 %v7666, 16
        %v7993 = vrot.slane %v7991, 4
        %v7994 = vor.u32 %v7993, %v7989
        %v7995 = vrot.slane %v7994, 4
        %v7997 = vshll.u32 %v7685, 16
        %v7999 = vrot.slane %v7997, 5
        %v8000 = vsel %vm2136, %v7995, %v7999
        %v8002 = vshrl.u32 %v7667, 16
        %v8004 = vrot.slane %v8002, 4
        %v8005 = vshll.u32 %v7667, 16
        %v8007 = vrot.slane %v8005, 5
        %v8008 = vor.u32 %v8004, %v8007
        %v8009 = vrot.slane %v8008, 4
        %v8011 = vshll.u32 %v7668, 16
        %v8013 = vrot.slane %v8011, 5
        %v8014 = vsel %vm2136, %v8009, %v8013
        %v8015 = vshrl.u32 %v7668, 16
        %v8017 = vrot.slane %v8015, 4
        %v8018 = vor.u32 %v8017, %v8013
        %v8019 = vrot.slane %v8018, 4
        %v8021 = vshll.u32 %v7686, 16
        %v8023 = vrot.slane %v8021, 5
        %v8024 = vsel %vm2136, %v8019, %v8023
        %v8026 = vshrl.u32 %v7669, 16
        %v8028 = vrot.slane %v8026, 4
        %v8029 = vshll.u32 %v7669, 16
        %v8031 = vrot.slane %v8029, 5
        %v8032 = vor.u32 %v8028, %v8031
        %v8033 = vrot.slane %v8032, 4
        %v8035 = vshll.u32 %v7670, 16
        %v8037 = vrot.slane %v8035, 5
        %v8038 = vsel %vm2136, %v8033, %v8037
        %v8039 = vshrl.u32 %v7670, 16
        %v8041 = vrot.slane %v8039, 4
        %v8042 = vor.u32 %v8041, %v8037
        %v8043 = vrot.slane %v8042, 4
        %v8045 = vshll.u32 %v7687, 16
        %v8047 = vrot.slane %v8045, 5
        %v8048 = vsel %vm2136, %v8043, %v8047
        %v8050 = vshrl.u32 %v7671, 16
        %v8052 = vrot.slane %v8050, 4
        %v8053 = vshll.u32 %v7671, 16
        %v8055 = vrot.slane %v8053, 5
        %v8056 = vor.u32 %v8052, %v8055
        %v8057 = vrot.slane %v8056, 4
        %v8059 = vshll.u32 %v7672, 16
        %v8061 = vrot.slane %v8059, 5
        %v8062 = vsel %vm2136, %v8057, %v8061
        %v8063 = vshrl.u32 %v7672, 16
        %v8065 = vrot.slane %v8063, 4
        %v8066 = vor.u32 %v8065, %v8061
        %v8067 = vrot.slane %v8066, 4
        %v8069 = vshll.u32 %v7688, 16
        %v8071 = vrot.slane %v8069, 5
        %v8072 = vsel %vm2136, %v8067, %v8071
        %v8073 = vld [vmem:[%s628] sm:$0xe]
        %v8074 = vld [vmem:[%s628 + $0xc] sm:$0xe]
        %v8075 = vld [vmem:[%s628 + $0x18] sm:$0xe]
        %v8076 = vld [vmem:[%s628 + $0x24] sm:$0xe]
        %v8077 = vld [vmem:[%s628 + $0x30] sm:$0xe]
        %v8078 = vld [vmem:[%s628 + $0x3c] sm:$0xe]
        %v8079 = vld [vmem:[%s628 + $0x48] sm:$0xe]
        %v8080 = vld [vmem:[%s628 + $0x54] sm:$0xe]
        %v8081 = vld [vmem:[%s628 + $0x60] sm:$0xe]
        %v8082 = vld [vmem:[%s628 + $0x6c] sm:$0xe]
        %v8083 = vld [vmem:[%s628 + $0x78] sm:$0xe]
        %v8084 = vld [vmem:[%s628 + $0x84] sm:$0xe]
        %v8085 = vld [vmem:[%s628 + $0x90] sm:$0xe]
        %v8086 = vld [vmem:[%s628 + $0x9c] sm:$0xe]
        %v8087 = vld [vmem:[%s628 + $0xa8] sm:$0xe]
        %v8088 = vld [vmem:[%s628 + $0xb4] sm:$0xe]
        %v8137 = vrot.slane %v8073, 5
        %v8138 = vrot.slane %v8137, 4
        %v8139 = vrot.slane %v7642, 5
        %v8140 = vsel %vm2587, %v8138, %v8139
        %v8141 = vrot.slane %v8139, 4
        %v8142 = vrot.slane %v7673, 5
        %v8143 = vsel %vm2587, %v8141, %v8142
        %v8144 = vrot.slane %v8074, 5
        %v8145 = vrot.slane %v8144, 4
        %v8146 = vrot.slane %v7644, 5
        %v8147 = vsel %vm2587, %v8145, %v8146
        %v8148 = vrot.slane %v8146, 4
        %v8149 = vrot.slane %v7674, 5
        %v8150 = vsel %vm2587, %v8148, %v8149
        %v8151 = vrot.slane %v8075, 5
        %v8152 = vrot.slane %v8151, 4
        %v8153 = vrot.slane %v7646, 5
        %v8154 = vsel %vm2587, %v8152, %v8153
        %v8155 = vrot.slane %v8153, 4
        %v8156 = vrot.slane %v7675, 5
        %v8157 = vsel %vm2587, %v8155, %v8156
        %v8158 = vrot.slane %v8076, 5
        %v8159 = vrot.slane %v8158, 4
        %v8160 = vrot.slane %v7648, 5
        %v8161 = vsel %vm2587, %v8159, %v8160
        %v8162 = vrot.slane %v8160, 4
        %v8163 = vrot.slane %v7676, 5
        %v8164 = vsel %vm2587, %v8162, %v8163
        %v8165 = vrot.slane %v8077, 5
        %v8166 = vrot.slane %v8165, 4
        %v8167 = vrot.slane %v7650, 5
        %v8168 = vsel %vm2587, %v8166, %v8167
        %v8169 = vrot.slane %v8167, 4
        %v8170 = vrot.slane %v7677, 5
        %v8171 = vsel %vm2587, %v8169, %v8170
        %v8172 = vrot.slane %v8078, 5
        %v8173 = vrot.slane %v8172, 4
        %v8174 = vrot.slane %v7652, 5
        %v8175 = vsel %vm2587, %v8173, %v8174
        %v8176 = vrot.slane %v8174, 4
        %v8177 = vrot.slane %v7678, 5
        %v8178 = vsel %vm2587, %v8176, %v8177
        %v8179 = vrot.slane %v8079, 5
        %v8180 = vrot.slane %v8179, 4
        %v8181 = vrot.slane %v7654, 5
        %v8182 = vsel %vm2587, %v8180, %v8181
        %v8183 = vrot.slane %v8181, 4
        %v8184 = vrot.slane %v7679, 5
        %v8185 = vsel %vm2587, %v8183, %v8184
        %v8186 = vrot.slane %v8080, 5
        %v8187 = vrot.slane %v8186, 4
        %v8188 = vrot.slane %v7656, 5
        %v8189 = vsel %vm2587, %v8187, %v8188
        %v8190 = vrot.slane %v8188, 4
        %v8191 = vrot.slane %v7680, 5
        %v8192 = vsel %vm2587, %v8190, %v8191
        %v8193 = vrot.slane %v8081, 5
        %v8194 = vrot.slane %v8193, 4
        %v8195 = vrot.slane %v7658, 5
        %v8196 = vsel %vm2587, %v8194, %v8195
        %v8197 = vrot.slane %v8195, 4
        %v8198 = vrot.slane %v7681, 5
        %v8199 = vsel %vm2587, %v8197, %v8198
        %v8200 = vrot.slane %v8082, 5
        %v8201 = vrot.slane %v8200, 4
        %v8202 = vrot.slane %v7660, 5
        %v8203 = vsel %vm2587, %v8201, %v8202
        %v8204 = vrot.slane %v8202, 4
        %v8205 = vrot.slane %v7682, 5
        %v8206 = vsel %vm2587, %v8204, %v8205
        %v8207 = vrot.slane %v8083, 5
        %v8208 = vrot.slane %v8207, 4
        %v8209 = vrot.slane %v7662, 5
        %v8210 = vsel %vm2587, %v8208, %v8209
        %v8211 = vrot.slane %v8209, 4
        %v8212 = vrot.slane %v7683, 5
        %v8213 = vsel %vm2587, %v8211, %v8212
        %v8214 = vrot.slane %v8084, 5
        %v8215 = vrot.slane %v8214, 4
        %v8216 = vrot.slane %v7664, 5
        %v8217 = vsel %vm2587, %v8215, %v8216
        %v8218 = vrot.slane %v8216, 4
        %v8219 = vrot.slane %v7684, 5
        %v8220 = vsel %vm2587, %v8218, %v8219
        %v8221 = vrot.slane %v8085, 5
        %v8222 = vrot.slane %v8221, 4
        %v8223 = vrot.slane %v7666, 5
        %v8224 = vsel %vm2587, %v8222, %v8223
        %v8225 = vrot.slane %v8223, 4
        %v8226 = vrot.slane %v7685, 5
        %v8227 = vsel %vm2587, %v8225, %v8226
        %v8228 = vrot.slane %v8086, 5
        %v8229 = vrot.slane %v8228, 4
        %v8230 = vrot.slane %v7668, 5
        %v8231 = vsel %vm2587, %v8229, %v8230
        %v8232 = vrot.slane %v8230, 4
        %v8233 = vrot.slane %v7686, 5
        %v8234 = vsel %vm2587, %v8232, %v8233
        %v8235 = vrot.slane %v8087, 5
        %v8236 = vrot.slane %v8235, 4
        %v8237 = vrot.slane %v7670, 5
        %v8238 = vsel %vm2587, %v8236, %v8237
        %v8239 = vrot.slane %v8237, 4
        %v8240 = vrot.slane %v7687, 5
        %v8241 = vsel %vm2587, %v8239, %v8240
        %v8242 = vrot.slane %v8088, 5
        %v8243 = vrot.slane %v8242, 4
        %v8244 = vrot.slane %v7672, 5
        %v8245 = vsel %vm2587, %v8243, %v8244
        %v8246 = vrot.slane %v8244, 4
        %v8247 = vrot.slane %v7688, 5
        %v8248 = vsel %vm2587, %v8246, %v8247
        %v8249 = vld [vmem:[%s3308] sm:$0xf]
        %v8250 = vld [vmem:[%s3308 + $0x4] sm:$0xf]
        %v8251 = vld [vmem:[%s3308 + $0xc] sm:$0xf]
        %v8252 = vld [vmem:[%s3308 + $0x10] sm:$0xf]
        %v8253 = vld [vmem:[%s3308 + $0x18] sm:$0xf]
        %v8254 = vld [vmem:[%s3308 + $0x1c] sm:$0xf]
        %v8255 = vld [vmem:[%s3308 + $0x24] sm:$0xf]
        %v8256 = vld [vmem:[%s3308 + $0x28] sm:$0xf]
        %v8257 = vld [vmem:[%s3308 + $0x30] sm:$0xf]
        %v8258 = vld [vmem:[%s3308 + $0x34] sm:$0xf]
        %v8259 = vld [vmem:[%s3308 + $0x3c] sm:$0xf]
        %v8260 = vld [vmem:[%s3308 + $0x40] sm:$0xf]
        %v8261 = vld [vmem:[%s3308 + $0x48] sm:$0xf]
        %v8262 = vld [vmem:[%s3308 + $0x4c] sm:$0xf]
        %v8263 = vld [vmem:[%s3308 + $0x54] sm:$0xf]
        %v8264 = vld [vmem:[%s3308 + $0x58] sm:$0xf]
        %v8265 = vld [vmem:[%s3308 + $0x60] sm:$0xf]
        %v8266 = vld [vmem:[%s3308 + $0x64] sm:$0xf]
        %v8267 = vld [vmem:[%s3308 + $0x6c] sm:$0xf]
        %v8268 = vld [vmem:[%s3308 + $0x70] sm:$0xf]
        %v8269 = vld [vmem:[%s3308 + $0x78] sm:$0xf]
        %v8270 = vld [vmem:[%s3308 + $0x7c] sm:$0xf]
        %v8271 = vld [vmem:[%s3308 + $0x84] sm:$0xf]
        %v8272 = vld [vmem:[%s3308 + $0x88] sm:$0xf]
        %v8273 = vld [vmem:[%s3308 + $0x90] sm:$0xf]
        %v8274 = vld [vmem:[%s3308 + $0x94] sm:$0xf]
        %v8275 = vld [vmem:[%s3308 + $0x9c] sm:$0xf]
        %v8276 = vld [vmem:[%s3308 + $0xa0] sm:$0xf]
        %v8277 = vld [vmem:[%s3308 + $0xa8] sm:$0xf]
        %v8278 = vld [vmem:[%s3308 + $0xac] sm:$0xf]
        %v8279 = vld [vmem:[%s3308 + $0xb4] sm:$0xf]
        %v8280 = vld [vmem:[%s3308 + $0xb8] sm:$0xf]
        %v8281 = vld [vmem:[%s3308 + $0x8] sm:$0x1]
        %v8282 = vld [vmem:[%s3308 + $0x14] sm:$0x1]
        %v8283 = vld [vmem:[%s3308 + $0x20] sm:$0x1]
        %v8284 = vld [vmem:[%s3308 + $0x2c] sm:$0x1]
        %v8285 = vld [vmem:[%s3308 + $0x38] sm:$0x1]
        %v8286 = vld [vmem:[%s3308 + $0x44] sm:$0x1]
        %v8287 = vld [vmem:[%s3308 + $0x50] sm:$0x1]
        %v8288 = vld [vmem:[%s3308 + $0x5c] sm:$0x1]
        %v8289 = vld [vmem:[%s3308 + $0x68] sm:$0x1]
        %v8290 = vld [vmem:[%s3308 + $0x74] sm:$0x1]
        %v8291 = vld [vmem:[%s3308 + $0x80] sm:$0x1]
        %v8292 = vld [vmem:[%s3308 + $0x8c] sm:$0x1]
        %v8293 = vld [vmem:[%s3308 + $0x98] sm:$0x1]
        %v8294 = vld [vmem:[%s3308 + $0xa4] sm:$0x1]
        %v8295 = vld [vmem:[%s3308 + $0xb0] sm:$0x1]
        %v8296 = vld [vmem:[%s3308 + $0xbc] sm:$0x1]
        %v8298 = vshrl.u32 %v8249, 16
        %v8300 = vrot.slane %v8298, 4
        %v8301 = vshll.u32 %v8249, 16
        %v8303 = vrot.slane %v8301, 5
        %v8304 = vor.u32 %v8300, %v8303
        %v8305 = vrot.slane %v8304, 4
        %v8307 = vshll.u32 %v8250, 16
        %v8309 = vrot.slane %v8307, 5
        %v8310 = vsel %vm2136, %v8305, %v8309
        %v8311 = vshrl.u32 %v8250, 16
        %v8313 = vrot.slane %v8311, 4
        %v8314 = vor.u32 %v8313, %v8309
        %v8315 = vrot.slane %v8314, 4
        %v8317 = vshll.u32 %v8281, 16
        %v8319 = vrot.slane %v8317, 5
        %v8320 = vsel %vm2136, %v8315, %v8319
        %v8322 = vshrl.u32 %v8251, 16
        %v8324 = vrot.slane %v8322, 4
        %v8325 = vshll.u32 %v8251, 16
        %v8327 = vrot.slane %v8325, 5
        %v8328 = vor.u32 %v8324, %v8327
        %v8329 = vrot.slane %v8328, 4
        %v8331 = vshll.u32 %v8252, 16
        %v8333 = vrot.slane %v8331, 5
        %v8334 = vsel %vm2136, %v8329, %v8333
        %v8335 = vshrl.u32 %v8252, 16
        %v8337 = vrot.slane %v8335, 4
        %v8338 = vor.u32 %v8337, %v8333
        %v8339 = vrot.slane %v8338, 4
        %v8341 = vshll.u32 %v8282, 16
        %v8343 = vrot.slane %v8341, 5
        %v8344 = vsel %vm2136, %v8339, %v8343
        %v8346 = vshrl.u32 %v8253, 16
        %v8348 = vrot.slane %v8346, 4
        %v8349 = vshll.u32 %v8253, 16
        %v8351 = vrot.slane %v8349, 5
        %v8352 = vor.u32 %v8348, %v8351
        %v8353 = vrot.slane %v8352, 4
        %v8355 = vshll.u32 %v8254, 16
        %v8357 = vrot.slane %v8355, 5
        %v8358 = vsel %vm2136, %v8353, %v8357
        %v8359 = vshrl.u32 %v8254, 16
        %v8361 = vrot.slane %v8359, 4
        %v8362 = vor.u32 %v8361, %v8357
        %v8363 = vrot.slane %v8362, 4
        %v8365 = vshll.u32 %v8283, 16
        %v8367 = vrot.slane %v8365, 5
        %v8368 = vsel %vm2136, %v8363, %v8367
        %v8370 = vshrl.u32 %v8255, 16
        %v8372 = vrot.slane %v8370, 4
        %v8373 = vshll.u32 %v8255, 16
        %v8375 = vrot.slane %v8373, 5
        %v8376 = vor.u32 %v8372, %v8375
        %v8377 = vrot.slane %v8376, 4
        %v8379 = vshll.u32 %v8256, 16
        %v8381 = vrot.slane %v8379, 5
        %v8382 = vsel %vm2136, %v8377, %v8381
        %v8383 = vshrl.u32 %v8256, 16
        %v8385 = vrot.slane %v8383, 4
        %v8386 = vor.u32 %v8385, %v8381
        %v8387 = vrot.slane %v8386, 4
        %v8389 = vshll.u32 %v8284, 16
        %v8391 = vrot.slane %v8389, 5
        %v8392 = vsel %vm2136, %v8387, %v8391
        %v8394 = vshrl.u32 %v8257, 16
        %v8396 = vrot.slane %v8394, 4
        %v8397 = vshll.u32 %v8257, 16
        %v8399 = vrot.slane %v8397, 5
        %v8400 = vor.u32 %v8396, %v8399
        %v8401 = vrot.slane %v8400, 4
        %v8403 = vshll.u32 %v8258, 16
        %v8405 = vrot.slane %v8403, 5
        %v8406 = vsel %vm2136, %v8401, %v8405
        %v8407 = vshrl.u32 %v8258, 16
        %v8409 = vrot.slane %v8407, 4
        %v8410 = vor.u32 %v8409, %v8405
        %v8411 = vrot.slane %v8410, 4
        %v8413 = vshll.u32 %v8285, 16
        %v8415 = vrot.slane %v8413, 5
        %v8416 = vsel %vm2136, %v8411, %v8415
        %v8418 = vshrl.u32 %v8259, 16
        %v8420 = vrot.slane %v8418, 4
        %v8421 = vshll.u32 %v8259, 16
        %v8423 = vrot.slane %v8421, 5
        %v8424 = vor.u32 %v8420, %v8423
        %v8425 = vrot.slane %v8424, 4
        %v8427 = vshll.u32 %v8260, 16
        %v8429 = vrot.slane %v8427, 5
        %v8430 = vsel %vm2136, %v8425, %v8429
        %v8431 = vshrl.u32 %v8260, 16
        %v8433 = vrot.slane %v8431, 4
        %v8434 = vor.u32 %v8433, %v8429
        %v8435 = vrot.slane %v8434, 4
        %v8437 = vshll.u32 %v8286, 16
        %v8439 = vrot.slane %v8437, 5
        %v8440 = vsel %vm2136, %v8435, %v8439
        %v8442 = vshrl.u32 %v8261, 16
        %v8444 = vrot.slane %v8442, 4
        %v8445 = vshll.u32 %v8261, 16
        %v8447 = vrot.slane %v8445, 5
        %v8448 = vor.u32 %v8444, %v8447
        %v8449 = vrot.slane %v8448, 4
        %v8451 = vshll.u32 %v8262, 16
        %v8453 = vrot.slane %v8451, 5
        %v8454 = vsel %vm2136, %v8449, %v8453
        %v8455 = vshrl.u32 %v8262, 16
        %v8457 = vrot.slane %v8455, 4
        %v8458 = vor.u32 %v8457, %v8453
        %v8459 = vrot.slane %v8458, 4
        %v8461 = vshll.u32 %v8287, 16
        %v8463 = vrot.slane %v8461, 5
        %v8464 = vsel %vm2136, %v8459, %v8463
        %v8466 = vshrl.u32 %v8263, 16
        %v8468 = vrot.slane %v8466, 4
        %v8469 = vshll.u32 %v8263, 16
        %v8471 = vrot.slane %v8469, 5
        %v8472 = vor.u32 %v8468, %v8471
        %v8473 = vrot.slane %v8472, 4
        %v8475 = vshll.u32 %v8264, 16
        %v8477 = vrot.slane %v8475, 5
        %v8478 = vsel %vm2136, %v8473, %v8477
        %v8479 = vshrl.u32 %v8264, 16
        %v8481 = vrot.slane %v8479, 4
        %v8482 = vor.u32 %v8481, %v8477
        %v8483 = vrot.slane %v8482, 4
        %v8485 = vshll.u32 %v8288, 16
        %v8487 = vrot.slane %v8485, 5
        %v8488 = vsel %vm2136, %v8483, %v8487
        %v8490 = vshrl.u32 %v8265, 16
        %v8492 = vrot.slane %v8490, 4
        %v8493 = vshll.u32 %v8265, 16
        %v8495 = vrot.slane %v8493, 5
        %v8496 = vor.u32 %v8492, %v8495
        %v8497 = vrot.slane %v8496, 4
        %v8499 = vshll.u32 %v8266, 16
        %v8501 = vrot.slane %v8499, 5
        %v8502 = vsel %vm2136, %v8497, %v8501
        %v8503 = vshrl.u32 %v8266, 16
        %v8505 = vrot.slane %v8503, 4
        %v8506 = vor.u32 %v8505, %v8501
        %v8507 = vrot.slane %v8506, 4
        %v8509 = vshll.u32 %v8289, 16
        %v8511 = vrot.slane %v8509, 5
        %v8512 = vsel %vm2136, %v8507, %v8511
        %v8514 = vshrl.u32 %v8267, 16
        %v8516 = vrot.slane %v8514, 4
        %v8517 = vshll.u32 %v8267, 16
        %v8519 = vrot.slane %v8517, 5
        %v8520 = vor.u32 %v8516, %v8519
        %v8521 = vrot.slane %v8520, 4
        %v8523 = vshll.u32 %v8268, 16
        %v8525 = vrot.slane %v8523, 5
        %v8526 = vsel %vm2136, %v8521, %v8525
        %v8527 = vshrl.u32 %v8268, 16
        %v8529 = vrot.slane %v8527, 4
        %v8530 = vor.u32 %v8529, %v8525
        %v8531 = vrot.slane %v8530, 4
        %v8533 = vshll.u32 %v8290, 16
        %v8535 = vrot.slane %v8533, 5
        %v8536 = vsel %vm2136, %v8531, %v8535
        %v8538 = vshrl.u32 %v8269, 16
        %v8540 = vrot.slane %v8538, 4
        %v8541 = vshll.u32 %v8269, 16
        %v8543 = vrot.slane %v8541, 5
        %v8544 = vor.u32 %v8540, %v8543
        %v8545 = vrot.slane %v8544, 4
        %v8547 = vshll.u32 %v8270, 16
        %v8549 = vrot.slane %v8547, 5
        %v8550 = vsel %vm2136, %v8545, %v8549
        %v8551 = vshrl.u32 %v8270, 16
        %v8553 = vrot.slane %v8551, 4
        %v8554 = vor.u32 %v8553, %v8549
        %v8555 = vrot.slane %v8554, 4
        %v8557 = vshll.u32 %v8291, 16
        %v8559 = vrot.slane %v8557, 5
        %v8560 = vsel %vm2136, %v8555, %v8559
        %v8562 = vshrl.u32 %v8271, 16
        %v8564 = vrot.slane %v8562, 4
        %v8565 = vshll.u32 %v8271, 16
        %v8567 = vrot.slane %v8565, 5
        %v8568 = vor.u32 %v8564, %v8567
        %v8569 = vrot.slane %v8568, 4
        %v8571 = vshll.u32 %v8272, 16
        %v8573 = vrot.slane %v8571, 5
        %v8574 = vsel %vm2136, %v8569, %v8573
        %v8575 = vshrl.u32 %v8272, 16
        %v8577 = vrot.slane %v8575, 4
        %v8578 = vor.u32 %v8577, %v8573
        %v8579 = vrot.slane %v8578, 4
        %v8581 = vshll.u32 %v8292, 16
        %v8583 = vrot.slane %v8581, 5
        %v8584 = vsel %vm2136, %v8579, %v8583
        %v8586 = vshrl.u32 %v8273, 16
        %v8588 = vrot.slane %v8586, 4
        %v8589 = vshll.u32 %v8273, 16
        %v8591 = vrot.slane %v8589, 5
        %v8592 = vor.u32 %v8588, %v8591
        %v8593 = vrot.slane %v8592, 4
        %v8595 = vshll.u32 %v8274, 16
        %v8597 = vrot.slane %v8595, 5
        %v8598 = vsel %vm2136, %v8593, %v8597
        %v8599 = vshrl.u32 %v8274, 16
        %v8601 = vrot.slane %v8599, 4
        %v8602 = vor.u32 %v8601, %v8597
        %v8603 = vrot.slane %v8602, 4
        %v8605 = vshll.u32 %v8293, 16
        %v8607 = vrot.slane %v8605, 5
        %v8608 = vsel %vm2136, %v8603, %v8607
        %v8610 = vshrl.u32 %v8275, 16
        %v8612 = vrot.slane %v8610, 4
        %v8613 = vshll.u32 %v8275, 16
        %v8615 = vrot.slane %v8613, 5
        %v8616 = vor.u32 %v8612, %v8615
        %v8617 = vrot.slane %v8616, 4
        %v8619 = vshll.u32 %v8276, 16
        %v8621 = vrot.slane %v8619, 5
        %v8622 = vsel %vm2136, %v8617, %v8621
        %v8623 = vshrl.u32 %v8276, 16
        %v8625 = vrot.slane %v8623, 4
        %v8626 = vor.u32 %v8625, %v8621
        %v8627 = vrot.slane %v8626, 4
        %v8629 = vshll.u32 %v8294, 16
        %v8631 = vrot.slane %v8629, 5
        %v8632 = vsel %vm2136, %v8627, %v8631
        %v8634 = vshrl.u32 %v8277, 16
        %v8636 = vrot.slane %v8634, 4
        %v8637 = vshll.u32 %v8277, 16
        %v8639 = vrot.slane %v8637, 5
        %v8640 = vor.u32 %v8636, %v8639
        %v8641 = vrot.slane %v8640, 4
        %v8643 = vshll.u32 %v8278, 16
        %v8645 = vrot.slane %v8643, 5
        %v8646 = vsel %vm2136, %v8641, %v8645
        %v8647 = vshrl.u32 %v8278, 16
        %v8649 = vrot.slane %v8647, 4
        %v8650 = vor.u32 %v8649, %v8645
        %v8651 = vrot.slane %v8650, 4
        %v8653 = vshll.u32 %v8295, 16
        %v8655 = vrot.slane %v8653, 5
        %v8656 = vsel %vm2136, %v8651, %v8655
        %v8658 = vshrl.u32 %v8279, 16
        %v8660 = vrot.slane %v8658, 4
        %v8661 = vshll.u32 %v8279, 16
        %v8663 = vrot.slane %v8661, 5
        %v8664 = vor.u32 %v8660, %v8663
        %v8665 = vrot.slane %v8664, 4
        %v8667 = vshll.u32 %v8280, 16
        %v8669 = vrot.slane %v8667, 5
        %v8670 = vsel %vm2136, %v8665, %v8669
        %v8671 = vshrl.u32 %v8280, 16
        %v8673 = vrot.slane %v8671, 4
        %v8674 = vor.u32 %v8673, %v8669
        %v8675 = vrot.slane %v8674, 4
        %v8677 = vshll.u32 %v8296, 16
        %v8679 = vrot.slane %v8677, 5
        %v8680 = vsel %vm2136, %v8675, %v8679
        %v8681 = vld [vmem:[%s3308] sm:$0xe]
        %v8682 = vld [vmem:[%s3308 + $0xc] sm:$0xe]
        %v8683 = vld [vmem:[%s3308 + $0x18] sm:$0xe]
        %v8684 = vld [vmem:[%s3308 + $0x24] sm:$0xe]
        %v8685 = vld [vmem:[%s3308 + $0x30] sm:$0xe]
        %v8686 = vld [vmem:[%s3308 + $0x3c] sm:$0xe]
        %v8687 = vld [vmem:[%s3308 + $0x48] sm:$0xe]
        %v8688 = vld [vmem:[%s3308 + $0x54] sm:$0xe]
        %v8689 = vld [vmem:[%s3308 + $0x60] sm:$0xe]
        %v8690 = vld [vmem:[%s3308 + $0x6c] sm:$0xe]
        %v8691 = vld [vmem:[%s3308 + $0x78] sm:$0xe]
        %v8692 = vld [vmem:[%s3308 + $0x84] sm:$0xe]
        %v8693 = vld [vmem:[%s3308 + $0x90] sm:$0xe]
        %v8694 = vld [vmem:[%s3308 + $0x9c] sm:$0xe]
        %v8695 = vld [vmem:[%s3308 + $0xa8] sm:$0xe]
        %v8696 = vld [vmem:[%s3308 + $0xb4] sm:$0xe]
        %v8745 = vrot.slane %v8681, 5
        %v8746 = vrot.slane %v8745, 4
        %v8747 = vrot.slane %v8250, 5
        %v8748 = vsel %vm2587, %v8746, %v8747
        %v8749 = vrot.slane %v8747, 4
        %v8750 = vrot.slane %v8281, 5
        %v8751 = vsel %vm2587, %v8749, %v8750
        %v8752 = vrot.slane %v8682, 5
        %v8753 = vrot.slane %v8752, 4
        %v8754 = vrot.slane %v8252, 5
        %v8755 = vsel %vm2587, %v8753, %v8754
        %v8756 = vrot.slane %v8754, 4
        %v8757 = vrot.slane %v8282, 5
        %v8758 = vsel %vm2587, %v8756, %v8757
        %v8759 = vrot.slane %v8683, 5
        %v8760 = vrot.slane %v8759, 4
        %v8761 = vrot.slane %v8254, 5
        %v8762 = vsel %vm2587, %v8760, %v8761
        %v8763 = vrot.slane %v8761, 4
        %v8764 = vrot.slane %v8283, 5
        %v8765 = vsel %vm2587, %v8763, %v8764
        %v8766 = vrot.slane %v8684, 5
        %v8767 = vrot.slane %v8766, 4
        %v8768 = vrot.slane %v8256, 5
        %v8769 = vsel %vm2587, %v8767, %v8768
        %v8770 = vrot.slane %v8768, 4
        %v8771 = vrot.slane %v8284, 5
        %v8772 = vsel %vm2587, %v8770, %v8771
        %v8773 = vrot.slane %v8685, 5
        %v8774 = vrot.slane %v8773, 4
        %v8775 = vrot.slane %v8258, 5
        %v8776 = vsel %vm2587, %v8774, %v8775
        %v8777 = vrot.slane %v8775, 4
        %v8778 = vrot.slane %v8285, 5
        %v8779 = vsel %vm2587, %v8777, %v8778
        %v8780 = vrot.slane %v8686, 5
        %v8781 = vrot.slane %v8780, 4
        %v8782 = vrot.slane %v8260, 5
        %v8783 = vsel %vm2587, %v8781, %v8782
        %v8784 = vrot.slane %v8782, 4
        %v8785 = vrot.slane %v8286, 5
        %v8786 = vsel %vm2587, %v8784, %v8785
        %v8787 = vrot.slane %v8687, 5
        %v8788 = vrot.slane %v8787, 4
        %v8789 = vrot.slane %v8262, 5
        %v8790 = vsel %vm2587, %v8788, %v8789
        %v8791 = vrot.slane %v8789, 4
        %v8792 = vrot.slane %v8287, 5
        %v8793 = vsel %vm2587, %v8791, %v8792
        %v8794 = vrot.slane %v8688, 5
        %v8795 = vrot.slane %v8794, 4
        %v8796 = vrot.slane %v8264, 5
        %v8797 = vsel %vm2587, %v8795, %v8796
        %v8798 = vrot.slane %v8796, 4
        %v8799 = vrot.slane %v8288, 5
        %v8800 = vsel %vm2587, %v8798, %v8799
        %v8801 = vrot.slane %v8689, 5
        %v8802 = vrot.slane %v8801, 4
        %v8803 = vrot.slane %v8266, 5
        %v8804 = vsel %vm2587, %v8802, %v8803
        %v8805 = vrot.slane %v8803, 4
        %v8806 = vrot.slane %v8289, 5
        %v8807 = vsel %vm2587, %v8805, %v8806
        %v8808 = vrot.slane %v8690, 5
        %v8809 = vrot.slane %v8808, 4
        %v8810 = vrot.slane %v8268, 5
        %v8811 = vsel %vm2587, %v8809, %v8810
        %v8812 = vrot.slane %v8810, 4
        %v8813 = vrot.slane %v8290, 5
        %v8814 = vsel %vm2587, %v8812, %v8813
        %v8815 = vrot.slane %v8691, 5
        %v8816 = vrot.slane %v8815, 4
        %v8817 = vrot.slane %v8270, 5
        %v8818 = vsel %vm2587, %v8816, %v8817
        %v8819 = vrot.slane %v8817, 4
        %v8820 = vrot.slane %v8291, 5
        %v8821 = vsel %vm2587, %v8819, %v8820
        %v8822 = vrot.slane %v8692, 5
        %v8823 = vrot.slane %v8822, 4
        %v8824 = vrot.slane %v8272, 5
        %v8825 = vsel %vm2587, %v8823, %v8824
        %v8826 = vrot.slane %v8824, 4
        %v8827 = vrot.slane %v8292, 5
        %v8828 = vsel %vm2587, %v8826, %v8827
        %v8829 = vrot.slane %v8693, 5
        %v8830 = vrot.slane %v8829, 4
        %v8831 = vrot.slane %v8274, 5
        %v8832 = vsel %vm2587, %v8830, %v8831
        %v8833 = vrot.slane %v8831, 4
        %v8834 = vrot.slane %v8293, 5
        %v8835 = vsel %vm2587, %v8833, %v8834
        %v8836 = vrot.slane %v8694, 5
        %v8837 = vrot.slane %v8836, 4
        %v8838 = vrot.slane %v8276, 5
        %v8839 = vsel %vm2587, %v8837, %v8838
        %v8840 = vrot.slane %v8838, 4
        %v8841 = vrot.slane %v8294, 5
        %v8842 = vsel %vm2587, %v8840, %v8841
        %v8843 = vrot.slane %v8695, 5
        %v8844 = vrot.slane %v8843, 4
        %v8845 = vrot.slane %v8278, 5
        %v8846 = vsel %vm2587, %v8844, %v8845
        %v8847 = vrot.slane %v8845, 4
        %v8848 = vrot.slane %v8295, 5
        %v8849 = vsel %vm2587, %v8847, %v8848
        %v8850 = vrot.slane %v8696, 5
        %v8851 = vrot.slane %v8850, 4
        %v8852 = vrot.slane %v8280, 5
        %v8853 = vsel %vm2587, %v8851, %v8852
        %v8854 = vrot.slane %v8852, 4
        %v8855 = vrot.slane %v8296, 5
        %v8856 = vsel %vm2587, %v8854, %v8855
        %v8873 = vunpack.c.l.b16 %v7033
        %v8874 = vunpack.c.l.b16 %v7034
        %v8875 = vunpack.c.l.b16 %v7035
        %v8876 = vunpack.c.l.b16 %v7036
        %v8877 = vunpack.c.l.b16 %v7037
        %v8878 = vunpack.c.l.b16 %v7038
        %v8879 = vunpack.c.l.b16 %v7039
        %v8880 = vunpack.c.l.b16 %v7040
        %v8881 = vunpack.c.l.b16 %v7041
        %v8882 = vunpack.c.l.b16 %v7042
        %v8883 = vunpack.c.l.b16 %v7043
        %v8884 = vunpack.c.l.b16 %v7044
        %v8885 = vunpack.c.l.b16 %v7045
        %v8886 = vunpack.c.l.b16 %v7046
        %v8887 = vunpack.c.l.b16 %v7047
        %v8888 = vunpack.c.l.b16 %v7048
        %v8889 = vunpack.c.l.b16 %v7049
        %v8890 = vunpack.c.l.b16 %v7050
        %v8891 = vunpack.c.l.b16 %v7051
        %v8892 = vunpack.c.l.b16 %v7052
        %v8893 = vunpack.c.l.b16 %v7053
        %v8894 = vunpack.c.l.b16 %v7054
        %v8895 = vunpack.c.l.b16 %v7055
        %v8896 = vunpack.c.l.b16 %v7056
        %v8897 = vunpack.c.l.b16 %v7057
        %v8898 = vunpack.c.l.b16 %v7058
        %v8899 = vunpack.c.l.b16 %v7059
        %v8900 = vunpack.c.l.b16 %v7060
        %v8901 = vunpack.c.l.b16 %v7061
        %v8902 = vunpack.c.l.b16 %v7062
        %v8903 = vunpack.c.l.b16 %v7063
        %v8904 = vunpack.c.l.b16 %v7064
        %v8905 = vpack.c.b16 %v8874, %v8873
        %v8906 = vpack.c.b16 %v8876, %v8875
        %v8907 = vpack.c.b16 %v8878, %v8877
        %v8908 = vpack.c.b16 %v8880, %v8879
        %v8909 = vpack.c.b16 %v8882, %v8881
        %v8910 = vpack.c.b16 %v8884, %v8883
        %v8911 = vpack.c.b16 %v8886, %v8885
        %v8912 = vpack.c.b16 %v8888, %v8887
        %v8913 = vpack.c.b16 %v8890, %v8889
        %v8914 = vpack.c.b16 %v8892, %v8891
        %v8915 = vpack.c.b16 %v8894, %v8893
        %v8916 = vpack.c.b16 %v8896, %v8895
        %v8917 = vpack.c.b16 %v8898, %v8897
        %v8918 = vpack.c.b16 %v8900, %v8899
        %v8919 = vpack.c.b16 %v8902, %v8901
        %v8920 = vpack.c.b16 %v8904, %v8903
        %v8937 = vunpack.c.l.b16 %v7094
        %v8938 = vunpack.c.l.b16 %v7104
        %v8939 = vunpack.c.l.b16 %v7118
        %v8940 = vunpack.c.l.b16 %v7128
        %v8941 = vunpack.c.l.b16 %v7142
        %v8942 = vunpack.c.l.b16 %v7152
        %v8943 = vunpack.c.l.b16 %v7166
        %v8944 = vunpack.c.l.b16 %v7176
        %v8945 = vunpack.c.l.b16 %v7190
        %v8946 = vunpack.c.l.b16 %v7200
        %v8947 = vunpack.c.l.b16 %v7214
        %v8948 = vunpack.c.l.b16 %v7224
        %v8949 = vunpack.c.l.b16 %v7238
        %v8950 = vunpack.c.l.b16 %v7248
        %v8951 = vunpack.c.l.b16 %v7262
        %v8952 = vunpack.c.l.b16 %v7272
        %v8953 = vunpack.c.l.b16 %v7286
        %v8954 = vunpack.c.l.b16 %v7296
        %v8955 = vunpack.c.l.b16 %v7310
        %v8956 = vunpack.c.l.b16 %v7320
        %v8957 = vunpack.c.l.b16 %v7334
        %v8958 = vunpack.c.l.b16 %v7344
        %v8959 = vunpack.c.l.b16 %v7358
        %v8960 = vunpack.c.l.b16 %v7368
        %v8961 = vunpack.c.l.b16 %v7382
        %v8962 = vunpack.c.l.b16 %v7392
        %v8963 = vunpack.c.l.b16 %v7406
        %v8964 = vunpack.c.l.b16 %v7416
        %v8965 = vunpack.c.l.b16 %v7430
        %v8966 = vunpack.c.l.b16 %v7440
        %v8967 = vunpack.c.l.b16 %v7454
        %v8968 = vunpack.c.l.b16 %v7464
        %v8969 = vpack.c.b16 %v8938, %v8937
        %v8970 = vpack.c.b16 %v8940, %v8939
        %v8971 = vpack.c.b16 %v8942, %v8941
        %v8972 = vpack.c.b16 %v8944, %v8943
        %v8973 = vpack.c.b16 %v8946, %v8945
        %v8974 = vpack.c.b16 %v8948, %v8947
        %v8975 = vpack.c.b16 %v8950, %v8949
        %v8976 = vpack.c.b16 %v8952, %v8951
        %v8977 = vpack.c.b16 %v8954, %v8953
        %v8978 = vpack.c.b16 %v8956, %v8955
        %v8979 = vpack.c.b16 %v8958, %v8957
        %v8980 = vpack.c.b16 %v8960, %v8959
        %v8981 = vpack.c.b16 %v8962, %v8961
        %v8982 = vpack.c.b16 %v8964, %v8963
        %v8983 = vpack.c.b16 %v8966, %v8965
        %v8984 = vpack.c.b16 %v8968, %v8967
        %v9001 = vunpack.c.l.b16 %v7532
        %v9002 = vunpack.c.l.b16 %v7535
        %v9003 = vunpack.c.l.b16 %v7539
        %v9004 = vunpack.c.l.b16 %v7542
        %v9005 = vunpack.c.l.b16 %v7546
        %v9006 = vunpack.c.l.b16 %v7549
        %v9007 = vunpack.c.l.b16 %v7553
        %v9008 = vunpack.c.l.b16 %v7556
        %v9009 = vunpack.c.l.b16 %v7560
        %v9010 = vunpack.c.l.b16 %v7563
        %v9011 = vunpack.c.l.b16 %v7567
        %v9012 = vunpack.c.l.b16 %v7570
        %v9013 = vunpack.c.l.b16 %v7574
        %v9014 = vunpack.c.l.b16 %v7577
        %v9015 = vunpack.c.l.b16 %v7581
        %v9016 = vunpack.c.l.b16 %v7584
        %v9017 = vunpack.c.l.b16 %v7588
        %v9018 = vunpack.c.l.b16 %v7591
        %v9019 = vunpack.c.l.b16 %v7595
        %v9020 = vunpack.c.l.b16 %v7598
        %v9021 = vunpack.c.l.b16 %v7602
        %v9022 = vunpack.c.l.b16 %v7605
        %v9023 = vunpack.c.l.b16 %v7609
        %v9024 = vunpack.c.l.b16 %v7612
        %v9025 = vunpack.c.l.b16 %v7616
        %v9026 = vunpack.c.l.b16 %v7619
        %v9027 = vunpack.c.l.b16 %v7623
        %v9028 = vunpack.c.l.b16 %v7626
        %v9029 = vunpack.c.l.b16 %v7630
        %v9030 = vunpack.c.l.b16 %v7633
        %v9031 = vunpack.c.l.b16 %v7637
        %v9032 = vunpack.c.l.b16 %v7640
        %v9033 = vpack.c.b16 %v9002, %v9001
        %v9034 = vpack.c.b16 %v9004, %v9003
        %v9035 = vpack.c.b16 %v9006, %v9005
        %v9036 = vpack.c.b16 %v9008, %v9007
        %v9037 = vpack.c.b16 %v9010, %v9009
        %v9038 = vpack.c.b16 %v9012, %v9011
        %v9039 = vpack.c.b16 %v9014, %v9013
        %v9040 = vpack.c.b16 %v9016, %v9015
        %v9041 = vpack.c.b16 %v9018, %v9017
        %v9042 = vpack.c.b16 %v9020, %v9019
        %v9043 = vpack.c.b16 %v9022, %v9021
        %v9044 = vpack.c.b16 %v9024, %v9023
        %v9045 = vpack.c.b16 %v9026, %v9025
        %v9046 = vpack.c.b16 %v9028, %v9027
        %v9047 = vpack.c.b16 %v9030, %v9029
        %v9048 = vpack.c.b16 %v9032, %v9031
        %v9081 = vunpack.c.l.b16 %v7641
        %v9082 = vunpack.c.l.b16 %v7642
        %v9083 = vunpack.c.l.b16 %v7643
        %v9084 = vunpack.c.l.b16 %v7644
        %v9085 = vunpack.c.l.b16 %v7645
        %v9086 = vunpack.c.l.b16 %v7646
        %v9087 = vunpack.c.l.b16 %v7647
        %v9088 = vunpack.c.l.b16 %v7648
        %v9089 = vunpack.c.l.b16 %v7649
        %v9090 = vunpack.c.l.b16 %v7650
        %v9091 = vunpack.c.l.b16 %v7651
        %v9092 = vunpack.c.l.b16 %v7652
        %v9093 = vunpack.c.l.b16 %v7653
        %v9094 = vunpack.c.l.b16 %v7654
        %v9095 = vunpack.c.l.b16 %v7655
        %v9096 = vunpack.c.l.b16 %v7656
        %v9097 = vunpack.c.l.b16 %v7657
        %v9098 = vunpack.c.l.b16 %v7658
        %v9099 = vunpack.c.l.b16 %v7659
        %v9100 = vunpack.c.l.b16 %v7660
        %v9101 = vunpack.c.l.b16 %v7661
        %v9102 = vunpack.c.l.b16 %v7662
        %v9103 = vunpack.c.l.b16 %v7663
        %v9104 = vunpack.c.l.b16 %v7664
        %v9105 = vunpack.c.l.b16 %v7665
        %v9106 = vunpack.c.l.b16 %v7666
        %v9107 = vunpack.c.l.b16 %v7667
        %v9108 = vunpack.c.l.b16 %v7668
        %v9109 = vunpack.c.l.b16 %v7669
        %v9110 = vunpack.c.l.b16 %v7670
        %v9111 = vunpack.c.l.b16 %v7671
        %v9112 = vunpack.c.l.b16 %v7672
        %v9113 = vpack.c.b16 %v9082, %v9081
        %v9114 = vpack.c.b16 %v9084, %v9083
        %v9115 = vpack.c.b16 %v9086, %v9085
        %v9116 = vpack.c.b16 %v9088, %v9087
        %v9117 = vpack.c.b16 %v9090, %v9089
        %v9118 = vpack.c.b16 %v9092, %v9091
        %v9119 = vpack.c.b16 %v9094, %v9093
        %v9120 = vpack.c.b16 %v9096, %v9095
        %v9121 = vpack.c.b16 %v9098, %v9097
        %v9122 = vpack.c.b16 %v9100, %v9099
        %v9123 = vpack.c.b16 %v9102, %v9101
        %v9124 = vpack.c.b16 %v9104, %v9103
        %v9125 = vpack.c.b16 %v9106, %v9105
        %v9126 = vpack.c.b16 %v9108, %v9107
        %v9127 = vpack.c.b16 %v9110, %v9109
        %v9128 = vpack.c.b16 %v9112, %v9111
        %v9145 = vunpack.c.l.b16 %v7702
        %v9146 = vunpack.c.l.b16 %v7712
        %v9147 = vunpack.c.l.b16 %v7726
        %v9148 = vunpack.c.l.b16 %v7736
        %v9149 = vunpack.c.l.b16 %v7750
        %v9150 = vunpack.c.l.b16 %v7760
        %v9151 = vunpack.c.l.b16 %v7774
        %v9152 = vunpack.c.l.b16 %v7784
        %v9153 = vunpack.c.l.b16 %v7798
        %v9154 = vunpack.c.l.b16 %v7808
        %v9155 = vunpack.c.l.b16 %v7822
        %v9156 = vunpack.c.l.b16 %v7832
        %v9157 = vunpack.c.l.b16 %v7846
        %v9158 = vunpack.c.l.b16 %v7856
        %v9159 = vunpack.c.l.b16 %v7870
        %v9160 = vunpack.c.l.b16 %v7880
        %v9161 = vunpack.c.l.b16 %v7894
        %v9162 = vunpack.c.l.b16 %v7904
        %v9163 = vunpack.c.l.b16 %v7918
        %v9164 = vunpack.c.l.b16 %v7928
        %v9165 = vunpack.c.l.b16 %v7942
        %v9166 = vunpack.c.l.b16 %v7952
        %v9167 = vunpack.c.l.b16 %v7966
        %v9168 = vunpack.c.l.b16 %v7976
        %v9169 = vunpack.c.l.b16 %v7990
        %v9170 = vunpack.c.l.b16 %v8000
        %v9171 = vunpack.c.l.b16 %v8014
        %v9172 = vunpack.c.l.b16 %v8024
        %v9173 = vunpack.c.l.b16 %v8038
        %v9174 = vunpack.c.l.b16 %v8048
        %v9175 = vunpack.c.l.b16 %v8062
        %v9176 = vunpack.c.l.b16 %v8072
        %v9177 = vpack.c.b16 %v9146, %v9145
        %v9178 = vpack.c.b16 %v9148, %v9147
        %v9179 = vpack.c.b16 %v9150, %v9149
        %v9180 = vpack.c.b16 %v9152, %v9151
        %v9181 = vpack.c.b16 %v9154, %v9153
        %v9182 = vpack.c.b16 %v9156, %v9155
        %v9183 = vpack.c.b16 %v9158, %v9157
        %v9184 = vpack.c.b16 %v9160, %v9159
        %v9185 = vpack.c.b16 %v9162, %v9161
        %v9186 = vpack.c.b16 %v9164, %v9163
        %v9187 = vpack.c.b16 %v9166, %v9165
        %v9188 = vpack.c.b16 %v9168, %v9167
        %v9189 = vpack.c.b16 %v9170, %v9169
        %v9190 = vpack.c.b16 %v9172, %v9171
        %v9191 = vpack.c.b16 %v9174, %v9173
        %v9192 = vpack.c.b16 %v9176, %v9175
        %v9209 = vunpack.c.l.b16 %v8140
        %v9210 = vunpack.c.l.b16 %v8143
        %v9211 = vunpack.c.l.b16 %v8147
        %v9212 = vunpack.c.l.b16 %v8150
        %v9213 = vunpack.c.l.b16 %v8154
        %v9214 = vunpack.c.l.b16 %v8157
        %v9215 = vunpack.c.l.b16 %v8161
        %v9216 = vunpack.c.l.b16 %v8164
        %v9217 = vunpack.c.l.b16 %v8168
        %v9218 = vunpack.c.l.b16 %v8171
        %v9219 = vunpack.c.l.b16 %v8175
        %v9220 = vunpack.c.l.b16 %v8178
        %v9221 = vunpack.c.l.b16 %v8182
        %v9222 = vunpack.c.l.b16 %v8185
        %v9223 = vunpack.c.l.b16 %v8189
        %v9224 = vunpack.c.l.b16 %v8192
        %v9225 = vunpack.c.l.b16 %v8196
        %v9226 = vunpack.c.l.b16 %v8199
        %v9227 = vunpack.c.l.b16 %v8203
        %v9228 = vunpack.c.l.b16 %v8206
        %v9229 = vunpack.c.l.b16 %v8210
        %v9230 = vunpack.c.l.b16 %v8213
        %v9231 = vunpack.c.l.b16 %v8217
        %v9232 = vunpack.c.l.b16 %v8220
        %v9233 = vunpack.c.l.b16 %v8224
        %v9234 = vunpack.c.l.b16 %v8227
        %v9235 = vunpack.c.l.b16 %v8231
        %v9236 = vunpack.c.l.b16 %v8234
        %v9237 = vunpack.c.l.b16 %v8238
        %v9238 = vunpack.c.l.b16 %v8241
        %v9239 = vunpack.c.l.b16 %v8245
        %v9240 = vunpack.c.l.b16 %v8248
        %v9241 = vpack.c.b16 %v9210, %v9209
        %v9242 = vpack.c.b16 %v9212, %v9211
        %v9243 = vpack.c.b16 %v9214, %v9213
        %v9244 = vpack.c.b16 %v9216, %v9215
        %v9245 = vpack.c.b16 %v9218, %v9217
        %v9246 = vpack.c.b16 %v9220, %v9219
        %v9247 = vpack.c.b16 %v9222, %v9221
        %v9248 = vpack.c.b16 %v9224, %v9223
        %v9249 = vpack.c.b16 %v9226, %v9225
        %v9250 = vpack.c.b16 %v9228, %v9227
        %v9251 = vpack.c.b16 %v9230, %v9229
        %v9252 = vpack.c.b16 %v9232, %v9231
        %v9253 = vpack.c.b16 %v9234, %v9233
        %v9254 = vpack.c.b16 %v9236, %v9235
        %v9255 = vpack.c.b16 %v9238, %v9237
        %v9256 = vpack.c.b16 %v9240, %v9239
        %v9289 = vunpack.c.l.b16 %v8249
        %v9290 = vunpack.c.l.b16 %v8250
        %v9291 = vunpack.c.l.b16 %v8251
        %v9292 = vunpack.c.l.b16 %v8252
        %v9293 = vunpack.c.l.b16 %v8253
        %v9294 = vunpack.c.l.b16 %v8254
        %v9295 = vunpack.c.l.b16 %v8255
        %v9296 = vunpack.c.l.b16 %v8256
        %v9297 = vunpack.c.l.b16 %v8257
        %v9298 = vunpack.c.l.b16 %v8258
        %v9299 = vunpack.c.l.b16 %v8259
        %v9300 = vunpack.c.l.b16 %v8260
        %v9301 = vunpack.c.l.b16 %v8261
        %v9302 = vunpack.c.l.b16 %v8262
        %v9303 = vunpack.c.l.b16 %v8263
        %v9304 = vunpack.c.l.b16 %v8264
        %v9305 = vunpack.c.l.b16 %v8265
        %v9306 = vunpack.c.l.b16 %v8266
        %v9307 = vunpack.c.l.b16 %v8267
        %v9308 = vunpack.c.l.b16 %v8268
        %v9309 = vunpack.c.l.b16 %v8269
        %v9310 = vunpack.c.l.b16 %v8270
        %v9311 = vunpack.c.l.b16 %v8271
        %v9312 = vunpack.c.l.b16 %v8272
        %v9313 = vunpack.c.l.b16 %v8273
        %v9314 = vunpack.c.l.b16 %v8274
        %v9315 = vunpack.c.l.b16 %v8275
        %v9316 = vunpack.c.l.b16 %v8276
        %v9317 = vunpack.c.l.b16 %v8277
        %v9318 = vunpack.c.l.b16 %v8278
        %v9319 = vunpack.c.l.b16 %v8279
        %v9320 = vunpack.c.l.b16 %v8280
        %v9321 = vpack.c.b16 %v9290, %v9289
        %v9322 = vpack.c.b16 %v9292, %v9291
        %v9323 = vpack.c.b16 %v9294, %v9293
        %v9324 = vpack.c.b16 %v9296, %v9295
        %v9325 = vpack.c.b16 %v9298, %v9297
        %v9326 = vpack.c.b16 %v9300, %v9299
        %v9327 = vpack.c.b16 %v9302, %v9301
        %v9328 = vpack.c.b16 %v9304, %v9303
        %v9329 = vpack.c.b16 %v9306, %v9305
        %v9330 = vpack.c.b16 %v9308, %v9307
        %v9331 = vpack.c.b16 %v9310, %v9309
        %v9332 = vpack.c.b16 %v9312, %v9311
        %v9333 = vpack.c.b16 %v9314, %v9313
        %v9334 = vpack.c.b16 %v9316, %v9315
        %v9335 = vpack.c.b16 %v9318, %v9317
        %v9336 = vpack.c.b16 %v9320, %v9319
        %v9353 = vunpack.c.l.b16 %v8310
        %v9354 = vunpack.c.l.b16 %v8320
        %v9355 = vunpack.c.l.b16 %v8334
        %v9356 = vunpack.c.l.b16 %v8344
        %v9357 = vunpack.c.l.b16 %v8358
        %v9358 = vunpack.c.l.b16 %v8368
        %v9359 = vunpack.c.l.b16 %v8382
        %v9360 = vunpack.c.l.b16 %v8392
        %v9361 = vunpack.c.l.b16 %v8406
        %v9362 = vunpack.c.l.b16 %v8416
        %v9363 = vunpack.c.l.b16 %v8430
        %v9364 = vunpack.c.l.b16 %v8440
        %v9365 = vunpack.c.l.b16 %v8454
        %v9366 = vunpack.c.l.b16 %v8464
        %v9367 = vunpack.c.l.b16 %v8478
        %v9368 = vunpack.c.l.b16 %v8488
        %v9369 = vunpack.c.l.b16 %v8502
        %v9370 = vunpack.c.l.b16 %v8512
        %v9371 = vunpack.c.l.b16 %v8526
        %v9372 = vunpack.c.l.b16 %v8536
        %v9373 = vunpack.c.l.b16 %v8550
        %v9374 = vunpack.c.l.b16 %v8560
        %v9375 = vunpack.c.l.b16 %v8574
        %v9376 = vunpack.c.l.b16 %v8584
        %v9377 = vunpack.c.l.b16 %v8598
        %v9378 = vunpack.c.l.b16 %v8608
        %v9379 = vunpack.c.l.b16 %v8622
        %v9380 = vunpack.c.l.b16 %v8632
        %v9381 = vunpack.c.l.b16 %v8646
        %v9382 = vunpack.c.l.b16 %v8656
        %v9383 = vunpack.c.l.b16 %v8670
        %v9384 = vunpack.c.l.b16 %v8680
        %v9385 = vpack.c.b16 %v9354, %v9353
        %v9386 = vpack.c.b16 %v9356, %v9355
        %v9387 = vpack.c.b16 %v9358, %v9357
        %v9388 = vpack.c.b16 %v9360, %v9359
        %v9389 = vpack.c.b16 %v9362, %v9361
        %v9390 = vpack.c.b16 %v9364, %v9363
        %v9391 = vpack.c.b16 %v9366, %v9365
        %v9392 = vpack.c.b16 %v9368, %v9367
        %v9393 = vpack.c.b16 %v9370, %v9369
        %v9394 = vpack.c.b16 %v9372, %v9371
        %v9395 = vpack.c.b16 %v9374, %v9373
        %v9396 = vpack.c.b16 %v9376, %v9375
        %v9397 = vpack.c.b16 %v9378, %v9377
        %v9398 = vpack.c.b16 %v9380, %v9379
        %v9399 = vpack.c.b16 %v9382, %v9381
        %v9400 = vpack.c.b16 %v9384, %v9383
        %v9417 = vunpack.c.l.b16 %v8748
        %v9418 = vunpack.c.l.b16 %v8751
        %v9419 = vunpack.c.l.b16 %v8755
        %v9420 = vunpack.c.l.b16 %v8758
        %v9421 = vunpack.c.l.b16 %v8762
        %v9422 = vunpack.c.l.b16 %v8765
        %v9423 = vunpack.c.l.b16 %v8769
        %v9424 = vunpack.c.l.b16 %v8772
        %v9425 = vunpack.c.l.b16 %v8776
        %v9426 = vunpack.c.l.b16 %v8779
        %v9427 = vunpack.c.l.b16 %v8783
        %v9428 = vunpack.c.l.b16 %v8786
        %v9429 = vunpack.c.l.b16 %v8790
        %v9430 = vunpack.c.l.b16 %v8793
        %v9431 = vunpack.c.l.b16 %v8797
        %v9432 = vunpack.c.l.b16 %v8800
        %v9433 = vunpack.c.l.b16 %v8804
        %v9434 = vunpack.c.l.b16 %v8807
        %v9435 = vunpack.c.l.b16 %v8811
        %v9436 = vunpack.c.l.b16 %v8814
        %v9437 = vunpack.c.l.b16 %v8818
        %v9438 = vunpack.c.l.b16 %v8821
        %v9439 = vunpack.c.l.b16 %v8825
        %v9440 = vunpack.c.l.b16 %v8828
        %v9441 = vunpack.c.l.b16 %v8832
        %v9442 = vunpack.c.l.b16 %v8835
        %v9443 = vunpack.c.l.b16 %v8839
        %v9444 = vunpack.c.l.b16 %v8842
        %v9445 = vunpack.c.l.b16 %v8846
        %v9446 = vunpack.c.l.b16 %v8849
        %v9447 = vunpack.c.l.b16 %v8853
        %v9448 = vunpack.c.l.b16 %v8856
        %v9449 = vpack.c.b16 %v9418, %v9417
        %v9450 = vpack.c.b16 %v9420, %v9419
        %v9451 = vpack.c.b16 %v9422, %v9421
        %v9452 = vpack.c.b16 %v9424, %v9423
        %v9453 = vpack.c.b16 %v9426, %v9425
        %v9454 = vpack.c.b16 %v9428, %v9427
        %v9455 = vpack.c.b16 %v9430, %v9429
        %v9456 = vpack.c.b16 %v9432, %v9431
        %v9457 = vpack.c.b16 %v9434, %v9433
        %v9458 = vpack.c.b16 %v9436, %v9435
        %v9459 = vpack.c.b16 %v9438, %v9437
        %v9460 = vpack.c.b16 %v9440, %v9439
        %v9461 = vpack.c.b16 %v9442, %v9441
        %v9462 = vpack.c.b16 %v9444, %v9443
        %v9463 = vpack.c.b16 %v9446, %v9445
        %v9464 = vpack.c.b16 %v9448, %v9447
        %v9482 = vlaneseq
        %v9483 = vshrl.u32 %v9482, 7
        %v9484 = vsub.s32 0, %v9483
        %v9485 = vrot.slane %v7032, %v9484
        %v9631 = vunpack.c.l.b16 %v6888
        %v9632 = vunpack.c.l.b16 %v6889
        %v9633 = vunpack.c.l.b16 %v6890
        %v9634 = vunpack.c.l.b16 %v6891
        %v9635 = vunpack.c.l.b16 %v6892
        %v9636 = vunpack.c.l.b16 %v6893
        %v9637 = vunpack.c.l.b16 %v6894
        %v9638 = vunpack.c.l.b16 %v6895
        %v9639 = vunpack.c.l.b16 %v6896
        %v9640 = vunpack.c.l.b16 %v6897
        %v9641 = vunpack.c.l.b16 %v6898
        %v9642 = vunpack.c.l.b16 %v6899
        %v9643 = vunpack.c.l.b16 %v6900
        %v9644 = vunpack.c.l.b16 %v6901
        %v9645 = vunpack.c.l.b16 %v6902
        %v9646 = vunpack.c.l.b16 %v6903
        %v9647 = vunpack.c.l.b16 %v6904
        %v9648 = vunpack.c.l.b16 %v6905
        %v9649 = vunpack.c.l.b16 %v6906
        %v9650 = vunpack.c.l.b16 %v6907
        %v9651 = vunpack.c.l.b16 %v6908
        %v9652 = vunpack.c.l.b16 %v6909
        %v9653 = vunpack.c.l.b16 %v6910
        %v9654 = vunpack.c.l.b16 %v6911
        %v9655 = vunpack.c.l.b16 %v6912
        %v9656 = vunpack.c.l.b16 %v6913
        %v9657 = vunpack.c.l.b16 %v6914
        %v9658 = vunpack.c.l.b16 %v6915
        %v9659 = vunpack.c.l.b16 %v6916
        %v9660 = vunpack.c.l.b16 %v6917
        %v9661 = vunpack.c.l.b16 %v6918
        %v9662 = vunpack.c.l.b16 %v6919
        %v9663 = vunpack.c.l.b16 %v6920
        %v9664 = vunpack.c.l.b16 %v6921
        %v9665 = vunpack.c.l.b16 %v6922
        %v9666 = vunpack.c.l.b16 %v6923
        %v9667 = vunpack.c.l.b16 %v6924
        %v9668 = vunpack.c.l.b16 %v6925
        %v9669 = vunpack.c.l.b16 %v6926
        %v9670 = vunpack.c.l.b16 %v6927
        %v9671 = vunpack.c.l.b16 %v6928
        %v9672 = vunpack.c.l.b16 %v6929
        %v9673 = vunpack.c.l.b16 %v6930
        %v9674 = vunpack.c.l.b16 %v6931
        %v9675 = vunpack.c.l.b16 %v6932
        %v9676 = vunpack.c.l.b16 %v6933
        %v9677 = vunpack.c.l.b16 %v6934
        %v9678 = vunpack.c.l.b16 %v6935
        %v9679 = vunpack.c.l.b16 %v6936
        %v9680 = vunpack.c.l.b16 %v6937
        %v9681 = vunpack.c.l.b16 %v6938
        %v9682 = vunpack.c.l.b16 %v6939
        %v9683 = vunpack.c.l.b16 %v6940
        %v9684 = vunpack.c.l.b16 %v6941
        %v9685 = vunpack.c.l.b16 %v6942
        %v9686 = vunpack.c.l.b16 %v6943
        %v9687 = vunpack.c.l.b16 %v6944
        %v9688 = vunpack.c.l.b16 %v6945
        %v9689 = vunpack.c.l.b16 %v6946
        %v9690 = vunpack.c.l.b16 %v6947
        %v9691 = vunpack.c.l.b16 %v6948
        %v9692 = vunpack.c.l.b16 %v6949
        %v9693 = vunpack.c.l.b16 %v6950
        %v9694 = vunpack.c.l.b16 %v6951
        %v9695 = vunpack.c.l.b16 %v6952
        %v9696 = vunpack.c.l.b16 %v6953
        %v9697 = vunpack.c.l.b16 %v6954
        %v9698 = vunpack.c.l.b16 %v6955
        %v9699 = vunpack.c.l.b16 %v6956
        %v9700 = vunpack.c.l.b16 %v6957
        %v9701 = vunpack.c.l.b16 %v6958
        %v9702 = vunpack.c.l.b16 %v6959
        %v9703 = vunpack.c.l.b16 %v6960
        %v9704 = vunpack.c.l.b16 %v6961
        %v9705 = vunpack.c.l.b16 %v6962
        %v9706 = vunpack.c.l.b16 %v6963
        %v9707 = vunpack.c.l.b16 %v6964
        %v9708 = vunpack.c.l.b16 %v6965
        %v9709 = vunpack.c.l.b16 %v6966
        %v9710 = vunpack.c.l.b16 %v6967
        %v9711 = vunpack.c.l.b16 %v6968
        %v9712 = vunpack.c.l.b16 %v6969
        %v9713 = vunpack.c.l.b16 %v6970
        %v9714 = vunpack.c.l.b16 %v6971
        %v9715 = vunpack.c.l.b16 %v6972
        %v9716 = vunpack.c.l.b16 %v6973
        %v9717 = vunpack.c.l.b16 %v6974
        %v9718 = vunpack.c.l.b16 %v6975
        %v9719 = vunpack.c.l.b16 %v6976
        %v9720 = vunpack.c.l.b16 %v6977
        %v9721 = vunpack.c.l.b16 %v6978
        %v9722 = vunpack.c.l.b16 %v6979
        %v9723 = vunpack.c.l.b16 %v6980
        %v9724 = vunpack.c.l.b16 %v6981
        %v9725 = vunpack.c.l.b16 %v6982
        %v9726 = vunpack.c.l.b16 %v6983
        %v9727 = vunpack.c.l.b16 %v6984
        %v9728 = vunpack.c.l.b16 %v6985
        %v9729 = vunpack.c.l.b16 %v6986
        %v9730 = vunpack.c.l.b16 %v6987
        %v9731 = vunpack.c.l.b16 %v6988
        %v9732 = vunpack.c.l.b16 %v6989
        %v9733 = vunpack.c.l.b16 %v6990
        %v9734 = vunpack.c.l.b16 %v6991
        %v9735 = vunpack.c.l.b16 %v6992
        %v9736 = vunpack.c.l.b16 %v6993
        %v9737 = vunpack.c.l.b16 %v6994
        %v9738 = vunpack.c.l.b16 %v6995
        %v9739 = vunpack.c.l.b16 %v6996
        %v9740 = vunpack.c.l.b16 %v6997
        %v9741 = vunpack.c.l.b16 %v6998
        %v9742 = vunpack.c.l.b16 %v6999
        %v9743 = vunpack.c.l.b16 %v7000
        %v9744 = vunpack.c.l.b16 %v7001
        %v9745 = vunpack.c.l.b16 %v7002
        %v9746 = vunpack.c.l.b16 %v7003
        %v9747 = vunpack.c.l.b16 %v7004
        %v9748 = vunpack.c.l.b16 %v7005
        %v9749 = vunpack.c.l.b16 %v7006
        %v9750 = vunpack.c.l.b16 %v7007
        %v9751 = vunpack.c.l.b16 %v7008
        %v9752 = vunpack.c.l.b16 %v7009
        %v9753 = vunpack.c.l.b16 %v7010
        %v9754 = vunpack.c.l.b16 %v7011
        %v9755 = vunpack.c.l.b16 %v7012
        %v9756 = vunpack.c.l.b16 %v7013
        %v9757 = vunpack.c.l.b16 %v7014
        %v9758 = vunpack.c.l.b16 %v7015
        %v9759 = vunpack.c.l.b16 %v7016
        %v9760 = vunpack.c.l.b16 %v7017
        %v9761 = vunpack.c.l.b16 %v7018
        %v9762 = vunpack.c.l.b16 %v7019
        %v9763 = vunpack.c.l.b16 %v7020
        %v9764 = vunpack.c.l.b16 %v7021
        %v9765 = vunpack.c.l.b16 %v7022
        %v9766 = vunpack.c.l.b16 %v7023
        %v9767 = vunpack.c.l.b16 %v7024
        %v9768 = vunpack.c.l.b16 %v7025
        %v9769 = vunpack.c.l.b16 %v7026
        %v9770 = vunpack.c.l.b16 %v7027
        %v9771 = vunpack.c.l.b16 %v7028
        %v9772 = vunpack.c.l.b16 %v7029
        %v9773 = vunpack.c.l.b16 %v7030
        %v9774 = vunpack.c.l.b16 %v7031
        %v9775 = vpack.c.b16 %v9632, %v9631
        %v9776 = vpack.c.b16 %v9634, %v9633
        %v9777 = vpack.c.b16 %v9636, %v9635
        %v9778 = vpack.c.b16 %v9638, %v9637
        %v9779 = vpack.c.b16 %v9640, %v9639
        %v9780 = vpack.c.b16 %v9642, %v9641
        %v9781 = vpack.c.b16 %v9644, %v9643
        %v9782 = vpack.c.b16 %v9646, %v9645
        %v9783 = vpack.c.b16 %v9648, %v9647
        %v9784 = vpack.c.b16 %v9650, %v9649
        %v9785 = vpack.c.b16 %v9652, %v9651
        %v9786 = vpack.c.b16 %v9654, %v9653
        %v9787 = vpack.c.b16 %v9656, %v9655
        %v9788 = vpack.c.b16 %v9658, %v9657
        %v9789 = vpack.c.b16 %v9660, %v9659
        %v9790 = vpack.c.b16 %v9662, %v9661
        %v9791 = vpack.c.b16 %v9664, %v9663
        %v9792 = vpack.c.b16 %v9666, %v9665
        %v9793 = vpack.c.b16 %v9668, %v9667
        %v9794 = vpack.c.b16 %v9670, %v9669
        %v9795 = vpack.c.b16 %v9672, %v9671
        %v9796 = vpack.c.b16 %v9674, %v9673
        %v9797 = vpack.c.b16 %v9676, %v9675
        %v9798 = vpack.c.b16 %v9678, %v9677
        %v9799 = vpack.c.b16 %v9680, %v9679
        %v9800 = vpack.c.b16 %v9682, %v9681
        %v9801 = vpack.c.b16 %v9684, %v9683
        %v9802 = vpack.c.b16 %v9686, %v9685
        %v9803 = vpack.c.b16 %v9688, %v9687
        %v9804 = vpack.c.b16 %v9690, %v9689
        %v9805 = vpack.c.b16 %v9692, %v9691
        %v9806 = vpack.c.b16 %v9694, %v9693
        %v9807 = vpack.c.b16 %v9696, %v9695
        %v9808 = vpack.c.b16 %v9698, %v9697
        %v9809 = vpack.c.b16 %v9700, %v9699
        %v9810 = vpack.c.b16 %v9702, %v9701
        %v9811 = vpack.c.b16 %v9704, %v9703
        %v9812 = vpack.c.b16 %v9706, %v9705
        %v9813 = vpack.c.b16 %v9708, %v9707
        %v9814 = vpack.c.b16 %v9710, %v9709
        %v9815 = vpack.c.b16 %v9712, %v9711
        %v9816 = vpack.c.b16 %v9714, %v9713
        %v9817 = vpack.c.b16 %v9716, %v9715
        %v9818 = vpack.c.b16 %v9718, %v9717
        %v9819 = vpack.c.b16 %v9720, %v9719
        %v9820 = vpack.c.b16 %v9722, %v9721
        %v9821 = vpack.c.b16 %v9724, %v9723
        %v9822 = vpack.c.b16 %v9726, %v9725
        %v9823 = vpack.c.b16 %v9728, %v9727
        %v9824 = vpack.c.b16 %v9730, %v9729
        %v9825 = vpack.c.b16 %v9732, %v9731
        %v9826 = vpack.c.b16 %v9734, %v9733
        %v9827 = vpack.c.b16 %v9736, %v9735
        %v9828 = vpack.c.b16 %v9738, %v9737
        %v9829 = vpack.c.b16 %v9740, %v9739
        %v9830 = vpack.c.b16 %v9742, %v9741
        %v9831 = vpack.c.b16 %v9744, %v9743
        %v9832 = vpack.c.b16 %v9746, %v9745
        %v9833 = vpack.c.b16 %v9748, %v9747
        %v9834 = vpack.c.b16 %v9750, %v9749
        %v9835 = vpack.c.b16 %v9752, %v9751
        %v9836 = vpack.c.b16 %v9754, %v9753
        %v9837 = vpack.c.b16 %v9756, %v9755
        %v9838 = vpack.c.b16 %v9758, %v9757
        %v9839 = vpack.c.b16 %v9760, %v9759
        %v9840 = vpack.c.b16 %v9762, %v9761
        %v9841 = vpack.c.b16 %v9764, %v9763
        %v9842 = vpack.c.b16 %v9766, %v9765
        %v9843 = vpack.c.b16 %v9768, %v9767
        %v9844 = vpack.c.b16 %v9770, %v9769
        %v9845 = vpack.c.b16 %v9772, %v9771
        %v9846 = vpack.c.b16 %v9774, %v9773
        %9919 = vmatprep.subr.bf16.mxu0 0
        %9920 = vmatpush1.bf16.msra.mxu0 %v9775
        %9921 = vmatprep.subr.bf16.mxu0 0
        %9922 = vmatpush1.bf16.msra.mxu0 %v9776
        %9923 = vmatprep.subr.bf16.mxu0 0
        %9924 = vmatpush1.bf16.msra.mxu0 %v9777
        %9925 = vmatprep.subr.bf16.mxu0 0
        %9926 = vmatpush1.bf16.msra.mxu0 %v9778
        %9927 = vmatprep.subr.bf16.mxu0 0
        %9928 = vmatpush1.bf16.msra.mxu0 %v9779
        %9929 = vmatprep.subr.bf16.mxu0 0
        %9930 = vmatpush1.bf16.msra.mxu0 %v9780
        %9931 = vmatprep.subr.bf16.mxu0 0
        %9932 = vmatpush1.bf16.msra.mxu0 %v9781
        %9933 = vmatprep.subr.bf16.mxu0 0
        %9934 = vmatpush1.bf16.msra.mxu0 %v9782
        %9935 = vmatprep.subr.bf16.mxu0 0
        %9936 = vmatpush1.bf16.msra.mxu0 %v9783
        %9937 = vmatprep.subr.bf16.mxu0 0
        %9938 = vmatpush1.bf16.msra.mxu0 %v9784
        %9939 = vmatprep.subr.bf16.mxu0 0
        %9940 = vmatpush1.bf16.msra.mxu0 %v9785
        %9941 = vmatprep.subr.bf16.mxu0 0
        %9942 = vmatpush1.bf16.msra.mxu0 %v9786
        %9943 = vmatprep.subr.bf16.mxu0 0
        %9944 = vmatpush1.bf16.msra.mxu0 %v9787
        %9945 = vmatprep.subr.bf16.mxu0 0
        %9946 = vmatpush1.bf16.msra.mxu0 %v9788
        %9947 = vmatprep.subr.bf16.mxu0 0
        %9948 = vmatpush1.bf16.msra.mxu0 %v9789
        %9949 = vmatprep.subr.bf16.mxu0 0
        %9950 = vmatpush1.bf16.msra.mxu0 %v9790
        %9951 = vmatprep.mubr.bf16.mxu0 %v8969
        %9952 = vmatmul.mubr.bf16.gmra.mrb[0].mxu0 %v8905
        %v9953 = vpop.f32.mrb[0].mxu0
        %v9954 = vadd.f32 %v9485, %v9953
        %v9955 = vpop.f32.mrb[0].mxu0
        %v9956 = vpop.f32.mrb[0].mxu0
        %v9957 = vadd.f32 %v9485, %v9956
        %v9958 = vpop.f32.mrb[0].mxu0
        %9959 = vmatprep.mubr.bf16.mxu0 %v8970
        %9960 = vmatmul.mubr.bf16.gmra.mrb[0].mxu0 %v8906
        %v9961 = vpop.f32.mrb[0].mxu0
        %v9962 = vadd.f32 %v9485, %v9961
        %v9963 = vpop.f32.mrb[0].mxu0
        %v9964 = vpop.f32.mrb[0].mxu0
        %v9965 = vadd.f32 %v9485, %v9964
        %v9966 = vpop.f32.mrb[0].mxu0
        %9967 = vmatprep.mubr.bf16.mxu0 %v8971
        %9968 = vmatmul.mubr.bf16.gmra.mrb[0].mxu0 %v8907
        %v9969 = vpop.f32.mrb[0].mxu0
        %v9970 = vadd.f32 %v9485, %v9969
        %v9971 = vpop.f32.mrb[0].mxu0
        %v9972 = vpop.f32.mrb[0].mxu0
        %v9973 = vadd.f32 %v9485, %v9972
        %v9974 = vpop.f32.mrb[0].mxu0
        %9975 = vmatprep.mubr.bf16.mxu0 %v8972
        %9976 = vmatmul.mubr.bf16.gmra.mrb[0].mxu0 %v8908
        %v9977 = vpop.f32.mrb[0].mxu0
        %v9978 = vadd.f32 %v9485, %v9977
        %v9979 = vpop.f32.mrb[0].mxu0
        %v9980 = vpop.f32.mrb[0].mxu0
        %v9981 = vadd.f32 %v9485, %v9980
        %v9982 = vpop.f32.mrb[0].mxu0
        %9983 = vmatprep.mubr.bf16.mxu0 %v8973
        %9984 = vmatmul.mubr.bf16.gmra.mrb[0].mxu0 %v8909
        %v9985 = vpop.f32.mrb[0].mxu0
        %v9986 = vadd.f32 %v9485, %v9985
        %v9987 = vpop.f32.mrb[0].mxu0
        %v9988 = vpop.f32.mrb[0].mxu0
        %v9989 = vadd.f32 %v9485, %v9988
        %v9990 = vpop.f32.mrb[0].mxu0
        %9991 = vmatprep.mubr.bf16.mxu0 %v8974
        %9992 = vmatmul.mubr.bf16.gmra.mrb[0].mxu0 %v8910
        %v9993 = vpop.f32.mrb[0].mxu0
        %v9994 = vadd.f32 %v9485, %v9993
        %v9995 = vpop.f32.mrb[0].mxu0
        %v9996 = vpop.f32.mrb[0].mxu0
        %v9997 = vadd.f32 %v9485, %v9996
        %v9998 = vpop.f32.mrb[0].mxu0
        %9999 = vmatprep.mubr.bf16.mxu0 %v8975
        %10000 = vmatmul.mubr.bf16.gmra.mrb[0].mxu0 %v8911
        %v10001 = vpop.f32.mrb[0].mxu0
        %v10002 = vadd.f32 %v9485, %v10001
        %v10003 = vpop.f32.mrb[0].mxu0
        %v10004 = vpop.f32.mrb[0].mxu0
        %v10005 = vadd.f32 %v9485, %v10004
        %v10006 = vpop.f32.mrb[0].mxu0
        %10007 = vmatprep.mubr.bf16.mxu0 %v8976
        %10008 = vmatmul.mubr.bf16.gmra.mrb[0].mxu0 %v8912
        %v10009 = vpop.f32.mrb[0].mxu0
        %v10010 = vadd.f32 %v9485, %v10009
        %v10011 = vpop.f32.mrb[0].mxu0
        %v10012 = vpop.f32.mrb[0].mxu0
        %v10013 = vadd.f32 %v9485, %v10012
        %v10014 = vpop.f32.mrb[0].mxu0
        %10015 = vmatprep.mubr.bf16.mxu0 %v8977
        %10016 = vmatmul.mubr.bf16.gmra.mrb[0].mxu0 %v8913
        %v10017 = vpop.f32.mrb[0].mxu0
        %v10018 = vadd.f32 %v9485, %v10017
        %v10019 = vpop.f32.mrb[0].mxu0
        %v10020 = vpop.f32.mrb[0].mxu0
        %v10021 = vadd.f32 %v9485, %v10020
        %v10022 = vpop.f32.mrb[0].mxu0
        %10023 = vmatprep.mubr.bf16.mxu0 %v8978
        %10024 = vmatmul.mubr.bf16.gmra.mrb[0].mxu0 %v8914
        %v10025 = vpop.f32.mrb[0].mxu0
        %v10026 = vadd.f32 %v9485, %v10025
        %v10027 = vpop.f32.mrb[0].mxu0
        %v10028 = vpop.f32.mrb[0].mxu0
        %v10029 = vadd.f32 %v9485, %v10028
        %v10030 = vpop.f32.mrb[0].mxu0
        %10031 = vmatprep.mubr.bf16.mxu0 %v8979
        %10032 = vmatmul.mubr.bf16.gmra.mrb[0].mxu0 %v8915
        %v10033 = vpop.f32.mrb[0].mxu0
        %v10034 = vadd.f32 %v9485, %v10033
        %v10035 = vpop.f32.mrb[0].mxu0
        %v10036 = vpop.f32.mrb[0].mxu0
        %v10037 = vadd.f32 %v9485, %v10036
        %v10038 = vpop.f32.mrb[0].mxu0
        %10039 = vmatprep.mubr.bf16.mxu0 %v8980
        %10040 = vmatmul.mubr.bf16.gmra.mrb[0].mxu0 %v8916
        %v10041 = vpop.f32.mrb[0].mxu0
        %v10042 = vadd.f32 %v9485, %v10041
        %v10043 = vpop.f32.mrb[0].mxu0
        %v10044 = vpop.f32.mrb[0].mxu0
        %v10045 = vadd.f32 %v9485, %v10044
        %v10046 = vpop.f32.mrb[0].mxu0
        %10047 = vmatprep.mubr.bf16.mxu0 %v8981
        %10048 = vmatmul.mubr.bf16.gmra.mrb[0].mxu0 %v8917
        %v10049 = vpop.f32.mrb[0].mxu0
        %v10050 = vadd.f32 %v9485, %v10049
        %v10051 = vpop.f32.mrb[0].mxu0
        %v10052 = vpop.f32.mrb[0].mxu0
        %v10053 = vadd.f32 %v9485, %v10052
        %v10054 = vpop.f32.mrb[0].mxu0
        %10055 = vmatprep.mubr.bf16.mxu0 %v8982
        %10056 = vmatmul.mubr.bf16.gmra.mrb[0].mxu0 %v8918
        %v10057 = vpop.f32.mrb[0].mxu0
        %v10058 = vadd.f32 %v9485, %v10057
        %v10059 = vpop.f32.mrb[0].mxu0
        %v10060 = vpop.f32.mrb[0].mxu0
        %v10061 = vadd.f32 %v9485, %v10060
        %v10062 = vpop.f32.mrb[0].mxu0
        %10063 = vmatprep.mubr.bf16.mxu0 %v8983
        %10064 = vmatmul.mubr.bf16.gmra.mrb[0].mxu0 %v8919
        %v10065 = vpop.f32.mrb[0].mxu0
        %v10066 = vadd.f32 %v9485, %v10065
        %v10067 = vpop.f32.mrb[0].mxu0
        %v10068 = vpop.f32.mrb[0].mxu0
        %v10069 = vadd.f32 %v9485, %v10068
        %v10070 = vpop.f32.mrb[0].mxu0
        %10071 = vmatprep.mubr.bf16.mxu0 %v8984
        %10072 = vmatmul.mubr.bf16.gmra.mrb[0].mxu0 %v8920
        %v10073 = vpop.f32.mrb[0].mxu0
        %v10074 = vadd.f32 %v9485, %v10073
        %v10075 = vpop.f32.mrb[0].mxu0
        %v10076 = vpop.f32.mrb[0].mxu0
        %v10077 = vadd.f32 %v9485, %v10076
        %v10078 = vpop.f32.mrb[0].mxu0
        %10079 = vdwg.mxu0
        %10080 = vmatprep.subr.bf16.mxu0 0
        %10081 = vmatpush1.bf16.msra.mxu0 %v9791
        %10082 = vmatprep.subr.bf16.mxu0 0
        %10083 = vmatpush1.bf16.msra.mxu0 %v9792
        %10084 = vmatprep.subr.bf16.mxu0 0
        %10085 = vmatpush1.bf16.msra.mxu0 %v9793
        %10086 = vmatprep.subr.bf16.mxu0 0
        %10087 = vmatpush1.bf16.msra.mxu0 %v9794
        %10088 = vmatprep.subr.bf16.mxu0 0
        %10089 = vmatpush1.bf16.msra.mxu0 %v9795
        %10090 = vmatprep.subr.bf16.mxu0 0
        %10091 = vmatpush1.bf16.msra.mxu0 %v9796
        %10092 = vmatprep.subr.bf16.mxu0 0
        %10093 = vmatpush1.bf16.msra.mxu0 %v9797
        %10094 = vmatprep.subr.bf16.mxu0 0
        %10095 = vmatpush1.bf16.msra.mxu0 %v9798
        %10096 = vmatprep.subr.bf16.mxu0 0
        %10097 = vmatpush1.bf16.msra.mxu0 %v9799
        %10098 = vmatprep.subr.bf16.mxu0 0
        %10099 = vmatpush1.bf16.msra.mxu0 %v9800
        %10100 = vmatprep.subr.bf16.mxu0 0
        %10101 = vmatpush1.bf16.msra.mxu0 %v9801
        %10102 = vmatprep.subr.bf16.mxu0 0
        %10103 = vmatpush1.bf16.msra.mxu0 %v9802
        %10104 = vmatprep.subr.bf16.mxu0 0
        %10105 = vmatpush1.bf16.msra.mxu0 %v9803
        %10106 = vmatprep.subr.bf16.mxu0 0
        %10107 = vmatpush1.bf16.msra.mxu0 %v9804
        %10108 = vmatprep.subr.bf16.mxu0 0
        %10109 = vmatpush1.bf16.msra.mxu0 %v9805
        %10110 = vmatprep.subr.bf16.mxu0 0
        %10111 = vmatpush1.bf16.msra.mxu0 %v9806
        %10112 = vmatprep.mubr.bf16.mxu0 %v9113
        %10113 = vmatmul.mubr.bf16.gmra.mrb[0].mxu0 %v9033
        %v10114 = vpop.f32.mrb[0].mxu0
        %v10115 = vadd.f32 %v9954, %v10114
        %v10116 = vpop.f32.mrb[0].mxu0
        %v10117 = vpop.f32.mrb[0].mxu0
        %v10118 = vadd.f32 %v9957, %v10117
        %v10119 = vpop.f32.mrb[0].mxu0
        %10120 = vmatprep.mubr.bf16.mxu0 %v9114
        %10121 = vmatmul.mubr.bf16.gmra.mrb[0].mxu0 %v9034
        %v10122 = vpop.f32.mrb[0].mxu0
        %v10123 = vadd.f32 %v9962, %v10122
        %v10124 = vpop.f32.mrb[0].mxu0
        %v10125 = vpop.f32.mrb[0].mxu0
        %v10126 = vadd.f32 %v9965, %v10125
        %v10127 = vpop.f32.mrb[0].mxu0
        %10128 = vmatprep.mubr.bf16.mxu0 %v9115
        %10129 = vmatmul.mubr.bf16.gmra.mrb[0].mxu0 %v9035
        %v10130 = vpop.f32.mrb[0].mxu0
        %v10131 = vadd.f32 %v9970, %v10130
        %v10132 = vpop.f32.mrb[0].mxu0
        %v10133 = vpop.f32.mrb[0].mxu0
        %v10134 = vadd.f32 %v9973, %v10133
        %v10135 = vpop.f32.mrb[0].mxu0
        %10136 = vmatprep.mubr.bf16.mxu0 %v9116
        %10137 = vmatmul.mubr.bf16.gmra.mrb[0].mxu0 %v9036
        %v10138 = vpop.f32.mrb[0].mxu0
        %v10139 = vadd.f32 %v9978, %v10138
        %v10140 = vpop.f32.mrb[0].mxu0
        %v10141 = vpop.f32.mrb[0].mxu0
        %v10142 = vadd.f32 %v9981, %v10141
        %v10143 = vpop.f32.mrb[0].mxu0
        %10144 = vmatprep.mubr.bf16.mxu0 %v9117
        %10145 = vmatmul.mubr.bf16.gmra.mrb[0].mxu0 %v9037
        %v10146 = vpop.f32.mrb[0].mxu0
        %v10147 = vadd.f32 %v9986, %v10146
        %v10148 = vpop.f32.mrb[0].mxu0
        %v10149 = vpop.f32.mrb[0].mxu0
        %v10150 = vadd.f32 %v9989, %v10149
        %v10151 = vpop.f32.mrb[0].mxu0
        %10152 = vmatprep.mubr.bf16.mxu0 %v9118
        %10153 = vmatmul.mubr.bf16.gmra.mrb[0].mxu0 %v9038
        %v10154 = vpop.f32.mrb[0].mxu0
        %v10155 = vadd.f32 %v9994, %v10154
        %v10156 = vpop.f32.mrb[0].mxu0
        %v10157 = vpop.f32.mrb[0].mxu0
        %v10158 = vadd.f32 %v9997, %v10157
        %v10159 = vpop.f32.mrb[0].mxu0
        %10160 = vmatprep.mubr.bf16.mxu0 %v9119
        %10161 = vmatmul.mubr.bf16.gmra.mrb[0].mxu0 %v9039
        %v10162 = vpop.f32.mrb[0].mxu0
        %v10163 = vadd.f32 %v10002, %v10162
        %v10164 = vpop.f32.mrb[0].mxu0
        %v10165 = vpop.f32.mrb[0].mxu0
        %v10166 = vadd.f32 %v10005, %v10165
        %v10167 = vpop.f32.mrb[0].mxu0
        %10168 = vmatprep.mubr.bf16.mxu0 %v9120
        %10169 = vmatmul.mubr.bf16.gmra.mrb[0].mxu0 %v9040
        %v10170 = vpop.f32.mrb[0].mxu0
        %v10171 = vadd.f32 %v10010, %v10170
        %v10172 = vpop.f32.mrb[0].mxu0
        %v10173 = vpop.f32.mrb[0].mxu0
        %v10174 = vadd.f32 %v10013, %v10173
        %v10175 = vpop.f32.mrb[0].mxu0
        %10176 = vmatprep.mubr.bf16.mxu0 %v9121
        %10177 = vmatmul.mubr.bf16.gmra.mrb[0].mxu0 %v9041
        %v10178 = vpop.f32.mrb[0].mxu0
        %v10179 = vadd.f32 %v10018, %v10178
        %v10180 = vpop.f32.mrb[0].mxu0
        %v10181 = vpop.f32.mrb[0].mxu0
        %v10182 = vadd.f32 %v10021, %v10181
        %v10183 = vpop.f32.mrb[0].mxu0
        %10184 = vmatprep.mubr.bf16.mxu0 %v9122
        %10185 = vmatmul.mubr.bf16.gmra.mrb[0].mxu0 %v9042
        %v10186 = vpop.f32.mrb[0].mxu0
        %v10187 = vadd.f32 %v10026, %v10186
        %v10188 = vpop.f32.mrb[0].mxu0
        %v10189 = vpop.f32.mrb[0].mxu0
        %v10190 = vadd.f32 %v10029, %v10189
        %v10191 = vpop.f32.mrb[0].mxu0
        %10192 = vmatprep.mubr.bf16.mxu0 %v9123
        %10193 = vmatmul.mubr.bf16.gmra.mrb[0].mxu0 %v9043
        %v10194 = vpop.f32.mrb[0].mxu0
        %v10195 = vadd.f32 %v10034, %v10194
        %v10196 = vpop.f32.mrb[0].mxu0
        %v10197 = vpop.f32.mrb[0].mxu0
        %v10198 = vadd.f32 %v10037, %v10197
        %v10199 = vpop.f32.mrb[0].mxu0
        %10200 = vmatprep.mubr.bf16.mxu0 %v9124
        %10201 = vmatmul.mubr.bf16.gmra.mrb[0].mxu0 %v9044
        %v10202 = vpop.f32.mrb[0].mxu0
        %v10203 = vadd.f32 %v10042, %v10202
        %v10204 = vpop.f32.mrb[0].mxu0
        %v10205 = vpop.f32.mrb[0].mxu0
        %v10206 = vadd.f32 %v10045, %v10205
        %v10207 = vpop.f32.mrb[0].mxu0
        %10208 = vmatprep.mubr.bf16.mxu0 %v9125
        %10209 = vmatmul.mubr.bf16.gmra.mrb[0].mxu0 %v9045
        %v10210 = vpop.f32.mrb[0].mxu0
        %v10211 = vadd.f32 %v10050, %v10210
        %v10212 = vpop.f32.mrb[0].mxu0
        %v10213 = vpop.f32.mrb[0].mxu0
        %v10214 = vadd.f32 %v10053, %v10213
        %v10215 = vpop.f32.mrb[0].mxu0
        %10216 = vmatprep.mubr.bf16.mxu0 %v9126
        %10217 = vmatmul.mubr.bf16.gmra.mrb[0].mxu0 %v9046
        %v10218 = vpop.f32.mrb[0].mxu0
        %v10219 = vadd.f32 %v10058, %v10218
        %v10220 = vpop.f32.mrb[0].mxu0
        %v10221 = vpop.f32.mrb[0].mxu0
        %v10222 = vadd.f32 %v10061, %v10221
        %v10223 = vpop.f32.mrb[0].mxu0
        %10224 = vmatprep.mubr.bf16.mxu0 %v9127
        %10225 = vmatmul.mubr.bf16.gmra.mrb[0].mxu0 %v9047
        %v10226 = vpop.f32.mrb[0].mxu0
        %v10227 = vadd.f32 %v10066, %v10226
        %v10228 = vpop.f32.mrb[0].mxu0
        %v10229 = vpop.f32.mrb[0].mxu0
        %v10230 = vadd.f32 %v10069, %v10229
        %v10231 = vpop.f32.mrb[0].mxu0
        %10232 = vmatprep.mubr.bf16.mxu0 %v9128
        %10233 = vmatmul.mubr.bf16.gmra.mrb[0].mxu0 %v9048
        %v10234 = vpop.f32.mrb[0].mxu0
        %v10235 = vadd.f32 %v10074, %v10234
        %v10236 = vpop.f32.mrb[0].mxu0
        %v10237 = vpop.f32.mrb[0].mxu0
        %v10238 = vadd.f32 %v10077, %v10237
        %v10239 = vpop.f32.mrb[0].mxu0
        %10240 = vdwg.mxu0
        %10241 = vmatprep.subr.bf16.mxu0 0
        %10242 = vmatpush1.bf16.msra.mxu0 %v9807
        %10243 = vmatprep.subr.bf16.mxu0 0
        %10244 = vmatpush1.bf16.msra.mxu0 %v9808
        %10245 = vmatprep.subr.bf16.mxu0 0
        %10246 = vmatpush1.bf16.msra.mxu0 %v9809
        %10247 = vmatprep.subr.bf16.mxu0 0
        %10248 = vmatpush1.bf16.msra.mxu0 %v9810
        %10249 = vmatprep.subr.bf16.mxu0 0
        %10250 = vmatpush1.bf16.msra.mxu0 %v9811
        %10251 = vmatprep.subr.bf16.mxu0 0
        %10252 = vmatpush1.bf16.msra.mxu0 %v9812
        %10253 = vmatprep.subr.bf16.mxu0 0
        %10254 = vmatpush1.bf16.msra.mxu0 %v9813
        %10255 = vmatprep.subr.bf16.mxu0 0
        %10256 = vmatpush1.bf16.msra.mxu0 %v9814
        %10257 = vmatprep.subr.bf16.mxu0 0
        %10258 = vmatpush1.bf16.msra.mxu0 %v9815
        %10259 = vmatprep.subr.bf16.mxu0 0
        %10260 = vmatpush1.bf16.msra.mxu0 %v9816
        %10261 = vmatprep.subr.bf16.mxu0 0
        %10262 = vmatpush1.bf16.msra.mxu0 %v9817
        %10263 = vmatprep.subr.bf16.mxu0 0
        %10264 = vmatpush1.bf16.msra.mxu0 %v9818
        %10265 = vmatprep.subr.bf16.mxu0 0
        %10266 = vmatpush1.bf16.msra.mxu0 %v9819
        %10267 = vmatprep.subr.bf16.mxu0 0
        %10268 = vmatpush1.bf16.msra.mxu0 %v9820
        %10269 = vmatprep.subr.bf16.mxu0 0
        %10270 = vmatpush1.bf16.msra.mxu0 %v9821
        %10271 = vmatprep.subr.bf16.mxu0 0
        %10272 = vmatpush1.bf16.msra.mxu0 %v9822
        %10273 = vmatprep.mubr.bf16.mxu0 %v9241
        %10274 = vmatmul.mubr.bf16.gmra.mrb[0].mxu0 %v9177
        %v10275 = vpop.f32.mrb[0].mxu0
        %v10276 = vadd.f32 %v10115, %v10275
        %v10277 = vpop.f32.mrb[0].mxu0
        %v10278 = vpop.f32.mrb[0].mxu0
        %v10279 = vadd.f32 %v10118, %v10278
        %v10280 = vpop.f32.mrb[0].mxu0
        %10281 = vmatprep.mubr.bf16.mxu0 %v9242
        %10282 = vmatmul.mubr.bf16.gmra.mrb[0].mxu0 %v9178
        %v10283 = vpop.f32.mrb[0].mxu0
        %v10284 = vadd.f32 %v10123, %v10283
        %v10285 = vpop.f32.mrb[0].mxu0
        %v10286 = vpop.f32.mrb[0].mxu0
        %v10287 = vadd.f32 %v10126, %v10286
        %v10288 = vpop.f32.mrb[0].mxu0
        %10289 = vmatprep.mubr.bf16.mxu0 %v9243
        %10290 = vmatmul.mubr.bf16.gmra.mrb[0].mxu0 %v9179
        %v10291 = vpop.f32.mrb[0].mxu0
        %v10292 = vadd.f32 %v10131, %v10291
        %v10293 = vpop.f32.mrb[0].mxu0
        %v10294 = vpop.f32.mrb[0].mxu0
        %v10295 = vadd.f32 %v10134, %v10294
        %v10296 = vpop.f32.mrb[0].mxu0
        %10297 = vmatprep.mubr.bf16.mxu0 %v9244
        %10298 = vmatmul.mubr.bf16.gmra.mrb[0].mxu0 %v9180
        %v10299 = vpop.f32.mrb[0].mxu0
        %v10300 = vadd.f32 %v10139, %v10299
        %v10301 = vpop.f32.mrb[0].mxu0
        %v10302 = vpop.f32.mrb[0].mxu0
        %v10303 = vadd.f32 %v10142, %v10302
        %v10304 = vpop.f32.mrb[0].mxu0
        %10305 = vmatprep.mubr.bf16.mxu0 %v9245
        %10306 = vmatmul.mubr.bf16.gmra.mrb[0].mxu0 %v9181
        %v10307 = vpop.f32.mrb[0].mxu0
        %v10308 = vadd.f32 %v10147, %v10307
        %v10309 = vpop.f32.mrb[0].mxu0
        %v10310 = vpop.f32.mrb[0].mxu0
        %v10311 = vadd.f32 %v10150, %v10310
        %v10312 = vpop.f32.mrb[0].mxu0
        %10313 = vmatprep.mubr.bf16.mxu0 %v9246
        %10314 = vmatmul.mubr.bf16.gmra.mrb[0].mxu0 %v9182
        %v10315 = vpop.f32.mrb[0].mxu0
        %v10316 = vadd.f32 %v10155, %v10315
        %v10317 = vpop.f32.mrb[0].mxu0
        %v10318 = vpop.f32.mrb[0].mxu0
        %v10319 = vadd.f32 %v10158, %v10318
        %v10320 = vpop.f32.mrb[0].mxu0
        %10321 = vmatprep.mubr.bf16.mxu0 %v9247
        %10322 = vmatmul.mubr.bf16.gmra.mrb[0].mxu0 %v9183
        %v10323 = vpop.f32.mrb[0].mxu0
        %v10324 = vadd.f32 %v10163, %v10323
        %v10325 = vpop.f32.mrb[0].mxu0
        %v10326 = vpop.f32.mrb[0].mxu0
        %v10327 = vadd.f32 %v10166, %v10326
        %v10328 = vpop.f32.mrb[0].mxu0
        %10329 = vmatprep.mubr.bf16.mxu0 %v9248
        %10330 = vmatmul.mubr.bf16.gmra.mrb[0].mxu0 %v9184
        %v10331 = vpop.f32.mrb[0].mxu0
        %v10332 = vadd.f32 %v10171, %v10331
        %v10333 = vpop.f32.mrb[0].mxu0
        %v10334 = vpop.f32.mrb[0].mxu0
        %v10335 = vadd.f32 %v10174, %v10334
        %v10336 = vpop.f32.mrb[0].mxu0
        %10337 = vmatprep.mubr.bf16.mxu0 %v9249
        %10338 = vmatmul.mubr.bf16.gmra.mrb[0].mxu0 %v9185
        %v10339 = vpop.f32.mrb[0].mxu0
        %v10340 = vadd.f32 %v10179, %v10339
        %v10341 = vpop.f32.mrb[0].mxu0
        %v10342 = vpop.f32.mrb[0].mxu0
        %v10343 = vadd.f32 %v10182, %v10342
        %v10344 = vpop.f32.mrb[0].mxu0
        %10345 = vmatprep.mubr.bf16.mxu0 %v9250
        %10346 = vmatmul.mubr.bf16.gmra.mrb[0].mxu0 %v9186
        %v10347 = vpop.f32.mrb[0].mxu0
        %v10348 = vadd.f32 %v10187, %v10347
        %v10349 = vpop.f32.mrb[0].mxu0
        %v10350 = vpop.f32.mrb[0].mxu0
        %v10351 = vadd.f32 %v10190, %v10350
        %v10352 = vpop.f32.mrb[0].mxu0
        %10353 = vmatprep.mubr.bf16.mxu0 %v9251
        %10354 = vmatmul.mubr.bf16.gmra.mrb[0].mxu0 %v9187
        %v10355 = vpop.f32.mrb[0].mxu0
        %v10356 = vadd.f32 %v10195, %v10355
        %v10357 = vpop.f32.mrb[0].mxu0
        %v10358 = vpop.f32.mrb[0].mxu0
        %v10359 = vadd.f32 %v10198, %v10358
        %v10360 = vpop.f32.mrb[0].mxu0
        %10361 = vmatprep.mubr.bf16.mxu0 %v9252
        %10362 = vmatmul.mubr.bf16.gmra.mrb[0].mxu0 %v9188
        %v10363 = vpop.f32.mrb[0].mxu0
        %v10364 = vadd.f32 %v10203, %v10363
        %v10365 = vpop.f32.mrb[0].mxu0
        %v10366 = vpop.f32.mrb[0].mxu0
        %v10367 = vadd.f32 %v10206, %v10366
        %v10368 = vpop.f32.mrb[0].mxu0
        %10369 = vmatprep.mubr.bf16.mxu0 %v9253
        %10370 = vmatmul.mubr.bf16.gmra.mrb[0].mxu0 %v9189
        %v10371 = vpop.f32.mrb[0].mxu0
        %v10372 = vadd.f32 %v10211, %v10371
        %v10373 = vpop.f32.mrb[0].mxu0
        %v10374 = vpop.f32.mrb[0].mxu0
        %v10375 = vadd.f32 %v10214, %v10374
        %v10376 = vpop.f32.mrb[0].mxu0
        %10377 = vmatprep.mubr.bf16.mxu0 %v9254
        %10378 = vmatmul.mubr.bf16.gmra.mrb[0].mxu0 %v9190
        %v10379 = vpop.f32.mrb[0].mxu0
        %v10380 = vadd.f32 %v10219, %v10379
        %v10381 = vpop.f32.mrb[0].mxu0
        %v10382 = vpop.f32.mrb[0].mxu0
        %v10383 = vadd.f32 %v10222, %v10382
        %v10384 = vpop.f32.mrb[0].mxu0
        %10385 = vmatprep.mubr.bf16.mxu0 %v9255
        %10386 = vmatmul.mubr.bf16.gmra.mrb[0].mxu0 %v9191
        %v10387 = vpop.f32.mrb[0].mxu0
        %v10388 = vadd.f32 %v10227, %v10387
        %v10389 = vpop.f32.mrb[0].mxu0
        %v10390 = vpop.f32.mrb[0].mxu0
        %v10391 = vadd.f32 %v10230, %v10390
        %v10392 = vpop.f32.mrb[0].mxu0
        %10393 = vmatprep.mubr.bf16.mxu0 %v9256
        %10394 = vmatmul.mubr.bf16.gmra.mrb[0].mxu0 %v9192
        %v10395 = vpop.f32.mrb[0].mxu0
        %v10396 = vadd.f32 %v10235, %v10395
        %v10397 = vpop.f32.mrb[0].mxu0
        %v10398 = vpop.f32.mrb[0].mxu0
        %v10399 = vadd.f32 %v10238, %v10398
        %v10400 = vpop.f32.mrb[0].mxu0
        %10401 = vdwg.mxu0
        %10402 = vmatprep.subr.bf16.mxu0 0
        %10403 = vmatpush1.bf16.msra.mxu0 %v9823
        %10404 = vmatprep.subr.bf16.mxu0 0
        %10405 = vmatpush1.bf16.msra.mxu0 %v9824
        %10406 = vmatprep.subr.bf16.mxu0 0
        %10407 = vmatpush1.bf16.msra.mxu0 %v9825
        %10408 = vmatprep.subr.bf16.mxu0 0
        %10409 = vmatpush1.bf16.msra.mxu0 %v9826
        %10410 = vmatprep.subr.bf16.mxu0 0
        %10411 = vmatpush1.bf16.msra.mxu0 %v9827
        %10412 = vmatprep.subr.bf16.mxu0 0
        %10413 = vmatpush1.bf16.msra.mxu0 %v9828
        %10414 = vmatprep.subr.bf16.mxu0 0
        %10415 = vmatpush1.bf16.msra.mxu0 %v9829
        %10416 = vmatprep.subr.bf16.mxu0 0
        %10417 = vmatpush1.bf16.msra.mxu0 %v9830
        %10418 = vmatprep.subr.bf16.mxu0 0
        %10419 = vmatpush1.bf16.msra.mxu0 %v9831
        %10420 = vmatprep.subr.bf16.mxu0 0
        %10421 = vmatpush1.bf16.msra.mxu0 %v9832
        %10422 = vmatprep.subr.bf16.mxu0 0
        %10423 = vmatpush1.bf16.msra.mxu0 %v9833
        %10424 = vmatprep.subr.bf16.mxu0 0
        %10425 = vmatpush1.bf16.msra.mxu0 %v9834
        %10426 = vmatprep.subr.bf16.mxu0 0
        %10427 = vmatpush1.bf16.msra.mxu0 %v9835
        %10428 = vmatprep.subr.bf16.mxu0 0
        %10429 = vmatpush1.bf16.msra.mxu0 %v9836
        %10430 = vmatprep.subr.bf16.mxu0 0
        %10431 = vmatpush1.bf16.msra.mxu0 %v9837
        %10432 = vmatprep.subr.bf16.mxu0 0
        %10433 = vmatpush1.bf16.msra.mxu0 %v9838
        %10434 = vmatprep.mubr.bf16.mxu0 %v9385
        %10435 = vmatmul.mubr.bf16.gmra.mrb[0].mxu0 %v9321
        %v10436 = vpop.f32.mrb[0].mxu0
        %v10437 = vadd.f32 %v10276, %v10436
        %v10438 = vpop.f32.mrb[0].mxu0
        %v10439 = vpop.f32.mrb[0].mxu0
        %v10440 = vadd.f32 %v10279, %v10439
        %v10441 = vpop.f32.mrb[0].mxu0
        %10442 = vmatprep.mubr.bf16.mxu0 %v9386
        %10443 = vmatmul.mubr.bf16.gmra.mrb[0].mxu0 %v9322
        %v10444 = vpop.f32.mrb[0].mxu0
        %v10445 = vadd.f32 %v10284, %v10444
        %v10446 = vpop.f32.mrb[0].mxu0
        %v10447 = vpop.f32.mrb[0].mxu0
        %v10448 = vadd.f32 %v10287, %v10447
        %v10449 = vpop.f32.mrb[0].mxu0
        %10450 = vmatprep.mubr.bf16.mxu0 %v9387
        %10451 = vmatmul.mubr.bf16.gmra.mrb[0].mxu0 %v9323
        %v10452 = vpop.f32.mrb[0].mxu0
        %v10453 = vadd.f32 %v10292, %v10452
        %v10454 = vpop.f32.mrb[0].mxu0
        %v10455 = vpop.f32.mrb[0].mxu0
        %v10456 = vadd.f32 %v10295, %v10455
        %v10457 = vpop.f32.mrb[0].mxu0
        %10458 = vmatprep.mubr.bf16.mxu0 %v9388
        %10459 = vmatmul.mubr.bf16.gmra.mrb[0].mxu0 %v9324
        %v10460 = vpop.f32.mrb[0].mxu0
        %v10461 = vadd.f32 %v10300, %v10460
        %v10462 = vpop.f32.mrb[0].mxu0
        %v10463 = vpop.f32.mrb[0].mxu0
        %v10464 = vadd.f32 %v10303, %v10463
        %v10465 = vpop.f32.mrb[0].mxu0
        %10466 = vmatprep.mubr.bf16.mxu0 %v9389
        %10467 = vmatmul.mubr.bf16.gmra.mrb[0].mxu0 %v9325
        %v10468 = vpop.f32.mrb[0].mxu0
        %v10469 = vadd.f32 %v10308, %v10468
        %v10470 = vpop.f32.mrb[0].mxu0
        %v10471 = vpop.f32.mrb[0].mxu0
        %v10472 = vadd.f32 %v10311, %v10471
        %v10473 = vpop.f32.mrb[0].mxu0
        %10474 = vmatprep.mubr.bf16.mxu0 %v9390
        %10475 = vmatmul.mubr.bf16.gmra.mrb[0].mxu0 %v9326
        %v10476 = vpop.f32.mrb[0].mxu0
        %v10477 = vadd.f32 %v10316, %v10476
        %v10478 = vpop.f32.mrb[0].mxu0
        %v10479 = vpop.f32.mrb[0].mxu0
        %v10480 = vadd.f32 %v10319, %v10479
        %v10481 = vpop.f32.mrb[0].mxu0
        %10482 = vmatprep.mubr.bf16.mxu0 %v9391
        %10483 = vmatmul.mubr.bf16.gmra.mrb[0].mxu0 %v9327
        %v10484 = vpop.f32.mrb[0].mxu0
        %v10485 = vadd.f32 %v10324, %v10484
        %v10486 = vpop.f32.mrb[0].mxu0
        %v10487 = vpop.f32.mrb[0].mxu0
        %v10488 = vadd.f32 %v10327, %v10487
        %v10489 = vpop.f32.mrb[0].mxu0
        %10490 = vmatprep.mubr.bf16.mxu0 %v9392
        %10491 = vmatmul.mubr.bf16.gmra.mrb[0].mxu0 %v9328
        %v10492 = vpop.f32.mrb[0].mxu0
        %v10493 = vadd.f32 %v10332, %v10492
        %v10494 = vpop.f32.mrb[0].mxu0
        %v10495 = vpop.f32.mrb[0].mxu0
        %v10496 = vadd.f32 %v10335, %v10495
        %v10497 = vpop.f32.mrb[0].mxu0
        %10498 = vmatprep.mubr.bf16.mxu0 %v9393
        %10499 = vmatmul.mubr.bf16.gmra.mrb[0].mxu0 %v9329
        %v10500 = vpop.f32.mrb[0].mxu0
        %v10501 = vadd.f32 %v10340, %v10500
        %v10502 = vpop.f32.mrb[0].mxu0
        %v10503 = vpop.f32.mrb[0].mxu0
        %v10504 = vadd.f32 %v10343, %v10503
        %v10505 = vpop.f32.mrb[0].mxu0
        %10506 = vmatprep.mubr.bf16.mxu0 %v9394
        %10507 = vmatmul.mubr.bf16.gmra.mrb[0].mxu0 %v9330
        %v10508 = vpop.f32.mrb[0].mxu0
        %v10509 = vadd.f32 %v10348, %v10508
        %v10510 = vpop.f32.mrb[0].mxu0
        %v10511 = vpop.f32.mrb[0].mxu0
        %v10512 = vadd.f32 %v10351, %v10511
        %v10513 = vpop.f32.mrb[0].mxu0
        %10514 = vmatprep.mubr.bf16.mxu0 %v9395
        %10515 = vmatmul.mubr.bf16.gmra.mrb[0].mxu0 %v9331
        %v10516 = vpop.f32.mrb[0].mxu0
        %v10517 = vadd.f32 %v10356, %v10516
        %v10518 = vpop.f32.mrb[0].mxu0
        %v10519 = vpop.f32.mrb[0].mxu0
        %v10520 = vadd.f32 %v10359, %v10519
        %v10521 = vpop.f32.mrb[0].mxu0
        %10522 = vmatprep.mubr.bf16.mxu0 %v9396
        %10523 = vmatmul.mubr.bf16.gmra.mrb[0].mxu0 %v9332
        %v10524 = vpop.f32.mrb[0].mxu0
        %v10525 = vadd.f32 %v10364, %v10524
        %v10526 = vpop.f32.mrb[0].mxu0
        %v10527 = vpop.f32.mrb[0].mxu0
        %v10528 = vadd.f32 %v10367, %v10527
        %v10529 = vpop.f32.mrb[0].mxu0
        %10530 = vmatprep.mubr.bf16.mxu0 %v9397
        %10531 = vmatmul.mubr.bf16.gmra.mrb[0].mxu0 %v9333
        %v10532 = vpop.f32.mrb[0].mxu0
        %v10533 = vadd.f32 %v10372, %v10532
        %v10534 = vpop.f32.mrb[0].mxu0
        %v10535 = vpop.f32.mrb[0].mxu0
        %v10536 = vadd.f32 %v10375, %v10535
        %v10537 = vpop.f32.mrb[0].mxu0
        %10538 = vmatprep.mubr.bf16.mxu0 %v9398
        %10539 = vmatmul.mubr.bf16.gmra.mrb[0].mxu0 %v9334
        %v10540 = vpop.f32.mrb[0].mxu0
        %v10541 = vadd.f32 %v10380, %v10540
        %v10542 = vpop.f32.mrb[0].mxu0
        %v10543 = vpop.f32.mrb[0].mxu0
        %v10544 = vadd.f32 %v10383, %v10543
        %v10545 = vpop.f32.mrb[0].mxu0
        %10546 = vmatprep.mubr.bf16.mxu0 %v9399
        %10547 = vmatmul.mubr.bf16.gmra.mrb[0].mxu0 %v9335
        %v10548 = vpop.f32.mrb[0].mxu0
        %v10549 = vadd.f32 %v10388, %v10548
        %v10550 = vpop.f32.mrb[0].mxu0
        %v10551 = vpop.f32.mrb[0].mxu0
        %v10552 = vadd.f32 %v10391, %v10551
        %v10553 = vpop.f32.mrb[0].mxu0
        %10554 = vmatprep.mubr.bf16.mxu0 %v9400
        %10555 = vmatmul.mubr.bf16.gmra.mrb[0].mxu0 %v9336
        %v10556 = vpop.f32.mrb[0].mxu0
        %v10557 = vadd.f32 %v10396, %v10556
        %v10558 = vpop.f32.mrb[0].mxu0
        %v10559 = vpop.f32.mrb[0].mxu0
        %v10560 = vadd.f32 %v10399, %v10559
        %v10561 = vpop.f32.mrb[0].mxu0
        %10562 = vdwg.mxu0
        %10563 = vmatprep.subr.bf16.mxu0 0
        %10564 = vmatpush1.bf16.msra.mxu0 %v9839
        %10565 = vmatprep.subr.bf16.mxu0 0
        %10566 = vmatpush1.bf16.msra.mxu0 %v9840
        %10567 = vmatprep.subr.bf16.mxu0 0
        %10568 = vmatpush1.bf16.msra.mxu0 %v9841
        %10569 = vmatprep.subr.bf16.mxu0 0
        %10570 = vmatpush1.bf16.msra.mxu0 %v9842
        %10571 = vmatprep.subr.bf16.mxu0 0
        %10572 = vmatpush1.bf16.msra.mxu0 %v9843
        %10573 = vmatprep.subr.bf16.mxu0 0
        %10574 = vmatpush1.bf16.msra.mxu0 %v9844
        %10575 = vmatprep.subr.bf16.mxu0 0
        %10576 = vmatpush1.bf16.msra.mxu0 %v9845
        %10577 = vmatprep.subr.bf16.mxu0 0
        %10578 = vmatpush1.bf16.msra.mxu0 %v9846
        %10579 = vmatprep.subr.bf16.mxu0 0
        %10580 = vmatpush1.bf16.msra.mxu0 0
        %10581 = vmatprep.subr.bf16.mxu0 0
        %10582 = vmatpush1.bf16.msra.mxu0 0
        %10583 = vmatprep.subr.bf16.mxu0 0
        %10584 = vmatpush1.bf16.msra.mxu0 0
        %10585 = vmatprep.subr.bf16.mxu0 0
        %10586 = vmatpush1.bf16.msra.mxu0 0
        %10587 = vmatprep.subr.bf16.mxu0 0
        %10588 = vmatpush1.bf16.msra.mxu0 0
        %10589 = vmatprep.subr.bf16.mxu0 0
        %10590 = vmatpush1.bf16.msra.mxu0 0
        %10591 = vmatprep.subr.bf16.mxu0 0
        %10592 = vmatpush1.bf16.msra.mxu0 0
        %10593 = vmatprep.subr.bf16.mxu0 0
        %10594 = vmatpush1.bf16.msra.mxu0 0
        %10595 = vmatprep.mubr.bf16.mxu0 0
        %10596 = vmatmul.mubr.bf16.gmra.mrb[0].mxu0 %v9449
        %v10597 = vpop.f32.mrb[0].mxu0
        %v10598 = vadd.f32 %v10437, %v10597
        %v10599 = vpop.f32.mrb[0].mxu0
        %v10600 = vpop.f32.mrb[0].mxu0
        %v10601 = vadd.f32 %v10440, %v10600
        %v10602 = vpop.f32.mrb[0].mxu0
        %10603 = vmatprep.mubr.bf16.mxu0 0
        %10604 = vmatmul.mubr.bf16.gmra.mrb[0].mxu0 %v9450
        %v10605 = vpop.f32.mrb[0].mxu0
        %v10606 = vadd.f32 %v10445, %v10605
        %v10607 = vpop.f32.mrb[0].mxu0
        %v10608 = vpop.f32.mrb[0].mxu0
        %v10609 = vadd.f32 %v10448, %v10608
        %v10610 = vpop.f32.mrb[0].mxu0
        %10611 = vmatprep.mubr.bf16.mxu0 0
        %10612 = vmatmul.mubr.bf16.gmra.mrb[0].mxu0 %v9451
        %v10613 = vpop.f32.mrb[0].mxu0
        %v10614 = vadd.f32 %v10453, %v10613
        %v10615 = vpop.f32.mrb[0].mxu0
        %v10616 = vpop.f32.mrb[0].mxu0
        %v10617 = vadd.f32 %v10456, %v10616
        %v10618 = vpop.f32.mrb[0].mxu0
        %10619 = vmatprep.mubr.bf16.mxu0 0
        %10620 = vmatmul.mubr.bf16.gmra.mrb[0].mxu0 %v9452
        %v10621 = vpop.f32.mrb[0].mxu0
        %v10622 = vadd.f32 %v10461, %v10621
        %v10623 = vpop.f32.mrb[0].mxu0
        %v10624 = vpop.f32.mrb[0].mxu0
        %v10625 = vadd.f32 %v10464, %v10624
        %v10626 = vpop.f32.mrb[0].mxu0
        %10627 = vmatprep.mubr.bf16.mxu0 0
        %10628 = vmatmul.mubr.bf16.gmra.mrb[0].mxu0 %v9453
        %v10629 = vpop.f32.mrb[0].mxu0
        %v10630 = vadd.f32 %v10469, %v10629
        %v10631 = vpop.f32.mrb[0].mxu0
        %v10632 = vpop.f32.mrb[0].mxu0
        %v10633 = vadd.f32 %v10472, %v10632
        %v10634 = vpop.f32.mrb[0].mxu0
        %10635 = vmatprep.mubr.bf16.mxu0 0
        %10636 = vmatmul.mubr.bf16.gmra.mrb[0].mxu0 %v9454
        %v10637 = vpop.f32.mrb[0].mxu0
        %v10638 = vadd.f32 %v10477, %v10637
        %v10639 = vpop.f32.mrb[0].mxu0
        %v10640 = vpop.f32.mrb[0].mxu0
        %v10641 = vadd.f32 %v10480, %v10640
        %v10642 = vpop.f32.mrb[0].mxu0
        %10643 = vmatprep.mubr.bf16.mxu0 0
        %10644 = vmatmul.mubr.bf16.gmra.mrb[0].mxu0 %v9455
        %v10645 = vpop.f32.mrb[0].mxu0
        %v10646 = vadd.f32 %v10485, %v10645
        %v10647 = vpop.f32.mrb[0].mxu0
        %v10648 = vpop.f32.mrb[0].mxu0
        %v10649 = vadd.f32 %v10488, %v10648
        %v10650 = vpop.f32.mrb[0].mxu0
        %10651 = vmatprep.mubr.bf16.mxu0 0
        %10652 = vmatmul.mubr.bf16.gmra.mrb[0].mxu0 %v9456
        %v10653 = vpop.f32.mrb[0].mxu0
        %v10654 = vadd.f32 %v10493, %v10653
        %v10655 = vpop.f32.mrb[0].mxu0
        %v10656 = vpop.f32.mrb[0].mxu0
        %v10657 = vadd.f32 %v10496, %v10656
        %v10658 = vpop.f32.mrb[0].mxu0
        %10659 = vmatprep.mubr.bf16.mxu0 0
        %10660 = vmatmul.mubr.bf16.gmra.mrb[0].mxu0 %v9457
        %v10661 = vpop.f32.mrb[0].mxu0
        %v10662 = vadd.f32 %v10501, %v10661
        %v10663 = vpop.f32.mrb[0].mxu0
        %v10664 = vpop.f32.mrb[0].mxu0
        %v10665 = vadd.f32 %v10504, %v10664
        %v10666 = vpop.f32.mrb[0].mxu0
        %10667 = vmatprep.mubr.bf16.mxu0 0
        %10668 = vmatmul.mubr.bf16.gmra.mrb[0].mxu0 %v9458
        %v10669 = vpop.f32.mrb[0].mxu0
        %v10670 = vadd.f32 %v10509, %v10669
        %v10671 = vpop.f32.mrb[0].mxu0
        %v10672 = vpop.f32.mrb[0].mxu0
        %v10673 = vadd.f32 %v10512, %v10672
        %v10674 = vpop.f32.mrb[0].mxu0
        %10675 = vmatprep.mubr.bf16.mxu0 0
        %10676 = vmatmul.mubr.bf16.gmra.mrb[0].mxu0 %v9459
        %v10677 = vpop.f32.mrb[0].mxu0
        %v10678 = vadd.f32 %v10517, %v10677
        %v10679 = vpop.f32.mrb[0].mxu0
        %v10680 = vpop.f32.mrb[0].mxu0
        %v10681 = vadd.f32 %v10520, %v10680
        %v10682 = vpop.f32.mrb[0].mxu0
        %10683 = vmatprep.mubr.bf16.mxu0 0
        %10684 = vmatmul.mubr.bf16.gmra.mrb[0].mxu0 %v9460
        %v10685 = vpop.f32.mrb[0].mxu0
        %v10686 = vadd.f32 %v10525, %v10685
        %v10687 = vpop.f32.mrb[0].mxu0
        %v10688 = vpop.f32.mrb[0].mxu0
        %v10689 = vadd.f32 %v10528, %v10688
        %v10690 = vpop.f32.mrb[0].mxu0
        %10691 = vmatprep.mubr.bf16.mxu0 0
        %10692 = vmatmul.mubr.bf16.gmra.mrb[0].mxu0 %v9461
        %v10693 = vpop.f32.mrb[0].mxu0
        %v10694 = vadd.f32 %v10533, %v10693
        %v10695 = vpop.f32.mrb[0].mxu0
        %v10696 = vpop.f32.mrb[0].mxu0
        %v10697 = vadd.f32 %v10536, %v10696
        %v10698 = vpop.f32.mrb[0].mxu0
        %10699 = vmatprep.mubr.bf16.mxu0 0
        %10700 = vmatmul.mubr.bf16.gmra.mrb[0].mxu0 %v9462
        %v10701 = vpop.f32.mrb[0].mxu0
        %v10702 = vadd.f32 %v10541, %v10701
        %v10703 = vpop.f32.mrb[0].mxu0
        %v10704 = vpop.f32.mrb[0].mxu0
        %v10705 = vadd.f32 %v10544, %v10704
        %v10706 = vpop.f32.mrb[0].mxu0
        %10707 = vmatprep.mubr.bf16.mxu0 0
        %10708 = vmatmul.mubr.bf16.gmra.mrb[0].mxu0 %v9463
        %v10709 = vpop.f32.mrb[0].mxu0
        %v10710 = vadd.f32 %v10549, %v10709
        %v10711 = vpop.f32.mrb[0].mxu0
        %v10712 = vpop.f32.mrb[0].mxu0
        %v10713 = vadd.f32 %v10552, %v10712
        %v10714 = vpop.f32.mrb[0].mxu0
        %10715 = vmatprep.mubr.bf16.mxu0 0
        %10716 = vmatmul.mubr.bf16.gmra.mrb[0].mxu0 %v9464
        %v10717 = vpop.f32.mrb[0].mxu0
        %v10718 = vadd.f32 %v10557, %v10717
        %v10719 = vpop.f32.mrb[0].mxu0
        %v10720 = vpop.f32.mrb[0].mxu0
        %v10721 = vadd.f32 %v10560, %v10720
        %v10722 = vpop.f32.mrb[0].mxu0
        %10723 = vdwg.mxu0
        %v10724 = vld [vmem:[%s508] sm:$0xff]
        %v10725 = vld [vmem:[%s508 + $0x8] sm:$0xff]
        %v10726 = vld [vmem:[%s508 + $0x10] sm:$0xff]
        %v10727 = vld [vmem:[%s508 + $0x18] sm:$0xff]
        %v10728 = vld [vmem:[%s508 + $0x20] sm:$0xff]
        %v10729 = vld [vmem:[%s508 + $0x28] sm:$0xff]
        %v10730 = vld [vmem:[%s508 + $0x30] sm:$0xff]
        %v10731 = vld [vmem:[%s508 + $0x38] sm:$0xff]
        %v10732 = vld [vmem:[%s508 + $0x40] sm:$0xff]
        %v10733 = vld [vmem:[%s508 + $0x48] sm:$0xff]
        %v10734 = vld [vmem:[%s508 + $0x50] sm:$0xff]
        %v10735 = vld [vmem:[%s508 + $0x58] sm:$0xff]
        %v10736 = vld [vmem:[%s508 + $0x60] sm:$0xff]
        %v10737 = vld [vmem:[%s508 + $0x68] sm:$0xff]
        %v10738 = vld [vmem:[%s508 + $0x70] sm:$0xff]
        %v10739 = vld [vmem:[%s508 + $0x78] sm:$0xff]
        %v10740 = vld [vmem:[%s508 + $0x80] sm:$0xff]
        %v10741 = vld [vmem:[%s508 + $0x88] sm:$0xff]
        %v10742 = vld [vmem:[%s508 + $0x90] sm:$0xff]
        %v10743 = vld [vmem:[%s508 + $0x98] sm:$0xff]
        %v10744 = vld [vmem:[%s508 + $0xa0] sm:$0xff]
        %v10745 = vld [vmem:[%s508 + $0xa8] sm:$0xff]
        %v10746 = vld [vmem:[%s508 + $0xb0] sm:$0xff]
        %v10747 = vld [vmem:[%s508 + $0xb8] sm:$0xff]
        %v10748 = vld [vmem:[%s508 + $0xc0] sm:$0xff]
        %v10749 = vld [vmem:[%s508 + $0xc8] sm:$0xff]
        %v10750 = vld [vmem:[%s508 + $0xd0] sm:$0xff]
        %v10751 = vld [vmem:[%s508 + $0xd8] sm:$0xff]
        %v10752 = vld [vmem:[%s508 + $0xe0] sm:$0xff]
        %v10753 = vld [vmem:[%s508 + $0xe8] sm:$0xff]
        %v10754 = vld [vmem:[%s508 + $0xf0] sm:$0xff]
        %v10755 = vld [vmem:[%s508 + $0xf8] sm:$0xff]
        %v10756 = vadd.f32 %v10598, %v10724
        %v10757 = vadd.f32 %v10601, %v10725
        %v10758 = vadd.f32 %v10606, %v10726
        %v10759 = vadd.f32 %v10609, %v10727
        %v10760 = vadd.f32 %v10614, %v10728
        %v10761 = vadd.f32 %v10617, %v10729
        %v10762 = vadd.f32 %v10622, %v10730
        %v10763 = vadd.f32 %v10625, %v10731
        %v10764 = vadd.f32 %v10630, %v10732
        %v10765 = vadd.f32 %v10633, %v10733
        %v10766 = vadd.f32 %v10638, %v10734
        %v10767 = vadd.f32 %v10641, %v10735
        %v10768 = vadd.f32 %v10646, %v10736
        %v10769 = vadd.f32 %v10649, %v10737
        %v10770 = vadd.f32 %v10654, %v10738
        %v10771 = vadd.f32 %v10657, %v10739
        %v10772 = vadd.f32 %v10662, %v10740
        %v10773 = vadd.f32 %v10665, %v10741
        %v10774 = vadd.f32 %v10670, %v10742
        %v10775 = vadd.f32 %v10673, %v10743
        %v10776 = vadd.f32 %v10678, %v10744
        %v10777 = vadd.f32 %v10681, %v10745
        %v10778 = vadd.f32 %v10686, %v10746
        %v10779 = vadd.f32 %v10689, %v10747
        %v10780 = vadd.f32 %v10694, %v10748
        %v10781 = vadd.f32 %v10697, %v10749
        %v10782 = vadd.f32 %v10702, %v10750
        %v10783 = vadd.f32 %v10705, %v10751
        %v10784 = vadd.f32 %v10710, %v10752
        %v10785 = vadd.f32 %v10713, %v10753
        %v10786 = vadd.f32 %v10718, %v10754
        %v10787 = vadd.f32 %v10721, %v10755
        %v10788 = vld [vmem:[%s517] sm:$0xff]
        %v10789 = vld [vmem:[%s517 + $0x8] sm:$0xff]
        %v10790 = vld [vmem:[%s517 + $0x10] sm:$0xff]
        %v10791 = vld [vmem:[%s517 + $0x18] sm:$0xff]
        %v10792 = vld [vmem:[%s517 + $0x20] sm:$0xff]
        %v10793 = vld [vmem:[%s517 + $0x28] sm:$0xff]
        %v10794 = vld [vmem:[%s517 + $0x30] sm:$0xff]
        %v10795 = vld [vmem:[%s517 + $0x38] sm:$0xff]
        %v10796 = vld [vmem:[%s517 + $0x40] sm:$0xff]
        %v10797 = vld [vmem:[%s517 + $0x48] sm:$0xff]
        %v10798 = vld [vmem:[%s517 + $0x50] sm:$0xff]
        %v10799 = vld [vmem:[%s517 + $0x58] sm:$0xff]
        %v10800 = vld [vmem:[%s517 + $0x60] sm:$0xff]
        %v10801 = vld [vmem:[%s517 + $0x68] sm:$0xff]
        %v10802 = vld [vmem:[%s517 + $0x70] sm:$0xff]
        %v10803 = vld [vmem:[%s517 + $0x78] sm:$0xff]
        %v10804 = vld [vmem:[%s517 + $0x80] sm:$0xff]
        %v10805 = vld [vmem:[%s517 + $0x88] sm:$0xff]
        %v10806 = vld [vmem:[%s517 + $0x90] sm:$0xff]
        %v10807 = vld [vmem:[%s517 + $0x98] sm:$0xff]
        %v10808 = vld [vmem:[%s517 + $0xa0] sm:$0xff]
        %v10809 = vld [vmem:[%s517 + $0xa8] sm:$0xff]
        %v10810 = vld [vmem:[%s517 + $0xb0] sm:$0xff]
        %v10811 = vld [vmem:[%s517 + $0xb8] sm:$0xff]
        %v10812 = vld [vmem:[%s517 + $0xc0] sm:$0xff]
        %v10813 = vld [vmem:[%s517 + $0xc8] sm:$0xff]
        %v10814 = vld [vmem:[%s517 + $0xd0] sm:$0xff]
        %v10815 = vld [vmem:[%s517 + $0xd8] sm:$0xff]
        %v10816 = vld [vmem:[%s517 + $0xe0] sm:$0xff]
        %v10817 = vld [vmem:[%s517 + $0xe8] sm:$0xff]
        %v10818 = vld [vmem:[%s517 + $0xf0] sm:$0xff]
        %v10819 = vld [vmem:[%s517 + $0xf8] sm:$0xff]
        %v10820 = vadd.f32 %v10756, %v10788
        %v10821 = vadd.f32 %v10757, %v10789
        %v10822 = vadd.f32 %v10758, %v10790
        %v10823 = vadd.f32 %v10759, %v10791
        %v10824 = vadd.f32 %v10760, %v10792
        %v10825 = vadd.f32 %v10761, %v10793
        %v10826 = vadd.f32 %v10762, %v10794
        %v10827 = vadd.f32 %v10763, %v10795
        %v10828 = vadd.f32 %v10764, %v10796
        %v10829 = vadd.f32 %v10765, %v10797
        %v10830 = vadd.f32 %v10766, %v10798
        %v10831 = vadd.f32 %v10767, %v10799
        %v10832 = vadd.f32 %v10768, %v10800
        %v10833 = vadd.f32 %v10769, %v10801
        %v10834 = vadd.f32 %v10770, %v10802
        %v10835 = vadd.f32 %v10771, %v10803
        %v10836 = vadd.f32 %v10772, %v10804
        %v10837 = vadd.f32 %v10773, %v10805
        %v10838 = vadd.f32 %v10774, %v10806
        %v10839 = vadd.f32 %v10775, %v10807
        %v10840 = vadd.f32 %v10776, %v10808
        %v10841 = vadd.f32 %v10777, %v10809
        %v10842 = vadd.f32 %v10778, %v10810
        %v10843 = vadd.f32 %v10779, %v10811
        %v10844 = vadd.f32 %v10780, %v10812
        %v10845 = vadd.f32 %v10781, %v10813
        %v10846 = vadd.f32 %v10782, %v10814
        %v10847 = vadd.f32 %v10783, %v10815
        %v10848 = vadd.f32 %v10784, %v10816
        %v10849 = vadd.f32 %v10785, %v10817
        %v10850 = vadd.f32 %v10786, %v10818
        %v10851 = vadd.f32 %v10787, %v10819
        %10852 = vst [vmem:[%s602] sm:$0xff] %v10820
        %10853 = vst [vmem:[%s602 + $0x8] sm:$0xff] %v10821
        %10854 = vst [vmem:[%s602 + $0x10] sm:$0xff] %v10822
        %10855 = vst [vmem:[%s602 + $0x18] sm:$0xff] %v10823
        %10856 = vst [vmem:[%s602 + $0x20] sm:$0xff] %v10824
        %10857 = vst [vmem:[%s602 + $0x28] sm:$0xff] %v10825
        %10858 = vst [vmem:[%s602 + $0x30] sm:$0xff] %v10826
        %10859 = vst [vmem:[%s602 + $0x38] sm:$0xff] %v10827
        %10860 = vst [vmem:[%s602 + $0x40] sm:$0xff] %v10828
        %10861 = vst [vmem:[%s602 + $0x48] sm:$0xff] %v10829
        %10862 = vst [vmem:[%s602 + $0x50] sm:$0xff] %v10830
        %10863 = vst [vmem:[%s602 + $0x58] sm:$0xff] %v10831
        %10864 = vst [vmem:[%s602 + $0x60] sm:$0xff] %v10832
        %10865 = vst [vmem:[%s602 + $0x68] sm:$0xff] %v10833
        %10866 = vst [vmem:[%s602 + $0x70] sm:$0xff] %v10834
        %10867 = vst [vmem:[%s602 + $0x78] sm:$0xff] %v10835
        %10868 = vst [vmem:[%s602 + $0x80] sm:$0xff] %v10836
        %10869 = vst [vmem:[%s602 + $0x88] sm:$0xff] %v10837
        %10870 = vst [vmem:[%s602 + $0x90] sm:$0xff] %v10838
        %10871 = vst [vmem:[%s602 + $0x98] sm:$0xff] %v10839
        %10872 = vst [vmem:[%s602 + $0xa0] sm:$0xff] %v10840
        %10873 = vst [vmem:[%s602 + $0xa8] sm:$0xff] %v10841
        %10874 = vst [vmem:[%s602 + $0xb0] sm:$0xff] %v10842
        %10875 = vst [vmem:[%s602 + $0xb8] sm:$0xff] %v10843
        %10876 = vst [vmem:[%s602 + $0xc0] sm:$0xff] %v10844
        %10877 = vst [vmem:[%s602 + $0xc8] sm:$0xff] %v10845
        %10878 = vst [vmem:[%s602 + $0xd0] sm:$0xff] %v10846
        %10879 = vst [vmem:[%s602 + $0xd8] sm:$0xff] %v10847
        %10880 = vst [vmem:[%s602 + $0xe0] sm:$0xff] %v10848
        %10881 = vst [vmem:[%s602 + $0xe8] sm:$0xff] %v10849
        %10882 = vst [vmem:[%s602 + $0xf0] sm:$0xff] %v10850
        %10883 = vst [vmem:[%s602 + $0xf8] sm:$0xff] %v10851
        %s10884 = sand.u32 %s307, 1
        %s10885 = scalar_lea.sflag [#allocation5], %s10884
        %s10886 = sand.u32 %s307, 1
        %s10887 = smul.addr %s10886, 256
        %s10888 = scalar_lea.vmem [#allocation23], %s10887
        // Predicated region
        $region117: #{tpu_custom_call.1} parent=67 // pred_check
          %p10889 = pneg %p317
        $region118: #{tpu_custom_call.1} parent=67 // pred_check_branch
          %10891 = sbr.rel (%p10889) target = $region120
        $region119: #{tpu_custom_call.1} parent=67 // pred_region
          %s10893 = ssub.s32 4096, 4096
          %10894 = vsyncadd %s10885, %s10893
          %s10895 = smul.addr %s37, 32
          %s10896 = smul.addr %s10895, 128
          %s10897 = scalar_lea.hbm %s12, %s10896
          %s10898 = sshll.u32 %s10888, 4
          %s10899 = int_to_ptr.vmem [resolvable:$true] %s10898
          %10904 = dma.vmem_to_hbm [thread:$0]  %s10899, 4096, %s10897, %s10885, 128, 128, 8
        $region120: #{tpu_custom_call.1} parent=67 // pred_fallthru
          _
      $region68: #{tpu_custom_call.1} parent=5 // pred_fallthru
        _
      %p10905 = scmp.le.s32.totalorder 2, %s32
      // Predicated region
      $region121: #{tpu_custom_call.1} parent=5 // pred_check
        %p10906 = pneg %p10905
      $region122: #{tpu_custom_call.1} parent=5 // pred_check_branch
        %10908 = sbr.rel (%p10906) target = $region124
      $region123: #{tpu_custom_call.1} parent=5 // pred_region
        %s10909 = ssub.s32 %s32, 2
        // Predicated region
        $region125: #{tpu_custom_call.1} parent=123 // pred_check
          %p10910 = pneg %p323
        $region126: #{tpu_custom_call.1} parent=123 // pred_check_branch
          %10912 = sbr.rel (%p10910) target = $region128
        $region127: #{tpu_custom_call.1} parent=123 // pred_region
          %s10913 = sand.u32 %s308, 1
          %s10914 = scalar_lea.sflag [#allocation5], %s10913
          %s10915 = sand.u32 %s308, 1
          %s10916 = smul.addr %s10915, 256
          %s10917 = scalar_lea.vmem [#allocation23], %s10916
          %10918 = dma.done %s10914, 4096
        $region128: #{tpu_custom_call.1} parent=123 // pred_fallthru
          _
      $region124: #{tpu_custom_call.1} parent=5 // pred_fallthru
        _
    $region6: #{tpu_custom_call.1} parent=1 // loop_footer
      %s36 = sadd.s32 1, %s32
    $region7: #{tpu_custom_call.1} parent=1 // loop_footer_branch
      %31 = sbr.rel target = $region3
    $region8: #{tpu_custom_call.1} parent=1 // loop_exit
      _
    %10919 = vsyncpa [#allocation4], 1
    %s10920 = scalar_lea.sflag [#allocation4], 1
    %10921 = vsyncpa %s10920, 1
    %10922 = vsyncpa [#allocation7], 1
    %s10923 = scalar_lea.sflag [#allocation7], 1
    %10924 = vsyncpa %s10923, 1
    %10925 = vsyncpa [#allocation10], 1
    %10926 = vsyncpa [#allocation13], 1
    %10927 = vsyncpa [#allocation16], 1
    %10928 = vsyncpa [#allocation19], 1
    %10929 = vsyncpa [#allocation22], 1
    %10930 = vsyncpa [#allocation5], 1
    %s10931 = scalar_lea.sflag [#allocation5], 1
    %10932 = vsyncpa %s10931, 1

</llo_original>
